<compile_context>
chip_gen: v7x
topology: tpu7x:2x2x1
jax: 0.10.0
libtpu: 0.0.40
codegen_flags: <defaults>
</compile_context>

<pallas_src>
import functools

import jax
import jax.numpy as jnp
from jax.experimental import pallas as pl
from jax.experimental.pallas import tpu as pltpu

C_PAD = 128  # lane-padded channel width carried between layers


# ----------------------------------------------------------------------------
# small helpers
# ----------------------------------------------------------------------------
def _round_up(v, m):
    return ((v + m - 1) // m) * m


def _pad2d(x, rows, cols, value=0.0):
    r, c = x.shape
    return jnp.pad(x, ((0, rows - r), (0, cols - c)), constant_values=value)


# ----------------------------------------------------------------------------
# Pallas kernels
# ----------------------------------------------------------------------------
def _mm_kernel(x_ref, w_ref, b_ref, o_ref, *, relu):
    # bf16 MXU matmul, f32 accumulation + epilogue (v5e VPU has no bf16 path),
    # cast to the output dtype only on the final store.
    acc = jnp.dot(x_ref[...], w_ref[...], preferred_element_type=jnp.float32)
    y = acc + b_ref[...]
    if relu:
        y = jnp.maximum(y, 0.0)
    o_ref[...] = y.astype(o_ref.dtype)


def _conv3_kernel(xw_ref, w_ref, b_ref, o_ref, *, relu, H, W8, C3, Cout):
    # Direct 3x3 stride-1 conv: the width taps are pre-stacked on the lane axis
    # (C3 = 3*C), the three height taps are accumulated here via major-axis slices.
    HW = H * W8
    acc = jnp.dot(xw_ref[0, 0:H, :, :].reshape(HW, C3), w_ref[0],
                  preferred_element_type=jnp.float32)
    for di in range(1, 3):
        acc = acc + jnp.dot(xw_ref[0, di:di + H, :, :].reshape(HW, C3), w_ref[di],
                            preferred_element_type=jnp.float32)
    y = acc + b_ref[...]
    if relu:
        y = jnp.maximum(y, 0.0)
    o_ref[...] = y.reshape(1, H, W8, Cout).astype(o_ref.dtype)


def _conv3_res_kernel(xw_ref, w_ref, b_ref, r_ref, o_ref, *, relu, H, W8, C3, Cout):
    HW = H * W8
    acc = jnp.dot(xw_ref[0, 0:H, :, :].reshape(HW, C3), w_ref[0],
                  preferred_element_type=jnp.float32)
    for di in range(1, 3):
        acc = acc + jnp.dot(xw_ref[0, di:di + H, :, :].reshape(HW, C3), w_ref[di],
                            preferred_element_type=jnp.float32)
    y = acc + b_ref[...]
    if relu:
        y = jnp.maximum(y, 0.0)
    # module semantics: ReLU is inside the Sequential, identity added afterwards.
    y = y + r_ref[0].reshape(HW, Cout).astype(jnp.float32)
    o_ref[...] = y.reshape(1, H, W8, Cout).astype(o_ref.dtype)


def _pool_kernel(me_ref, mo_ref, o_ref, *, Ho):
    # height-direction 3-tap max (stride 2) over even/odd row phases; slices are
    # along a major (untiled) axis only.
    a = me_ref[0, 0:Ho, :, :]
    b = mo_ref[0, 0:Ho, :, :]
    c = me_ref[0, 1:Ho + 1, :, :]
    o_ref[0] = jnp.maximum(jnp.maximum(a, b), c)


def _sumpool_kernel(x_ref, o_ref):
    # pure spatial sum (1/HW is folded into the fc weights), f32 accumulation.
    o_ref[...] = jnp.sum(x_ref[...].astype(jnp.float32), axis=1)


# ----------------------------------------------------------------------------
# fused matmul + shift + ReLU  --  stem / stride-2 conv / fc path
# ----------------------------------------------------------------------------
def fused_matmul(x, w, bias, *, relu=False, out_dtype=jnp.float32):
    """y = maybe_relu(x @ w + bias), tiled over (M, N); BN scale is pre-folded into w."""
    M, K = x.shape
    N = w.shape[1]

    Mp0 = _round_up(M, 16)           # bf16 packs two rows per sublane
    Kp = _round_up(K, 128)
    Np = _round_up(N, 128)
    TN = 256 if Np % 256 == 0 else 128
    TM = min(512, Mp0)               # 512-row tiles ~ HBM roofline (vs ~63% at 256)
    Mp = _round_up(Mp0, TM)
    # v7x has 2 TensorCores: keep >= 2 grid programs when the problem allows it.
    while (Mp // TM) * (Np // TN) < 2 and TM >= 32:
        TM //= 2
        Mp = _round_up(Mp0, TM)

    xp = _pad2d(x, Mp, Kp).astype(jnp.bfloat16)     # no-ops when already padded bf16
    wp = _pad2d(w, Kp, Np).astype(jnp.bfloat16)
    bp = _pad2d(bias.reshape(1, -1).astype(jnp.float32), 1, Np)

    out_bytes = 2 if out_dtype == jnp.bfloat16 else 4
    out = pl.pallas_call(
        functools.partial(_mm_kernel, relu=relu),
        out_shape=jax.ShapeDtypeStruct((Mp, Np), out_dtype),
        grid=(Mp // TM, Np // TN),
        in_specs=[
            pl.BlockSpec((TM, Kp), lambda i, j: (i, 0)),
            pl.BlockSpec((Kp, TN), lambda i, j: (0, j)),
            pl.BlockSpec((1, TN), lambda i, j: (0, j)),
        ],
        out_specs=pl.BlockSpec((TM, TN), lambda i, j: (i, j)),
        compiler_params=pltpu.CompilerParams(
            dimension_semantics=("parallel", "parallel"),
            vmem_limit_bytes=48 * 1024 * 1024,
        ),
        cost_estimate=pl.CostEstimate(
            flops=2 * Mp * Kp * Np,
            transcendentals=0,
            bytes_accessed=int(xp.size * 2 + wp.size * 2 + bp.size * 4
                               + Mp * Np * out_bytes),
        ),
    )(xp, wp, bp)
    return out[:M, :N]


# ----------------------------------------------------------------------------
# direct 3x3 / stride-1 conv (+BN shift, ReLU, optional residual), bf16 in/out
# ----------------------------------------------------------------------------
def conv3x3_direct(x, wt, shift, *, real_w, relu=True, residual=None):
    """x: (N,H,Wstore,128) bf16 (valid width real_w); wt: (3, 3*128, 128) bf16
    (BN scale folded, zero rows for padded Cin); shift: (128,) f32.
    Returns (N, H, W8, 128) bf16, W8 = round_up(real_w, 8); columns >= real_w are
    don't-care, padded output channels stay exactly zero."""
    N, H, _, C = x.shape
    W = real_w
    W8 = _round_up(W, 8)
    Hp = H + 2
    C3 = wt.shape[1]
    Cout = wt.shape[2]

    # Width-tap stack in plain JAX (bf16, 3x -- vs 9x f32 before); the spatial zero
    # ring is built here so the kernel never sees a boundary.
    xp = jnp.pad(x[:, :, :W, :], ((0, 0), (1, 1), (1, 1 + (W8 - W)), (0, 0)))
    xw = jnp.concatenate([xp[:, :, d:d + W8, :] for d in range(3)], axis=-1)

    shift2 = shift.reshape(1, Cout).astype(jnp.float32)

    in_specs = [
        pl.BlockSpec((1, Hp, W8, C3), lambda n: (n, 0, 0, 0)),
        pl.BlockSpec(wt.shape, lambda n: (0, 0, 0)),
        pl.BlockSpec((1, Cout), lambda n: (0, 0)),
    ]
    args = [xw, wt, shift2]
    bytes_accessed = xw.size * 2 + wt.size * 2 + shift2.size * 4 + N * H * W8 * Cout * 2
    if residual is not None:
        res = residual
        if res.shape[2] < W8:
            res = jnp.pad(res, ((0, 0), (0, 0), (0, W8 - res.shape[2]), (0, 0)))
        elif res.shape[2] > W8:
            res = res[:, :, :W8, :]
        in_specs.append(pl.BlockSpec((1, H, W8, Cout), lambda n: (n, 0, 0, 0)))
        args.append(res)
        bytes_accessed += res.size * 2
        kernel = functools.partial(_conv3_res_kernel, relu=relu, H=H, W8=W8,
                                   C3=C3, Cout=Cout)
    else:
        kernel = functools.partial(_conv3_kernel, relu=relu, H=H, W8=W8,
                                   C3=C3, Cout=Cout)

    # TODO(synk): for very large images, add an H-tile grid axis (with a 1-row halo
    # via manual DMA) instead of whole-image blocks.
    out = pl.pallas_call(
        kernel,
        out_shape=jax.ShapeDtypeStruct((N, H, W8, Cout), jnp.bfloat16),
        grid=(N,),
        in_specs=in_specs,
        out_specs=pl.BlockSpec((1, H, W8, Cout), lambda n: (n, 0, 0, 0)),
        compiler_params=pltpu.CompilerParams(
            dimension_semantics=("parallel",),
            vmem_limit_bytes=48 * 1024 * 1024,
        ),
        cost_estimate=pl.CostEstimate(
            flops=2 * N * H * W8 * C3 * Cout * 3,
            transcendentals=0,
            bytes_accessed=int(bytes_accessed),
        ),
    )(*args)
    return out


# ----------------------------------------------------------------------------
# pooling
# ----------------------------------------------------------------------------
def maxpool_3x3_s2_p1(x, *, real_w):
    # x: (N, H, Wstore, C) bf16, valid width real_w.  Width-direction max is a fused
    # strided-slice max in XLA (single input read, no 9-view blow-up); the Pallas
    # kernel finishes the height direction from even/odd row phases.
    N, H, _, C = x.shape
    W = real_w
    Ho = (H - 1) // 2 + 1
    Wo = (W - 1) // 2 + 1
    NEG = float("-inf")
    xp = jnp.pad(x[:, :, :W, :], ((0, 0), (1, 1), (1, 1), (0, 0)), constant_values=NEG)
    m = jnp.maximum(jnp.maximum(xp[:, :, 0:2 * Wo:2, :], xp[:, :, 1:2 * Wo:2, :]),
                    xp[:, :, 2:2 * Wo + 1:2, :])          # (N, H+2, Wo, C)
    me = m[:, 0::2, :, :]                                  # rows 0,2,...  (Ho+1 rows)
    mo = m[:, 1::2, :, :]                                  # rows 1,3,...
    He, Hod = me.shape[1], mo.shape[1]

    out = pl.pallas_call(
        functools.partial(_pool_kernel, Ho=Ho),
        out_shape=jax.ShapeDtypeStruct((N, Ho, Wo, C), x.dtype),
        grid=(N,),
        in_specs=[pl.BlockSpec((1, He, Wo, C), lambda n: (n, 0, 0, 0)),
                  pl.BlockSpec((1, Hod, Wo, C), lambda n: (n, 0, 0, 0))],
        out_specs=pl.BlockSpec((1, Ho, Wo, C), lambda n: (n, 0, 0, 0)),
        compiler_params=pltpu.CompilerParams(dimension_semantics=("parallel",)),
    )(me, mo)
    return out, Wo


def global_sum_pool(x):
    # x: (N, H, W, C) bf16 -> (N, C) f32 spatial SUM (1/HW folded into fc weights).
    N, H, W, C = x.shape
    HW = H * W
    xr = x.reshape(N, HW, C)
    return pl.pallas_call(
        _sumpool_kernel,
        out_shape=jax.ShapeDtypeStruct((N, C), jnp.float32),
        grid=(1,),
        in_specs=[pl.BlockSpec((N, HW, C), lambda i: (0, 0, 0))],
        out_specs=pl.BlockSpec((N, C), lambda i: (0, 0)),
    )(xr)


# ----------------------------------------------------------------------------
# conv glue (im2col kept only for the 7x7 stem and the single stride-2 conv)
# ----------------------------------------------------------------------------
def _im2col(x, k, stride, pad):
    # x: (N, H, W, C) bf16 (cast BEFORE building patches) -> (N*Ho*Wo, k*k*C) bf16
    N, H, W, C = x.shape
    xp = jnp.pad(x, ((0, 0), (pad, pad), (pad, pad), (0, 0)))
    Ho = (H + 2 * pad - k) // stride + 1
    Wo = (W + 2 * pad - k) // stride + 1
    patches = []
    for di in range(k):
        for dj in range(k):
            patches.append(xp[:, di:di + stride * Ho:stride, dj:dj + stride * Wo:stride, :])
    cols = jnp.stack(patches, axis=3)                 # (N, Ho, Wo, k*k, C)
    return cols.reshape(N * Ho * Wo, k * k * C), Ho, Wo


# ----------------------------------------------------------------------------
# parameters (deterministic; BN folded, scale baked into bf16 weights, lane-padded)
# ----------------------------------------------------------------------------
def init_params(key, num_classes=1000):
    ks = jax.random.split(key, 12)
    C = C_PAD

    def conv_w(k, kh, kw, cin, cout):
        fan_in = kh * kw * cin
        return jax.random.normal(k, (kh, kw, cin, cout), jnp.float32) / jnp.sqrt(float(fan_in))

    def bn_fold(k, c):
        # inference-mode BatchNorm folded into per-channel scale/shift
        k1, k2, k3, k4 = jax.random.split(k, 4)
        gamma = 1.0 + 0.1 * jax.random.normal(k1, (c,), jnp.float32)
        beta = 0.1 * jax.random.normal(k2, (c,), jnp.float32)
        rmean = 0.1 * jax.random.normal(k3, (c,), jnp.float32)
        rvar = 1.0 + 0.1 * jnp.abs(jax.random.normal(k4, (c,), jnp.float32))
        scale = gamma / jnp.sqrt(rvar + 1e-5)
        shift = beta - rmean * scale
        return scale, shift

    def pack_shift(shift):
        return jnp.pad(shift, (0, C - shift.shape[0])).astype(jnp.float32)

    def pack_im2col_w(w, scale, cin_pad=None):
        # (kh,kw,cin,cout) -> (kh*kw*cin_pad, 128) bf16, BN scale folded, zero-padded
        kh, kw, cin, cout = w.shape
        cin_pad = cin if cin_pad is None else cin_pad
        wf = w * scale.reshape(1, 1, 1, -1)
        wf = jnp.pad(wf, ((0, 0), (0, 0), (0, cin_pad - cin), (0, C - cout)))
        return wf.reshape(kh * kw * cin_pad, C).astype(jnp.bfloat16)

    def pack_direct_w(w, scale):
        # (3,3,cin,cout) -> (3, 3*128, 128) bf16 for the in-kernel tap-accumulating conv
        kh, kw, cin, cout = w.shape
        wf = w * scale.reshape(1, 1, 1, -1)
        wf = jnp.pad(wf, ((0, 0), (0, 0), (0, C - cin), (0, C - cout)))
        return wf.reshape(kh, kw * C, C).astype(jnp.bfloat16)

    p = {}
    w = conv_w(ks[0], 7, 7, 3, 64); s, b = bn_fold(ks[1], 64)
    p["stem_w"] = pack_im2col_w(w, s)                      # (147, 128)
    p["stem_b"] = pack_shift(b)

    w = conv_w(ks[2], 3, 3, 64, 64); s, b = bn_fold(ks[3], 64)
    p["l1c1_w"] = pack_direct_w(w, s); p["l1c1_b"] = pack_shift(b)

    w = conv_w(ks[4], 3, 3, 64, 64); s, b = bn_fold(ks[5], 64)
    p["l1c2_w"] = pack_direct_w(w, s); p["l1c2_b"] = pack_shift(b)

    w = conv_w(ks[6], 3, 3, 64, 128); s, b = bn_fold(ks[7], 128)
    p["l2c1_w"] = pack_im2col_w(w, s, cin_pad=C)           # (1152, 128)
    p["l2c1_b"] = pack_shift(b)

    w = conv_w(ks[8], 3, 3, 128, 128); s, b = bn_fold(ks[9], 128)
    p["l2c2_w"] = pack_direct_w(w, s); p["l2c2_b"] = pack_shift(b)

    # TODO(synk): the module declares nn.Linear(2048, num_classes) but its forward
    # graph produces a 128-channel pooled feature; use in_features=128 so it runs.
    p["fc_w"] = jax.random.normal(ks[10], (C, num_classes), jnp.float32) / jnp.sqrt(float(C))
    p["fc_b"] = 0.01 * jax.random.normal(ks[11], (num_classes,), jnp.float32)
    return p


# ----------------------------------------------------------------------------
# forward pass
# ----------------------------------------------------------------------------
@jax.jit
def resnet50_forward(x_nchw, params):
    p = params
    # PyTorch NCHW -> NHWC so channels ride the 128-lane axis; cast to bf16 BEFORE
    # any patch/view materialization.
    x = jnp.transpose(x_nchw, (0, 2, 3, 1)).astype(jnp.bfloat16)
    N = x.shape[0]

    # stem: conv7x7/s2/p3 + BN + ReLU (im2col + fused MXU matmul), channels -> 128 padded
    cols, Ho, Wo = _im2col(x, 7, 2, 3)
    x = fused_matmul(cols, p["stem_w"], p["stem_b"], relu=True,
                     out_dtype=jnp.bfloat16).reshape(N, Ho, Wo, C_PAD)
    real_w = Wo

    # maxpool 3x3/s2/p1
    x, real_w = maxpool_3x3_s2_p1(x, real_w=real_w)

    # layer1 (module semantics: ReLU inside the Sequential, then + identity)
    identity = x
    y = conv3x3_direct(x, p["l1c1_w"], p["l1c1_b"], real_w=real_w, relu=True)
    x = conv3x3_direct(y, p["l1c2_w"], p["l1c2_b"], real_w=real_w, relu=True,
                       residual=identity)

    # layer2
    cols, Ho, Wo = _im2col(x[:, :, :real_w, :], 3, 2, 1)
    y = fused_matmul(cols, p["l2c1_w"], p["l2c1_b"], relu=True,
                     out_dtype=jnp.bfloat16).reshape(N, Ho, Wo, C_PAD)
    real_w = Wo
    y = conv3x3_direct(y, p["l2c2_w"], p["l2c2_b"], real_w=real_w, relu=True)
    # TODO(synk): original `self.layer2(x) + x` is a shape mismatch (128ch@H/2 vs
    # 64ch@H) and would raise in PyTorch; the impossible residual add is omitted.
    x = y

    # adaptive avgpool(1,1) -> flatten -> fc  (1/HW folded into the fc weights)
    hw = x.shape[1] * real_w
    pooled = global_sum_pool(x[:, :, :real_w, :])                  # (N, 128) f32 sums
    logits = fused_matmul(pooled, p["fc_w"] * (1.0 / float(hw)), p["fc_b"],
                          relu=False, out_dtype=jnp.float32)
    return logits


if __name__ == "__main__":
    key = jax.random.PRNGKey(0)
    kx, kp = jax.random.split(key)
    # small, forward-consistent shapes: batch=2, 3 input channels, 32x32 spatial
    x = jax.random.normal(kx, (2, 3, 32, 32), jnp.float32)        # NCHW like PyTorch
    params = init_params(kp, num_classes=1000)

    out = resnet50_forward(x, params)
    out = jax.block_until_ready(out)

    assert out.shape == (2, 1000), out.shape
    assert bool(jnp.all(jnp.isfinite(out)))
    print("KERNEL_OK")
</pallas_src>

<mosaic_0001>
module attributes {stable_mosaic.version = 11 : i64} {
  func.func @_mm_kernel(%arg0: i32, %arg1: i32, %arg2: memref<256x256xbf16, #tpu.memory_space<vmem>>, %arg3: memref<256x128xbf16, #tpu.memory_space<vmem>>, %arg4: memref<1x128xf32, #tpu.memory_space<vmem>>, %arg5: memref<256x128xbf16, #tpu.memory_space<vmem>>) attributes {dimension_semantics = [#tpu.dimension_semantics<parallel>, #tpu.dimension_semantics<parallel>], iteration_bounds = array<i64: 2, 1>, scalar_prefetch = 0 : i64, scratch_operands = 0 : i64, tpu.core_type = #tpu.core_type<tc>, window_params = [{transform_indices = @transform_0, window_bounds = array<i64: 256, 256>}, {transform_indices = @transform_1, window_bounds = array<i64: 256, 128>}, {transform_indices = @transform_2, window_bounds = array<i64: 1, 128>}, {transform_indices = @transform_3, window_bounds = array<i64: 256, 128>}]} {
    %c0 = arith.constant 0 : index
    %c0_0 = arith.constant 0 : index
    %0 = vector.load %arg2[%c0, %c0_0] : memref<256x256xbf16, #tpu.memory_space<vmem>>, vector<256x256xbf16>
    %c0_1 = arith.constant 0 : index
    %c0_2 = arith.constant 0 : index
    %1 = vector.load %arg3[%c0_1, %c0_2] : memref<256x128xbf16, #tpu.memory_space<vmem>>, vector<256x128xbf16>
    %cst = arith.constant dense<0.000000e+00> : vector<256x128xf32>
    %2 = tpu.matmul %0, %1, %cst {dimension_numbers = #tpu.dot_dimension_numbers<[1], [0], [0], [1], [0, 0, 1, 1], [], []>} : vector<256x256xbf16>, vector<256x128xbf16>, vector<256x128xf32> -> vector<256x128xf32>
    %c0_3 = arith.constant 0 : index
    %c0_4 = arith.constant 0 : index
    %3 = vector.load %arg4[%c0_3, %c0_4] : memref<1x128xf32, #tpu.memory_space<vmem>>, vector<1x128xf32>
    %4 = vector.broadcast %3 : vector<1x128xf32> to vector<256x128xf32>
    %5 = arith.addf %2, %4 : vector<256x128xf32>
    %cst_5 = arith.constant 0.000000e+00 : f32
    %6 = vector.broadcast %cst_5 : f32 to vector<256x128xf32>
    %7 = arith.maximumf %5, %6 : vector<256x128xf32>
    %8 = arith.truncf %7 : vector<256x128xf32> to vector<256x128xbf16>
    %c0_6 = arith.constant 0 : index
    %c0_7 = arith.constant 0 : index
    %9 = vector.load %arg5[%c0_6, %c0_7] : memref<256x128xbf16, #tpu.memory_space<vmem>>, vector<256x128xbf16>
    tpu.vector_store %arg5[%c0_6, %c0_7], %8 {strides = array<i32>} : memref<256x128xbf16, #tpu.memory_space<vmem>>, vector<256x128xbf16>,
    return
  }
  func.func @transform_0(%arg0: i32, %arg1: i32) -> (i32, i32) {
    %c0_i32 = arith.constant 0 : i32
    %c0_i32_0 = arith.constant 0 : i32
    return %arg0, %c0_i32 : i32, i32
  }
  func.func @transform_1(%arg0: i32, %arg1: i32) -> (i32, i32) {
    %c0_i32 = arith.constant 0 : i32
    %c0_i32_0 = arith.constant 0 : i32
    return %c0_i32, %arg1 : i32, i32
  }
  func.func @transform_2(%arg0: i32, %arg1: i32) -> (i32, i32) {
    %c0_i32 = arith.constant 0 : i32
    %c0_i32_0 = arith.constant 0 : i32
    return %c0_i32, %arg1 : i32, i32
  }
  func.func @transform_3(%arg0: i32, %arg1: i32) -> (i32, i32) {
    %c0_i32 = arith.constant 0 : i32
    return %arg0, %arg1 : i32, i32
  }
}

module attributes {stable_mosaic.version = 11 : i64} {
  func.func @_pool_kernel(%arg0: i32, %arg1: memref<1x9x8x128xbf16, #tpu.memory_space<vmem>>, %arg2: memref<1x9x8x128xbf16, #tpu.memory_space<vmem>>, %arg3: memref<1x8x8x128xbf16, #tpu.memory_space<vmem>>) attributes {dimension_semantics = [#tpu.dimension_semantics<parallel>], iteration_bounds = array<i64: 2>, scalar_prefetch = 0 : i64, scratch_operands = 0 : i64, tpu.core_type = #tpu.core_type<tc>, window_params = [{transform_indices = @transform_0, window_bounds = array<i64: 1, 9, 8, 128>}, {transform_indices = @transform_1, window_bounds = array<i64: 1, 9, 8, 128>}, {transform_indices = @transform_2, window_bounds = array<i64: 1, 8, 8, 128>}]} {
    %c0 = arith.constant 0 : index
    %c0_0 = arith.constant 0 : index
    %c0_1 = arith.constant 0 : index
    %c0_2 = arith.constant 0 : index
    %0 = vector.load %arg1[%c0, %c0_0, %c0_1, %c0_2] : memref<1x9x8x128xbf16, #tpu.memory_space<vmem>>, vector<1x8x8x128xbf16>
    %1 = vector.shape_cast %0 : vector<1x8x8x128xbf16> to vector<8x8x128xbf16>
    %c0_3 = arith.constant 0 : index
    %c0_4 = arith.constant 0 : index
    %c0_5 = arith.constant 0 : index
    %c0_6 = arith.constant 0 : index
    %2 = vector.load %arg2[%c0_3, %c0_4, %c0_5, %c0_6] : memref<1x9x8x128xbf16, #tpu.memory_space<vmem>>, vector<1x8x8x128xbf16>
    %3 = vector.shape_cast %2 : vector<1x8x8x128xbf16> to vector<8x8x128xbf16>
    %c0_7 = arith.constant 0 : index
    %c1 = arith.constant 1 : index
    %c0_8 = arith.constant 0 : index
    %c0_9 = arith.constant 0 : index
    %4 = vector.load %arg1[%c0_7, %c1, %c0_8, %c0_9] : memref<1x9x8x128xbf16, #tpu.memory_space<vmem>>, vector<1x8x8x128xbf16>
    %5 = vector.shape_cast %4 : vector<1x8x8x128xbf16> to vector<8x8x128xbf16>
    %6 = arith.maximumf %1, %3 : vector<8x8x128xbf16>
    %7 = arith.maximumf %6, %5 : vector<8x8x128xbf16>
    %c0_10 = arith.constant 0 : index
    %c0_11 = arith.constant 0 : index
    %c0_12 = arith.constant 0 : index
    %c0_13 = arith.constant 0 : index
    %8 = vector.load %arg3[%c0_10, %c0_11, %c0_12, %c0_13] : memref<1x8x8x128xbf16, #tpu.memory_space<vmem>>, vector<1x8x8x128xbf16>
    %9 = vector.shape_cast %8 : vector<1x8x8x128xbf16> to vector<8x8x128xbf16>
    %10 = vector.shape_cast %7 : vector<8x8x128xbf16> to vector<1x8x8x128xbf16>
    tpu.vector_store %arg3[%c0_10, %c0_11, %c0_12, %c0_13], %10 {strides = array<i32>} : memref<1x8x8x128xbf16, #tpu.memory_space<vmem>>, vector<1x8x8x128xbf16>,
    return
  }
  func.func @transform_0(%arg0: i32) -> (i32, i32, i32, i32) {
    %c0_i32 = arith.constant 0 : i32
    %c0_i32_0 = arith.constant 0 : i32
    %c0_i32_1 = arith.constant 0 : i32
    %c0_i32_2 = arith.constant 0 : i32
    return %arg0, %c0_i32, %c0_i32_0, %c0_i32_1 : i32, i32, i32, i32
  }
  func.func @transform_1(%arg0: i32) -> (i32, i32, i32, i32) {
    %c0_i32 = arith.constant 0 : i32
    %c0_i32_0 = arith.constant 0 : i32
    %c0_i32_1 = arith.constant 0 : i32
    %c0_i32_2 = arith.constant 0 : i32
    return %arg0, %c0_i32, %c0_i32_0, %c0_i32_1 : i32, i32, i32, i32
  }
  func.func @transform_2(%arg0: i32) -> (i32, i32, i32, i32) {
    %c0_i32 = arith.constant 0 : i32
    %c0_i32_0 = arith.constant 0 : i32
    %c0_i32_1 = arith.constant 0 : i32
    %c0_i32_2 = arith.constant 0 : i32
    return %arg0, %c0_i32, %c0_i32_0, %c0_i32_1 : i32, i32, i32, i32
  }
}

module attributes {stable_mosaic.version = 11 : i64} {
  func.func @_conv3_kernel(%arg0: i32, %arg1: memref<1x10x8x384xbf16, #tpu.memory_space<vmem>>, %arg2: memref<3x384x128xbf16, #tpu.memory_space<vmem>>, %arg3: memref<1x128xf32, #tpu.memory_space<vmem>>, %arg4: memref<1x8x8x128xbf16, #tpu.memory_space<vmem>>) attributes {dimension_semantics = [#tpu.dimension_semantics<parallel>], iteration_bounds = array<i64: 2>, scalar_prefetch = 0 : i64, scratch_operands = 0 : i64, tpu.core_type = #tpu.core_type<tc>, window_params = [{transform_indices = @transform_0, window_bounds = array<i64: 1, 10, 8, 384>}, {pipeline_mode = #tpu.pipeline_mode<synchronous>, transform_indices = @transform_1, window_bounds = array<i64: 3, 384, 128>}, {pipeline_mode = #tpu.pipeline_mode<synchronous>, transform_indices = @transform_2, window_bounds = array<i64: 1, 128>}, {transform_indices = @transform_3, window_bounds = array<i64: 1, 8, 8, 128>}]} {
    %c0 = arith.constant 0 : index
    %c0_0 = arith.constant 0 : index
    %c0_1 = arith.constant 0 : index
    %c0_2 = arith.constant 0 : index
    %0 = vector.load %arg1[%c0, %c0_0, %c0_1, %c0_2] : memref<1x10x8x384xbf16, #tpu.memory_space<vmem>>, vector<1x8x8x384xbf16>
    %1 = vector.shape_cast %0 : vector<1x8x8x384xbf16> to vector<8x8x384xbf16>
    %2 = vector.shape_cast %1 : vector<8x8x384xbf16> to vector<64x384xbf16>
    %c0_3 = arith.constant 0 : index
    %c0_4 = arith.constant 0 : index
    %c0_5 = arith.constant 0 : index
    %3 = vector.load %arg2[%c0_3, %c0_4, %c0_5] : memref<3x384x128xbf16, #tpu.memory_space<vmem>>, vector<1x384x128xbf16>
    %4 = vector.shape_cast %3 : vector<1x384x128xbf16> to vector<384x128xbf16>
    %cst = arith.constant dense<0.000000e+00> : vector<64x128xf32>
    %5 = tpu.matmul %2, %4, %cst {dimension_numbers = #tpu.dot_dimension_numbers<[1], [0], [0], [1], [0, 0, 1, 1], [], []>} : vector<64x384xbf16>, vector<384x128xbf16>, vector<64x128xf32> -> vector<64x128xf32>
    %c0_6 = arith.constant 0 : index
    %c1 = arith.constant 1 : index
    %c0_7 = arith.constant 0 : index
    %c0_8 = arith.constant 0 : index
    %6 = vector.load %arg1[%c0_6, %c1, %c0_7, %c0_8] : memref<1x10x8x384xbf16, #tpu.memory_space<vmem>>, vector<1x8x8x384xbf16>
    %7 = vector.shape_cast %6 : vector<1x8x8x384xbf16> to vector<8x8x384xbf16>
    %8 = vector.shape_cast %7 : vector<8x8x384xbf16> to vector<64x384xbf16>
    %c1_9 = arith.constant 1 : index
    %c0_10 = arith.constant 0 : index
    %c0_11 = arith.constant 0 : index
    %9 = vector.load %arg2[%c1_9, %c0_10, %c0_11] : memref<3x384x128xbf16, #tpu.memory_space<vmem>>, vector<1x384x128xbf16>
    %10 = vector.shape_cast %9 : vector<1x384x128xbf16> to vector<384x128xbf16>
    %cst_12 = arith.constant dense<0.000000e+00> : vector<64x128xf32>
    %11 = tpu.matmul %8, %10, %cst_12 {dimension_numbers = #tpu.dot_dimension_numbers<[1], [0], [0], [1], [0, 0, 1, 1], [], []>} : vector<64x384xbf16>, vector<384x128xbf16>, vector<64x128xf32> -> vector<64x128xf32>
    %12 = arith.addf %5, %11 : vector<64x128xf32>
    %c0_13 = arith.constant 0 : index
    %c2 = arith.constant 2 : index
    %c0_14 = arith.constant 0 : index
    %c0_15 = arith.constant 0 : index
    %13 = vector.load %arg1[%c0_13, %c2, %c0_14, %c0_15] : memref<1x10x8x384xbf16, #tpu.memory_space<vmem>>, vector<1x8x8x384xbf16>
    %14 = vector.shape_cast %13 : vector<1x8x8x384xbf16> to vector<8x8x384xbf16>
    %15 = vector.shape_cast %14 : vector<8x8x384xbf16> to vector<64x384xbf16>
    %c2_16 = arith.constant 2 : index
    %c0_17 = arith.constant 0 : index
    %c0_18 = arith.constant 0 : index
    %16 = vector.load %arg2[%c2_16, %c0_17, %c0_18] : memref<3x384x128xbf16, #tpu.memory_space<vmem>>, vector<1x384x128xbf16>
    %17 = vector.shape_cast %16 : vector<1x384x128xbf16> to vector<384x128xbf16>
    %cst_19 = arith.constant dense<0.000000e+00> : vector<64x128xf32>
    %18 = tpu.matmul %15, %17, %cst_19 {dimension_numbers = #tpu.dot_dimension_numbers<[1], [0], [0], [1], [0, 0, 1, 1], [], []>} : vector<64x384xbf16>, vector<384x128xbf16>, vector<64x128xf32> -> vector<64x128xf32>
    %19 = arith.addf %12, %18 : vector<64x128xf32>
    %c0_20 = arith.constant 0 : index
    %c0_21 = arith.constant 0 : index
    %20 = vector.load %arg3[%c0_20, %c0_21] : memref<1x128xf32, #tpu.memory_space<vmem>>, vector<1x128xf32>
    %21 = vector.broadcast %20 : vector<1x128xf32> to vector<64x128xf32>
    %22 = arith.addf %19, %21 : vector<64x128xf32>
    %cst_22 = arith.constant 0.000000e+00 : f32
    %23 = vector.broadcast %cst_22 : f32 to vector<64x128xf32>
    %24 = arith.maximumf %22, %23 : vector<64x128xf32>
    %25 = vector.shape_cast %24 : vector<64x128xf32> to vector<1x8x8x128xf32>
    %26 = arith.truncf %25 : vector<1x8x8x128xf32> to vector<1x8x8x128xbf16>
    %c0_23 = arith.constant 0 : index
    %c0_24 = arith.constant 0 : index
    %c0_25 = arith.constant 0 : index
    %c0_26 = arith.constant 0 : index
    %27 = vector.load %arg4[%c0_23, %c0_24, %c0_25, %c0_26] : memref<1x8x8x128xbf16, #tpu.memory_space<vmem>>, vector<1x8x8x128xbf16>
    tpu.vector_store %arg4[%c0_23, %c0_24, %c0_25, %c0_26], %26 {strides = array<i32>} : memref<1x8x8x128xbf16, #tpu.memory_space<vmem>>, vector<1x8x8x128xbf16>,
    return
  }
  func.func @transform_0(%arg0: i32) -> (i32, i32, i32, i32) {
    %c0_i32 = arith.constant 0 : i32
    %c0_i32_0 = arith.constant 0 : i32
    %c0_i32_1 = arith.constant 0 : i32
    %c0_i32_2 = arith.constant 0 : i32
    return %arg0, %c0_i32, %c0_i32_0, %c0_i32_1 : i32, i32, i32, i32
  }
  func.func @transform_1(%arg0: i32) -> (i32, i32, i32) {
    %c0_i32 = arith.constant 0 : i32
    %c0_i32_0 = arith.constant 0 : i32
    %c0_i32_1 = arith.constant 0 : i32
    %c0_i32_2 = arith.constant 0 : i32
    return %c0_i32, %c0_i32_0, %c0_i32_1 : i32, i32, i32
  }
  func.func @transform_2(%arg0: i32) -> (i32, i32) {
    %c0_i32 = arith.constant 0 : i32
    %c0_i32_0 = arith.constant 0 : i32
    %c0_i32_1 = arith.constant 0 : i32
    return %c0_i32, %c0_i32_0 : i32, i32
  }
  func.func @transform_3(%arg0: i32) -> (i32, i32, i32, i32) {
    %c0_i32 = arith.constant 0 : i32
    %c0_i32_0 = arith.constant 0 : i32
    %c0_i32_1 = arith.constant 0 : i32
    %c0_i32_2 = arith.constant 0 : i32
    return %arg0, %c0_i32, %c0_i32_0, %c0_i32_1 : i32, i32, i32, i32
  }
}

module attributes {stable_mosaic.version = 11 : i64} {
  func.func @_conv3_res_kernel(%arg0: i32, %arg1: memref<1x10x8x384xbf16, #tpu.memory_space<vmem>>, %arg2: memref<3x384x128xbf16, #tpu.memory_space<vmem>>, %arg3: memref<1x128xf32, #tpu.memory_space<vmem>>, %arg4: memref<1x8x8x128xbf16, #tpu.memory_space<vmem>>, %arg5: memref<1x8x8x128xbf16, #tpu.memory_space<vmem>>) attributes {dimension_semantics = [#tpu.dimension_semantics<parallel>], iteration_bounds = array<i64: 2>, scalar_prefetch = 0 : i64, scratch_operands = 0 : i64, tpu.core_type = #tpu.core_type<tc>, window_params = [{transform_indices = @transform_0, window_bounds = array<i64: 1, 10, 8, 384>}, {pipeline_mode = #tpu.pipeline_mode<synchronous>, transform_indices = @transform_1, window_bounds = array<i64: 3, 384, 128>}, {pipeline_mode = #tpu.pipeline_mode<synchronous>, transform_indices = @transform_2, window_bounds = array<i64: 1, 128>}, {transform_indices = @transform_3, window_bounds = array<i64: 1, 8, 8, 128>}, {transform_indices = @transform_4, window_bounds = array<i64: 1, 8, 8, 128>}]} {
    %c0 = arith.constant 0 : index
    %c0_0 = arith.constant 0 : index
    %c0_1 = arith.constant 0 : index
    %c0_2 = arith.constant 0 : index
    %0 = vector.load %arg1[%c0, %c0_0, %c0_1, %c0_2] : memref<1x10x8x384xbf16, #tpu.memory_space<vmem>>, vector<1x8x8x384xbf16>
    %1 = vector.shape_cast %0 : vector<1x8x8x384xbf16> to vector<8x8x384xbf16>
    %2 = vector.shape_cast %1 : vector<8x8x384xbf16> to vector<64x384xbf16>
    %c0_3 = arith.constant 0 : index
    %c0_4 = arith.constant 0 : index
    %c0_5 = arith.constant 0 : index
    %3 = vector.load %arg2[%c0_3, %c0_4, %c0_5] : memref<3x384x128xbf16, #tpu.memory_space<vmem>>, vector<1x384x128xbf16>
    %4 = vector.shape_cast %3 : vector<1x384x128xbf16> to vector<384x128xbf16>
    %cst = arith.constant dense<0.000000e+00> : vector<64x128xf32>
    %5 = tpu.matmul %2, %4, %cst {dimension_numbers = #tpu.dot_dimension_numbers<[1], [0], [0], [1], [0, 0, 1, 1], [], []>} : vector<64x384xbf16>, vector<384x128xbf16>, vector<64x128xf32> -> vector<64x128xf32>
    %c0_6 = arith.constant 0 : index
    %c1 = arith.constant 1 : index
    %c0_7 = arith.constant 0 : index
    %c0_8 = arith.constant 0 : index
    %6 = vector.load %arg1[%c0_6, %c1, %c0_7, %c0_8] : memref<1x10x8x384xbf16, #tpu.memory_space<vmem>>, vector<1x8x8x384xbf16>
    %7 = vector.shape_cast %6 : vector<1x8x8x384xbf16> to vector<8x8x384xbf16>
    %8 = vector.shape_cast %7 : vector<8x8x384xbf16> to vector<64x384xbf16>
    %c1_9 = arith.constant 1 : index
    %c0_10 = arith.constant 0 : index
    %c0_11 = arith.constant 0 : index
    %9 = vector.load %arg2[%c1_9, %c0_10, %c0_11] : memref<3x384x128xbf16, #tpu.memory_space<vmem>>, vector<1x384x128xbf16>
    %10 = vector.shape_cast %9 : vector<1x384x128xbf16> to vector<384x128xbf16>
    %cst_12 = arith.constant dense<0.000000e+00> : vector<64x128xf32>
    %11 = tpu.matmul %8, %10, %cst_12 {dimension_numbers = #tpu.dot_dimension_numbers<[1], [0], [0], [1], [0, 0, 1, 1], [], []>} : vector<64x384xbf16>, vector<384x128xbf16>, vector<64x128xf32> -> vector<64x128xf32>
    %12 = arith.addf %5, %11 : vector<64x128xf32>
    %c0_13 = arith.constant 0 : index
    %c2 = arith.constant 2 : index
    %c0_14 = arith.constant 0 : index
    %c0_15 = arith.constant 0 : index
    %13 = vector.load %arg1[%c0_13, %c2, %c0_14, %c0_15] : memref<1x10x8x384xbf16, #tpu.memory_space<vmem>>, vector<1x8x8x384xbf16>
    %14 = vector.shape_cast %13 : vector<1x8x8x384xbf16> to vector<8x8x384xbf16>
    %15 = vector.shape_cast %14 : vector<8x8x384xbf16> to vector<64x384xbf16>
    %c2_16 = arith.constant 2 : index
    %c0_17 = arith.constant 0 : index
    %c0_18 = arith.constant 0 : index
    %16 = vector.load %arg2[%c2_16, %c0_17, %c0_18] : memref<3x384x128xbf16, #tpu.memory_space<vmem>>, vector<1x384x128xbf16>
    %17 = vector.shape_cast %16 : vector<1x384x128xbf16> to vector<384x128xbf16>
    %cst_19 = arith.constant dense<0.000000e+00> : vector<64x128xf32>
    %18 = tpu.matmul %15, %17, %cst_19 {dimension_numbers = #tpu.dot_dimension_numbers<[1], [0], [0], [1], [0, 0, 1, 1], [], []>} : vector<64x384xbf16>, vector<384x128xbf16>, vector<64x128xf32> -> vector<64x128xf32>
    %19 = arith.addf %12, %18 : vector<64x128xf32>
    %c0_20 = arith.constant 0 : index
    %c0_21 = arith.constant 0 : index
    %20 = vector.load %arg3[%c0_20, %c0_21] : memref<1x128xf32, #tpu.memory_space<vmem>>, vector<1x128xf32>
    %21 = vector.broadcast %20 : vector<1x128xf32> to vector<64x128xf32>
    %22 = arith.addf %19, %21 : vector<64x128xf32>
    %cst_22 = arith.constant 0.000000e+00 : f32
    %23 = vector.broadcast %cst_22 : f32 to vector<64x128xf32>
    %24 = arith.maximumf %22, %23 : vector<64x128xf32>
    %c0_23 = arith.constant 0 : index
    %c0_24 = arith.constant 0 : index
    %c0_25 = arith.constant 0 : index
    %c0_26 = arith.constant 0 : index
    %25 = vector.load %arg4[%c0_23, %c0_24, %c0_25, %c0_26] : memref<1x8x8x128xbf16, #tpu.memory_space<vmem>>, vector<1x8x8x128xbf16>
    %26 = vector.shape_cast %25 : vector<1x8x8x128xbf16> to vector<8x8x128xbf16>
    %27 = vector.shape_cast %26 : vector<8x8x128xbf16> to vector<64x128xbf16>
    %28 = arith.extf %27 : vector<64x128xbf16> to vector<64x128xf32>
    %29 = arith.addf %24, %28 : vector<64x128xf32>
    %30 = vector.shape_cast %29 : vector<64x128xf32> to vector<1x8x8x128xf32>
    %31 = arith.truncf %30 : vector<1x8x8x128xf32> to vector<1x8x8x128xbf16>
    %c0_27 = arith.constant 0 : index
    %c0_28 = arith.constant 0 : index
    %c0_29 = arith.constant 0 : index
    %c0_30 = arith.constant 0 : index
    %32 = vector.load %arg5[%c0_27, %c0_28, %c0_29, %c0_30] : memref<1x8x8x128xbf16, #tpu.memory_space<vmem>>, vector<1x8x8x128xbf16>
    tpu.vector_store %arg5[%c0_27, %c0_28, %c0_29, %c0_30], %31 {strides = array<i32>} : memref<1x8x8x128xbf16, #tpu.memory_space<vmem>>, vector<1x8x8x128xbf16>,
    return
  }
  func.func @transform_0(%arg0: i32) -> (i32, i32, i32, i32) {
    %c0_i32 = arith.constant 0 : i32
    %c0_i32_0 = arith.constant 0 : i32
    %c0_i32_1 = arith.constant 0 : i32
    %c0_i32_2 = arith.constant 0 : i32
    return %arg0, %c0_i32, %c0_i32_0, %c0_i32_1 : i32, i32, i32, i32
  }
  func.func @transform_1(%arg0: i32) -> (i32, i32, i32) {
    %c0_i32 = arith.constant 0 : i32
    %c0_i32_0 = arith.constant 0 : i32
    %c0_i32_1 = arith.constant 0 : i32
    %c0_i32_2 = arith.constant 0 : i32
    return %c0_i32, %c0_i32_0, %c0_i32_1 : i32, i32, i32
  }
  func.func @transform_2(%arg0: i32) -> (i32, i32) {
    %c0_i32 = arith.constant 0 : i32
    %c0_i32_0 = arith.constant 0 : i32
    %c0_i32_1 = arith.constant 0 : i32
    return %c0_i32, %c0_i32_0 : i32, i32
  }
  func.func @transform_3(%arg0: i32) -> (i32, i32, i32, i32) {
    %c0_i32 = arith.constant 0 : i32
    %c0_i32_0 = arith.constant 0 : i32
    %c0_i32_1 = arith.constant 0 : i32
    %c0_i32_2 = arith.constant 0 : i32
    return %arg0, %c0_i32, %c0_i32_0, %c0_i32_1 : i32, i32, i32, i32
  }
  func.func @transform_4(%arg0: i32) -> (i32, i32, i32, i32) {
    %c0_i32 = arith.constant 0 : i32
    %c0_i32_0 = arith.constant 0 : i32
    %c0_i32_1 = arith.constant 0 : i32
    %c0_i32_2 = arith.constant 0 : i32
    return %arg0, %c0_i32, %c0_i32_0, %c0_i32_1 : i32, i32, i32, i32
  }
}

module attributes {stable_mosaic.version = 11 : i64} {
  func.func @_mm_kernel(%arg0: i32, %arg1: i32, %arg2: memref<16x1152xbf16, #tpu.memory_space<vmem>>, %arg3: memref<1152x128xbf16, #tpu.memory_space<vmem>>, %arg4: memref<1x128xf32, #tpu.memory_space<vmem>>, %arg5: memref<16x128xbf16, #tpu.memory_space<vmem>>) attributes {dimension_semantics = [#tpu.dimension_semantics<parallel>, #tpu.dimension_semantics<parallel>], iteration_bounds = array<i64: 2, 1>, scalar_prefetch = 0 : i64, scratch_operands = 0 : i64, tpu.core_type = #tpu.core_type<tc>, window_params = [{transform_indices = @transform_0, window_bounds = array<i64: 16, 1152>}, {transform_indices = @transform_1, window_bounds = array<i64: 1152, 128>}, {transform_indices = @transform_2, window_bounds = array<i64: 1, 128>}, {transform_indices = @transform_3, window_bounds = array<i64: 16, 128>}]} {
    %c0 = arith.constant 0 : index
    %c0_0 = arith.constant 0 : index
    %0 = vector.load %arg2[%c0, %c0_0] : memref<16x1152xbf16, #tpu.memory_space<vmem>>, vector<16x1152xbf16>
    %c0_1 = arith.constant 0 : index
    %c0_2 = arith.constant 0 : index
    %1 = vector.load %arg3[%c0_1, %c0_2] : memref<1152x128xbf16, #tpu.memory_space<vmem>>, vector<1152x128xbf16>
    %cst = arith.constant dense<0.000000e+00> : vector<16x128xf32>
    %2 = tpu.matmul %0, %1, %cst {dimension_numbers = #tpu.dot_dimension_numbers<[1], [0], [0], [1], [0, 0, 1, 1], [], []>} : vector<16x1152xbf16>, vector<1152x128xbf16>, vector<16x128xf32> -> vector<16x128xf32>
    %c0_3 = arith.constant 0 : index
    %c0_4 = arith.constant 0 : index
    %3 = vector.load %arg4[%c0_3, %c0_4] : memref<1x128xf32, #tpu.memory_space<vmem>>, vector<1x128xf32>
    %4 = vector.broadcast %3 : vector<1x128xf32> to vector<16x128xf32>
    %5 = arith.addf %2, %4 : vector<16x128xf32>
    %cst_5 = arith.constant 0.000000e+00 : f32
    %6 = vector.broadcast %cst_5 : f32 to vector<16x128xf32>
    %7 = arith.maximumf %5, %6 : vector<16x128xf32>
    %8 = arith.truncf %7 : vector<16x128xf32> to vector<16x128xbf16>
    %c0_6 = arith.constant 0 : index
    %c0_7 = arith.constant 0 : index
    %9 = vector.load %arg5[%c0_6, %c0_7] : memref<16x128xbf16, #tpu.memory_space<vmem>>, vector<16x128xbf16>
    tpu.vector_store %arg5[%c0_6, %c0_7], %8 {strides = array<i32>} : memref<16x128xbf16, #tpu.memory_space<vmem>>, vector<16x128xbf16>,
    return
  }
  func.func @transform_0(%arg0: i32, %arg1: i32) -> (i32, i32) {
    %c0_i32 = arith.constant 0 : i32
    %c0_i32_0 = arith.constant 0 : i32
    return %arg0, %c0_i32 : i32, i32
  }
  func.func @transform_1(%arg0: i32, %arg1: i32) -> (i32, i32) {
    %c0_i32 = arith.constant 0 : i32
    %c0_i32_0 = arith.constant 0 : i32
    return %c0_i32, %arg1 : i32, i32
  }
  func.func @transform_2(%arg0: i32, %arg1: i32) -> (i32, i32) {
    %c0_i32 = arith.constant 0 : i32
    %c0_i32_0 = arith.constant 0 : i32
    return %c0_i32, %arg1 : i32, i32
  }
  func.func @transform_3(%arg0: i32, %arg1: i32) -> (i32, i32) {
    %c0_i32 = arith.constant 0 : i32
    return %arg0, %arg1 : i32, i32
  }
}

module attributes {stable_mosaic.version = 11 : i64} {
  func.func @_conv3_kernel(%arg0: i32, %arg1: memref<1x6x8x384xbf16, #tpu.memory_space<vmem>>, %arg2: memref<3x384x128xbf16, #tpu.memory_space<vmem>>, %arg3: memref<1x128xf32, #tpu.memory_space<vmem>>, %arg4: memref<1x4x8x128xbf16, #tpu.memory_space<vmem>>) attributes {dimension_semantics = [#tpu.dimension_semantics<parallel>], iteration_bounds = array<i64: 2>, scalar_prefetch = 0 : i64, scratch_operands = 0 : i64, tpu.core_type = #tpu.core_type<tc>, window_params = [{transform_indices = @transform_0, window_bounds = array<i64: 1, 6, 8, 384>}, {pipeline_mode = #tpu.pipeline_mode<synchronous>, transform_indices = @transform_1, window_bounds = array<i64: 3, 384, 128>}, {pipeline_mode = #tpu.pipeline_mode<synchronous>, transform_indices = @transform_2, window_bounds = array<i64: 1, 128>}, {transform_indices = @transform_3, window_bounds = array<i64: 1, 4, 8, 128>}]} {
    %c0 = arith.constant 0 : index
    %c0_0 = arith.constant 0 : index
    %c0_1 = arith.constant 0 : index
    %c0_2 = arith.constant 0 : index
    %0 = vector.load %arg1[%c0, %c0_0, %c0_1, %c0_2] : memref<1x6x8x384xbf16, #tpu.memory_space<vmem>>, vector<1x4x8x384xbf16>
    %1 = vector.shape_cast %0 : vector<1x4x8x384xbf16> to vector<4x8x384xbf16>
    %2 = vector.shape_cast %1 : vector<4x8x384xbf16> to vector<32x384xbf16>
    %c0_3 = arith.constant 0 : index
    %c0_4 = arith.constant 0 : index
    %c0_5 = arith.constant 0 : index
    %3 = vector.load %arg2[%c0_3, %c0_4, %c0_5] : memref<3x384x128xbf16, #tpu.memory_space<vmem>>, vector<1x384x128xbf16>
    %4 = vector.shape_cast %3 : vector<1x384x128xbf16> to vector<384x128xbf16>
    %cst = arith.constant dense<0.000000e+00> : vector<32x128xf32>
    %5 = tpu.matmul %2, %4, %cst {dimension_numbers = #tpu.dot_dimension_numbers<[1], [0], [0], [1], [0, 0, 1, 1], [], []>} : vector<32x384xbf16>, vector<384x128xbf16>, vector<32x128xf32> -> vector<32x128xf32>
    %c0_6 = arith.constant 0 : index
    %c1 = arith.constant 1 : index
    %c0_7 = arith.constant 0 : index
    %c0_8 = arith.constant 0 : index
    %6 = vector.load %arg1[%c0_6, %c1, %c0_7, %c0_8] : memref<1x6x8x384xbf16, #tpu.memory_space<vmem>>, vector<1x4x8x384xbf16>
    %7 = vector.shape_cast %6 : vector<1x4x8x384xbf16> to vector<4x8x384xbf16>
    %8 = vector.shape_cast %7 : vector<4x8x384xbf16> to vector<32x384xbf16>
    %c1_9 = arith.constant 1 : index
    %c0_10 = arith.constant 0 : index
    %c0_11 = arith.constant 0 : index
    %9 = vector.load %arg2[%c1_9, %c0_10, %c0_11] : memref<3x384x128xbf16, #tpu.memory_space<vmem>>, vector<1x384x128xbf16>
    %10 = vector.shape_cast %9 : vector<1x384x128xbf16> to vector<384x128xbf16>
    %cst_12 = arith.constant dense<0.000000e+00> : vector<32x128xf32>
    %11 = tpu.matmul %8, %10, %cst_12 {dimension_numbers = #tpu.dot_dimension_numbers<[1], [0], [0], [1], [0, 0, 1, 1], [], []>} : vector<32x384xbf16>, vector<384x128xbf16>, vector<32x128xf32> -> vector<32x128xf32>
    %12 = arith.addf %5, %11 : vector<32x128xf32>
    %c0_13 = arith.constant 0 : index
    %c2 = arith.constant 2 : index
    %c0_14 = arith.constant 0 : index
    %c0_15 = arith.constant 0 : index
    %13 = vector.load %arg1[%c0_13, %c2, %c0_14, %c0_15] : memref<1x6x8x384xbf16, #tpu.memory_space<vmem>>, vector<1x4x8x384xbf16>
    %14 = vector.shape_cast %13 : vector<1x4x8x384xbf16> to vector<4x8x384xbf16>
    %15 = vector.shape_cast %14 : vector<4x8x384xbf16> to vector<32x384xbf16>
    %c2_16 = arith.constant 2 : index
    %c0_17 = arith.constant 0 : index
    %c0_18 = arith.constant 0 : index
    %16 = vector.load %arg2[%c2_16, %c0_17, %c0_18] : memref<3x384x128xbf16, #tpu.memory_space<vmem>>, vector<1x384x128xbf16>
    %17 = vector.shape_cast %16 : vector<1x384x128xbf16> to vector<384x128xbf16>
    %cst_19 = arith.constant dense<0.000000e+00> : vector<32x128xf32>
    %18 = tpu.matmul %15, %17, %cst_19 {dimension_numbers = #tpu.dot_dimension_numbers<[1], [0], [0], [1], [0, 0, 1, 1], [], []>} : vector<32x384xbf16>, vector<384x128xbf16>, vector<32x128xf32> -> vector<32x128xf32>
    %19 = arith.addf %12, %18 : vector<32x128xf32>
    %c0_20 = arith.constant 0 : index
    %c0_21 = arith.constant 0 : index
    %20 = vector.load %arg3[%c0_20, %c0_21] : memref<1x128xf32, #tpu.memory_space<vmem>>, vector<1x128xf32>
    %21 = vector.broadcast %20 : vector<1x128xf32> to vector<32x128xf32>
    %22 = arith.addf %19, %21 : vector<32x128xf32>
    %cst_22 = arith.constant 0.000000e+00 : f32
    %23 = vector.broadcast %cst_22 : f32 to vector<32x128xf32>
    %24 = arith.maximumf %22, %23 : vector<32x128xf32>
    %25 = vector.shape_cast %24 : vector<32x128xf32> to vector<1x4x8x128xf32>
    %26 = arith.truncf %25 : vector<1x4x8x128xf32> to vector<1x4x8x128xbf16>
    %c0_23 = arith.constant 0 : index
    %c0_24 = arith.constant 0 : index
    %c0_25 = arith.constant 0 : index
    %c0_26 = arith.constant 0 : index
    %27 = vector.load %arg4[%c0_23, %c0_24, %c0_25, %c0_26] : memref<1x4x8x128xbf16, #tpu.memory_space<vmem>>, vector<1x4x8x128xbf16>
    tpu.vector_store %arg4[%c0_23, %c0_24, %c0_25, %c0_26], %26 {strides = array<i32>} : memref<1x4x8x128xbf16, #tpu.memory_space<vmem>>, vector<1x4x8x128xbf16>,
    return
  }
  func.func @transform_0(%arg0: i32) -> (i32, i32, i32, i32) {
    %c0_i32 = arith.constant 0 : i32
    %c0_i32_0 = arith.constant 0 : i32
    %c0_i32_1 = arith.constant 0 : i32
    %c0_i32_2 = arith.constant 0 : i32
    return %arg0, %c0_i32, %c0_i32_0, %c0_i32_1 : i32, i32, i32, i32
  }
  func.func @transform_1(%arg0: i32) -> (i32, i32, i32) {
    %c0_i32 = arith.constant 0 : i32
    %c0_i32_0 = arith.constant 0 : i32
    %c0_i32_1 = arith.constant 0 : i32
    %c0_i32_2 = arith.constant 0 : i32
    return %c0_i32, %c0_i32_0, %c0_i32_1 : i32, i32, i32
  }
  func.func @transform_2(%arg0: i32) -> (i32, i32) {
    %c0_i32 = arith.constant 0 : i32
    %c0_i32_0 = arith.constant 0 : i32
    %c0_i32_1 = arith.constant 0 : i32
    return %c0_i32, %c0_i32_0 : i32, i32
  }
  func.func @transform_3(%arg0: i32) -> (i32, i32, i32, i32) {
    %c0_i32 = arith.constant 0 : i32
    %c0_i32_0 = arith.constant 0 : i32
    %c0_i32_1 = arith.constant 0 : i32
    %c0_i32_2 = arith.constant 0 : i32
    return %arg0, %c0_i32, %c0_i32_0, %c0_i32_1 : i32, i32, i32, i32
  }
}

module attributes {stable_mosaic.version = 11 : i64} {
  func.func @_sumpool_kernel(%arg0: i32, %arg1: memref<2x16x128xbf16, #tpu.memory_space<vmem>>, %arg2: memref<2x128xf32, #tpu.memory_space<vmem>>) attributes {dimension_semantics = [#tpu.dimension_semantics<arbitrary>], iteration_bounds = array<i64: 1>, scalar_prefetch = 0 : i64, scratch_operands = 0 : i64, tpu.core_type = #tpu.core_type<tc>, window_params = [{pipeline_mode = #tpu.pipeline_mode<synchronous>, transform_indices = @transform_0, window_bounds = array<i64: 2, 16, 128>}, {pipeline_mode = #tpu.pipeline_mode<synchronous>, transform_indices = @transform_1, window_bounds = array<i64: 2, 128>}]} {
    %c0 = arith.constant 0 : index
    %c0_0 = arith.constant 0 : index
    %c0_1 = arith.constant 0 : index
    %0 = vector.load %arg1[%c0, %c0_0, %c0_1] : memref<2x16x128xbf16, #tpu.memory_space<vmem>>, vector<2x16x128xbf16>
    %1 = arith.extf %0 : vector<2x16x128xbf16> to vector<2x16x128xf32>
    %cst = arith.constant dense<0.000000e+00> : vector<2x128xf32>
    %2 = vector.multi_reduction <add>, %1, %cst [1] : vector<2x16x128xf32> to vector<2x128xf32>
    %c0_2 = arith.constant 0 : index
    %c0_3 = arith.constant 0 : index
    %3 = vector.load %arg2[%c0_2, %c0_3] : memref<2x128xf32, #tpu.memory_space<vmem>>, vector<2x128xf32>
    tpu.vector_store %arg2[%c0_2, %c0_3], %2 {strides = array<i32>} : memref<2x128xf32, #tpu.memory_space<vmem>>, vector<2x128xf32>,
    return
  }
  func.func @transform_0(%arg0: i32) -> (i32, i32, i32) {
    %c0_i32 = arith.constant 0 : i32
    %c0_i32_0 = arith.constant 0 : i32
    %c0_i32_1 = arith.constant 0 : i32
    %c0_i32_2 = arith.constant 0 : i32
    return %c0_i32, %c0_i32_0, %c0_i32_1 : i32, i32, i32
  }
  func.func @transform_1(%arg0: i32) -> (i32, i32) {
    %c0_i32 = arith.constant 0 : i32
    %c0_i32_0 = arith.constant 0 : i32
    %c0_i32_1 = arith.constant 0 : i32
    return %c0_i32, %c0_i32_0 : i32, i32
  }
}

module attributes {stable_mosaic.version = 11 : i64} {
  func.func @_mm_kernel(%arg0: i32, %arg1: i32, %arg2: memref<16x128xbf16, #tpu.memory_space<vmem>>, %arg3: memref<128x256xbf16, #tpu.memory_space<vmem>>, %arg4: memref<1x256xf32, #tpu.memory_space<vmem>>, %arg5: memref<16x256xf32, #tpu.memory_space<vmem>>) attributes {dimension_semantics = [#tpu.dimension_semantics<parallel>, #tpu.dimension_semantics<parallel>], iteration_bounds = array<i64: 1, 4>, scalar_prefetch = 0 : i64, scratch_operands = 0 : i64, tpu.core_type = #tpu.core_type<tc>, window_params = [{transform_indices = @transform_0, window_bounds = array<i64: 16, 128>}, {transform_indices = @transform_1, window_bounds = array<i64: 128, 256>}, {transform_indices = @transform_2, window_bounds = array<i64: 1, 256>}, {transform_indices = @transform_3, window_bounds = array<i64: 16, 256>}]} {
    %c0 = arith.constant 0 : index
    %c0_0 = arith.constant 0 : index
    %0 = vector.load %arg2[%c0, %c0_0] : memref<16x128xbf16, #tpu.memory_space<vmem>>, vector<16x128xbf16>
    %c0_1 = arith.constant 0 : index
    %c0_2 = arith.constant 0 : index
    %1 = vector.load %arg3[%c0_1, %c0_2] : memref<128x256xbf16, #tpu.memory_space<vmem>>, vector<128x256xbf16>
    %cst = arith.constant dense<0.000000e+00> : vector<16x256xf32>
    %2 = tpu.matmul %0, %1, %cst {dimension_numbers = #tpu.dot_dimension_numbers<[1], [0], [0], [1], [0, 0, 1, 1], [], []>} : vector<16x128xbf16>, vector<128x256xbf16>, vector<16x256xf32> -> vector<16x256xf32>
    %c0_3 = arith.constant 0 : index
    %c0_4 = arith.constant 0 : index
    %3 = vector.load %arg4[%c0_3, %c0_4] : memref<1x256xf32, #tpu.memory_space<vmem>>, vector<1x256xf32>
    %4 = vector.broadcast %3 : vector<1x256xf32> to vector<16x256xf32>
    %5 = arith.addf %2, %4 : vector<16x256xf32>
    %c0_5 = arith.constant 0 : index
    %c0_6 = arith.constant 0 : index
    %6 = vector.load %arg5[%c0_5, %c0_6] : memref<16x256xf32, #tpu.memory_space<vmem>>, vector<16x256xf32>
    tpu.vector_store %arg5[%c0_5, %c0_6], %5 {strides = array<i32>} : memref<16x256xf32, #tpu.memory_space<vmem>>, vector<16x256xf32>,
    return
  }
  func.func @transform_0(%arg0: i32, %arg1: i32) -> (i32, i32) {
    %c0_i32 = arith.constant 0 : i32
    %c0_i32_0 = arith.constant 0 : i32
    return %arg0, %c0_i32 : i32, i32
  }
  func.func @transform_1(%arg0: i32, %arg1: i32) -> (i32, i32) {
    %c0_i32 = arith.constant 0 : i32
    %c0_i32_0 = arith.constant 0 : i32
    return %c0_i32, %arg1 : i32, i32
  }
  func.func @transform_2(%arg0: i32, %arg1: i32) -> (i32, i32) {
    %c0_i32 = arith.constant 0 : i32
    %c0_i32_0 = arith.constant 0 : i32
    return %c0_i32, %arg1 : i32, i32
  }
  func.func @transform_3(%arg0: i32, %arg1: i32) -> (i32, i32) {
    %c0_i32 = arith.constant 0 : i32
    return %arg0, %arg1 : i32, i32
  }
}

</mosaic_0001>

<llo_original>
// kernel: resnet50_forward.8
$region0: #{resnet50_forward.8}
  #allocation0 [shape = 'u32[]', space=smem, size = 0x4, offset = 0x4, fixed_abs, tag = 'smem constant byte address 0x4 - core index']
  #allocation1 [shape = 'u32[144,128]{1,0:T(1,128)}', space=vmem, size = 0x12000, scoped, tag = 'internal scratch']
  %s0 = inlined_call_operand.vmem [shape: bf16[512,256], index: 0, kind: input, shape index: {}]
  %s1 = inlined_call_operand.vmem [shape: bf16[256,128], index: 1, kind: input, shape index: {}]
  %s2 = inlined_call_operand.vmem [shape: f32[1,128], index: 2, kind: input, shape index: {}]
  %s3 = inlined_call_operand.vmem [shape: bf16[512,128], index: 3, kind: output, shape index: {}]
  %s4 = sld [smem:[#allocation0]]
  $region45: #{resnet50_forward.8} parent=0
    _
  %s6 = ssub.s32 1, %s4
  %s7 = scalar_select 0, %s6, %s4
  loop: start=0, step=1, limit=4
  $region2: #{resnet50_forward.8} parent=0 // loop_pre_header
    _
  $region3: #{resnet50_forward.8} parent=0 // loop_header
    %s9 = sphi 0, %s13
    %p10 = scmp.ge.s32.totalorder %s9, 4
    %s16 = sphi 0, %s28
    %s17 = sphi 0, %s24
    %s18 = sphi 0, %s16
    %s19 = sphi 0, %s17
    %s20 = sphi 0, %s18
    %s21 = sphi 0, %s19
    %s31 = sphi 0, %s33
    %s34 = sphi 0, %s31
    %s35 = sphi 0, %s34
    %s51 = sphi 0, %s35
    %s57 = sphi 0, %s59
    %s60 = sphi 0, %s57
    %s61 = sphi 0, %s60
    %s77 = sphi 0, %s61
    %s83 = sphi 0, %s85
    %s86 = sphi 0, %s83
    %s87 = sphi 0, %s86
    %s103 = sphi 0, %s87
    %s111 = sphi 0, %s113
    %s114 = sphi 0, %s111
    %s115 = sphi 0, %s114
    %s131 = sphi 0, %s115
  $region4: #{resnet50_forward.8} parent=0 // loop_header_branch
    %12 = sbr.rel (%p10) target = $region8
  $region5: #{resnet50_forward.8} parent=0 // loop_body
    %s14 = ssub.s32 %s9, 1
    %s15 = ssub.s32 %s9, 2
    %s22 = sadd.s32 1, %s17
    %p23 = scmp.ge.s32.totalorder %s22, 1
    %s24 = scalar_select %p23, 0, %s22
    %s25 = sadd.s32 1, %s16
    %s26 = scalar_select %p23, %s25, %s16
    %p27 = scmp.ge.s32.totalorder %s26, 2
    %s28 = scalar_select %p27, 0, %s26
    %s29 = ssub.s32 %s16, %s28
    %p30 = scmp.eq.s32.totalorder %s29, 0
    %s32 = sadd.s32 %s31, 1
    %s33 = scalar_select %p30, %s31, %s32
    %p36 = pneg %p30
    %p37 = scmp.eq.s32.totalorder %s9, 1
    %p38 = por %p36, %p37
    %p39 = scmp.ne.s32.totalorder %s31, %s34
    %p40 = scmp.eq.s32.totalorder %s9, 0
    %p41 = por %p39, %p40
    %p42 = scmp.ne.s32.totalorder %s31, %s34
    %p43 = scmp.eq.s32.totalorder %s14, 1
    %p44 = por %p42, %p43
    %p45 = scmp.ne.s32.totalorder %s34, %s35
    %p46 = scmp.eq.s32.totalorder %s14, 0
    %p47 = por %p45, %p46
    %p48 = scmp.ne.s32.totalorder %s34, %s35
    %p49 = scmp.eq.s32.totalorder %s15, 1
    %p50 = por %p48, %p49
    %p52 = scmp.ne.s32.totalorder %s35, %s51
    %p53 = scmp.eq.s32.totalorder %s15, 0
    %p54 = por %p52, %p53
    %s55 = ssub.s32 %s17, %s24
    %p56 = scmp.eq.s32.totalorder %s55, 0
    %s58 = sadd.s32 %s57, 1
    %s59 = scalar_select %p56, %s57, %s58
    %p62 = pneg %p56
    %p63 = scmp.eq.s32.totalorder %s9, 1
    %p64 = por %p62, %p63
    %p65 = scmp.ne.s32.totalorder %s57, %s60
    %p66 = scmp.eq.s32.totalorder %s9, 0
    %p67 = por %p65, %p66
    %p68 = scmp.ne.s32.totalorder %s57, %s60
    %p69 = scmp.eq.s32.totalorder %s14, 1
    %p70 = por %p68, %p69
    %p71 = scmp.ne.s32.totalorder %s60, %s61
    %p72 = scmp.eq.s32.totalorder %s14, 0
    %p73 = por %p71, %p72
    %p74 = scmp.ne.s32.totalorder %s60, %s61
    %p75 = scmp.eq.s32.totalorder %s15, 1
    %p76 = por %p74, %p75
    %p78 = scmp.ne.s32.totalorder %s61, %s77
    %p79 = scmp.eq.s32.totalorder %s15, 0
    %p80 = por %p78, %p79
    %s81 = ssub.s32 %s17, %s24
    %p82 = scmp.eq.s32.totalorder %s81, 0
    %s84 = sadd.s32 %s83, 1
    %s85 = scalar_select %p82, %s83, %s84
    %p88 = pneg %p82
    %p89 = scmp.eq.s32.totalorder %s9, 1
    %p90 = por %p88, %p89
    %p91 = scmp.ne.s32.totalorder %s83, %s86
    %p92 = scmp.eq.s32.totalorder %s9, 0
    %p93 = por %p91, %p92
    %p94 = scmp.ne.s32.totalorder %s83, %s86
    %p95 = scmp.eq.s32.totalorder %s14, 1
    %p96 = por %p94, %p95
    %p97 = scmp.ne.s32.totalorder %s86, %s87
    %p98 = scmp.eq.s32.totalorder %s14, 0
    %p99 = por %p97, %p98
    %p100 = scmp.ne.s32.totalorder %s86, %s87
    %p101 = scmp.eq.s32.totalorder %s15, 1
    %p102 = por %p100, %p101
    %p104 = scmp.ne.s32.totalorder %s87, %s103
    %p105 = scmp.eq.s32.totalorder %s15, 0
    %p106 = por %p104, %p105
    %s107 = ssub.s32 %s16, %s28
    %s108 = ssub.s32 %s17, %s24
    %s109 = sor.u32 %s107, %s108
    %p110 = scmp.eq.s32.totalorder %s109, 0
    %s112 = sadd.s32 %s111, 1
    %s113 = scalar_select %p110, %s111, %s112
    %p116 = pneg %p110
    %p117 = scmp.eq.s32.totalorder %s9, 1
    %p118 = por %p116, %p117
    %p119 = scmp.ne.s32.totalorder %s111, %s114
    %p120 = scmp.eq.s32.totalorder %s9, 0
    %p121 = por %p119, %p120
    %p122 = scmp.ne.s32.totalorder %s111, %s114
    %p123 = scmp.eq.s32.totalorder %s14, 1
    %p124 = por %p122, %p123
    %p125 = scmp.ne.s32.totalorder %s114, %s115
    %p126 = scmp.eq.s32.totalorder %s14, 0
    %p127 = por %p125, %p126
    %p128 = scmp.ne.s32.totalorder %s114, %s115
    %p129 = scmp.eq.s32.totalorder %s15, 1
    %p130 = por %p128, %p129
    %p132 = scmp.ne.s32.totalorder %s115, %s131
    %p133 = scmp.eq.s32.totalorder %s15, 0
    %p134 = por %p132, %p133
    %p135 = scmp.le.s32.totalorder 1, %s9
    %p136 = scmp.lt.s32.totalorder %s9, 3
    %p137 = pnand %p135, %p136
    %p138 = pneg %p137
    // Predicated region
    $region9: #{resnet50_forward.8} parent=5 // pred_check
      _
    $region10: #{resnet50_forward.8} parent=5 // pred_check_branch
      %140 = sbr.rel (%p137) target = $region12
    $region11: #{resnet50_forward.8} parent=5 // pred_region
      %s141 = ssub.s32 %s9, 1
      // Predicated region
      $region13: #{resnet50_forward.8} parent=11 // pred_check
        %p142 = pneg %p73
      $region14: #{resnet50_forward.8} parent=11 // pred_check_branch
        %144 = sbr.rel (%p142) target = $region16
      $region15: #{resnet50_forward.8} parent=11 // pred_region
        %p145 = scmp.lt.s32.totalorder %s19, 0
        %s146 = scalar_select %p145, %s19, 0
        %s147 = smul.addr %s146, 4
        %s148 = scalar_lea.vmem %s1, %s147
      $region16: #{resnet50_forward.8} parent=11 // pred_fallthru
        _
      // Predicated region
      $region17: #{resnet50_forward.8} parent=11 // pred_check
        %p149 = pneg %p99
      $region18: #{resnet50_forward.8} parent=11 // pred_check_branch
        %151 = sbr.rel (%p149) target = $region20
      $region19: #{resnet50_forward.8} parent=11 // pred_region
        %p152 = scmp.lt.s32.totalorder %s19, 0
        %s153 = scalar_select %p152, %s19, 0
        %s154 = scalar_lea.vmem %s2, %s153
      $region20: #{resnet50_forward.8} parent=11 // pred_fallthru
        _
    $region12: #{resnet50_forward.8} parent=5 // pred_fallthru
      _
    %p155 = scmp.lt.s32.totalorder %s9, 2
    // Predicated region
    $region21: #{resnet50_forward.8} parent=5 // pred_check
      %p156 = pneg %p155
    $region22: #{resnet50_forward.8} parent=5 // pred_check_branch
      %158 = sbr.rel (%p156) target = $region24
    $region23: #{resnet50_forward.8} parent=5 // pred_region
      // Predicated region
      $region25: #{resnet50_forward.8} parent=23 // pred_check
        %p159 = pneg %p41
      $region26: #{resnet50_forward.8} parent=23 // pred_check_branch
        %161 = sbr.rel (%p159) target = $region28
      $region27: #{resnet50_forward.8} parent=23 // pred_region
        %s162 = smul.u32 32, %s16
        %p163 = scmp.lt.s32.totalorder %s162, 63
        %s164 = scalar_select %p163, %s162, 63
        %s165 = smul.addr %s164, 2
        %s166 = smul.addr %s165, 4
        %s167 = scalar_lea.vmem %s0, %s166
        %s168 = smul.u32 32, %s16
      $region28: #{resnet50_forward.8} parent=23 // pred_fallthru
        _
    $region24: #{resnet50_forward.8} parent=5 // pred_fallthru
      _
    %p169 = scmp.le.s32.totalorder 1, %s9
    %p170 = scmp.lt.s32.totalorder %s9, 3
    %p171 = pnand %p169, %p170
    %p172 = pneg %p171
    // Predicated region
    $region29: #{resnet50_forward.8} parent=5 // pred_check
      _
    $region30: #{resnet50_forward.8} parent=5 // pred_check_branch
      %174 = sbr.rel (%p171) target = $region32
    $region31: #{resnet50_forward.8} parent=5 // pred_region
      %s175 = ssub.s32 %s9, 1
      %s176 = smul.u32 32, %s18
      %p177 = scmp.lt.s32.totalorder %s176, 63
      %s178 = scalar_select %p177, %s176, 63
      %s179 = smul.addr %s178, 2
      %s180 = smul.addr %s179, 4
      %s181 = scalar_lea.vmem %s0, %s180
      %p182 = pneg %p47
      %p183 = pneg %p44
      %p184 = scmp.lt.s32.totalorder %s19, 0
      %s185 = scalar_select %p184, %s19, 0
      %s186 = smul.addr %s185, 4
      %s187 = scalar_lea.vmem %s1, %s186
      %p188 = pneg %p73
      %p189 = pneg %p70
      %p190 = scmp.lt.s32.totalorder %s19, 0
      %s191 = scalar_select %p190, %s19, 0
      %s192 = scalar_lea.vmem %s2, %s191
      %p193 = pneg %p99
      %p194 = pneg %p96
      %p195 = pneg %p127
      %p196 = pneg %p124
      %s197 = smul.u32 32, %s18
      %p198 = scmp.lt.s32.totalorder %s197, 63
      %s199 = scalar_select %p198, %s197, 63
      %p200 = scmp.lt.s32.totalorder %s19, 0
      %s201 = scalar_select %p200, %s19, 0
      %s202 = sadd.s32 %s201, %s199
      %s203 = smul.addr %s202, 4
      %s204 = scalar_lea.vmem %s3, %s203
      %s205 = smul.u32 32, %s18
      %p206 = scmp.lt.s32.totalorder %s205, 63
      %s207 = scalar_select %p206, %s205, 63
      %s208 = smul.addr %s207, 2
      %s209 = smul.addr %s208, 4
      %s210 = scalar_lea.vmem %s0, %s209
      %s211 = smul.u32 32, %s18
      %p212 = scmp.lt.s32.totalorder %s19, 0
      %s213 = scalar_select %p212, %s19, 0
      %s214 = smul.addr %s213, 4
      %s215 = scalar_lea.vmem %s1, %s214
      %p216 = scmp.lt.s32.totalorder %s19, 0
      %s217 = scalar_select %p216, %s19, 0
      %s218 = scalar_lea.vmem %s2, %s217
      %s219 = smul.u32 32, %s18
      %p220 = scmp.lt.s32.totalorder %s219, 63
      %s221 = scalar_select %p220, %s219, 63
      %p222 = scmp.lt.s32.totalorder %s19, 0
      %s223 = scalar_select %p222, %s19, 0
      %s224 = sadd.s32 %s223, %s221
      %s225 = smul.addr %s224, 4
      %s226 = scalar_lea.vmem %s3, %s225
      %s227 = smul.u32 32, %s18
      %v229 = vld [vmem:[%s210] sm:$0xff]
      %v230 = vld [vmem:[%s210 + $0x8] sm:$0xff]
      %v231 = vld [vmem:[%s210 + $0x10] sm:$0xff]
      %v232 = vld [vmem:[%s210 + $0x18] sm:$0xff]
      %v233 = vld [vmem:[%s210 + $0x20] sm:$0xff]
      %v234 = vld [vmem:[%s210 + $0x28] sm:$0xff]
      %v235 = vld [vmem:[%s210 + $0x30] sm:$0xff]
      %v236 = vld [vmem:[%s210 + $0x38] sm:$0xff]
      %v237 = vld [vmem:[%s210 + $0x40] sm:$0xff]
      %v238 = vld [vmem:[%s210 + $0x48] sm:$0xff]
      %v239 = vld [vmem:[%s210 + $0x50] sm:$0xff]
      %v240 = vld [vmem:[%s210 + $0x58] sm:$0xff]
      %v241 = vld [vmem:[%s210 + $0x60] sm:$0xff]
      %v242 = vld [vmem:[%s210 + $0x68] sm:$0xff]
      %v243 = vld [vmem:[%s210 + $0x70] sm:$0xff]
      %v244 = vld [vmem:[%s210 + $0x78] sm:$0xff]
      %v245 = vld [vmem:[%s210 + $0x80] sm:$0xff]
      %v246 = vld [vmem:[%s210 + $0x88] sm:$0xff]
      %v247 = vld [vmem:[%s210 + $0x90] sm:$0xff]
      %v248 = vld [vmem:[%s210 + $0x98] sm:$0xff]
      %v249 = vld [vmem:[%s210 + $0xa0] sm:$0xff]
      %v250 = vld [vmem:[%s210 + $0xa8] sm:$0xff]
      %v251 = vld [vmem:[%s210 + $0xb0] sm:$0xff]
      %v252 = vld [vmem:[%s210 + $0xb8] sm:$0xff]
      %v253 = vld [vmem:[%s210 + $0xc0] sm:$0xff]
      %v254 = vld [vmem:[%s210 + $0xc8] sm:$0xff]
      %v255 = vld [vmem:[%s210 + $0xd0] sm:$0xff]
      %v256 = vld [vmem:[%s210 + $0xd8] sm:$0xff]
      %v257 = vld [vmem:[%s210 + $0xe0] sm:$0xff]
      %v258 = vld [vmem:[%s210 + $0xe8] sm:$0xff]
      %v259 = vld [vmem:[%s210 + $0xf0] sm:$0xff]
      %v260 = vld [vmem:[%s210 + $0xf8] sm:$0xff]
      %v261 = vld [vmem:[%s215] sm:$0xf]
      %v262 = vld [vmem:[%s215 + $0x4] sm:$0xf]
      %v263 = vld [vmem:[%s215 + $0x8] sm:$0xf]
      %v264 = vld [vmem:[%s215 + $0xc] sm:$0xf]
      %v265 = vld [vmem:[%s215 + $0x10] sm:$0xf]
      %v266 = vld [vmem:[%s215 + $0x14] sm:$0xf]
      %v267 = vld [vmem:[%s215 + $0x18] sm:$0xf]
      %v268 = vld [vmem:[%s215 + $0x1c] sm:$0xf]
      %v269 = vld [vmem:[%s215 + $0x20] sm:$0xf]
      %v270 = vld [vmem:[%s215 + $0x24] sm:$0xf]
      %v271 = vld [vmem:[%s215 + $0x28] sm:$0xf]
      %v272 = vld [vmem:[%s215 + $0x2c] sm:$0xf]
      %v273 = vld [vmem:[%s215 + $0x30] sm:$0xf]
      %v274 = vld [vmem:[%s215 + $0x34] sm:$0xf]
      %v275 = vld [vmem:[%s215 + $0x38] sm:$0xf]
      %v276 = vld [vmem:[%s215 + $0x3c] sm:$0xf]
      %v277 = vld [vmem:[%s215 + $0x40] sm:$0xf]
      %v278 = vld [vmem:[%s215 + $0x44] sm:$0xf]
      %v279 = vld [vmem:[%s215 + $0x48] sm:$0xf]
      %v280 = vld [vmem:[%s215 + $0x4c] sm:$0xf]
      %v281 = vld [vmem:[%s215 + $0x50] sm:$0xf]
      %v282 = vld [vmem:[%s215 + $0x54] sm:$0xf]
      %v283 = vld [vmem:[%s215 + $0x58] sm:$0xf]
      %v284 = vld [vmem:[%s215 + $0x5c] sm:$0xf]
      %v285 = vld [vmem:[%s215 + $0x60] sm:$0xf]
      %v286 = vld [vmem:[%s215 + $0x64] sm:$0xf]
      %v287 = vld [vmem:[%s215 + $0x68] sm:$0xf]
      %v288 = vld [vmem:[%s215 + $0x6c] sm:$0xf]
      %v289 = vld [vmem:[%s215 + $0x70] sm:$0xf]
      %v290 = vld [vmem:[%s215 + $0x74] sm:$0xf]
      %v291 = vld [vmem:[%s215 + $0x78] sm:$0xf]
      %v292 = vld [vmem:[%s215 + $0x7c] sm:$0xf]
      %v293 = vld [vmem:[%s218] sm:$0x1]
      %v295 = vlaneseq
      %v296 = vshrl.u32 %v295, 7
      %v297 = vsub.s32 0, %v296
      %v298 = vrot.slane %v293, %v297
      %v332 = vunpack.c.l.b16 %v229
      %v333 = vunpack.c.h.b16 %v229
      %v334 = vunpack.c.l.b16 %v230
      %v335 = vunpack.c.h.b16 %v230
      %v336 = vunpack.c.l.b16 %v231
      %v337 = vunpack.c.h.b16 %v231
      %v338 = vunpack.c.l.b16 %v232
      %v339 = vunpack.c.h.b16 %v232
      %v340 = vunpack.c.l.b16 %v233
      %v341 = vunpack.c.h.b16 %v233
      %v342 = vunpack.c.l.b16 %v234
      %v343 = vunpack.c.h.b16 %v234
      %v344 = vunpack.c.l.b16 %v235
      %v345 = vunpack.c.h.b16 %v235
      %v346 = vunpack.c.l.b16 %v236
      %v347 = vunpack.c.h.b16 %v236
      %v348 = vunpack.c.l.b16 %v237
      %v349 = vunpack.c.h.b16 %v237
      %v350 = vunpack.c.l.b16 %v238
      %v351 = vunpack.c.h.b16 %v238
      %v352 = vunpack.c.l.b16 %v239
      %v353 = vunpack.c.h.b16 %v239
      %v354 = vunpack.c.l.b16 %v240
      %v355 = vunpack.c.h.b16 %v240
      %v356 = vunpack.c.l.b16 %v241
      %v357 = vunpack.c.h.b16 %v241
      %v358 = vunpack.c.l.b16 %v242
      %v359 = vunpack.c.h.b16 %v242
      %v360 = vunpack.c.l.b16 %v243
      %v361 = vunpack.c.h.b16 %v243
      %v362 = vunpack.c.l.b16 %v244
      %v363 = vunpack.c.h.b16 %v244
      %v364 = vunpack.c.l.b16 %v245
      %v365 = vunpack.c.h.b16 %v245
      %v366 = vunpack.c.l.b16 %v246
      %v367 = vunpack.c.h.b16 %v246
      %v368 = vunpack.c.l.b16 %v247
      %v369 = vunpack.c.h.b16 %v247
      %v370 = vunpack.c.l.b16 %v248
      %v371 = vunpack.c.h.b16 %v248
      %v372 = vunpack.c.l.b16 %v249
      %v373 = vunpack.c.h.b16 %v249
      %v374 = vunpack.c.l.b16 %v250
      %v375 = vunpack.c.h.b16 %v250
      %v376 = vunpack.c.l.b16 %v251
      %v377 = vunpack.c.h.b16 %v251
      %v378 = vunpack.c.l.b16 %v252
      %v379 = vunpack.c.h.b16 %v252
      %v380 = vunpack.c.l.b16 %v253
      %v381 = vunpack.c.h.b16 %v253
      %v382 = vunpack.c.l.b16 %v254
      %v383 = vunpack.c.h.b16 %v254
      %v384 = vunpack.c.l.b16 %v255
      %v385 = vunpack.c.h.b16 %v255
      %v386 = vunpack.c.l.b16 %v256
      %v387 = vunpack.c.h.b16 %v256
      %v388 = vunpack.c.l.b16 %v257
      %v389 = vunpack.c.h.b16 %v257
      %v390 = vunpack.c.l.b16 %v258
      %v391 = vunpack.c.h.b16 %v258
      %v392 = vunpack.c.l.b16 %v259
      %v393 = vunpack.c.h.b16 %v259
      %v394 = vunpack.c.l.b16 %v260
      %v395 = vunpack.c.h.b16 %v260
      %v396 = vpack.c.b16 %v334, %v332
      %v397 = vpack.c.b16 %v335, %v333
      %v398 = vpack.c.b16 %v338, %v336
      %v399 = vpack.c.b16 %v339, %v337
      %v400 = vpack.c.b16 %v342, %v340
      %v401 = vpack.c.b16 %v343, %v341
      %v402 = vpack.c.b16 %v346, %v344
      %v403 = vpack.c.b16 %v347, %v345
      %v404 = vpack.c.b16 %v350, %v348
      %v405 = vpack.c.b16 %v351, %v349
      %v406 = vpack.c.b16 %v354, %v352
      %v407 = vpack.c.b16 %v355, %v353
      %v408 = vpack.c.b16 %v358, %v356
      %v409 = vpack.c.b16 %v359, %v357
      %v410 = vpack.c.b16 %v362, %v360
      %v411 = vpack.c.b16 %v363, %v361
      %v412 = vpack.c.b16 %v366, %v364
      %v413 = vpack.c.b16 %v367, %v365
      %v414 = vpack.c.b16 %v370, %v368
      %v415 = vpack.c.b16 %v371, %v369
      %v416 = vpack.c.b16 %v374, %v372
      %v417 = vpack.c.b16 %v375, %v373
      %v418 = vpack.c.b16 %v378, %v376
      %v419 = vpack.c.b16 %v379, %v377
      %v420 = vpack.c.b16 %v382, %v380
      %v421 = vpack.c.b16 %v383, %v381
      %v422 = vpack.c.b16 %v386, %v384
      %v423 = vpack.c.b16 %v387, %v385
      %v424 = vpack.c.b16 %v390, %v388
      %v425 = vpack.c.b16 %v391, %v389
      %v426 = vpack.c.b16 %v394, %v392
      %v427 = vpack.c.b16 %v395, %v393
      %v492 = vunpack.c.l.b16 %v261
      %v493 = vunpack.c.l.b16 %v262
      %v494 = vunpack.c.l.b16 %v263
      %v495 = vunpack.c.l.b16 %v264
      %v496 = vunpack.c.l.b16 %v265
      %v497 = vunpack.c.l.b16 %v266
      %v498 = vunpack.c.l.b16 %v267
      %v499 = vunpack.c.l.b16 %v268
      %v500 = vunpack.c.l.b16 %v269
      %v501 = vunpack.c.l.b16 %v270
      %v502 = vunpack.c.l.b16 %v271
      %v503 = vunpack.c.l.b16 %v272
      %v504 = vunpack.c.l.b16 %v273
      %v505 = vunpack.c.l.b16 %v274
      %v506 = vunpack.c.l.b16 %v275
      %v507 = vunpack.c.l.b16 %v276
      %v508 = vunpack.c.l.b16 %v277
      %v509 = vunpack.c.l.b16 %v278
      %v510 = vunpack.c.l.b16 %v279
      %v511 = vunpack.c.l.b16 %v280
      %v512 = vunpack.c.l.b16 %v281
      %v513 = vunpack.c.l.b16 %v282
      %v514 = vunpack.c.l.b16 %v283
      %v515 = vunpack.c.l.b16 %v284
      %v516 = vunpack.c.l.b16 %v285
      %v517 = vunpack.c.l.b16 %v286
      %v518 = vunpack.c.l.b16 %v287
      %v519 = vunpack.c.l.b16 %v288
      %v520 = vunpack.c.l.b16 %v289
      %v521 = vunpack.c.l.b16 %v290
      %v522 = vunpack.c.l.b16 %v291
      %v523 = vunpack.c.l.b16 %v292
      %v524 = vpack.c.b16 %v493, %v492
      %v525 = vpack.c.b16 %v495, %v494
      %v526 = vpack.c.b16 %v497, %v496
      %v527 = vpack.c.b16 %v499, %v498
      %v528 = vpack.c.b16 %v501, %v500
      %v529 = vpack.c.b16 %v503, %v502
      %v530 = vpack.c.b16 %v505, %v504
      %v531 = vpack.c.b16 %v507, %v506
      %v532 = vpack.c.b16 %v509, %v508
      %v533 = vpack.c.b16 %v511, %v510
      %v534 = vpack.c.b16 %v513, %v512
      %v535 = vpack.c.b16 %v515, %v514
      %v536 = vpack.c.b16 %v517, %v516
      %v537 = vpack.c.b16 %v519, %v518
      %v538 = vpack.c.b16 %v521, %v520
      %v539 = vpack.c.b16 %v523, %v522
      %556 = vmatprep.subr.bf16.mxu0 0
      %557 = vmatpush1.bf16.msra.mxu0 %v524
      %558 = vmatprep.subr.bf16.mxu0 0
      %559 = vmatpush1.bf16.msra.mxu0 %v525
      %560 = vmatprep.subr.bf16.mxu0 0
      %561 = vmatpush1.bf16.msra.mxu0 %v526
      %562 = vmatprep.subr.bf16.mxu0 0
      %563 = vmatpush1.bf16.msra.mxu0 %v527
      %564 = vmatprep.subr.bf16.mxu0 0
      %565 = vmatpush1.bf16.msra.mxu0 %v528
      %566 = vmatprep.subr.bf16.mxu0 0
      %567 = vmatpush1.bf16.msra.mxu0 %v529
      %568 = vmatprep.subr.bf16.mxu0 0
      %569 = vmatpush1.bf16.msra.mxu0 %v530
      %570 = vmatprep.subr.bf16.mxu0 0
      %571 = vmatpush1.bf16.msra.mxu0 %v531
      %572 = vmatprep.subr.bf16.mxu0 0
      %573 = vmatpush1.bf16.msra.mxu0 %v532
      %574 = vmatprep.subr.bf16.mxu0 0
      %575 = vmatpush1.bf16.msra.mxu0 %v533
      %576 = vmatprep.subr.bf16.mxu0 0
      %577 = vmatpush1.bf16.msra.mxu0 %v534
      %578 = vmatprep.subr.bf16.mxu0 0
      %579 = vmatpush1.bf16.msra.mxu0 %v535
      %580 = vmatprep.subr.bf16.mxu0 0
      %581 = vmatpush1.bf16.msra.mxu0 %v536
      %582 = vmatprep.subr.bf16.mxu0 0
      %583 = vmatpush1.bf16.msra.mxu0 %v537
      %584 = vmatprep.subr.bf16.mxu0 0
      %585 = vmatpush1.bf16.msra.mxu0 %v538
      %586 = vmatprep.subr.bf16.mxu0 0
      %587 = vmatpush1.bf16.msra.mxu0 %v539
      %588 = vmatprep.mubr.bf16.mxu0 %v397
      %589 = vmatmul.mubr.bf16.gmra.mrb[0].mxu0 %v396
      %v590 = vpop.f32.mrb[0].mxu0
      %v591 = vadd.f32 %v298, %v590
      %v592 = vpop.f32.mrb[0].mxu0
      %v593 = vpop.f32.mrb[0].mxu0
      %v594 = vadd.f32 %v298, %v593
      %v595 = vpop.f32.mrb[0].mxu0
      %596 = vmatprep.mubr.bf16.mxu0 %v399
      %597 = vmatmul.mubr.bf16.gmra.mrb[0].mxu0 %v398
      %v598 = vpop.f32.mrb[0].mxu0
      %v599 = vadd.f32 %v298, %v598
      %v600 = vpop.f32.mrb[0].mxu0
      %v601 = vpop.f32.mrb[0].mxu0
      %v602 = vadd.f32 %v298, %v601
      %v603 = vpop.f32.mrb[0].mxu0
      %604 = vmatprep.mubr.bf16.mxu0 %v401
      %605 = vmatmul.mubr.bf16.gmra.mrb[0].mxu0 %v400
      %v606 = vpop.f32.mrb[0].mxu0
      %v607 = vadd.f32 %v298, %v606
      %v608 = vpop.f32.mrb[0].mxu0
      %v609 = vpop.f32.mrb[0].mxu0
      %v610 = vadd.f32 %v298, %v609
      %v611 = vpop.f32.mrb[0].mxu0
      %612 = vmatprep.mubr.bf16.mxu0 %v403
      %613 = vmatmul.mubr.bf16.gmra.mrb[0].mxu0 %v402
      %v614 = vpop.f32.mrb[0].mxu0
      %v615 = vadd.f32 %v298, %v614
      %v616 = vpop.f32.mrb[0].mxu0
      %v617 = vpop.f32.mrb[0].mxu0
      %v618 = vadd.f32 %v298, %v617
      %v619 = vpop.f32.mrb[0].mxu0
      %620 = vmatprep.mubr.bf16.mxu0 %v405
      %621 = vmatmul.mubr.bf16.gmra.mrb[0].mxu0 %v404
      %v622 = vpop.f32.mrb[0].mxu0
      %v623 = vadd.f32 %v298, %v622
      %v624 = vpop.f32.mrb[0].mxu0
      %v625 = vpop.f32.mrb[0].mxu0
      %v626 = vadd.f32 %v298, %v625
      %v627 = vpop.f32.mrb[0].mxu0
      %628 = vmatprep.mubr.bf16.mxu0 %v407
      %629 = vmatmul.mubr.bf16.gmra.mrb[0].mxu0 %v406
      %v630 = vpop.f32.mrb[0].mxu0
      %v631 = vadd.f32 %v298, %v630
      %v632 = vpop.f32.mrb[0].mxu0
      %v633 = vpop.f32.mrb[0].mxu0
      %v634 = vadd.f32 %v298, %v633
      %v635 = vpop.f32.mrb[0].mxu0
      %636 = vmatprep.mubr.bf16.mxu0 %v409
      %637 = vmatmul.mubr.bf16.gmra.mrb[0].mxu0 %v408
      %v638 = vpop.f32.mrb[0].mxu0
      %v639 = vadd.f32 %v298, %v638
      %v640 = vpop.f32.mrb[0].mxu0
      %v641 = vpop.f32.mrb[0].mxu0
      %v642 = vadd.f32 %v298, %v641
      %v643 = vpop.f32.mrb[0].mxu0
      %644 = vmatprep.mubr.bf16.mxu0 %v411
      %645 = vmatmul.mubr.bf16.gmra.mrb[0].mxu0 %v410
      %v646 = vpop.f32.mrb[0].mxu0
      %v647 = vadd.f32 %v298, %v646
      %v648 = vpop.f32.mrb[0].mxu0
      %v649 = vpop.f32.mrb[0].mxu0
      %v650 = vadd.f32 %v298, %v649
      %v651 = vpop.f32.mrb[0].mxu0
      %652 = vmatprep.mubr.bf16.mxu0 %v413
      %653 = vmatmul.mubr.bf16.gmra.mrb[0].mxu0 %v412
      %v654 = vpop.f32.mrb[0].mxu0
      %v655 = vadd.f32 %v298, %v654
      %v656 = vpop.f32.mrb[0].mxu0
      %v657 = vpop.f32.mrb[0].mxu0
      %v658 = vadd.f32 %v298, %v657
      %v659 = vpop.f32.mrb[0].mxu0
      %660 = vmatprep.mubr.bf16.mxu0 %v415
      %661 = vmatmul.mubr.bf16.gmra.mrb[0].mxu0 %v414
      %v662 = vpop.f32.mrb[0].mxu0
      %v663 = vadd.f32 %v298, %v662
      %v664 = vpop.f32.mrb[0].mxu0
      %v665 = vpop.f32.mrb[0].mxu0
      %v666 = vadd.f32 %v298, %v665
      %v667 = vpop.f32.mrb[0].mxu0
      %668 = vmatprep.mubr.bf16.mxu0 %v417
      %669 = vmatmul.mubr.bf16.gmra.mrb[0].mxu0 %v416
      %v670 = vpop.f32.mrb[0].mxu0
      %v671 = vadd.f32 %v298, %v670
      %v672 = vpop.f32.mrb[0].mxu0
      %v673 = vpop.f32.mrb[0].mxu0
      %v674 = vadd.f32 %v298, %v673
      %v675 = vpop.f32.mrb[0].mxu0
      %676 = vmatprep.mubr.bf16.mxu0 %v419
      %677 = vmatmul.mubr.bf16.gmra.mrb[0].mxu0 %v418
      %v678 = vpop.f32.mrb[0].mxu0
      %v679 = vadd.f32 %v298, %v678
      %v680 = vpop.f32.mrb[0].mxu0
      %v681 = vpop.f32.mrb[0].mxu0
      %v682 = vadd.f32 %v298, %v681
      %v683 = vpop.f32.mrb[0].mxu0
      %684 = vmatprep.mubr.bf16.mxu0 %v421
      %685 = vmatmul.mubr.bf16.gmra.mrb[0].mxu0 %v420
      %v686 = vpop.f32.mrb[0].mxu0
      %v687 = vadd.f32 %v298, %v686
      %v688 = vpop.f32.mrb[0].mxu0
      %v689 = vpop.f32.mrb[0].mxu0
      %v690 = vadd.f32 %v298, %v689
      %v691 = vpop.f32.mrb[0].mxu0
      %692 = vmatprep.mubr.bf16.mxu0 %v423
      %693 = vmatmul.mubr.bf16.gmra.mrb[0].mxu0 %v422
      %v694 = vpop.f32.mrb[0].mxu0
      %v695 = vadd.f32 %v298, %v694
      %v696 = vpop.f32.mrb[0].mxu0
      %v697 = vpop.f32.mrb[0].mxu0
      %v698 = vadd.f32 %v298, %v697
      %v699 = vpop.f32.mrb[0].mxu0
      %700 = vmatprep.mubr.bf16.mxu0 %v425
      %701 = vmatmul.mubr.bf16.gmra.mrb[0].mxu0 %v424
      %v702 = vpop.f32.mrb[0].mxu0
      %v703 = vadd.f32 %v298, %v702
      %v704 = vpop.f32.mrb[0].mxu0
      %v705 = vpop.f32.mrb[0].mxu0
      %v706 = vadd.f32 %v298, %v705
      %v707 = vpop.f32.mrb[0].mxu0
      %708 = vmatprep.mubr.bf16.mxu0 %v427
      %709 = vmatmul.mubr.bf16.gmra.mrb[0].mxu0 %v426
      %v710 = vpop.f32.mrb[0].mxu0
      %v711 = vadd.f32 %v298, %v710
      %v712 = vpop.f32.mrb[0].mxu0
      %v713 = vpop.f32.mrb[0].mxu0
      %v714 = vadd.f32 %v298, %v713
      %v715 = vpop.f32.mrb[0].mxu0
      %716 = vdwg.mxu0
      %v717 = vmax.f32 %v591, 0.0
      %v718 = vmax.f32 %v594, 0.0
      %v719 = vmax.f32 %v599, 0.0
      %v720 = vmax.f32 %v602, 0.0
      %v721 = vmax.f32 %v607, 0.0
      %v722 = vmax.f32 %v610, 0.0
      %v723 = vmax.f32 %v615, 0.0
      %v724 = vmax.f32 %v618, 0.0
      %v725 = vmax.f32 %v623, 0.0
      %v726 = vmax.f32 %v626, 0.0
      %v727 = vmax.f32 %v631, 0.0
      %v728 = vmax.f32 %v634, 0.0
      %v729 = vmax.f32 %v639, 0.0
      %v730 = vmax.f32 %v642, 0.0
      %v731 = vmax.f32 %v647, 0.0
      %v732 = vmax.f32 %v650, 0.0
      %v733 = vmax.f32 %v655, 0.0
      %v734 = vmax.f32 %v658, 0.0
      %v735 = vmax.f32 %v663, 0.0
      %v736 = vmax.f32 %v666, 0.0
      %v737 = vmax.f32 %v671, 0.0
      %v738 = vmax.f32 %v674, 0.0
      %v739 = vmax.f32 %v679, 0.0
      %v740 = vmax.f32 %v682, 0.0
      %v741 = vmax.f32 %v687, 0.0
      %v742 = vmax.f32 %v690, 0.0
      %v743 = vmax.f32 %v695, 0.0
      %v744 = vmax.f32 %v698, 0.0
      %v745 = vmax.f32 %v703, 0.0
      %v746 = vmax.f32 %v706, 0.0
      %v747 = vmax.f32 %v711, 0.0
      %v748 = vmax.f32 %v714, 0.0
      %v749 = vpack.c.bf16 %v718, %v717
      %v750 = vpack.c.bf16 %v720, %v719
      %v751 = vpack.c.bf16 %v722, %v721
      %v752 = vpack.c.bf16 %v724, %v723
      %v753 = vpack.c.bf16 %v726, %v725
      %v754 = vpack.c.bf16 %v728, %v727
      %v755 = vpack.c.bf16 %v730, %v729
      %v756 = vpack.c.bf16 %v732, %v731
      %v757 = vpack.c.bf16 %v734, %v733
      %v758 = vpack.c.bf16 %v736, %v735
      %v759 = vpack.c.bf16 %v738, %v737
      %v760 = vpack.c.bf16 %v740, %v739
      %v761 = vpack.c.bf16 %v742, %v741
      %v762 = vpack.c.bf16 %v744, %v743
      %v763 = vpack.c.bf16 %v746, %v745
      %v764 = vpack.c.bf16 %v748, %v747
      %v781 = vunpack.c.l.b16 %v749
      %v782 = vunpack.c.h.b16 %v749
      %v783 = vunpack.c.l.b16 %v750
      %v784 = vunpack.c.h.b16 %v750
      %v785 = vunpack.c.l.b16 %v751
      %v786 = vunpack.c.h.b16 %v751
      %v787 = vunpack.c.l.b16 %v752
      %v788 = vunpack.c.h.b16 %v752
      %v789 = vunpack.c.l.b16 %v753
      %v790 = vunpack.c.h.b16 %v753
      %v791 = vunpack.c.l.b16 %v754
      %v792 = vunpack.c.h.b16 %v754
      %v793 = vunpack.c.l.b16 %v755
      %v794 = vunpack.c.h.b16 %v755
      %v795 = vunpack.c.l.b16 %v756
      %v796 = vunpack.c.h.b16 %v756
      %v797 = vunpack.c.l.b16 %v757
      %v798 = vunpack.c.h.b16 %v757
      %v799 = vunpack.c.l.b16 %v758
      %v800 = vunpack.c.h.b16 %v758
      %v801 = vunpack.c.l.b16 %v759
      %v802 = vunpack.c.h.b16 %v759
      %v803 = vunpack.c.l.b16 %v760
      %v804 = vunpack.c.h.b16 %v760
      %v805 = vunpack.c.l.b16 %v761
      %v806 = vunpack.c.h.b16 %v761
      %v807 = vunpack.c.l.b16 %v762
      %v808 = vunpack.c.h.b16 %v762
      %v809 = vunpack.c.l.b16 %v763
      %v810 = vunpack.c.h.b16 %v763
      %v811 = vunpack.c.l.b16 %v764
      %v812 = vunpack.c.h.b16 %v764
      %v813 = vpack.c.b16 %v781, %v781
      %v814 = vpack.c.b16 %v782, %v782
      %v815 = vpack.c.b16 %v783, %v783
      %v816 = vpack.c.b16 %v784, %v784
      %v817 = vpack.c.b16 %v785, %v785
      %v818 = vpack.c.b16 %v786, %v786
      %v819 = vpack.c.b16 %v787, %v787
      %v820 = vpack.c.b16 %v788, %v788
      %v821 = vpack.c.b16 %v789, %v789
      %v822 = vpack.c.b16 %v790, %v790
      %v823 = vpack.c.b16 %v791, %v791
      %v824 = vpack.c.b16 %v792, %v792
      %v825 = vpack.c.b16 %v793, %v793
      %v826 = vpack.c.b16 %v794, %v794
      %v827 = vpack.c.b16 %v795, %v795
      %v828 = vpack.c.b16 %v796, %v796
      %v829 = vpack.c.b16 %v797, %v797
      %v830 = vpack.c.b16 %v798, %v798
      %v831 = vpack.c.b16 %v799, %v799
      %v832 = vpack.c.b16 %v800, %v800
      %v833 = vpack.c.b16 %v801, %v801
      %v834 = vpack.c.b16 %v802, %v802
      %v835 = vpack.c.b16 %v803, %v803
      %v836 = vpack.c.b16 %v804, %v804
      %v837 = vpack.c.b16 %v805, %v805
      %v838 = vpack.c.b16 %v806, %v806
      %v839 = vpack.c.b16 %v807, %v807
      %v840 = vpack.c.b16 %v808, %v808
      %v841 = vpack.c.b16 %v809, %v809
      %v842 = vpack.c.b16 %v810, %v810
      %v843 = vpack.c.b16 %v811, %v811
      %v844 = vpack.c.b16 %v812, %v812
      %877 = vst [vmem:[%s226] sm:$0xf] %v813
      %878 = vst [vmem:[%s226 + $0x4] sm:$0xf] %v814
      %879 = vst [vmem:[%s226 + $0x8] sm:$0xf] %v815
      %880 = vst [vmem:[%s226 + $0xc] sm:$0xf] %v816
      %881 = vst [vmem:[%s226 + $0x10] sm:$0xf] %v817
      %882 = vst [vmem:[%s226 + $0x14] sm:$0xf] %v818
      %883 = vst [vmem:[%s226 + $0x18] sm:$0xf] %v819
      %884 = vst [vmem:[%s226 + $0x1c] sm:$0xf] %v820
      %885 = vst [vmem:[%s226 + $0x20] sm:$0xf] %v821
      %886 = vst [vmem:[%s226 + $0x24] sm:$0xf] %v822
      %887 = vst [vmem:[%s226 + $0x28] sm:$0xf] %v823
      %888 = vst [vmem:[%s226 + $0x2c] sm:$0xf] %v824
      %889 = vst [vmem:[%s226 + $0x30] sm:$0xf] %v825
      %890 = vst [vmem:[%s226 + $0x34] sm:$0xf] %v826
      %891 = vst [vmem:[%s226 + $0x38] sm:$0xf] %v827
      %892 = vst [vmem:[%s226 + $0x3c] sm:$0xf] %v828
      %893 = vst [vmem:[%s226 + $0x40] sm:$0xf] %v829
      %894 = vst [vmem:[%s226 + $0x44] sm:$0xf] %v830
      %895 = vst [vmem:[%s226 + $0x48] sm:$0xf] %v831
      %896 = vst [vmem:[%s226 + $0x4c] sm:$0xf] %v832
      %897 = vst [vmem:[%s226 + $0x50] sm:$0xf] %v833
      %898 = vst [vmem:[%s226 + $0x54] sm:$0xf] %v834
      %899 = vst [vmem:[%s226 + $0x58] sm:$0xf] %v835
      %900 = vst [vmem:[%s226 + $0x5c] sm:$0xf] %v836
      %901 = vst [vmem:[%s226 + $0x60] sm:$0xf] %v837
      %902 = vst [vmem:[%s226 + $0x64] sm:$0xf] %v838
      %903 = vst [vmem:[%s226 + $0x68] sm:$0xf] %v839
      %904 = vst [vmem:[%s226 + $0x6c] sm:$0xf] %v840
      %905 = vst [vmem:[%s226 + $0x70] sm:$0xf] %v841
      %906 = vst [vmem:[%s226 + $0x74] sm:$0xf] %v842
      %907 = vst [vmem:[%s226 + $0x78] sm:$0xf] %v843
      %908 = vst [vmem:[%s226 + $0x7c] sm:$0xf] %v844
      %s909 = smul.u32 32, %s18
      %p910 = scmp.lt.s32.totalorder %s909, 63
      %s911 = scalar_select %p910, %s909, 63
      %p912 = scmp.lt.s32.totalorder %s19, 0
      %s913 = scalar_select %p912, %s19, 0
      %s914 = sadd.s32 %s913, %s911
      %s915 = smul.addr %s914, 4
      %s916 = scalar_lea.vmem %s3, %s915
      // Predicated region
      $region33: #{resnet50_forward.8} parent=31 // pred_check
        %p917 = pneg %p124
      $region34: #{resnet50_forward.8} parent=31 // pred_check_branch
        %919 = sbr.rel (%p917) target = $region36
      $region35: #{resnet50_forward.8} parent=31 // pred_region
        %s920 = smul.u32 32, %s18
      $region36: #{resnet50_forward.8} parent=31 // pred_fallthru
        _
    $region32: #{resnet50_forward.8} parent=5 // pred_fallthru
      _
    %p921 = scmp.le.s32.totalorder 2, %s9
    // Predicated region
    $region37: #{resnet50_forward.8} parent=5 // pred_check
      %p922 = pneg %p921
    $region38: #{resnet50_forward.8} parent=5 // pred_check_branch
      %924 = sbr.rel (%p922) target = $region40
    $region39: #{resnet50_forward.8} parent=5 // pred_region
      %s925 = ssub.s32 %s9, 2
      // Predicated region
      $region41: #{resnet50_forward.8} parent=39 // pred_check
        %p926 = pneg %p130
      $region42: #{resnet50_forward.8} parent=39 // pred_check_branch
        %928 = sbr.rel (%p926) target = $region44
      $region43: #{resnet50_forward.8} parent=39 // pred_region
        %s929 = smul.u32 32, %s20
        %p930 = scmp.lt.s32.totalorder %s929, 63
        %s931 = scalar_select %p930, %s929, 63
        %p932 = scmp.lt.s32.totalorder %s21, 0
        %s933 = scalar_select %p932, %s21, 0
        %s934 = sadd.s32 %s933, %s931
        %s935 = smul.addr %s934, 4
        %s936 = scalar_lea.vmem %s3, %s935
      $region44: #{resnet50_forward.8} parent=39 // pred_fallthru
        _
    $region40: #{resnet50_forward.8} parent=5 // pred_fallthru
      _
  $region6: #{resnet50_forward.8} parent=0 // loop_footer
    %s13 = sadd.s32 1, %s9
  $region7: #{resnet50_forward.8} parent=0 // loop_footer_branch
    %8 = sbr.rel target = $region3
  $region8: #{resnet50_forward.8} parent=0 // loop_exit
    _

// kernel: resnet50_forward.9
$region0: #{resnet50_forward.9}
  #allocation0 [shape = 'u32[]', space=smem, size = 0x4, offset = 0x4, fixed_abs, tag = 'smem constant byte address 0x4 - core index']
  #allocation1 [shape = 'u32[144,128]{1,0:T(1,128)}', space=vmem, size = 0x12000, scoped, tag = 'internal scratch']
  %s0 = inlined_call_operand.vmem [shape: bf16[2,9,8,128], index: 0, kind: input, shape index: {}]
  %s1 = inlined_call_operand.vmem [shape: bf16[2,9,8,128], index: 1, kind: input, shape index: {}]
  %s2 = inlined_call_operand.vmem [shape: bf16[2,8,8,128], index: 2, kind: output, shape index: {}]
  %s3 = sld [smem:[#allocation0]]
  $region41: #{resnet50_forward.9} parent=0
    _
  %s5 = ssub.s32 1, %s3
  %s6 = scalar_select 0, %s5, %s3
  loop: start=0, step=1, limit=4
  $region2: #{resnet50_forward.9} parent=0 // loop_pre_header
    _
  $region3: #{resnet50_forward.9} parent=0 // loop_header
    %s8 = sphi 0, %s12
    %p9 = scmp.ge.s32.totalorder %s8, 4
    %s18 = sphi 0, %s20
    %s21 = sphi 0, %s18
    %s22 = sphi 0, %s21
    %s38 = sphi 0, %s22
    %s44 = sphi 0, %s46
    %s47 = sphi 0, %s44
    %s48 = sphi 0, %s47
    %s64 = sphi 0, %s48
    %s70 = sphi 0, %s72
    %s73 = sphi 0, %s70
    %s74 = sphi 0, %s73
    %s90 = sphi 0, %s74
  $region4: #{resnet50_forward.9} parent=0 // loop_header_branch
    %11 = sbr.rel (%p9) target = $region8
  $region5: #{resnet50_forward.9} parent=0 // loop_body
    %s13 = ssub.s32 %s8, 1
    %s14 = ssub.s32 %s8, 2
    %s15 = sadd.s32 %s8, 1
    %s16 = ssub.s32 %s8, %s15
    %p17 = scmp.eq.s32.totalorder %s16, 0
    %s19 = sadd.s32 %s18, 1
    %s20 = scalar_select %p17, %s18, %s19
    %p23 = pneg %p17
    %p24 = scmp.eq.s32.totalorder %s8, 1
    %p25 = por %p23, %p24
    %p26 = scmp.ne.s32.totalorder %s18, %s21
    %p27 = scmp.eq.s32.totalorder %s8, 0
    %p28 = por %p26, %p27
    %p29 = scmp.ne.s32.totalorder %s18, %s21
    %p30 = scmp.eq.s32.totalorder %s13, 1
    %p31 = por %p29, %p30
    %p32 = scmp.ne.s32.totalorder %s21, %s22
    %p33 = scmp.eq.s32.totalorder %s13, 0
    %p34 = por %p32, %p33
    %p35 = scmp.ne.s32.totalorder %s21, %s22
    %p36 = scmp.eq.s32.totalorder %s14, 1
    %p37 = por %p35, %p36
    %p39 = scmp.ne.s32.totalorder %s22, %s38
    %p40 = scmp.eq.s32.totalorder %s14, 0
    %p41 = por %p39, %p40
    %s42 = ssub.s32 %s8, %s15
    %p43 = scmp.eq.s32.totalorder %s42, 0
    %s45 = sadd.s32 %s44, 1
    %s46 = scalar_select %p43, %s44, %s45
    %p49 = pneg %p43
    %p50 = scmp.eq.s32.totalorder %s8, 1
    %p51 = por %p49, %p50
    %p52 = scmp.ne.s32.totalorder %s44, %s47
    %p53 = scmp.eq.s32.totalorder %s8, 0
    %p54 = por %p52, %p53
    %p55 = scmp.ne.s32.totalorder %s44, %s47
    %p56 = scmp.eq.s32.totalorder %s13, 1
    %p57 = por %p55, %p56
    %p58 = scmp.ne.s32.totalorder %s47, %s48
    %p59 = scmp.eq.s32.totalorder %s13, 0
    %p60 = por %p58, %p59
    %p61 = scmp.ne.s32.totalorder %s47, %s48
    %p62 = scmp.eq.s32.totalorder %s14, 1
    %p63 = por %p61, %p62
    %p65 = scmp.ne.s32.totalorder %s48, %s64
    %p66 = scmp.eq.s32.totalorder %s14, 0
    %p67 = por %p65, %p66
    %s68 = ssub.s32 %s8, %s15
    %p69 = scmp.eq.s32.totalorder %s68, 0
    %s71 = sadd.s32 %s70, 1
    %s72 = scalar_select %p69, %s70, %s71
    %p75 = pneg %p69
    %p76 = scmp.eq.s32.totalorder %s8, 1
    %p77 = por %p75, %p76
    %p78 = scmp.ne.s32.totalorder %s70, %s73
    %p79 = scmp.eq.s32.totalorder %s8, 0
    %p80 = por %p78, %p79
    %p81 = scmp.ne.s32.totalorder %s70, %s73
    %p82 = scmp.eq.s32.totalorder %s13, 1
    %p83 = por %p81, %p82
    %p84 = scmp.ne.s32.totalorder %s73, %s74
    %p85 = scmp.eq.s32.totalorder %s13, 0
    %p86 = por %p84, %p85
    %p87 = scmp.ne.s32.totalorder %s73, %s74
    %p88 = scmp.eq.s32.totalorder %s14, 1
    %p89 = por %p87, %p88
    %p91 = scmp.ne.s32.totalorder %s74, %s90
    %p92 = scmp.eq.s32.totalorder %s14, 0
    %p93 = por %p91, %p92
    %p94 = scmp.le.s32.totalorder 1, %s8
    %p95 = scmp.lt.s32.totalorder %s8, 3
    %p96 = pnand %p94, %p95
    %p97 = pneg %p96
    // Predicated region
    $region9: #{resnet50_forward.9} parent=5 // pred_check
      _
    $region10: #{resnet50_forward.9} parent=5 // pred_check_branch
      %99 = sbr.rel (%p96) target = $region12
    $region11: #{resnet50_forward.9} parent=5 // pred_region
      %s100 = ssub.s32 %s8, 1
    $region12: #{resnet50_forward.9} parent=5 // pred_fallthru
      _
    %p101 = scmp.lt.s32.totalorder %s8, 2
    // Predicated region
    $region13: #{resnet50_forward.9} parent=5 // pred_check
      %p102 = pneg %p101
    $region14: #{resnet50_forward.9} parent=5 // pred_check_branch
      %104 = sbr.rel (%p102) target = $region16
    $region15: #{resnet50_forward.9} parent=5 // pred_region
      // Predicated region
      $region17: #{resnet50_forward.9} parent=15 // pred_check
        %p105 = pneg %p28
      $region18: #{resnet50_forward.9} parent=15 // pred_check_branch
        %107 = sbr.rel (%p105) target = $region20
      $region19: #{resnet50_forward.9} parent=15 // pred_region
        %p108 = scmp.lt.s32.totalorder %s8, 1
        %s109 = scalar_select %p108, %s8, 1
        %s110 = smul.addr %s109, 9
        %s111 = smul.addr %s110, 4
        %s112 = scalar_lea.vmem %s0, %s111
      $region20: #{resnet50_forward.9} parent=15 // pred_fallthru
        _
      // Predicated region
      $region21: #{resnet50_forward.9} parent=15 // pred_check
        %p113 = pneg %p54
      $region22: #{resnet50_forward.9} parent=15 // pred_check_branch
        %115 = sbr.rel (%p113) target = $region24
      $region23: #{resnet50_forward.9} parent=15 // pred_region
        %p116 = scmp.lt.s32.totalorder %s8, 1
        %s117 = scalar_select %p116, %s8, 1
        %s118 = smul.addr %s117, 9
        %s119 = smul.addr %s118, 4
        %s120 = scalar_lea.vmem %s1, %s119
      $region24: #{resnet50_forward.9} parent=15 // pred_fallthru
        _
    $region16: #{resnet50_forward.9} parent=5 // pred_fallthru
      _
    %p121 = scmp.le.s32.totalorder 1, %s8
    %p122 = scmp.lt.s32.totalorder %s8, 3
    %p123 = pnand %p121, %p122
    %p124 = pneg %p123
    // Predicated region
    $region25: #{resnet50_forward.9} parent=5 // pred_check
      _
    $region26: #{resnet50_forward.9} parent=5 // pred_check_branch
      %126 = sbr.rel (%p123) target = $region28
    $region27: #{resnet50_forward.9} parent=5 // pred_region
      %s127 = ssub.s32 %s8, 1
      %p128 = scmp.lt.s32.totalorder %s13, 1
      %s129 = scalar_select %p128, %s13, 1
      %s130 = smul.addr %s129, 9
      %s131 = smul.addr %s130, 4
      %s132 = scalar_lea.vmem %s0, %s131
      %p133 = pneg %p34
      %p134 = pneg %p31
      %p135 = scmp.lt.s32.totalorder %s13, 1
      %s136 = scalar_select %p135, %s13, 1
      %s137 = smul.addr %s136, 9
      %s138 = smul.addr %s137, 4
      %s139 = scalar_lea.vmem %s1, %s138
      %p140 = pneg %p60
      %p141 = pneg %p57
      %p142 = pneg %p86
      %p143 = pneg %p83
      %p144 = scmp.lt.s32.totalorder %s13, 1
      %s145 = scalar_select %p144, %s13, 1
      %s146 = smul.addr %s145, 8
      %s147 = smul.addr %s146, 4
      %s148 = scalar_lea.vmem %s2, %s147
      %p149 = scmp.lt.s32.totalorder %s13, 1
      %s150 = scalar_select %p149, %s13, 1
      %s151 = smul.addr %s150, 9
      %s152 = smul.addr %s151, 4
      %s153 = scalar_lea.vmem %s0, %s152
      %p154 = scmp.lt.s32.totalorder %s13, 1
      %s155 = scalar_select %p154, %s13, 1
      %s156 = smul.addr %s155, 9
      %s157 = smul.addr %s156, 4
      %s158 = scalar_lea.vmem %s1, %s157
      %p159 = scmp.lt.s32.totalorder %s13, 1
      %s160 = scalar_select %p159, %s13, 1
      %s161 = smul.addr %s160, 8
      %s162 = smul.addr %s161, 4
      %s163 = scalar_lea.vmem %s2, %s162
      %v164 = vld [vmem:[%s153] sm:$0xf]
      %v165 = vld [vmem:[%s153 + $0x4] sm:$0xf]
      %v166 = vld [vmem:[%s153 + $0x8] sm:$0xf]
      %v167 = vld [vmem:[%s153 + $0xc] sm:$0xf]
      %v168 = vld [vmem:[%s153 + $0x10] sm:$0xf]
      %v169 = vld [vmem:[%s153 + $0x14] sm:$0xf]
      %v170 = vld [vmem:[%s153 + $0x18] sm:$0xf]
      %v171 = vld [vmem:[%s153 + $0x1c] sm:$0xf]
      %v172 = vld [vmem:[%s158] sm:$0xf]
      %v173 = vld [vmem:[%s158 + $0x4] sm:$0xf]
      %v174 = vld [vmem:[%s158 + $0x8] sm:$0xf]
      %v175 = vld [vmem:[%s158 + $0xc] sm:$0xf]
      %v176 = vld [vmem:[%s158 + $0x10] sm:$0xf]
      %v177 = vld [vmem:[%s158 + $0x14] sm:$0xf]
      %v178 = vld [vmem:[%s158 + $0x18] sm:$0xf]
      %v179 = vld [vmem:[%s158 + $0x1c] sm:$0xf]
      %s180 = scalar_lea.vmem %s153, 4
      %v181 = vld [vmem:[%s180] sm:$0xf]
      %v182 = vld [vmem:[%s180 + $0x4] sm:$0xf]
      %v183 = vld [vmem:[%s180 + $0x8] sm:$0xf]
      %v184 = vld [vmem:[%s180 + $0xc] sm:$0xf]
      %v185 = vld [vmem:[%s180 + $0x10] sm:$0xf]
      %v186 = vld [vmem:[%s180 + $0x14] sm:$0xf]
      %v187 = vld [vmem:[%s180 + $0x18] sm:$0xf]
      %v188 = vld [vmem:[%s180 + $0x1c] sm:$0xf]
      %v189 = vmax.bf16 %v164, %v172
      %v190 = vmax.bf16 %v165, %v173
      %v191 = vmax.bf16 %v166, %v174
      %v192 = vmax.bf16 %v167, %v175
      %v193 = vmax.bf16 %v168, %v176
      %v194 = vmax.bf16 %v169, %v177
      %v195 = vmax.bf16 %v170, %v178
      %v196 = vmax.bf16 %v171, %v179
      %v197 = vmax.bf16 %v189, %v181
      %v198 = vmax.bf16 %v190, %v182
      %v199 = vmax.bf16 %v191, %v183
      %v200 = vmax.bf16 %v192, %v184
      %v201 = vmax.bf16 %v193, %v185
      %v202 = vmax.bf16 %v194, %v186
      %v203 = vmax.bf16 %v195, %v187
      %v204 = vmax.bf16 %v196, %v188
      %205 = vst [vmem:[%s163] sm:$0xf] %v197
      %206 = vst [vmem:[%s163 + $0x4] sm:$0xf] %v198
      %207 = vst [vmem:[%s163 + $0x8] sm:$0xf] %v199
      %208 = vst [vmem:[%s163 + $0xc] sm:$0xf] %v200
      %209 = vst [vmem:[%s163 + $0x10] sm:$0xf] %v201
      %210 = vst [vmem:[%s163 + $0x14] sm:$0xf] %v202
      %211 = vst [vmem:[%s163 + $0x18] sm:$0xf] %v203
      %212 = vst [vmem:[%s163 + $0x1c] sm:$0xf] %v204
      %p213 = scmp.lt.s32.totalorder %s13, 1
      %s214 = scalar_select %p213, %s13, 1
      %s215 = smul.addr %s214, 8
      %s216 = smul.addr %s215, 4
      %s217 = scalar_lea.vmem %s2, %s216
      // Predicated region
      $region29: #{resnet50_forward.9} parent=27 // pred_check
        %p218 = pneg %p83
      $region30: #{resnet50_forward.9} parent=27 // pred_check_branch
        %220 = sbr.rel (%p218) target = $region32
      $region31: #{resnet50_forward.9} parent=27 // pred_region
        _
      $region32: #{resnet50_forward.9} parent=27 // pred_fallthru
        _
    $region28: #{resnet50_forward.9} parent=5 // pred_fallthru
      _
    %p221 = scmp.le.s32.totalorder 2, %s8
    // Predicated region
    $region33: #{resnet50_forward.9} parent=5 // pred_check
      %p222 = pneg %p221
    $region34: #{resnet50_forward.9} parent=5 // pred_check_branch
      %224 = sbr.rel (%p222) target = $region36
    $region35: #{resnet50_forward.9} parent=5 // pred_region
      %s225 = ssub.s32 %s8, 2
      // Predicated region
      $region37: #{resnet50_forward.9} parent=35 // pred_check
        %p226 = pneg %p89
      $region38: #{resnet50_forward.9} parent=35 // pred_check_branch
        %228 = sbr.rel (%p226) target = $region40
      $region39: #{resnet50_forward.9} parent=35 // pred_region
        %p229 = scmp.lt.s32.totalorder %s14, 1
        %s230 = scalar_select %p229, %s14, 1
        %s231 = smul.addr %s230, 8
        %s232 = smul.addr %s231, 4
        %s233 = scalar_lea.vmem %s2, %s232
      $region40: #{resnet50_forward.9} parent=35 // pred_fallthru
        _
    $region36: #{resnet50_forward.9} parent=5 // pred_fallthru
      _
  $region6: #{resnet50_forward.9} parent=0 // loop_footer
    %s12 = sadd.s32 1, %s8
  $region7: #{resnet50_forward.9} parent=0 // loop_footer_branch
    %7 = sbr.rel target = $region3
  $region8: #{resnet50_forward.9} parent=0 // loop_exit
    _

// kernel: resnet50_forward.11
$region0: #{resnet50_forward.11}
  #allocation0 [shape = 'u32[]', space=smem, size = 0x4, offset = 0x4, fixed_abs, tag = 'smem constant byte address 0x4 - core index']
  #allocation1 [shape = 'u32[144,128]{1,0:T(1,128)}', space=vmem, size = 0x12000, scoped, tag = 'internal scratch']
  %s0 = inlined_call_operand.vmem [shape: bf16[2,10,8,384], index: 0, kind: input, shape index: {}]
  %s1 = inlined_call_operand.vmem [shape: bf16[3,384,128], index: 1, kind: input, shape index: {}]
  %s2 = inlined_call_operand.vmem [shape: f32[1,128], index: 2, kind: input, shape index: {}]
  %s3 = inlined_call_operand.vmem [shape: bf16[2,8,8,128], index: 3, kind: input, shape index: {}]
  %s4 = inlined_call_operand.vmem [shape: bf16[2,8,8,128], index: 4, kind: output, shape index: {}]
  %s5 = sld [smem:[#allocation0]]
  $region49: #{resnet50_forward.11} parent=0
    _
  %s7 = ssub.s32 1, %s5
  %s8 = scalar_select 0, %s7, %s5
  loop: start=0, step=1, limit=4
  $region2: #{resnet50_forward.11} parent=0 // loop_pre_header
    _
  $region3: #{resnet50_forward.11} parent=0 // loop_header
    %s10 = sphi 0, %s14
    %p11 = scmp.ge.s32.totalorder %s10, 4
    %s20 = sphi 0, %s22
    %s23 = sphi 0, %s20
    %s24 = sphi 0, %s23
    %s40 = sphi 0, %s24
    %s44 = sphi 0, %s44
    %s46 = sphi 0, %s44
    %s47 = sphi 0, %s46
    %s61 = sphi 0, %s47
    %s65 = sphi 0, %s65
    %s67 = sphi 0, %s65
    %s68 = sphi 0, %s67
    %s82 = sphi 0, %s68
    %s88 = sphi 0, %s90
    %s91 = sphi 0, %s88
    %s92 = sphi 0, %s91
    %s108 = sphi 0, %s92
    %s114 = sphi 0, %s116
    %s117 = sphi 0, %s114
    %s118 = sphi 0, %s117
    %s134 = sphi 0, %s118
  $region4: #{resnet50_forward.11} parent=0 // loop_header_branch
    %13 = sbr.rel (%p11) target = $region8
  $region5: #{resnet50_forward.11} parent=0 // loop_body
    %s15 = ssub.s32 %s10, 1
    %s16 = ssub.s32 %s10, 2
    %s17 = sadd.s32 %s10, 1
    %s18 = ssub.s32 %s10, %s17
    %p19 = scmp.eq.s32.totalorder %s18, 0
    %s21 = sadd.s32 %s20, 1
    %s22 = scalar_select %p19, %s20, %s21
    %p25 = pneg %p19
    %p26 = scmp.eq.s32.totalorder %s10, 1
    %p27 = por %p25, %p26
    %p28 = scmp.ne.s32.totalorder %s20, %s23
    %p29 = scmp.eq.s32.totalorder %s10, 0
    %p30 = por %p28, %p29
    %p31 = scmp.ne.s32.totalorder %s20, %s23
    %p32 = scmp.eq.s32.totalorder %s15, 1
    %p33 = por %p31, %p32
    %p34 = scmp.ne.s32.totalorder %s23, %s24
    %p35 = scmp.eq.s32.totalorder %s15, 0
    %p36 = por %p34, %p35
    %p37 = scmp.ne.s32.totalorder %s23, %s24
    %p38 = scmp.eq.s32.totalorder %s16, 1
    %p39 = por %p37, %p38
    %p41 = scmp.ne.s32.totalorder %s24, %s40
    %p42 = scmp.eq.s32.totalorder %s16, 0
    %p43 = por %p41, %p42
    %s45 = sadd.s32 %s44, 1
    %p48 = scmp.eq.s32.totalorder %s10, 1
    %p49 = scmp.ne.s32.totalorder %s44, %s46
    %p50 = scmp.eq.s32.totalorder %s10, 0
    %p51 = por %p49, %p50
    %p52 = scmp.ne.s32.totalorder %s44, %s46
    %p53 = scmp.eq.s32.totalorder %s15, 1
    %p54 = por %p52, %p53
    %p55 = scmp.ne.s32.totalorder %s46, %s47
    %p56 = scmp.eq.s32.totalorder %s15, 0
    %p57 = por %p55, %p56
    %p58 = scmp.ne.s32.totalorder %s46, %s47
    %p59 = scmp.eq.s32.totalorder %s16, 1
    %p60 = por %p58, %p59
    %p62 = scmp.ne.s32.totalorder %s47, %s61
    %p63 = scmp.eq.s32.totalorder %s16, 0
    %p64 = por %p62, %p63
    %s66 = sadd.s32 %s65, 1
    %p69 = scmp.eq.s32.totalorder %s10, 1
    %p70 = scmp.ne.s32.totalorder %s65, %s67
    %p71 = scmp.eq.s32.totalorder %s10, 0
    %p72 = por %p70, %p71
    %p73 = scmp.ne.s32.totalorder %s65, %s67
    %p74 = scmp.eq.s32.totalorder %s15, 1
    %p75 = por %p73, %p74
    %p76 = scmp.ne.s32.totalorder %s67, %s68
    %p77 = scmp.eq.s32.totalorder %s15, 0
    %p78 = por %p76, %p77
    %p79 = scmp.ne.s32.totalorder %s67, %s68
    %p80 = scmp.eq.s32.totalorder %s16, 1
    %p81 = por %p79, %p80
    %p83 = scmp.ne.s32.totalorder %s68, %s82
    %p84 = scmp.eq.s32.totalorder %s16, 0
    %p85 = por %p83, %p84
    %s86 = ssub.s32 %s10, %s17
    %p87 = scmp.eq.s32.totalorder %s86, 0
    %s89 = sadd.s32 %s88, 1
    %s90 = scalar_select %p87, %s88, %s89
    %p93 = pneg %p87
    %p94 = scmp.eq.s32.totalorder %s10, 1
    %p95 = por %p93, %p94
    %p96 = scmp.ne.s32.totalorder %s88, %s91
    %p97 = scmp.eq.s32.totalorder %s10, 0
    %p98 = por %p96, %p97
    %p99 = scmp.ne.s32.totalorder %s88, %s91
    %p100 = scmp.eq.s32.totalorder %s15, 1
    %p101 = por %p99, %p100
    %p102 = scmp.ne.s32.totalorder %s91, %s92
    %p103 = scmp.eq.s32.totalorder %s15, 0
    %p104 = por %p102, %p103
    %p105 = scmp.ne.s32.totalorder %s91, %s92
    %p106 = scmp.eq.s32.totalorder %s16, 1
    %p107 = por %p105, %p106
    %p109 = scmp.ne.s32.totalorder %s92, %s108
    %p110 = scmp.eq.s32.totalorder %s16, 0
    %p111 = por %p109, %p110
    %s112 = ssub.s32 %s10, %s17
    %p113 = scmp.eq.s32.totalorder %s112, 0
    %s115 = sadd.s32 %s114, 1
    %s116 = scalar_select %p113, %s114, %s115
    %p119 = pneg %p113
    %p120 = scmp.eq.s32.totalorder %s10, 1
    %p121 = por %p119, %p120
    %p122 = scmp.ne.s32.totalorder %s114, %s117
    %p123 = scmp.eq.s32.totalorder %s10, 0
    %p124 = por %p122, %p123
    %p125 = scmp.ne.s32.totalorder %s114, %s117
    %p126 = scmp.eq.s32.totalorder %s15, 1
    %p127 = por %p125, %p126
    %p128 = scmp.ne.s32.totalorder %s117, %s118
    %p129 = scmp.eq.s32.totalorder %s15, 0
    %p130 = por %p128, %p129
    %p131 = scmp.ne.s32.totalorder %s117, %s118
    %p132 = scmp.eq.s32.totalorder %s16, 1
    %p133 = por %p131, %p132
    %p135 = scmp.ne.s32.totalorder %s118, %s134
    %p136 = scmp.eq.s32.totalorder %s16, 0
    %p137 = por %p135, %p136
    %p138 = scmp.le.s32.totalorder 1, %s10
    %p139 = scmp.lt.s32.totalorder %s10, 3
    %p140 = pnand %p138, %p139
    %p141 = pneg %p140
    // Predicated region
    $region9: #{resnet50_forward.11} parent=5 // pred_check
      _
    $region10: #{resnet50_forward.11} parent=5 // pred_check_branch
      %143 = sbr.rel (%p140) target = $region12
    $region11: #{resnet50_forward.11} parent=5 // pred_region
      %s144 = ssub.s32 %s10, 1
      // Predicated region
      $region13: #{resnet50_forward.11} parent=11 // pred_check
        %p145 = pneg %p57
      $region14: #{resnet50_forward.11} parent=11 // pred_check_branch
        %147 = sbr.rel (%p145) target = $region16
      $region15: #{resnet50_forward.11} parent=11 // pred_region
        _
      $region16: #{resnet50_forward.11} parent=11 // pred_fallthru
        _
      // Predicated region
      $region17: #{resnet50_forward.11} parent=11 // pred_check
        %p148 = pneg %p78
      $region18: #{resnet50_forward.11} parent=11 // pred_check_branch
        %150 = sbr.rel (%p148) target = $region20
      $region19: #{resnet50_forward.11} parent=11 // pred_region
        _
      $region20: #{resnet50_forward.11} parent=11 // pred_fallthru
        _
    $region12: #{resnet50_forward.11} parent=5 // pred_fallthru
      _
    %p151 = scmp.lt.s32.totalorder %s10, 2
    // Predicated region
    $region21: #{resnet50_forward.11} parent=5 // pred_check
      %p152 = pneg %p151
    $region22: #{resnet50_forward.11} parent=5 // pred_check_branch
      %154 = sbr.rel (%p152) target = $region24
    $region23: #{resnet50_forward.11} parent=5 // pred_region
      // Predicated region
      $region25: #{resnet50_forward.11} parent=23 // pred_check
        %p155 = pneg %p30
      $region26: #{resnet50_forward.11} parent=23 // pred_check_branch
        %157 = sbr.rel (%p155) target = $region28
      $region27: #{resnet50_forward.11} parent=23 // pred_region
        %p158 = scmp.lt.s32.totalorder %s10, 1
        %s159 = scalar_select %p158, %s10, 1
        %s160 = smul.addr %s159, 30
        %s161 = smul.addr %s160, 4
        %s162 = scalar_lea.vmem %s0, %s161
      $region28: #{resnet50_forward.11} parent=23 // pred_fallthru
        _
      // Predicated region
      $region29: #{resnet50_forward.11} parent=23 // pred_check
        %p163 = pneg %p98
      $region30: #{resnet50_forward.11} parent=23 // pred_check_branch
        %165 = sbr.rel (%p163) target = $region32
      $region31: #{resnet50_forward.11} parent=23 // pred_region
        %p166 = scmp.lt.s32.totalorder %s10, 1
        %s167 = scalar_select %p166, %s10, 1
        %s168 = smul.addr %s167, 8
        %s169 = smul.addr %s168, 4
        %s170 = scalar_lea.vmem %s3, %s169
      $region32: #{resnet50_forward.11} parent=23 // pred_fallthru
        _
    $region24: #{resnet50_forward.11} parent=5 // pred_fallthru
      _
    %p171 = scmp.le.s32.totalorder 1, %s10
    %p172 = scmp.lt.s32.totalorder %s10, 3
    %p173 = pnand %p171, %p172
    %p174 = pneg %p173
    // Predicated region
    $region33: #{resnet50_forward.11} parent=5 // pred_check
      _
    $region34: #{resnet50_forward.11} parent=5 // pred_check_branch
      %176 = sbr.rel (%p173) target = $region36
    $region35: #{resnet50_forward.11} parent=5 // pred_region
      %s177 = ssub.s32 %s10, 1
      %p178 = scmp.lt.s32.totalorder %s15, 1
      %s179 = scalar_select %p178, %s15, 1
      %s180 = smul.addr %s179, 30
      %s181 = smul.addr %s180, 4
      %s182 = scalar_lea.vmem %s0, %s181
      %p183 = pneg %p36
      %p184 = pneg %p33
      %p185 = pneg %p57
      %p186 = pneg %p54
      %p187 = pneg %p78
      %p188 = pneg %p75
      %p189 = scmp.lt.s32.totalorder %s15, 1
      %s190 = scalar_select %p189, %s15, 1
      %s191 = smul.addr %s190, 8
      %s192 = smul.addr %s191, 4
      %s193 = scalar_lea.vmem %s3, %s192
      %p194 = pneg %p104
      %p195 = pneg %p101
      %p196 = pneg %p130
      %p197 = pneg %p127
      %p198 = scmp.lt.s32.totalorder %s15, 1
      %s199 = scalar_select %p198, %s15, 1
      %s200 = smul.addr %s199, 8
      %s201 = smul.addr %s200, 4
      %s202 = scalar_lea.vmem %s4, %s201
      %p203 = scmp.lt.s32.totalorder %s15, 1
      %s204 = scalar_select %p203, %s15, 1
      %s205 = smul.addr %s204, 30
      %s206 = smul.addr %s205, 4
      %s207 = scalar_lea.vmem %s0, %s206
      %p208 = scmp.lt.s32.totalorder %s15, 1
      %s209 = scalar_select %p208, %s15, 1
      %s210 = smul.addr %s209, 8
      %s211 = smul.addr %s210, 4
      %s212 = scalar_lea.vmem %s3, %s211
      %p213 = scmp.lt.s32.totalorder %s15, 1
      %s214 = scalar_select %p213, %s15, 1
      %s215 = smul.addr %s214, 8
      %s216 = smul.addr %s215, 4
      %s217 = scalar_lea.vmem %s4, %s216
      %v219 = vld [vmem:[%s207] sm:$0xff]
      %v220 = vld [vmem:[%s207 + $0x8] sm:$0xf]
      %v221 = vld [vmem:[%s207 + $0xc] sm:$0xff]
      %v222 = vld [vmem:[%s207 + $0x14] sm:$0xf]
      %v223 = vld [vmem:[%s207 + $0x18] sm:$0xff]
      %v224 = vld [vmem:[%s207 + $0x20] sm:$0xf]
      %v225 = vld [vmem:[%s207 + $0x24] sm:$0xff]
      %v226 = vld [vmem:[%s207 + $0x2c] sm:$0xf]
      %v227 = vld [vmem:[%s207 + $0x30] sm:$0xff]
      %v228 = vld [vmem:[%s207 + $0x38] sm:$0xf]
      %v229 = vld [vmem:[%s207 + $0x3c] sm:$0xff]
      %v230 = vld [vmem:[%s207 + $0x44] sm:$0xf]
      %v231 = vld [vmem:[%s207 + $0x48] sm:$0xff]
      %v232 = vld [vmem:[%s207 + $0x50] sm:$0xf]
      %v233 = vld [vmem:[%s207 + $0x54] sm:$0xff]
      %v234 = vld [vmem:[%s207 + $0x5c] sm:$0xf]
      %v235 = vld [vmem:[%s1] sm:$0xf]
      %v236 = vld [vmem:[%s1 + $0x4] sm:$0xf]
      %v237 = vld [vmem:[%s1 + $0x8] sm:$0xf]
      %v238 = vld [vmem:[%s1 + $0xc] sm:$0xf]
      %v239 = vld [vmem:[%s1 + $0x10] sm:$0xf]
      %v240 = vld [vmem:[%s1 + $0x14] sm:$0xf]
      %v241 = vld [vmem:[%s1 + $0x18] sm:$0xf]
      %v242 = vld [vmem:[%s1 + $0x1c] sm:$0xf]
      %v243 = vld [vmem:[%s1 + $0x20] sm:$0xf]
      %v244 = vld [vmem:[%s1 + $0x24] sm:$0xf]
      %v245 = vld [vmem:[%s1 + $0x28] sm:$0xf]
      %v246 = vld [vmem:[%s1 + $0x2c] sm:$0xf]
      %v247 = vld [vmem:[%s1 + $0x30] sm:$0xf]
      %v248 = vld [vmem:[%s1 + $0x34] sm:$0xf]
      %v249 = vld [vmem:[%s1 + $0x38] sm:$0xf]
      %v250 = vld [vmem:[%s1 + $0x3c] sm:$0xf]
      %v251 = vld [vmem:[%s1 + $0x40] sm:$0xf]
      %v252 = vld [vmem:[%s1 + $0x44] sm:$0xf]
      %v253 = vld [vmem:[%s1 + $0x48] sm:$0xf]
      %v254 = vld [vmem:[%s1 + $0x4c] sm:$0xf]
      %v255 = vld [vmem:[%s1 + $0x50] sm:$0xf]
      %v256 = vld [vmem:[%s1 + $0x54] sm:$0xf]
      %v257 = vld [vmem:[%s1 + $0x58] sm:$0xf]
      %v258 = vld [vmem:[%s1 + $0x5c] sm:$0xf]
      %v259 = vld [vmem:[%s1 + $0x60] sm:$0xf]
      %v260 = vld [vmem:[%s1 + $0x64] sm:$0xf]
      %v261 = vld [vmem:[%s1 + $0x68] sm:$0xf]
      %v262 = vld [vmem:[%s1 + $0x6c] sm:$0xf]
      %v263 = vld [vmem:[%s1 + $0x70] sm:$0xf]
      %v264 = vld [vmem:[%s1 + $0x74] sm:$0xf]
      %v265 = vld [vmem:[%s1 + $0x78] sm:$0xf]
      %v266 = vld [vmem:[%s1 + $0x7c] sm:$0xf]
      %v267 = vld [vmem:[%s1 + $0x80] sm:$0xf]
      %v268 = vld [vmem:[%s1 + $0x84] sm:$0xf]
      %v269 = vld [vmem:[%s1 + $0x88] sm:$0xf]
      %v270 = vld [vmem:[%s1 + $0x8c] sm:$0xf]
      %v271 = vld [vmem:[%s1 + $0x90] sm:$0xf]
      %v272 = vld [vmem:[%s1 + $0x94] sm:$0xf]
      %v273 = vld [vmem:[%s1 + $0x98] sm:$0xf]
      %v274 = vld [vmem:[%s1 + $0x9c] sm:$0xf]
      %v275 = vld [vmem:[%s1 + $0xa0] sm:$0xf]
      %v276 = vld [vmem:[%s1 + $0xa4] sm:$0xf]
      %v277 = vld [vmem:[%s1 + $0xa8] sm:$0xf]
      %v278 = vld [vmem:[%s1 + $0xac] sm:$0xf]
      %v279 = vld [vmem:[%s1 + $0xb0] sm:$0xf]
      %v280 = vld [vmem:[%s1 + $0xb4] sm:$0xf]
      %v281 = vld [vmem:[%s1 + $0xb8] sm:$0xf]
      %v282 = vld [vmem:[%s1 + $0xbc] sm:$0xf]
      %s283 = scalar_lea.vmem %s207, 12
      %v284 = vld [vmem:[%s283] sm:$0xff]
      %v285 = vld [vmem:[%s283 + $0x8] sm:$0xf]
      %v286 = vld [vmem:[%s283 + $0xc] sm:$0xff]
      %v287 = vld [vmem:[%s283 + $0x14] sm:$0xf]
      %v288 = vld [vmem:[%s283 + $0x18] sm:$0xff]
      %v289 = vld [vmem:[%s283 + $0x20] sm:$0xf]
      %v290 = vld [vmem:[%s283 + $0x24] sm:$0xff]
      %v291 = vld [vmem:[%s283 + $0x2c] sm:$0xf]
      %v292 = vld [vmem:[%s283 + $0x30] sm:$0xff]
      %v293 = vld [vmem:[%s283 + $0x38] sm:$0xf]
      %v294 = vld [vmem:[%s283 + $0x3c] sm:$0xff]
      %v295 = vld [vmem:[%s283 + $0x44] sm:$0xf]
      %v296 = vld [vmem:[%s283 + $0x48] sm:$0xff]
      %v297 = vld [vmem:[%s283 + $0x50] sm:$0xf]
      %v298 = vld [vmem:[%s283 + $0x54] sm:$0xff]
      %v299 = vld [vmem:[%s283 + $0x5c] sm:$0xf]
      %s300 = scalar_lea.vmem %s1, 192
      %v301 = vld [vmem:[%s300] sm:$0xf]
      %v302 = vld [vmem:[%s300 + $0x4] sm:$0xf]
      %v303 = vld [vmem:[%s300 + $0x8] sm:$0xf]
      %v304 = vld [vmem:[%s300 + $0xc] sm:$0xf]
      %v305 = vld [vmem:[%s300 + $0x10] sm:$0xf]
      %v306 = vld [vmem:[%s300 + $0x14] sm:$0xf]
      %v307 = vld [vmem:[%s300 + $0x18] sm:$0xf]
      %v308 = vld [vmem:[%s300 + $0x1c] sm:$0xf]
      %v309 = vld [vmem:[%s300 + $0x20] sm:$0xf]
      %v310 = vld [vmem:[%s300 + $0x24] sm:$0xf]
      %v311 = vld [vmem:[%s300 + $0x28] sm:$0xf]
      %v312 = vld [vmem:[%s300 + $0x2c] sm:$0xf]
      %v313 = vld [vmem:[%s300 + $0x30] sm:$0xf]
      %v314 = vld [vmem:[%s300 + $0x34] sm:$0xf]
      %v315 = vld [vmem:[%s300 + $0x38] sm:$0xf]
      %v316 = vld [vmem:[%s300 + $0x3c] sm:$0xf]
      %v317 = vld [vmem:[%s300 + $0x40] sm:$0xf]
      %v318 = vld [vmem:[%s300 + $0x44] sm:$0xf]
      %v319 = vld [vmem:[%s300 + $0x48] sm:$0xf]
      %v320 = vld [vmem:[%s300 + $0x4c] sm:$0xf]
      %v321 = vld [vmem:[%s300 + $0x50] sm:$0xf]
      %v322 = vld [vmem:[%s300 + $0x54] sm:$0xf]
      %v323 = vld [vmem:[%s300 + $0x58] sm:$0xf]
      %v324 = vld [vmem:[%s300 + $0x5c] sm:$0xf]
      %v325 = vld [vmem:[%s300 + $0x60] sm:$0xf]
      %v326 = vld [vmem:[%s300 + $0x64] sm:$0xf]
      %v327 = vld [vmem:[%s300 + $0x68] sm:$0xf]
      %v328 = vld [vmem:[%s300 + $0x6c] sm:$0xf]
      %v329 = vld [vmem:[%s300 + $0x70] sm:$0xf]
      %v330 = vld [vmem:[%s300 + $0x74] sm:$0xf]
      %v331 = vld [vmem:[%s300 + $0x78] sm:$0xf]
      %v332 = vld [vmem:[%s300 + $0x7c] sm:$0xf]
      %v333 = vld [vmem:[%s300 + $0x80] sm:$0xf]
      %v334 = vld [vmem:[%s300 + $0x84] sm:$0xf]
      %v335 = vld [vmem:[%s300 + $0x88] sm:$0xf]
      %v336 = vld [vmem:[%s300 + $0x8c] sm:$0xf]
      %v337 = vld [vmem:[%s300 + $0x90] sm:$0xf]
      %v338 = vld [vmem:[%s300 + $0x94] sm:$0xf]
      %v339 = vld [vmem:[%s300 + $0x98] sm:$0xf]
      %v340 = vld [vmem:[%s300 + $0x9c] sm:$0xf]
      %v341 = vld [vmem:[%s300 + $0xa0] sm:$0xf]
      %v342 = vld [vmem:[%s300 + $0xa4] sm:$0xf]
      %v343 = vld [vmem:[%s300 + $0xa8] sm:$0xf]
      %v344 = vld [vmem:[%s300 + $0xac] sm:$0xf]
      %v345 = vld [vmem:[%s300 + $0xb0] sm:$0xf]
      %v346 = vld [vmem:[%s300 + $0xb4] sm:$0xf]
      %v347 = vld [vmem:[%s300 + $0xb8] sm:$0xf]
      %v348 = vld [vmem:[%s300 + $0xbc] sm:$0xf]
      %v365 = vunpack.c.l.b16 %v284
      %v366 = vunpack.c.h.b16 %v284
      %v367 = vunpack.c.l.b16 %v285
      %v368 = vunpack.c.l.b16 %v286
      %v369 = vunpack.c.h.b16 %v286
      %v370 = vunpack.c.l.b16 %v287
      %v371 = vunpack.c.l.b16 %v288
      %v372 = vunpack.c.h.b16 %v288
      %v373 = vunpack.c.l.b16 %v289
      %v374 = vunpack.c.l.b16 %v290
      %v375 = vunpack.c.h.b16 %v290
      %v376 = vunpack.c.l.b16 %v291
      %v377 = vunpack.c.l.b16 %v292
      %v378 = vunpack.c.h.b16 %v292
      %v379 = vunpack.c.l.b16 %v293
      %v380 = vunpack.c.l.b16 %v294
      %v381 = vunpack.c.h.b16 %v294
      %v382 = vunpack.c.l.b16 %v295
      %v383 = vunpack.c.l.b16 %v296
      %v384 = vunpack.c.h.b16 %v296
      %v385 = vunpack.c.l.b16 %v297
      %v386 = vunpack.c.l.b16 %v298
      %v387 = vunpack.c.h.b16 %v298
      %v388 = vunpack.c.l.b16 %v299
      %v389 = vpack.c.b16 %v368, %v365
      %v390 = vpack.c.b16 %v369, %v366
      %v391 = vpack.c.b16 %v370, %v367
      %v392 = vpack.c.b16 %v374, %v371
      %v393 = vpack.c.b16 %v375, %v372
      %v394 = vpack.c.b16 %v376, %v373
      %v395 = vpack.c.b16 %v380, %v377
      %v396 = vpack.c.b16 %v381, %v378
      %v397 = vpack.c.b16 %v382, %v379
      %v398 = vpack.c.b16 %v386, %v383
      %v399 = vpack.c.b16 %v387, %v384
      %v400 = vpack.c.b16 %v388, %v385
      %v461 = vunpack.c.l.b16 %v301
      %v462 = vunpack.c.l.b16 %v302
      %v463 = vunpack.c.l.b16 %v303
      %v464 = vunpack.c.l.b16 %v304
      %v465 = vunpack.c.l.b16 %v305
      %v466 = vunpack.c.l.b16 %v306
      %v467 = vunpack.c.l.b16 %v307
      %v468 = vunpack.c.l.b16 %v308
      %v469 = vunpack.c.l.b16 %v309
      %v470 = vunpack.c.l.b16 %v310
      %v471 = vunpack.c.l.b16 %v311
      %v472 = vunpack.c.l.b16 %v312
      %v473 = vunpack.c.l.b16 %v313
      %v474 = vunpack.c.l.b16 %v314
      %v475 = vunpack.c.l.b16 %v315
      %v476 = vunpack.c.l.b16 %v316
      %v477 = vunpack.c.l.b16 %v317
      %v478 = vunpack.c.l.b16 %v318
      %v479 = vunpack.c.l.b16 %v319
      %v480 = vunpack.c.l.b16 %v320
      %v481 = vunpack.c.l.b16 %v321
      %v482 = vunpack.c.l.b16 %v322
      %v483 = vunpack.c.l.b16 %v323
      %v484 = vunpack.c.l.b16 %v324
      %v485 = vunpack.c.l.b16 %v325
      %v486 = vunpack.c.l.b16 %v326
      %v487 = vunpack.c.l.b16 %v327
      %v488 = vunpack.c.l.b16 %v328
      %v489 = vunpack.c.l.b16 %v329
      %v490 = vunpack.c.l.b16 %v330
      %v491 = vunpack.c.l.b16 %v331
      %v492 = vunpack.c.l.b16 %v332
      %v493 = vunpack.c.l.b16 %v333
      %v494 = vunpack.c.l.b16 %v334
      %v495 = vunpack.c.l.b16 %v335
      %v496 = vunpack.c.l.b16 %v336
      %v497 = vunpack.c.l.b16 %v337
      %v498 = vunpack.c.l.b16 %v338
      %v499 = vunpack.c.l.b16 %v339
      %v500 = vunpack.c.l.b16 %v340
      %v501 = vunpack.c.l.b16 %v341
      %v502 = vunpack.c.l.b16 %v342
      %v503 = vunpack.c.l.b16 %v343
      %v504 = vunpack.c.l.b16 %v344
      %v505 = vunpack.c.l.b16 %v345
      %v506 = vunpack.c.l.b16 %v346
      %v507 = vunpack.c.l.b16 %v347
      %v508 = vunpack.c.l.b16 %v348
      %v509 = vpack.c.b16 %v462, %v461
      %v510 = vpack.c.b16 %v464, %v463
      %v511 = vpack.c.b16 %v466, %v465
      %v512 = vpack.c.b16 %v468, %v467
      %v513 = vpack.c.b16 %v470, %v469
      %v514 = vpack.c.b16 %v472, %v471
      %v515 = vpack.c.b16 %v474, %v473
      %v516 = vpack.c.b16 %v476, %v475
      %v517 = vpack.c.b16 %v478, %v477
      %v518 = vpack.c.b16 %v480, %v479
      %v519 = vpack.c.b16 %v482, %v481
      %v520 = vpack.c.b16 %v484, %v483
      %v521 = vpack.c.b16 %v486, %v485
      %v522 = vpack.c.b16 %v488, %v487
      %v523 = vpack.c.b16 %v490, %v489
      %v524 = vpack.c.b16 %v492, %v491
      %v525 = vpack.c.b16 %v494, %v493
      %v526 = vpack.c.b16 %v496, %v495
      %v527 = vpack.c.b16 %v498, %v497
      %v528 = vpack.c.b16 %v500, %v499
      %v529 = vpack.c.b16 %v502, %v501
      %v530 = vpack.c.b16 %v504, %v503
      %v531 = vpack.c.b16 %v506, %v505
      %v532 = vpack.c.b16 %v508, %v507
      %557 = vmatprep.subr.bf16.mxu0 0
      %558 = vmatpush1.bf16.msra.mxu0 %v509
      %559 = vmatprep.subr.bf16.mxu0 0
      %560 = vmatpush1.bf16.msra.mxu0 %v510
      %561 = vmatprep.subr.bf16.mxu0 0
      %562 = vmatpush1.bf16.msra.mxu0 %v511
      %563 = vmatprep.subr.bf16.mxu0 0
      %564 = vmatpush1.bf16.msra.mxu0 %v512
      %565 = vmatprep.subr.bf16.mxu0 0
      %566 = vmatpush1.bf16.msra.mxu0 %v513
      %567 = vmatprep.subr.bf16.mxu0 0
      %568 = vmatpush1.bf16.msra.mxu0 %v514
      %569 = vmatprep.subr.bf16.mxu0 0
      %570 = vmatpush1.bf16.msra.mxu0 %v515
      %571 = vmatprep.subr.bf16.mxu0 0
      %572 = vmatpush1.bf16.msra.mxu0 %v516
      %573 = vmatprep.subr.bf16.mxu0 0
      %574 = vmatpush1.bf16.msra.mxu0 %v517
      %575 = vmatprep.subr.bf16.mxu0 0
      %576 = vmatpush1.bf16.msra.mxu0 %v518
      %577 = vmatprep.subr.bf16.mxu0 0
      %578 = vmatpush1.bf16.msra.mxu0 %v519
      %579 = vmatprep.subr.bf16.mxu0 0
      %580 = vmatpush1.bf16.msra.mxu0 %v520
      %581 = vmatprep.subr.bf16.mxu0 0
      %582 = vmatpush1.bf16.msra.mxu0 %v521
      %583 = vmatprep.subr.bf16.mxu0 0
      %584 = vmatpush1.bf16.msra.mxu0 %v522
      %585 = vmatprep.subr.bf16.mxu0 0
      %586 = vmatpush1.bf16.msra.mxu0 %v523
      %587 = vmatprep.subr.bf16.mxu0 0
      %588 = vmatpush1.bf16.msra.mxu0 %v524
      %589 = vmatprep.mubr.bf16.mxu0 %v390
      %590 = vmatmul.mubr.bf16.gmra.mrb[0].mxu0 %v389
      %v591 = vpop.f32.mrb[0].mxu0
      %v592 = vadd.f32 0.0, %v591
      %v593 = vpop.f32.mrb[0].mxu0
      %v594 = vpop.f32.mrb[0].mxu0
      %v595 = vadd.f32 0.0, %v594
      %v596 = vpop.f32.mrb[0].mxu0
      %597 = vmatprep.mubr.bf16.mxu0 %v393
      %598 = vmatmul.mubr.bf16.gmra.mrb[0].mxu0 %v392
      %v599 = vpop.f32.mrb[0].mxu0
      %v600 = vadd.f32 0.0, %v599
      %v601 = vpop.f32.mrb[0].mxu0
      %v602 = vpop.f32.mrb[0].mxu0
      %v603 = vadd.f32 0.0, %v602
      %v604 = vpop.f32.mrb[0].mxu0
      %605 = vmatprep.mubr.bf16.mxu0 %v396
      %606 = vmatmul.mubr.bf16.gmra.mrb[0].mxu0 %v395
      %v607 = vpop.f32.mrb[0].mxu0
      %v608 = vadd.f32 0.0, %v607
      %v609 = vpop.f32.mrb[0].mxu0
      %v610 = vpop.f32.mrb[0].mxu0
      %v611 = vadd.f32 0.0, %v610
      %v612 = vpop.f32.mrb[0].mxu0
      %613 = vmatprep.mubr.bf16.mxu0 %v399
      %614 = vmatmul.mubr.bf16.gmra.mrb[0].mxu0 %v398
      %v615 = vpop.f32.mrb[0].mxu0
      %v616 = vadd.f32 0.0, %v615
      %v617 = vpop.f32.mrb[0].mxu0
      %v618 = vpop.f32.mrb[0].mxu0
      %v619 = vadd.f32 0.0, %v618
      %v620 = vpop.f32.mrb[0].mxu0
      %621 = vdwg.mxu0
      %622 = vmatprep.subr.bf16.mxu0 0
      %623 = vmatpush1.bf16.msra.mxu0 %v525
      %624 = vmatprep.subr.bf16.mxu0 0
      %625 = vmatpush1.bf16.msra.mxu0 %v526
      %626 = vmatprep.subr.bf16.mxu0 0
      %627 = vmatpush1.bf16.msra.mxu0 %v527
      %628 = vmatprep.subr.bf16.mxu0 0
      %629 = vmatpush1.bf16.msra.mxu0 %v528
      %630 = vmatprep.subr.bf16.mxu0 0
      %631 = vmatpush1.bf16.msra.mxu0 %v529
      %632 = vmatprep.subr.bf16.mxu0 0
      %633 = vmatpush1.bf16.msra.mxu0 %v530
      %634 = vmatprep.subr.bf16.mxu0 0
      %635 = vmatpush1.bf16.msra.mxu0 %v531
      %636 = vmatprep.subr.bf16.mxu0 0
      %637 = vmatpush1.bf16.msra.mxu0 %v532
      %638 = vmatprep.subr.bf16.mxu0 0
      %639 = vmatpush1.bf16.msra.mxu0 0
      %640 = vmatprep.subr.bf16.mxu0 0
      %641 = vmatpush1.bf16.msra.mxu0 0
      %642 = vmatprep.subr.bf16.mxu0 0
      %643 = vmatpush1.bf16.msra.mxu0 0
      %644 = vmatprep.subr.bf16.mxu0 0
      %645 = vmatpush1.bf16.msra.mxu0 0
      %646 = vmatprep.subr.bf16.mxu0 0
      %647 = vmatpush1.bf16.msra.mxu0 0
      %648 = vmatprep.subr.bf16.mxu0 0
      %649 = vmatpush1.bf16.msra.mxu0 0
      %650 = vmatprep.subr.bf16.mxu0 0
      %651 = vmatpush1.bf16.msra.mxu0 0
      %652 = vmatprep.subr.bf16.mxu0 0
      %653 = vmatpush1.bf16.msra.mxu0 0
      %654 = vmatprep.mubr.bf16.mxu0 0
      %655 = vmatmul.mubr.bf16.gmra.mrb[0].mxu0 %v391
      %v656 = vpop.f32.mrb[0].mxu0
      %v657 = vadd.f32 %v592, %v656
      %v658 = vpop.f32.mrb[0].mxu0
      %v659 = vpop.f32.mrb[0].mxu0
      %v660 = vadd.f32 %v595, %v659
      %v661 = vpop.f32.mrb[0].mxu0
      %662 = vmatprep.mubr.bf16.mxu0 0
      %663 = vmatmul.mubr.bf16.gmra.mrb[0].mxu0 %v394
      %v664 = vpop.f32.mrb[0].mxu0
      %v665 = vadd.f32 %v600, %v664
      %v666 = vpop.f32.mrb[0].mxu0
      %v667 = vpop.f32.mrb[0].mxu0
      %v668 = vadd.f32 %v603, %v667
      %v669 = vpop.f32.mrb[0].mxu0
      %670 = vmatprep.mubr.bf16.mxu0 0
      %671 = vmatmul.mubr.bf16.gmra.mrb[0].mxu0 %v397
      %v672 = vpop.f32.mrb[0].mxu0
      %v673 = vadd.f32 %v608, %v672
      %v674 = vpop.f32.mrb[0].mxu0
      %v675 = vpop.f32.mrb[0].mxu0
      %v676 = vadd.f32 %v611, %v675
      %v677 = vpop.f32.mrb[0].mxu0
      %678 = vmatprep.mubr.bf16.mxu0 0
      %679 = vmatmul.mubr.bf16.gmra.mrb[0].mxu0 %v400
      %v680 = vpop.f32.mrb[0].mxu0
      %v681 = vadd.f32 %v616, %v680
      %v682 = vpop.f32.mrb[0].mxu0
      %v683 = vpop.f32.mrb[0].mxu0
      %v684 = vadd.f32 %v619, %v683
      %v685 = vpop.f32.mrb[0].mxu0
      %686 = vdwg.mxu0
      %v703 = vunpack.c.l.b16 %v219
      %v704 = vunpack.c.h.b16 %v219
      %v705 = vunpack.c.l.b16 %v220
      %v706 = vunpack.c.l.b16 %v221
      %v707 = vunpack.c.h.b16 %v221
      %v708 = vunpack.c.l.b16 %v222
      %v709 = vunpack.c.l.b16 %v223
      %v710 = vunpack.c.h.b16 %v223
      %v711 = vunpack.c.l.b16 %v224
      %v712 = vunpack.c.l.b16 %v225
      %v713 = vunpack.c.h.b16 %v225
      %v714 = vunpack.c.l.b16 %v226
      %v715 = vunpack.c.l.b16 %v227
      %v716 = vunpack.c.h.b16 %v227
      %v717 = vunpack.c.l.b16 %v228
      %v718 = vunpack.c.l.b16 %v229
      %v719 = vunpack.c.h.b16 %v229
      %v720 = vunpack.c.l.b16 %v230
      %v721 = vunpack.c.l.b16 %v231
      %v722 = vunpack.c.h.b16 %v231
      %v723 = vunpack.c.l.b16 %v232
      %v724 = vunpack.c.l.b16 %v233
      %v725 = vunpack.c.h.b16 %v233
      %v726 = vunpack.c.l.b16 %v234
      %v727 = vpack.c.b16 %v706, %v703
      %v728 = vpack.c.b16 %v707, %v704
      %v729 = vpack.c.b16 %v708, %v705
      %v730 = vpack.c.b16 %v712, %v709
      %v731 = vpack.c.b16 %v713, %v710
      %v732 = vpack.c.b16 %v714, %v711
      %v733 = vpack.c.b16 %v718, %v715
      %v734 = vpack.c.b16 %v719, %v716
      %v735 = vpack.c.b16 %v720, %v717
      %v736 = vpack.c.b16 %v724, %v721
      %v737 = vpack.c.b16 %v725, %v722
      %v738 = vpack.c.b16 %v726, %v723
      %v799 = vunpack.c.l.b16 %v235
      %v800 = vunpack.c.l.b16 %v236
      %v801 = vunpack.c.l.b16 %v237
      %v802 = vunpack.c.l.b16 %v238
      %v803 = vunpack.c.l.b16 %v239
      %v804 = vunpack.c.l.b16 %v240
      %v805 = vunpack.c.l.b16 %v241
      %v806 = vunpack.c.l.b16 %v242
      %v807 = vunpack.c.l.b16 %v243
      %v808 = vunpack.c.l.b16 %v244
      %v809 = vunpack.c.l.b16 %v245
      %v810 = vunpack.c.l.b16 %v246
      %v811 = vunpack.c.l.b16 %v247
      %v812 = vunpack.c.l.b16 %v248
      %v813 = vunpack.c.l.b16 %v249
      %v814 = vunpack.c.l.b16 %v250
      %v815 = vunpack.c.l.b16 %v251
      %v816 = vunpack.c.l.b16 %v252
      %v817 = vunpack.c.l.b16 %v253
      %v818 = vunpack.c.l.b16 %v254
      %v819 = vunpack.c.l.b16 %v255
      %v820 = vunpack.c.l.b16 %v256
      %v821 = vunpack.c.l.b16 %v257
      %v822 = vunpack.c.l.b16 %v258
      %v823 = vunpack.c.l.b16 %v259
      %v824 = vunpack.c.l.b16 %v260
      %v825 = vunpack.c.l.b16 %v261
      %v826 = vunpack.c.l.b16 %v262
      %v827 = vunpack.c.l.b16 %v263
      %v828 = vunpack.c.l.b16 %v264
      %v829 = vunpack.c.l.b16 %v265
      %v830 = vunpack.c.l.b16 %v266
      %v831 = vunpack.c.l.b16 %v267
      %v832 = vunpack.c.l.b16 %v268
      %v833 = vunpack.c.l.b16 %v269
      %v834 = vunpack.c.l.b16 %v270
      %v835 = vunpack.c.l.b16 %v271
      %v836 = vunpack.c.l.b16 %v272
      %v837 = vunpack.c.l.b16 %v273
      %v838 = vunpack.c.l.b16 %v274
      %v839 = vunpack.c.l.b16 %v275
      %v840 = vunpack.c.l.b16 %v276
      %v841 = vunpack.c.l.b16 %v277
      %v842 = vunpack.c.l.b16 %v278
      %v843 = vunpack.c.l.b16 %v279
      %v844 = vunpack.c.l.b16 %v280
      %v845 = vunpack.c.l.b16 %v281
      %v846 = vunpack.c.l.b16 %v282
      %v847 = vpack.c.b16 %v800, %v799
      %v848 = vpack.c.b16 %v802, %v801
      %v849 = vpack.c.b16 %v804, %v803
      %v850 = vpack.c.b16 %v806, %v805
      %v851 = vpack.c.b16 %v808, %v807
      %v852 = vpack.c.b16 %v810, %v809
      %v853 = vpack.c.b16 %v812, %v811
      %v854 = vpack.c.b16 %v814, %v813
      %v855 = vpack.c.b16 %v816, %v815
      %v856 = vpack.c.b16 %v818, %v817
      %v857 = vpack.c.b16 %v820, %v819
      %v858 = vpack.c.b16 %v822, %v821
      %v859 = vpack.c.b16 %v824, %v823
      %v860 = vpack.c.b16 %v826, %v825
      %v861 = vpack.c.b16 %v828, %v827
      %v862 = vpack.c.b16 %v830, %v829
      %v863 = vpack.c.b16 %v832, %v831
      %v864 = vpack.c.b16 %v834, %v833
      %v865 = vpack.c.b16 %v836, %v835
      %v866 = vpack.c.b16 %v838, %v837
      %v867 = vpack.c.b16 %v840, %v839
      %v868 = vpack.c.b16 %v842, %v841
      %v869 = vpack.c.b16 %v844, %v843
      %v870 = vpack.c.b16 %v846, %v845
      %895 = vmatprep.subr.bf16.mxu0 0
      %896 = vmatpush1.bf16.msra.mxu0 %v847
      %897 = vmatprep.subr.bf16.mxu0 0
      %898 = vmatpush1.bf16.msra.mxu0 %v848
      %899 = vmatprep.subr.bf16.mxu0 0
      %900 = vmatpush1.bf16.msra.mxu0 %v849
      %901 = vmatprep.subr.bf16.mxu0 0
      %902 = vmatpush1.bf16.msra.mxu0 %v850
      %903 = vmatprep.subr.bf16.mxu0 0
      %904 = vmatpush1.bf16.msra.mxu0 %v851
      %905 = vmatprep.subr.bf16.mxu0 0
      %906 = vmatpush1.bf16.msra.mxu0 %v852
      %907 = vmatprep.subr.bf16.mxu0 0
      %908 = vmatpush1.bf16.msra.mxu0 %v853
      %909 = vmatprep.subr.bf16.mxu0 0
      %910 = vmatpush1.bf16.msra.mxu0 %v854
      %911 = vmatprep.subr.bf16.mxu0 0
      %912 = vmatpush1.bf16.msra.mxu0 %v855
      %913 = vmatprep.subr.bf16.mxu0 0
      %914 = vmatpush1.bf16.msra.mxu0 %v856
      %915 = vmatprep.subr.bf16.mxu0 0
      %916 = vmatpush1.bf16.msra.mxu0 %v857
      %917 = vmatprep.subr.bf16.mxu0 0
      %918 = vmatpush1.bf16.msra.mxu0 %v858
      %919 = vmatprep.subr.bf16.mxu0 0
      %920 = vmatpush1.bf16.msra.mxu0 %v859
      %921 = vmatprep.subr.bf16.mxu0 0
      %922 = vmatpush1.bf16.msra.mxu0 %v860
      %923 = vmatprep.subr.bf16.mxu0 0
      %924 = vmatpush1.bf16.msra.mxu0 %v861
      %925 = vmatprep.subr.bf16.mxu0 0
      %926 = vmatpush1.bf16.msra.mxu0 %v862
      %927 = vmatprep.mubr.bf16.mxu0 %v728
      %928 = vmatmul.mubr.bf16.gmra.mrb[0].mxu0 %v727
      %v929 = vpop.f32.mrb[0].mxu0
      %v930 = vadd.f32 %v657, %v929
      %v931 = vpop.f32.mrb[0].mxu0
      %v932 = vpop.f32.mrb[0].mxu0
      %v933 = vadd.f32 %v660, %v932
      %v934 = vpop.f32.mrb[0].mxu0
      %935 = vmatprep.mubr.bf16.mxu0 %v731
      %936 = vmatmul.mubr.bf16.gmra.mrb[0].mxu0 %v730
      %v937 = vpop.f32.mrb[0].mxu0
      %v938 = vadd.f32 %v665, %v937
      %v939 = vpop.f32.mrb[0].mxu0
      %v940 = vpop.f32.mrb[0].mxu0
      %v941 = vadd.f32 %v668, %v940
      %v942 = vpop.f32.mrb[0].mxu0
      %943 = vmatprep.mubr.bf16.mxu0 %v734
      %944 = vmatmul.mubr.bf16.gmra.mrb[0].mxu0 %v733
      %v945 = vpop.f32.mrb[0].mxu0
      %v946 = vadd.f32 %v673, %v945
      %v947 = vpop.f32.mrb[0].mxu0
      %v948 = vpop.f32.mrb[0].mxu0
      %v949 = vadd.f32 %v676, %v948
      %v950 = vpop.f32.mrb[0].mxu0
      %951 = vmatprep.mubr.bf16.mxu0 %v737
      %952 = vmatmul.mubr.bf16.gmra.mrb[0].mxu0 %v736
      %v953 = vpop.f32.mrb[0].mxu0
      %v954 = vadd.f32 %v681, %v953
      %v955 = vpop.f32.mrb[0].mxu0
      %v956 = vpop.f32.mrb[0].mxu0
      %v957 = vadd.f32 %v684, %v956
      %v958 = vpop.f32.mrb[0].mxu0
      %959 = vdwg.mxu0
      %960 = vmatprep.subr.bf16.mxu0 0
      %961 = vmatpush1.bf16.msra.mxu0 %v863
      %962 = vmatprep.subr.bf16.mxu0 0
      %963 = vmatpush1.bf16.msra.mxu0 %v864
      %964 = vmatprep.subr.bf16.mxu0 0
      %965 = vmatpush1.bf16.msra.mxu0 %v865
      %966 = vmatprep.subr.bf16.mxu0 0
      %967 = vmatpush1.bf16.msra.mxu0 %v866
      %968 = vmatprep.subr.bf16.mxu0 0
      %969 = vmatpush1.bf16.msra.mxu0 %v867
      %970 = vmatprep.subr.bf16.mxu0 0
      %971 = vmatpush1.bf16.msra.mxu0 %v868
      %972 = vmatprep.subr.bf16.mxu0 0
      %973 = vmatpush1.bf16.msra.mxu0 %v869
      %974 = vmatprep.subr.bf16.mxu0 0
      %975 = vmatpush1.bf16.msra.mxu0 %v870
      %976 = vmatprep.subr.bf16.mxu0 0
      %977 = vmatpush1.bf16.msra.mxu0 0
      %978 = vmatprep.subr.bf16.mxu0 0
      %979 = vmatpush1.bf16.msra.mxu0 0
      %980 = vmatprep.subr.bf16.mxu0 0
      %981 = vmatpush1.bf16.msra.mxu0 0
      %982 = vmatprep.subr.bf16.mxu0 0
      %983 = vmatpush1.bf16.msra.mxu0 0
      %984 = vmatprep.subr.bf16.mxu0 0
      %985 = vmatpush1.bf16.msra.mxu0 0
      %986 = vmatprep.subr.bf16.mxu0 0
      %987 = vmatpush1.bf16.msra.mxu0 0
      %988 = vmatprep.subr.bf16.mxu0 0
      %989 = vmatpush1.bf16.msra.mxu0 0
      %990 = vmatprep.subr.bf16.mxu0 0
      %991 = vmatpush1.bf16.msra.mxu0 0
      %992 = vmatprep.mubr.bf16.mxu0 0
      %993 = vmatmul.mubr.bf16.gmra.mrb[0].mxu0 %v729
      %v994 = vpop.f32.mrb[0].mxu0
      %v995 = vadd.f32 %v930, %v994
      %v996 = vpop.f32.mrb[0].mxu0
      %v997 = vpop.f32.mrb[0].mxu0
      %v998 = vadd.f32 %v933, %v997
      %v999 = vpop.f32.mrb[0].mxu0
      %1000 = vmatprep.mubr.bf16.mxu0 0
      %1001 = vmatmul.mubr.bf16.gmra.mrb[0].mxu0 %v732
      %v1002 = vpop.f32.mrb[0].mxu0
      %v1003 = vadd.f32 %v938, %v1002
      %v1004 = vpop.f32.mrb[0].mxu0
      %v1005 = vpop.f32.mrb[0].mxu0
      %v1006 = vadd.f32 %v941, %v1005
      %v1007 = vpop.f32.mrb[0].mxu0
      %1008 = vmatprep.mubr.bf16.mxu0 0
      %1009 = vmatmul.mubr.bf16.gmra.mrb[0].mxu0 %v735
      %v1010 = vpop.f32.mrb[0].mxu0
      %v1011 = vadd.f32 %v946, %v1010
      %v1012 = vpop.f32.mrb[0].mxu0
      %v1013 = vpop.f32.mrb[0].mxu0
      %v1014 = vadd.f32 %v949, %v1013
      %v1015 = vpop.f32.mrb[0].mxu0
      %1016 = vmatprep.mubr.bf16.mxu0 0
      %1017 = vmatmul.mubr.bf16.gmra.mrb[0].mxu0 %v738
      %v1018 = vpop.f32.mrb[0].mxu0
      %v1019 = vadd.f32 %v954, %v1018
      %v1020 = vpop.f32.mrb[0].mxu0
      %v1021 = vpop.f32.mrb[0].mxu0
      %v1022 = vadd.f32 %v957, %v1021
      %v1023 = vpop.f32.mrb[0].mxu0
      %1024 = vdwg.mxu0
      %s1025 = scalar_lea.vmem %s207, 24
      %v1026 = vld [vmem:[%s1025] sm:$0xff]
      %v1027 = vld [vmem:[%s1025 + $0x8] sm:$0xf]
      %v1028 = vld [vmem:[%s1025 + $0xc] sm:$0xff]
      %v1029 = vld [vmem:[%s1025 + $0x14] sm:$0xf]
      %v1030 = vld [vmem:[%s1025 + $0x18] sm:$0xff]
      %v1031 = vld [vmem:[%s1025 + $0x20] sm:$0xf]
      %v1032 = vld [vmem:[%s1025 + $0x24] sm:$0xff]
      %v1033 = vld [vmem:[%s1025 + $0x2c] sm:$0xf]
      %v1034 = vld [vmem:[%s1025 + $0x30] sm:$0xff]
      %v1035 = vld [vmem:[%s1025 + $0x38] sm:$0xf]
      %v1036 = vld [vmem:[%s1025 + $0x3c] sm:$0xff]
      %v1037 = vld [vmem:[%s1025 + $0x44] sm:$0xf]
      %v1038 = vld [vmem:[%s1025 + $0x48] sm:$0xff]
      %v1039 = vld [vmem:[%s1025 + $0x50] sm:$0xf]
      %v1040 = vld [vmem:[%s1025 + $0x54] sm:$0xff]
      %v1041 = vld [vmem:[%s1025 + $0x5c] sm:$0xf]
      %s1042 = scalar_lea.vmem %s1, 384
      %v1043 = vld [vmem:[%s1042] sm:$0xf]
      %v1044 = vld [vmem:[%s1042 + $0x4] sm:$0xf]
      %v1045 = vld [vmem:[%s1042 + $0x8] sm:$0xf]
      %v1046 = vld [vmem:[%s1042 + $0xc] sm:$0xf]
      %v1047 = vld [vmem:[%s1042 + $0x10] sm:$0xf]
      %v1048 = vld [vmem:[%s1042 + $0x14] sm:$0xf]
      %v1049 = vld [vmem:[%s1042 + $0x18] sm:$0xf]
      %v1050 = vld [vmem:[%s1042 + $0x1c] sm:$0xf]
      %v1051 = vld [vmem:[%s1042 + $0x20] sm:$0xf]
      %v1052 = vld [vmem:[%s1042 + $0x24] sm:$0xf]
      %v1053 = vld [vmem:[%s1042 + $0x28] sm:$0xf]
      %v1054 = vld [vmem:[%s1042 + $0x2c] sm:$0xf]
      %v1055 = vld [vmem:[%s1042 + $0x30] sm:$0xf]
      %v1056 = vld [vmem:[%s1042 + $0x34] sm:$0xf]
      %v1057 = vld [vmem:[%s1042 + $0x38] sm:$0xf]
      %v1058 = vld [vmem:[%s1042 + $0x3c] sm:$0xf]
      %v1059 = vld [vmem:[%s1042 + $0x40] sm:$0xf]
      %v1060 = vld [vmem:[%s1042 + $0x44] sm:$0xf]
      %v1061 = vld [vmem:[%s1042 + $0x48] sm:$0xf]
      %v1062 = vld [vmem:[%s1042 + $0x4c] sm:$0xf]
      %v1063 = vld [vmem:[%s1042 + $0x50] sm:$0xf]
      %v1064 = vld [vmem:[%s1042 + $0x54] sm:$0xf]
      %v1065 = vld [vmem:[%s1042 + $0x58] sm:$0xf]
      %v1066 = vld [vmem:[%s1042 + $0x5c] sm:$0xf]
      %v1067 = vld [vmem:[%s1042 + $0x60] sm:$0xf]
      %v1068 = vld [vmem:[%s1042 + $0x64] sm:$0xf]
      %v1069 = vld [vmem:[%s1042 + $0x68] sm:$0xf]
      %v1070 = vld [vmem:[%s1042 + $0x6c] sm:$0xf]
      %v1071 = vld [vmem:[%s1042 + $0x70] sm:$0xf]
      %v1072 = vld [vmem:[%s1042 + $0x74] sm:$0xf]
      %v1073 = vld [vmem:[%s1042 + $0x78] sm:$0xf]
      %v1074 = vld [vmem:[%s1042 + $0x7c] sm:$0xf]
      %v1075 = vld [vmem:[%s1042 + $0x80] sm:$0xf]
      %v1076 = vld [vmem:[%s1042 + $0x84] sm:$0xf]
      %v1077 = vld [vmem:[%s1042 + $0x88] sm:$0xf]
      %v1078 = vld [vmem:[%s1042 + $0x8c] sm:$0xf]
      %v1079 = vld [vmem:[%s1042 + $0x90] sm:$0xf]
      %v1080 = vld [vmem:[%s1042 + $0x94] sm:$0xf]
      %v1081 = vld [vmem:[%s1042 + $0x98] sm:$0xf]
      %v1082 = vld [vmem:[%s1042 + $0x9c] sm:$0xf]
      %v1083 = vld [vmem:[%s1042 + $0xa0] sm:$0xf]
      %v1084 = vld [vmem:[%s1042 + $0xa4] sm:$0xf]
      %v1085 = vld [vmem:[%s1042 + $0xa8] sm:$0xf]
      %v1086 = vld [vmem:[%s1042 + $0xac] sm:$0xf]
      %v1087 = vld [vmem:[%s1042 + $0xb0] sm:$0xf]
      %v1088 = vld [vmem:[%s1042 + $0xb4] sm:$0xf]
      %v1089 = vld [vmem:[%s1042 + $0xb8] sm:$0xf]
      %v1090 = vld [vmem:[%s1042 + $0xbc] sm:$0xf]
      %v1107 = vunpack.c.l.b16 %v1026
      %v1108 = vunpack.c.h.b16 %v1026
      %v1109 = vunpack.c.l.b16 %v1027
      %v1110 = vunpack.c.l.b16 %v1028
      %v1111 = vunpack.c.h.b16 %v1028
      %v1112 = vunpack.c.l.b16 %v1029
      %v1113 = vunpack.c.l.b16 %v1030
      %v1114 = vunpack.c.h.b16 %v1030
      %v1115 = vunpack.c.l.b16 %v1031
      %v1116 = vunpack.c.l.b16 %v1032
      %v1117 = vunpack.c.h.b16 %v1032
      %v1118 = vunpack.c.l.b16 %v1033
      %v1119 = vunpack.c.l.b16 %v1034
      %v1120 = vunpack.c.h.b16 %v1034
      %v1121 = vunpack.c.l.b16 %v1035
      %v1122 = vunpack.c.l.b16 %v1036
      %v1123 = vunpack.c.h.b16 %v1036
      %v1124 = vunpack.c.l.b16 %v1037
      %v1125 = vunpack.c.l.b16 %v1038
      %v1126 = vunpack.c.h.b16 %v1038
      %v1127 = vunpack.c.l.b16 %v1039
      %v1128 = vunpack.c.l.b16 %v1040
      %v1129 = vunpack.c.h.b16 %v1040
      %v1130 = vunpack.c.l.b16 %v1041
      %v1131 = vpack.c.b16 %v1110, %v1107
      %v1132 = vpack.c.b16 %v1111, %v1108
      %v1133 = vpack.c.b16 %v1112, %v1109
      %v1134 = vpack.c.b16 %v1116, %v1113
      %v1135 = vpack.c.b16 %v1117, %v1114
      %v1136 = vpack.c.b16 %v1118, %v1115
      %v1137 = vpack.c.b16 %v1122, %v1119
      %v1138 = vpack.c.b16 %v1123, %v1120
      %v1139 = vpack.c.b16 %v1124, %v1121
      %v1140 = vpack.c.b16 %v1128, %v1125
      %v1141 = vpack.c.b16 %v1129, %v1126
      %v1142 = vpack.c.b16 %v1130, %v1127
      %v1203 = vunpack.c.l.b16 %v1043
      %v1204 = vunpack.c.l.b16 %v1044
      %v1205 = vunpack.c.l.b16 %v1045
      %v1206 = vunpack.c.l.b16 %v1046
      %v1207 = vunpack.c.l.b16 %v1047
      %v1208 = vunpack.c.l.b16 %v1048
      %v1209 = vunpack.c.l.b16 %v1049
      %v1210 = vunpack.c.l.b16 %v1050
      %v1211 = vunpack.c.l.b16 %v1051
      %v1212 = vunpack.c.l.b16 %v1052
      %v1213 = vunpack.c.l.b16 %v1053
      %v1214 = vunpack.c.l.b16 %v1054
      %v1215 = vunpack.c.l.b16 %v1055
      %v1216 = vunpack.c.l.b16 %v1056
      %v1217 = vunpack.c.l.b16 %v1057
      %v1218 = vunpack.c.l.b16 %v1058
      %v1219 = vunpack.c.l.b16 %v1059
      %v1220 = vunpack.c.l.b16 %v1060
      %v1221 = vunpack.c.l.b16 %v1061
      %v1222 = vunpack.c.l.b16 %v1062
      %v1223 = vunpack.c.l.b16 %v1063
      %v1224 = vunpack.c.l.b16 %v1064
      %v1225 = vunpack.c.l.b16 %v1065
      %v1226 = vunpack.c.l.b16 %v1066
      %v1227 = vunpack.c.l.b16 %v1067
      %v1228 = vunpack.c.l.b16 %v1068
      %v1229 = vunpack.c.l.b16 %v1069
      %v1230 = vunpack.c.l.b16 %v1070
      %v1231 = vunpack.c.l.b16 %v1071
      %v1232 = vunpack.c.l.b16 %v1072
      %v1233 = vunpack.c.l.b16 %v1073
      %v1234 = vunpack.c.l.b16 %v1074
      %v1235 = vunpack.c.l.b16 %v1075
      %v1236 = vunpack.c.l.b16 %v1076
      %v1237 = vunpack.c.l.b16 %v1077
      %v1238 = vunpack.c.l.b16 %v1078
      %v1239 = vunpack.c.l.b16 %v1079
      %v1240 = vunpack.c.l.b16 %v1080
      %v1241 = vunpack.c.l.b16 %v1081
      %v1242 = vunpack.c.l.b16 %v1082
      %v1243 = vunpack.c.l.b16 %v1083
      %v1244 = vunpack.c.l.b16 %v1084
      %v1245 = vunpack.c.l.b16 %v1085
      %v1246 = vunpack.c.l.b16 %v1086
      %v1247 = vunpack.c.l.b16 %v1087
      %v1248 = vunpack.c.l.b16 %v1088
      %v1249 = vunpack.c.l.b16 %v1089
      %v1250 = vunpack.c.l.b16 %v1090
      %v1251 = vpack.c.b16 %v1204, %v1203
      %v1252 = vpack.c.b16 %v1206, %v1205
      %v1253 = vpack.c.b16 %v1208, %v1207
      %v1254 = vpack.c.b16 %v1210, %v1209
      %v1255 = vpack.c.b16 %v1212, %v1211
      %v1256 = vpack.c.b16 %v1214, %v1213
      %v1257 = vpack.c.b16 %v1216, %v1215
      %v1258 = vpack.c.b16 %v1218, %v1217
      %v1259 = vpack.c.b16 %v1220, %v1219
      %v1260 = vpack.c.b16 %v1222, %v1221
      %v1261 = vpack.c.b16 %v1224, %v1223
      %v1262 = vpack.c.b16 %v1226, %v1225
      %v1263 = vpack.c.b16 %v1228, %v1227
      %v1264 = vpack.c.b16 %v1230, %v1229
      %v1265 = vpack.c.b16 %v1232, %v1231
      %v1266 = vpack.c.b16 %v1234, %v1233
      %v1267 = vpack.c.b16 %v1236, %v1235
      %v1268 = vpack.c.b16 %v1238, %v1237
      %v1269 = vpack.c.b16 %v1240, %v1239
      %v1270 = vpack.c.b16 %v1242, %v1241
      %v1271 = vpack.c.b16 %v1244, %v1243
      %v1272 = vpack.c.b16 %v1246, %v1245
      %v1273 = vpack.c.b16 %v1248, %v1247
      %v1274 = vpack.c.b16 %v1250, %v1249
      %1299 = vmatprep.subr.bf16.mxu0 0
      %1300 = vmatpush1.bf16.msra.mxu0 %v1251
      %1301 = vmatprep.subr.bf16.mxu0 0
      %1302 = vmatpush1.bf16.msra.mxu0 %v1252
      %1303 = vmatprep.subr.bf16.mxu0 0
      %1304 = vmatpush1.bf16.msra.mxu0 %v1253
      %1305 = vmatprep.subr.bf16.mxu0 0
      %1306 = vmatpush1.bf16.msra.mxu0 %v1254
      %1307 = vmatprep.subr.bf16.mxu0 0
      %1308 = vmatpush1.bf16.msra.mxu0 %v1255
      %1309 = vmatprep.subr.bf16.mxu0 0
      %1310 = vmatpush1.bf16.msra.mxu0 %v1256
      %1311 = vmatprep.subr.bf16.mxu0 0
      %1312 = vmatpush1.bf16.msra.mxu0 %v1257
      %1313 = vmatprep.subr.bf16.mxu0 0
      %1314 = vmatpush1.bf16.msra.mxu0 %v1258
      %1315 = vmatprep.subr.bf16.mxu0 0
      %1316 = vmatpush1.bf16.msra.mxu0 %v1259
      %1317 = vmatprep.subr.bf16.mxu0 0
      %1318 = vmatpush1.bf16.msra.mxu0 %v1260
      %1319 = vmatprep.subr.bf16.mxu0 0
      %1320 = vmatpush1.bf16.msra.mxu0 %v1261
      %1321 = vmatprep.subr.bf16.mxu0 0
      %1322 = vmatpush1.bf16.msra.mxu0 %v1262
      %1323 = vmatprep.subr.bf16.mxu0 0
      %1324 = vmatpush1.bf16.msra.mxu0 %v1263
      %1325 = vmatprep.subr.bf16.mxu0 0
      %1326 = vmatpush1.bf16.msra.mxu0 %v1264
      %1327 = vmatprep.subr.bf16.mxu0 0
      %1328 = vmatpush1.bf16.msra.mxu0 %v1265
      %1329 = vmatprep.subr.bf16.mxu0 0
      %1330 = vmatpush1.bf16.msra.mxu0 %v1266
      %1331 = vmatprep.mubr.bf16.mxu0 %v1132
      %1332 = vmatmul.mubr.bf16.gmra.mrb[0].mxu0 %v1131
      %v1333 = vpop.f32.mrb[0].mxu0
      %v1334 = vadd.f32 0.0, %v1333
      %v1335 = vpop.f32.mrb[0].mxu0
      %v1336 = vpop.f32.mrb[0].mxu0
      %v1337 = vadd.f32 0.0, %v1336
      %v1338 = vpop.f32.mrb[0].mxu0
      %1339 = vmatprep.mubr.bf16.mxu0 %v1135
      %1340 = vmatmul.mubr.bf16.gmra.mrb[0].mxu0 %v1134
      %v1341 = vpop.f32.mrb[0].mxu0
      %v1342 = vadd.f32 0.0, %v1341
      %v1343 = vpop.f32.mrb[0].mxu0
      %v1344 = vpop.f32.mrb[0].mxu0
      %v1345 = vadd.f32 0.0, %v1344
      %v1346 = vpop.f32.mrb[0].mxu0
      %1347 = vmatprep.mubr.bf16.mxu0 %v1138
      %1348 = vmatmul.mubr.bf16.gmra.mrb[0].mxu0 %v1137
      %v1349 = vpop.f32.mrb[0].mxu0
      %v1350 = vadd.f32 0.0, %v1349
      %v1351 = vpop.f32.mrb[0].mxu0
      %v1352 = vpop.f32.mrb[0].mxu0
      %v1353 = vadd.f32 0.0, %v1352
      %v1354 = vpop.f32.mrb[0].mxu0
      %1355 = vmatprep.mubr.bf16.mxu0 %v1141
      %1356 = vmatmul.mubr.bf16.gmra.mrb[0].mxu0 %v1140
      %v1357 = vpop.f32.mrb[0].mxu0
      %v1358 = vadd.f32 0.0, %v1357
      %v1359 = vpop.f32.mrb[0].mxu0
      %v1360 = vpop.f32.mrb[0].mxu0
      %v1361 = vadd.f32 0.0, %v1360
      %v1362 = vpop.f32.mrb[0].mxu0
      %1363 = vdwg.mxu0
      %1364 = vmatprep.subr.bf16.mxu0 0
      %1365 = vmatpush1.bf16.msra.mxu0 %v1267
      %1366 = vmatprep.subr.bf16.mxu0 0
      %1367 = vmatpush1.bf16.msra.mxu0 %v1268
      %1368 = vmatprep.subr.bf16.mxu0 0
      %1369 = vmatpush1.bf16.msra.mxu0 %v1269
      %1370 = vmatprep.subr.bf16.mxu0 0
      %1371 = vmatpush1.bf16.msra.mxu0 %v1270
      %1372 = vmatprep.subr.bf16.mxu0 0
      %1373 = vmatpush1.bf16.msra.mxu0 %v1271
      %1374 = vmatprep.subr.bf16.mxu0 0
      %1375 = vmatpush1.bf16.msra.mxu0 %v1272
      %1376 = vmatprep.subr.bf16.mxu0 0
      %1377 = vmatpush1.bf16.msra.mxu0 %v1273
      %1378 = vmatprep.subr.bf16.mxu0 0
      %1379 = vmatpush1.bf16.msra.mxu0 %v1274
      %1380 = vmatprep.subr.bf16.mxu0 0
      %1381 = vmatpush1.bf16.msra.mxu0 0
      %1382 = vmatprep.subr.bf16.mxu0 0
      %1383 = vmatpush1.bf16.msra.mxu0 0
      %1384 = vmatprep.subr.bf16.mxu0 0
      %1385 = vmatpush1.bf16.msra.mxu0 0
      %1386 = vmatprep.subr.bf16.mxu0 0
      %1387 = vmatpush1.bf16.msra.mxu0 0
      %1388 = vmatprep.subr.bf16.mxu0 0
      %1389 = vmatpush1.bf16.msra.mxu0 0
      %1390 = vmatprep.subr.bf16.mxu0 0
      %1391 = vmatpush1.bf16.msra.mxu0 0
      %1392 = vmatprep.subr.bf16.mxu0 0
      %1393 = vmatpush1.bf16.msra.mxu0 0
      %1394 = vmatprep.subr.bf16.mxu0 0
      %1395 = vmatpush1.bf16.msra.mxu0 0
      %1396 = vmatprep.mubr.bf16.mxu0 0
      %1397 = vmatmul.mubr.bf16.gmra.mrb[0].mxu0 %v1133
      %v1398 = vpop.f32.mrb[0].mxu0
      %v1399 = vadd.f32 %v1334, %v1398
      %v1400 = vpop.f32.mrb[0].mxu0
      %v1401 = vpop.f32.mrb[0].mxu0
      %v1402 = vadd.f32 %v1337, %v1401
      %v1403 = vpop.f32.mrb[0].mxu0
      %1404 = vmatprep.mubr.bf16.mxu0 0
      %1405 = vmatmul.mubr.bf16.gmra.mrb[0].mxu0 %v1136
      %v1406 = vpop.f32.mrb[0].mxu0
      %v1407 = vadd.f32 %v1342, %v1406
      %v1408 = vpop.f32.mrb[0].mxu0
      %v1409 = vpop.f32.mrb[0].mxu0
      %v1410 = vadd.f32 %v1345, %v1409
      %v1411 = vpop.f32.mrb[0].mxu0
      %1412 = vmatprep.mubr.bf16.mxu0 0
      %1413 = vmatmul.mubr.bf16.gmra.mrb[0].mxu0 %v1139
      %v1414 = vpop.f32.mrb[0].mxu0
      %v1415 = vadd.f32 %v1350, %v1414
      %v1416 = vpop.f32.mrb[0].mxu0
      %v1417 = vpop.f32.mrb[0].mxu0
      %v1418 = vadd.f32 %v1353, %v1417
      %v1419 = vpop.f32.mrb[0].mxu0
      %1420 = vmatprep.mubr.bf16.mxu0 0
      %1421 = vmatmul.mubr.bf16.gmra.mrb[0].mxu0 %v1142
      %v1422 = vpop.f32.mrb[0].mxu0
      %v1423 = vadd.f32 %v1358, %v1422
      %v1424 = vpop.f32.mrb[0].mxu0
      %v1425 = vpop.f32.mrb[0].mxu0
      %v1426 = vadd.f32 %v1361, %v1425
      %v1427 = vpop.f32.mrb[0].mxu0
      %1428 = vdwg.mxu0
      %v1429 = vadd.f32 %v995, %v1399
      %v1430 = vadd.f32 %v998, %v1402
      %v1431 = vadd.f32 %v1003, %v1407
      %v1432 = vadd.f32 %v1006, %v1410
      %v1433 = vadd.f32 %v1011, %v1415
      %v1434 = vadd.f32 %v1014, %v1418
      %v1435 = vadd.f32 %v1019, %v1423
      %v1436 = vadd.f32 %v1022, %v1426
      %v1437 = vld [vmem:[%s2] sm:$0x1]
      %v1439 = vlaneseq
      %v1440 = vshrl.u32 %v1439, 7
      %v1441 = vsub.s32 0, %v1440
      %v1442 = vrot.slane %v1437, %v1441
      %v1444 = vadd.f32 %v1429, %v1442
      %v1445 = vadd.f32 %v1430, %v1442
      %v1446 = vadd.f32 %v1431, %v1442
      %v1447 = vadd.f32 %v1432, %v1442
      %v1448 = vadd.f32 %v1433, %v1442
      %v1449 = vadd.f32 %v1434, %v1442
      %v1450 = vadd.f32 %v1435, %v1442
      %v1451 = vadd.f32 %v1436, %v1442
      %v1452 = vmax.f32 %v1444, 0.0
      %v1453 = vmax.f32 %v1445, 0.0
      %v1454 = vmax.f32 %v1446, 0.0
      %v1455 = vmax.f32 %v1447, 0.0
      %v1456 = vmax.f32 %v1448, 0.0
      %v1457 = vmax.f32 %v1449, 0.0
      %v1458 = vmax.f32 %v1450, 0.0
      %v1459 = vmax.f32 %v1451, 0.0
      %v1460 = vld [vmem:[%s212] sm:$0xf]
      %v1461 = vld [vmem:[%s212 + $0x4] sm:$0xf]
      %v1462 = vld [vmem:[%s212 + $0x8] sm:$0xf]
      %v1463 = vld [vmem:[%s212 + $0xc] sm:$0xf]
      %v1464 = vld [vmem:[%s212 + $0x10] sm:$0xf]
      %v1465 = vld [vmem:[%s212 + $0x14] sm:$0xf]
      %v1466 = vld [vmem:[%s212 + $0x18] sm:$0xf]
      %v1467 = vld [vmem:[%s212 + $0x1c] sm:$0xf]
      %v1468 = vunpack.c.l.bf16 %v1460
      %v1469 = vunpack.c.l.bf16 %v1461
      %v1470 = vunpack.c.l.bf16 %v1462
      %v1471 = vunpack.c.l.bf16 %v1463
      %v1472 = vunpack.c.l.bf16 %v1464
      %v1473 = vunpack.c.l.bf16 %v1465
      %v1474 = vunpack.c.l.bf16 %v1466
      %v1475 = vunpack.c.l.bf16 %v1467
      %v1476 = vadd.f32 %v1452, %v1468
      %v1477 = vadd.f32 %v1453, %v1469
      %v1478 = vadd.f32 %v1454, %v1470
      %v1479 = vadd.f32 %v1455, %v1471
      %v1480 = vadd.f32 %v1456, %v1472
      %v1481 = vadd.f32 %v1457, %v1473
      %v1482 = vadd.f32 %v1458, %v1474
      %v1483 = vadd.f32 %v1459, %v1475
      %v1484 = vpack.c.bf16 %v1476, %v1476
      %v1485 = vpack.c.bf16 %v1477, %v1477
      %v1486 = vpack.c.bf16 %v1478, %v1478
      %v1487 = vpack.c.bf16 %v1479, %v1479
      %v1488 = vpack.c.bf16 %v1480, %v1480
      %v1489 = vpack.c.bf16 %v1481, %v1481
      %v1490 = vpack.c.bf16 %v1482, %v1482
      %v1491 = vpack.c.bf16 %v1483, %v1483
      %1492 = vst [vmem:[%s217] sm:$0xf] %v1484
      %1493 = vst [vmem:[%s217 + $0x4] sm:$0xf] %v1485
      %1494 = vst [vmem:[%s217 + $0x8] sm:$0xf] %v1486
      %1495 = vst [vmem:[%s217 + $0xc] sm:$0xf] %v1487
      %1496 = vst [vmem:[%s217 + $0x10] sm:$0xf] %v1488
      %1497 = vst [vmem:[%s217 + $0x14] sm:$0xf] %v1489
      %1498 = vst [vmem:[%s217 + $0x18] sm:$0xf] %v1490
      %1499 = vst [vmem:[%s217 + $0x1c] sm:$0xf] %v1491
      %p1500 = scmp.lt.s32.totalorder %s15, 1
      %s1501 = scalar_select %p1500, %s15, 1
      %s1502 = smul.addr %s1501, 8
      %s1503 = smul.addr %s1502, 4
      %s1504 = scalar_lea.vmem %s4, %s1503
      // Predicated region
      $region37: #{resnet50_forward.11} parent=35 // pred_check
        %p1505 = pneg %p127
      $region38: #{resnet50_forward.11} parent=35 // pred_check_branch
        %1507 = sbr.rel (%p1505) target = $region40
      $region39: #{resnet50_forward.11} parent=35 // pred_region
        _
      $region40: #{resnet50_forward.11} parent=35 // pred_fallthru
        _
    $region36: #{resnet50_forward.11} parent=5 // pred_fallthru
      _
    %p1508 = scmp.le.s32.totalorder 2, %s10
    // Predicated region
    $region41: #{resnet50_forward.11} parent=5 // pred_check
      %p1509 = pneg %p1508
    $region42: #{resnet50_forward.11} parent=5 // pred_check_branch
      %1511 = sbr.rel (%p1509) target = $region44
    $region43: #{resnet50_forward.11} parent=5 // pred_region
      %s1512 = ssub.s32 %s10, 2
      // Predicated region
      $region45: #{resnet50_forward.11} parent=43 // pred_check
        %p1513 = pneg %p133
      $region46: #{resnet50_forward.11} parent=43 // pred_check_branch
        %1515 = sbr.rel (%p1513) target = $region48
      $region47: #{resnet50_forward.11} parent=43 // pred_region
        %p1516 = scmp.lt.s32.totalorder %s16, 1
        %s1517 = scalar_select %p1516, %s16, 1
        %s1518 = smul.addr %s1517, 8
        %s1519 = smul.addr %s1518, 4
        %s1520 = scalar_lea.vmem %s4, %s1519
      $region48: #{resnet50_forward.11} parent=43 // pred_fallthru
        _
    $region44: #{resnet50_forward.11} parent=5 // pred_fallthru
      _
  $region6: #{resnet50_forward.11} parent=0 // loop_footer
    %s14 = sadd.s32 1, %s10
  $region7: #{resnet50_forward.11} parent=0 // loop_footer_branch
    %9 = sbr.rel target = $region3
  $region8: #{resnet50_forward.11} parent=0 // loop_exit
    _

// kernel: resnet50_forward.10
$region0: #{resnet50_forward.10}
  #allocation0 [shape = 'u32[]', space=smem, size = 0x4, offset = 0x4, fixed_abs, tag = 'smem constant byte address 0x4 - core index']
  #allocation1 [shape = 'u32[144,128]{1,0:T(1,128)}', space=vmem, size = 0x12000, scoped, tag = 'internal scratch']
  %s0 = inlined_call_operand.vmem [shape: bf16[2,10,8,384], index: 0, kind: input, shape index: {}]
  %s1 = inlined_call_operand.vmem [shape: bf16[3,384,128], index: 1, kind: input, shape index: {}]
  %s2 = inlined_call_operand.vmem [shape: f32[1,128], index: 2, kind: input, shape index: {}]
  %s3 = inlined_call_operand.vmem [shape: bf16[2,8,8,128], index: 3, kind: output, shape index: {}]
  %s4 = sld [smem:[#allocation0]]
  $region45: #{resnet50_forward.10} parent=0
    _
  %s6 = ssub.s32 1, %s4
  %s7 = scalar_select 0, %s6, %s4
  loop: start=0, step=1, limit=4
  $region2: #{resnet50_forward.10} parent=0 // loop_pre_header
    _
  $region3: #{resnet50_forward.10} parent=0 // loop_header
    %s9 = sphi 0, %s13
    %p10 = scmp.ge.s32.totalorder %s9, 4
    %s19 = sphi 0, %s21
    %s22 = sphi 0, %s19
    %s23 = sphi 0, %s22
    %s39 = sphi 0, %s23
    %s43 = sphi 0, %s43
    %s45 = sphi 0, %s43
    %s46 = sphi 0, %s45
    %s60 = sphi 0, %s46
    %s64 = sphi 0, %s64
    %s66 = sphi 0, %s64
    %s67 = sphi 0, %s66
    %s81 = sphi 0, %s67
    %s87 = sphi 0, %s89
    %s90 = sphi 0, %s87
    %s91 = sphi 0, %s90
    %s107 = sphi 0, %s91
  $region4: #{resnet50_forward.10} parent=0 // loop_header_branch
    %12 = sbr.rel (%p10) target = $region8
  $region5: #{resnet50_forward.10} parent=0 // loop_body
    %s14 = ssub.s32 %s9, 1
    %s15 = ssub.s32 %s9, 2
    %s16 = sadd.s32 %s9, 1
    %s17 = ssub.s32 %s9, %s16
    %p18 = scmp.eq.s32.totalorder %s17, 0
    %s20 = sadd.s32 %s19, 1
    %s21 = scalar_select %p18, %s19, %s20
    %p24 = pneg %p18
    %p25 = scmp.eq.s32.totalorder %s9, 1
    %p26 = por %p24, %p25
    %p27 = scmp.ne.s32.totalorder %s19, %s22
    %p28 = scmp.eq.s32.totalorder %s9, 0
    %p29 = por %p27, %p28
    %p30 = scmp.ne.s32.totalorder %s19, %s22
    %p31 = scmp.eq.s32.totalorder %s14, 1
    %p32 = por %p30, %p31
    %p33 = scmp.ne.s32.totalorder %s22, %s23
    %p34 = scmp.eq.s32.totalorder %s14, 0
    %p35 = por %p33, %p34
    %p36 = scmp.ne.s32.totalorder %s22, %s23
    %p37 = scmp.eq.s32.totalorder %s15, 1
    %p38 = por %p36, %p37
    %p40 = scmp.ne.s32.totalorder %s23, %s39
    %p41 = scmp.eq.s32.totalorder %s15, 0
    %p42 = por %p40, %p41
    %s44 = sadd.s32 %s43, 1
    %p47 = scmp.eq.s32.totalorder %s9, 1
    %p48 = scmp.ne.s32.totalorder %s43, %s45
    %p49 = scmp.eq.s32.totalorder %s9, 0
    %p50 = por %p48, %p49
    %p51 = scmp.ne.s32.totalorder %s43, %s45
    %p52 = scmp.eq.s32.totalorder %s14, 1
    %p53 = por %p51, %p52
    %p54 = scmp.ne.s32.totalorder %s45, %s46
    %p55 = scmp.eq.s32.totalorder %s14, 0
    %p56 = por %p54, %p55
    %p57 = scmp.ne.s32.totalorder %s45, %s46
    %p58 = scmp.eq.s32.totalorder %s15, 1
    %p59 = por %p57, %p58
    %p61 = scmp.ne.s32.totalorder %s46, %s60
    %p62 = scmp.eq.s32.totalorder %s15, 0
    %p63 = por %p61, %p62
    %s65 = sadd.s32 %s64, 1
    %p68 = scmp.eq.s32.totalorder %s9, 1
    %p69 = scmp.ne.s32.totalorder %s64, %s66
    %p70 = scmp.eq.s32.totalorder %s9, 0
    %p71 = por %p69, %p70
    %p72 = scmp.ne.s32.totalorder %s64, %s66
    %p73 = scmp.eq.s32.totalorder %s14, 1
    %p74 = por %p72, %p73
    %p75 = scmp.ne.s32.totalorder %s66, %s67
    %p76 = scmp.eq.s32.totalorder %s14, 0
    %p77 = por %p75, %p76
    %p78 = scmp.ne.s32.totalorder %s66, %s67
    %p79 = scmp.eq.s32.totalorder %s15, 1
    %p80 = por %p78, %p79
    %p82 = scmp.ne.s32.totalorder %s67, %s81
    %p83 = scmp.eq.s32.totalorder %s15, 0
    %p84 = por %p82, %p83
    %s85 = ssub.s32 %s9, %s16
    %p86 = scmp.eq.s32.totalorder %s85, 0
    %s88 = sadd.s32 %s87, 1
    %s89 = scalar_select %p86, %s87, %s88
    %p92 = pneg %p86
    %p93 = scmp.eq.s32.totalorder %s9, 1
    %p94 = por %p92, %p93
    %p95 = scmp.ne.s32.totalorder %s87, %s90
    %p96 = scmp.eq.s32.totalorder %s9, 0
    %p97 = por %p95, %p96
    %p98 = scmp.ne.s32.totalorder %s87, %s90
    %p99 = scmp.eq.s32.totalorder %s14, 1
    %p100 = por %p98, %p99
    %p101 = scmp.ne.s32.totalorder %s90, %s91
    %p102 = scmp.eq.s32.totalorder %s14, 0
    %p103 = por %p101, %p102
    %p104 = scmp.ne.s32.totalorder %s90, %s91
    %p105 = scmp.eq.s32.totalorder %s15, 1
    %p106 = por %p104, %p105
    %p108 = scmp.ne.s32.totalorder %s91, %s107
    %p109 = scmp.eq.s32.totalorder %s15, 0
    %p110 = por %p108, %p109
    %p111 = scmp.le.s32.totalorder 1, %s9
    %p112 = scmp.lt.s32.totalorder %s9, 3
    %p113 = pnand %p111, %p112
    %p114 = pneg %p113
    // Predicated region
    $region9: #{resnet50_forward.10} parent=5 // pred_check
      _
    $region10: #{resnet50_forward.10} parent=5 // pred_check_branch
      %116 = sbr.rel (%p113) target = $region12
    $region11: #{resnet50_forward.10} parent=5 // pred_region
      %s117 = ssub.s32 %s9, 1
      // Predicated region
      $region13: #{resnet50_forward.10} parent=11 // pred_check
        %p118 = pneg %p56
      $region14: #{resnet50_forward.10} parent=11 // pred_check_branch
        %120 = sbr.rel (%p118) target = $region16
      $region15: #{resnet50_forward.10} parent=11 // pred_region
        _
      $region16: #{resnet50_forward.10} parent=11 // pred_fallthru
        _
      // Predicated region
      $region17: #{resnet50_forward.10} parent=11 // pred_check
        %p121 = pneg %p77
      $region18: #{resnet50_forward.10} parent=11 // pred_check_branch
        %123 = sbr.rel (%p121) target = $region20
      $region19: #{resnet50_forward.10} parent=11 // pred_region
        _
      $region20: #{resnet50_forward.10} parent=11 // pred_fallthru
        _
    $region12: #{resnet50_forward.10} parent=5 // pred_fallthru
      _
    %p124 = scmp.lt.s32.totalorder %s9, 2
    // Predicated region
    $region21: #{resnet50_forward.10} parent=5 // pred_check
      %p125 = pneg %p124
    $region22: #{resnet50_forward.10} parent=5 // pred_check_branch
      %127 = sbr.rel (%p125) target = $region24
    $region23: #{resnet50_forward.10} parent=5 // pred_region
      // Predicated region
      $region25: #{resnet50_forward.10} parent=23 // pred_check
        %p128 = pneg %p29
      $region26: #{resnet50_forward.10} parent=23 // pred_check_branch
        %130 = sbr.rel (%p128) target = $region28
      $region27: #{resnet50_forward.10} parent=23 // pred_region
        %p131 = scmp.lt.s32.totalorder %s9, 1
        %s132 = scalar_select %p131, %s9, 1
        %s133 = smul.addr %s132, 30
        %s134 = smul.addr %s133, 4
        %s135 = scalar_lea.vmem %s0, %s134
      $region28: #{resnet50_forward.10} parent=23 // pred_fallthru
        _
    $region24: #{resnet50_forward.10} parent=5 // pred_fallthru
      _
    %p136 = scmp.le.s32.totalorder 1, %s9
    %p137 = scmp.lt.s32.totalorder %s9, 3
    %p138 = pnand %p136, %p137
    %p139 = pneg %p138
    // Predicated region
    $region29: #{resnet50_forward.10} parent=5 // pred_check
      _
    $region30: #{resnet50_forward.10} parent=5 // pred_check_branch
      %141 = sbr.rel (%p138) target = $region32
    $region31: #{resnet50_forward.10} parent=5 // pred_region
      %s142 = ssub.s32 %s9, 1
      %p143 = scmp.lt.s32.totalorder %s14, 1
      %s144 = scalar_select %p143, %s14, 1
      %s145 = smul.addr %s144, 30
      %s146 = smul.addr %s145, 4
      %s147 = scalar_lea.vmem %s0, %s146
      %p148 = pneg %p35
      %p149 = pneg %p32
      %p150 = pneg %p56
      %p151 = pneg %p53
      %p152 = pneg %p77
      %p153 = pneg %p74
      %p154 = pneg %p103
      %p155 = pneg %p100
      %p156 = scmp.lt.s32.totalorder %s14, 1
      %s157 = scalar_select %p156, %s14, 1
      %s158 = smul.addr %s157, 8
      %s159 = smul.addr %s158, 4
      %s160 = scalar_lea.vmem %s3, %s159
      %p161 = scmp.lt.s32.totalorder %s14, 1
      %s162 = scalar_select %p161, %s14, 1
      %s163 = smul.addr %s162, 30
      %s164 = smul.addr %s163, 4
      %s165 = scalar_lea.vmem %s0, %s164
      %p166 = scmp.lt.s32.totalorder %s14, 1
      %s167 = scalar_select %p166, %s14, 1
      %s168 = smul.addr %s167, 8
      %s169 = smul.addr %s168, 4
      %s170 = scalar_lea.vmem %s3, %s169
      %v172 = vld [vmem:[%s165] sm:$0xff]
      %v173 = vld [vmem:[%s165 + $0x8] sm:$0xf]
      %v174 = vld [vmem:[%s165 + $0xc] sm:$0xff]
      %v175 = vld [vmem:[%s165 + $0x14] sm:$0xf]
      %v176 = vld [vmem:[%s165 + $0x18] sm:$0xff]
      %v177 = vld [vmem:[%s165 + $0x20] sm:$0xf]
      %v178 = vld [vmem:[%s165 + $0x24] sm:$0xff]
      %v179 = vld [vmem:[%s165 + $0x2c] sm:$0xf]
      %v180 = vld [vmem:[%s165 + $0x30] sm:$0xff]
      %v181 = vld [vmem:[%s165 + $0x38] sm:$0xf]
      %v182 = vld [vmem:[%s165 + $0x3c] sm:$0xff]
      %v183 = vld [vmem:[%s165 + $0x44] sm:$0xf]
      %v184 = vld [vmem:[%s165 + $0x48] sm:$0xff]
      %v185 = vld [vmem:[%s165 + $0x50] sm:$0xf]
      %v186 = vld [vmem:[%s165 + $0x54] sm:$0xff]
      %v187 = vld [vmem:[%s165 + $0x5c] sm:$0xf]
      %v188 = vld [vmem:[%s1] sm:$0xf]
      %v189 = vld [vmem:[%s1 + $0x4] sm:$0xf]
      %v190 = vld [vmem:[%s1 + $0x8] sm:$0xf]
      %v191 = vld [vmem:[%s1 + $0xc] sm:$0xf]
      %v192 = vld [vmem:[%s1 + $0x10] sm:$0xf]
      %v193 = vld [vmem:[%s1 + $0x14] sm:$0xf]
      %v194 = vld [vmem:[%s1 + $0x18] sm:$0xf]
      %v195 = vld [vmem:[%s1 + $0x1c] sm:$0xf]
      %v196 = vld [vmem:[%s1 + $0x20] sm:$0xf]
      %v197 = vld [vmem:[%s1 + $0x24] sm:$0xf]
      %v198 = vld [vmem:[%s1 + $0x28] sm:$0xf]
      %v199 = vld [vmem:[%s1 + $0x2c] sm:$0xf]
      %v200 = vld [vmem:[%s1 + $0x30] sm:$0xf]
      %v201 = vld [vmem:[%s1 + $0x34] sm:$0xf]
      %v202 = vld [vmem:[%s1 + $0x38] sm:$0xf]
      %v203 = vld [vmem:[%s1 + $0x3c] sm:$0xf]
      %v204 = vld [vmem:[%s1 + $0x40] sm:$0xf]
      %v205 = vld [vmem:[%s1 + $0x44] sm:$0xf]
      %v206 = vld [vmem:[%s1 + $0x48] sm:$0xf]
      %v207 = vld [vmem:[%s1 + $0x4c] sm:$0xf]
      %v208 = vld [vmem:[%s1 + $0x50] sm:$0xf]
      %v209 = vld [vmem:[%s1 + $0x54] sm:$0xf]
      %v210 = vld [vmem:[%s1 + $0x58] sm:$0xf]
      %v211 = vld [vmem:[%s1 + $0x5c] sm:$0xf]
      %v212 = vld [vmem:[%s1 + $0x60] sm:$0xf]
      %v213 = vld [vmem:[%s1 + $0x64] sm:$0xf]
      %v214 = vld [vmem:[%s1 + $0x68] sm:$0xf]
      %v215 = vld [vmem:[%s1 + $0x6c] sm:$0xf]
      %v216 = vld [vmem:[%s1 + $0x70] sm:$0xf]
      %v217 = vld [vmem:[%s1 + $0x74] sm:$0xf]
      %v218 = vld [vmem:[%s1 + $0x78] sm:$0xf]
      %v219 = vld [vmem:[%s1 + $0x7c] sm:$0xf]
      %v220 = vld [vmem:[%s1 + $0x80] sm:$0xf]
      %v221 = vld [vmem:[%s1 + $0x84] sm:$0xf]
      %v222 = vld [vmem:[%s1 + $0x88] sm:$0xf]
      %v223 = vld [vmem:[%s1 + $0x8c] sm:$0xf]
      %v224 = vld [vmem:[%s1 + $0x90] sm:$0xf]
      %v225 = vld [vmem:[%s1 + $0x94] sm:$0xf]
      %v226 = vld [vmem:[%s1 + $0x98] sm:$0xf]
      %v227 = vld [vmem:[%s1 + $0x9c] sm:$0xf]
      %v228 = vld [vmem:[%s1 + $0xa0] sm:$0xf]
      %v229 = vld [vmem:[%s1 + $0xa4] sm:$0xf]
      %v230 = vld [vmem:[%s1 + $0xa8] sm:$0xf]
      %v231 = vld [vmem:[%s1 + $0xac] sm:$0xf]
      %v232 = vld [vmem:[%s1 + $0xb0] sm:$0xf]
      %v233 = vld [vmem:[%s1 + $0xb4] sm:$0xf]
      %v234 = vld [vmem:[%s1 + $0xb8] sm:$0xf]
      %v235 = vld [vmem:[%s1 + $0xbc] sm:$0xf]
      %s236 = scalar_lea.vmem %s165, 12
      %v237 = vld [vmem:[%s236] sm:$0xff]
      %v238 = vld [vmem:[%s236 + $0x8] sm:$0xf]
      %v239 = vld [vmem:[%s236 + $0xc] sm:$0xff]
      %v240 = vld [vmem:[%s236 + $0x14] sm:$0xf]
      %v241 = vld [vmem:[%s236 + $0x18] sm:$0xff]
      %v242 = vld [vmem:[%s236 + $0x20] sm:$0xf]
      %v243 = vld [vmem:[%s236 + $0x24] sm:$0xff]
      %v244 = vld [vmem:[%s236 + $0x2c] sm:$0xf]
      %v245 = vld [vmem:[%s236 + $0x30] sm:$0xff]
      %v246 = vld [vmem:[%s236 + $0x38] sm:$0xf]
      %v247 = vld [vmem:[%s236 + $0x3c] sm:$0xff]
      %v248 = vld [vmem:[%s236 + $0x44] sm:$0xf]
      %v249 = vld [vmem:[%s236 + $0x48] sm:$0xff]
      %v250 = vld [vmem:[%s236 + $0x50] sm:$0xf]
      %v251 = vld [vmem:[%s236 + $0x54] sm:$0xff]
      %v252 = vld [vmem:[%s236 + $0x5c] sm:$0xf]
      %s253 = scalar_lea.vmem %s1, 192
      %v254 = vld [vmem:[%s253] sm:$0xf]
      %v255 = vld [vmem:[%s253 + $0x4] sm:$0xf]
      %v256 = vld [vmem:[%s253 + $0x8] sm:$0xf]
      %v257 = vld [vmem:[%s253 + $0xc] sm:$0xf]
      %v258 = vld [vmem:[%s253 + $0x10] sm:$0xf]
      %v259 = vld [vmem:[%s253 + $0x14] sm:$0xf]
      %v260 = vld [vmem:[%s253 + $0x18] sm:$0xf]
      %v261 = vld [vmem:[%s253 + $0x1c] sm:$0xf]
      %v262 = vld [vmem:[%s253 + $0x20] sm:$0xf]
      %v263 = vld [vmem:[%s253 + $0x24] sm:$0xf]
      %v264 = vld [vmem:[%s253 + $0x28] sm:$0xf]
      %v265 = vld [vmem:[%s253 + $0x2c] sm:$0xf]
      %v266 = vld [vmem:[%s253 + $0x30] sm:$0xf]
      %v267 = vld [vmem:[%s253 + $0x34] sm:$0xf]
      %v268 = vld [vmem:[%s253 + $0x38] sm:$0xf]
      %v269 = vld [vmem:[%s253 + $0x3c] sm:$0xf]
      %v270 = vld [vmem:[%s253 + $0x40] sm:$0xf]
      %v271 = vld [vmem:[%s253 + $0x44] sm:$0xf]
      %v272 = vld [vmem:[%s253 + $0x48] sm:$0xf]
      %v273 = vld [vmem:[%s253 + $0x4c] sm:$0xf]
      %v274 = vld [vmem:[%s253 + $0x50] sm:$0xf]
      %v275 = vld [vmem:[%s253 + $0x54] sm:$0xf]
      %v276 = vld [vmem:[%s253 + $0x58] sm:$0xf]
      %v277 = vld [vmem:[%s253 + $0x5c] sm:$0xf]
      %v278 = vld [vmem:[%s253 + $0x60] sm:$0xf]
      %v279 = vld [vmem:[%s253 + $0x64] sm:$0xf]
      %v280 = vld [vmem:[%s253 + $0x68] sm:$0xf]
      %v281 = vld [vmem:[%s253 + $0x6c] sm:$0xf]
      %v282 = vld [vmem:[%s253 + $0x70] sm:$0xf]
      %v283 = vld [vmem:[%s253 + $0x74] sm:$0xf]
      %v284 = vld [vmem:[%s253 + $0x78] sm:$0xf]
      %v285 = vld [vmem:[%s253 + $0x7c] sm:$0xf]
      %v286 = vld [vmem:[%s253 + $0x80] sm:$0xf]
      %v287 = vld [vmem:[%s253 + $0x84] sm:$0xf]
      %v288 = vld [vmem:[%s253 + $0x88] sm:$0xf]
      %v289 = vld [vmem:[%s253 + $0x8c] sm:$0xf]
      %v290 = vld [vmem:[%s253 + $0x90] sm:$0xf]
      %v291 = vld [vmem:[%s253 + $0x94] sm:$0xf]
      %v292 = vld [vmem:[%s253 + $0x98] sm:$0xf]
      %v293 = vld [vmem:[%s253 + $0x9c] sm:$0xf]
      %v294 = vld [vmem:[%s253 + $0xa0] sm:$0xf]
      %v295 = vld [vmem:[%s253 + $0xa4] sm:$0xf]
      %v296 = vld [vmem:[%s253 + $0xa8] sm:$0xf]
      %v297 = vld [vmem:[%s253 + $0xac] sm:$0xf]
      %v298 = vld [vmem:[%s253 + $0xb0] sm:$0xf]
      %v299 = vld [vmem:[%s253 + $0xb4] sm:$0xf]
      %v300 = vld [vmem:[%s253 + $0xb8] sm:$0xf]
      %v301 = vld [vmem:[%s253 + $0xbc] sm:$0xf]
      %v318 = vunpack.c.l.b16 %v237
      %v319 = vunpack.c.h.b16 %v237
      %v320 = vunpack.c.l.b16 %v238
      %v321 = vunpack.c.l.b16 %v239
      %v322 = vunpack.c.h.b16 %v239
      %v323 = vunpack.c.l.b16 %v240
      %v324 = vunpack.c.l.b16 %v241
      %v325 = vunpack.c.h.b16 %v241
      %v326 = vunpack.c.l.b16 %v242
      %v327 = vunpack.c.l.b16 %v243
      %v328 = vunpack.c.h.b16 %v243
      %v329 = vunpack.c.l.b16 %v244
      %v330 = vunpack.c.l.b16 %v245
      %v331 = vunpack.c.h.b16 %v245
      %v332 = vunpack.c.l.b16 %v246
      %v333 = vunpack.c.l.b16 %v247
      %v334 = vunpack.c.h.b16 %v247
      %v335 = vunpack.c.l.b16 %v248
      %v336 = vunpack.c.l.b16 %v249
      %v337 = vunpack.c.h.b16 %v249
      %v338 = vunpack.c.l.b16 %v250
      %v339 = vunpack.c.l.b16 %v251
      %v340 = vunpack.c.h.b16 %v251
      %v341 = vunpack.c.l.b16 %v252
      %v342 = vpack.c.b16 %v321, %v318
      %v343 = vpack.c.b16 %v322, %v319
      %v344 = vpack.c.b16 %v323, %v320
      %v345 = vpack.c.b16 %v327, %v324
      %v346 = vpack.c.b16 %v328, %v325
      %v347 = vpack.c.b16 %v329, %v326
      %v348 = vpack.c.b16 %v333, %v330
      %v349 = vpack.c.b16 %v334, %v331
      %v350 = vpack.c.b16 %v335, %v332
      %v351 = vpack.c.b16 %v339, %v336
      %v352 = vpack.c.b16 %v340, %v337
      %v353 = vpack.c.b16 %v341, %v338
      %v414 = vunpack.c.l.b16 %v254
      %v415 = vunpack.c.l.b16 %v255
      %v416 = vunpack.c.l.b16 %v256
      %v417 = vunpack.c.l.b16 %v257
      %v418 = vunpack.c.l.b16 %v258
      %v419 = vunpack.c.l.b16 %v259
      %v420 = vunpack.c.l.b16 %v260
      %v421 = vunpack.c.l.b16 %v261
      %v422 = vunpack.c.l.b16 %v262
      %v423 = vunpack.c.l.b16 %v263
      %v424 = vunpack.c.l.b16 %v264
      %v425 = vunpack.c.l.b16 %v265
      %v426 = vunpack.c.l.b16 %v266
      %v427 = vunpack.c.l.b16 %v267
      %v428 = vunpack.c.l.b16 %v268
      %v429 = vunpack.c.l.b16 %v269
      %v430 = vunpack.c.l.b16 %v270
      %v431 = vunpack.c.l.b16 %v271
      %v432 = vunpack.c.l.b16 %v272
      %v433 = vunpack.c.l.b16 %v273
      %v434 = vunpack.c.l.b16 %v274
      %v435 = vunpack.c.l.b16 %v275
      %v436 = vunpack.c.l.b16 %v276
      %v437 = vunpack.c.l.b16 %v277
      %v438 = vunpack.c.l.b16 %v278
      %v439 = vunpack.c.l.b16 %v279
      %v440 = vunpack.c.l.b16 %v280
      %v441 = vunpack.c.l.b16 %v281
      %v442 = vunpack.c.l.b16 %v282
      %v443 = vunpack.c.l.b16 %v283
      %v444 = vunpack.c.l.b16 %v284
      %v445 = vunpack.c.l.b16 %v285
      %v446 = vunpack.c.l.b16 %v286
      %v447 = vunpack.c.l.b16 %v287
      %v448 = vunpack.c.l.b16 %v288
      %v449 = vunpack.c.l.b16 %v289
      %v450 = vunpack.c.l.b16 %v290
      %v451 = vunpack.c.l.b16 %v291
      %v452 = vunpack.c.l.b16 %v292
      %v453 = vunpack.c.l.b16 %v293
      %v454 = vunpack.c.l.b16 %v294
      %v455 = vunpack.c.l.b16 %v295
      %v456 = vunpack.c.l.b16 %v296
      %v457 = vunpack.c.l.b16 %v297
      %v458 = vunpack.c.l.b16 %v298
      %v459 = vunpack.c.l.b16 %v299
      %v460 = vunpack.c.l.b16 %v300
      %v461 = vunpack.c.l.b16 %v301
      %v462 = vpack.c.b16 %v415, %v414
      %v463 = vpack.c.b16 %v417, %v416
      %v464 = vpack.c.b16 %v419, %v418
      %v465 = vpack.c.b16 %v421, %v420
      %v466 = vpack.c.b16 %v423, %v422
      %v467 = vpack.c.b16 %v425, %v424
      %v468 = vpack.c.b16 %v427, %v426
      %v469 = vpack.c.b16 %v429, %v428
      %v470 = vpack.c.b16 %v431, %v430
      %v471 = vpack.c.b16 %v433, %v432
      %v472 = vpack.c.b16 %v435, %v434
      %v473 = vpack.c.b16 %v437, %v436
      %v474 = vpack.c.b16 %v439, %v438
      %v475 = vpack.c.b16 %v441, %v440
      %v476 = vpack.c.b16 %v443, %v442
      %v477 = vpack.c.b16 %v445, %v444
      %v478 = vpack.c.b16 %v447, %v446
      %v479 = vpack.c.b16 %v449, %v448
      %v480 = vpack.c.b16 %v451, %v450
      %v481 = vpack.c.b16 %v453, %v452
      %v482 = vpack.c.b16 %v455, %v454
      %v483 = vpack.c.b16 %v457, %v456
      %v484 = vpack.c.b16 %v459, %v458
      %v485 = vpack.c.b16 %v461, %v460
      %510 = vmatprep.subr.bf16.mxu0 0
      %511 = vmatpush1.bf16.msra.mxu0 %v462
      %512 = vmatprep.subr.bf16.mxu0 0
      %513 = vmatpush1.bf16.msra.mxu0 %v463
      %514 = vmatprep.subr.bf16.mxu0 0
      %515 = vmatpush1.bf16.msra.mxu0 %v464
      %516 = vmatprep.subr.bf16.mxu0 0
      %517 = vmatpush1.bf16.msra.mxu0 %v465
      %518 = vmatprep.subr.bf16.mxu0 0
      %519 = vmatpush1.bf16.msra.mxu0 %v466
      %520 = vmatprep.subr.bf16.mxu0 0
      %521 = vmatpush1.bf16.msra.mxu0 %v467
      %522 = vmatprep.subr.bf16.mxu0 0
      %523 = vmatpush1.bf16.msra.mxu0 %v468
      %524 = vmatprep.subr.bf16.mxu0 0
      %525 = vmatpush1.bf16.msra.mxu0 %v469
      %526 = vmatprep.subr.bf16.mxu0 0
      %527 = vmatpush1.bf16.msra.mxu0 %v470
      %528 = vmatprep.subr.bf16.mxu0 0
      %529 = vmatpush1.bf16.msra.mxu0 %v471
      %530 = vmatprep.subr.bf16.mxu0 0
      %531 = vmatpush1.bf16.msra.mxu0 %v472
      %532 = vmatprep.subr.bf16.mxu0 0
      %533 = vmatpush1.bf16.msra.mxu0 %v473
      %534 = vmatprep.subr.bf16.mxu0 0
      %535 = vmatpush1.bf16.msra.mxu0 %v474
      %536 = vmatprep.subr.bf16.mxu0 0
      %537 = vmatpush1.bf16.msra.mxu0 %v475
      %538 = vmatprep.subr.bf16.mxu0 0
      %539 = vmatpush1.bf16.msra.mxu0 %v476
      %540 = vmatprep.subr.bf16.mxu0 0
      %541 = vmatpush1.bf16.msra.mxu0 %v477
      %542 = vmatprep.mubr.bf16.mxu0 %v343
      %543 = vmatmul.mubr.bf16.gmra.mrb[0].mxu0 %v342
      %v544 = vpop.f32.mrb[0].mxu0
      %v545 = vadd.f32 0.0, %v544
      %v546 = vpop.f32.mrb[0].mxu0
      %v547 = vpop.f32.mrb[0].mxu0
      %v548 = vadd.f32 0.0, %v547
      %v549 = vpop.f32.mrb[0].mxu0
      %550 = vmatprep.mubr.bf16.mxu0 %v346
      %551 = vmatmul.mubr.bf16.gmra.mrb[0].mxu0 %v345
      %v552 = vpop.f32.mrb[0].mxu0
      %v553 = vadd.f32 0.0, %v552
      %v554 = vpop.f32.mrb[0].mxu0
      %v555 = vpop.f32.mrb[0].mxu0
      %v556 = vadd.f32 0.0, %v555
      %v557 = vpop.f32.mrb[0].mxu0
      %558 = vmatprep.mubr.bf16.mxu0 %v349
      %559 = vmatmul.mubr.bf16.gmra.mrb[0].mxu0 %v348
      %v560 = vpop.f32.mrb[0].mxu0
      %v561 = vadd.f32 0.0, %v560
      %v562 = vpop.f32.mrb[0].mxu0
      %v563 = vpop.f32.mrb[0].mxu0
      %v564 = vadd.f32 0.0, %v563
      %v565 = vpop.f32.mrb[0].mxu0
      %566 = vmatprep.mubr.bf16.mxu0 %v352
      %567 = vmatmul.mubr.bf16.gmra.mrb[0].mxu0 %v351
      %v568 = vpop.f32.mrb[0].mxu0
      %v569 = vadd.f32 0.0, %v568
      %v570 = vpop.f32.mrb[0].mxu0
      %v571 = vpop.f32.mrb[0].mxu0
      %v572 = vadd.f32 0.0, %v571
      %v573 = vpop.f32.mrb[0].mxu0
      %574 = vdwg.mxu0
      %575 = vmatprep.subr.bf16.mxu0 0
      %576 = vmatpush1.bf16.msra.mxu0 %v478
      %577 = vmatprep.subr.bf16.mxu0 0
      %578 = vmatpush1.bf16.msra.mxu0 %v479
      %579 = vmatprep.subr.bf16.mxu0 0
      %580 = vmatpush1.bf16.msra.mxu0 %v480
      %581 = vmatprep.subr.bf16.mxu0 0
      %582 = vmatpush1.bf16.msra.mxu0 %v481
      %583 = vmatprep.subr.bf16.mxu0 0
      %584 = vmatpush1.bf16.msra.mxu0 %v482
      %585 = vmatprep.subr.bf16.mxu0 0
      %586 = vmatpush1.bf16.msra.mxu0 %v483
      %587 = vmatprep.subr.bf16.mxu0 0
      %588 = vmatpush1.bf16.msra.mxu0 %v484
      %589 = vmatprep.subr.bf16.mxu0 0
      %590 = vmatpush1.bf16.msra.mxu0 %v485
      %591 = vmatprep.subr.bf16.mxu0 0
      %592 = vmatpush1.bf16.msra.mxu0 0
      %593 = vmatprep.subr.bf16.mxu0 0
      %594 = vmatpush1.bf16.msra.mxu0 0
      %595 = vmatprep.subr.bf16.mxu0 0
      %596 = vmatpush1.bf16.msra.mxu0 0
      %597 = vmatprep.subr.bf16.mxu0 0
      %598 = vmatpush1.bf16.msra.mxu0 0
      %599 = vmatprep.subr.bf16.mxu0 0
      %600 = vmatpush1.bf16.msra.mxu0 0
      %601 = vmatprep.subr.bf16.mxu0 0
      %602 = vmatpush1.bf16.msra.mxu0 0
      %603 = vmatprep.subr.bf16.mxu0 0
      %604 = vmatpush1.bf16.msra.mxu0 0
      %605 = vmatprep.subr.bf16.mxu0 0
      %606 = vmatpush1.bf16.msra.mxu0 0
      %607 = vmatprep.mubr.bf16.mxu0 0
      %608 = vmatmul.mubr.bf16.gmra.mrb[0].mxu0 %v344
      %v609 = vpop.f32.mrb[0].mxu0
      %v610 = vadd.f32 %v545, %v609
      %v611 = vpop.f32.mrb[0].mxu0
      %v612 = vpop.f32.mrb[0].mxu0
      %v613 = vadd.f32 %v548, %v612
      %v614 = vpop.f32.mrb[0].mxu0
      %615 = vmatprep.mubr.bf16.mxu0 0
      %616 = vmatmul.mubr.bf16.gmra.mrb[0].mxu0 %v347
      %v617 = vpop.f32.mrb[0].mxu0
      %v618 = vadd.f32 %v553, %v617
      %v619 = vpop.f32.mrb[0].mxu0
      %v620 = vpop.f32.mrb[0].mxu0
      %v621 = vadd.f32 %v556, %v620
      %v622 = vpop.f32.mrb[0].mxu0
      %623 = vmatprep.mubr.bf16.mxu0 0
      %624 = vmatmul.mubr.bf16.gmra.mrb[0].mxu0 %v350
      %v625 = vpop.f32.mrb[0].mxu0
      %v626 = vadd.f32 %v561, %v625
      %v627 = vpop.f32.mrb[0].mxu0
      %v628 = vpop.f32.mrb[0].mxu0
      %v629 = vadd.f32 %v564, %v628
      %v630 = vpop.f32.mrb[0].mxu0
      %631 = vmatprep.mubr.bf16.mxu0 0
      %632 = vmatmul.mubr.bf16.gmra.mrb[0].mxu0 %v353
      %v633 = vpop.f32.mrb[0].mxu0
      %v634 = vadd.f32 %v569, %v633
      %v635 = vpop.f32.mrb[0].mxu0
      %v636 = vpop.f32.mrb[0].mxu0
      %v637 = vadd.f32 %v572, %v636
      %v638 = vpop.f32.mrb[0].mxu0
      %639 = vdwg.mxu0
      %v656 = vunpack.c.l.b16 %v172
      %v657 = vunpack.c.h.b16 %v172
      %v658 = vunpack.c.l.b16 %v173
      %v659 = vunpack.c.l.b16 %v174
      %v660 = vunpack.c.h.b16 %v174
      %v661 = vunpack.c.l.b16 %v175
      %v662 = vunpack.c.l.b16 %v176
      %v663 = vunpack.c.h.b16 %v176
      %v664 = vunpack.c.l.b16 %v177
      %v665 = vunpack.c.l.b16 %v178
      %v666 = vunpack.c.h.b16 %v178
      %v667 = vunpack.c.l.b16 %v179
      %v668 = vunpack.c.l.b16 %v180
      %v669 = vunpack.c.h.b16 %v180
      %v670 = vunpack.c.l.b16 %v181
      %v671 = vunpack.c.l.b16 %v182
      %v672 = vunpack.c.h.b16 %v182
      %v673 = vunpack.c.l.b16 %v183
      %v674 = vunpack.c.l.b16 %v184
      %v675 = vunpack.c.h.b16 %v184
      %v676 = vunpack.c.l.b16 %v185
      %v677 = vunpack.c.l.b16 %v186
      %v678 = vunpack.c.h.b16 %v186
      %v679 = vunpack.c.l.b16 %v187
      %v680 = vpack.c.b16 %v659, %v656
      %v681 = vpack.c.b16 %v660, %v657
      %v682 = vpack.c.b16 %v661, %v658
      %v683 = vpack.c.b16 %v665, %v662
      %v684 = vpack.c.b16 %v666, %v663
      %v685 = vpack.c.b16 %v667, %v664
      %v686 = vpack.c.b16 %v671, %v668
      %v687 = vpack.c.b16 %v672, %v669
      %v688 = vpack.c.b16 %v673, %v670
      %v689 = vpack.c.b16 %v677, %v674
      %v690 = vpack.c.b16 %v678, %v675
      %v691 = vpack.c.b16 %v679, %v676
      %v752 = vunpack.c.l.b16 %v188
      %v753 = vunpack.c.l.b16 %v189
      %v754 = vunpack.c.l.b16 %v190
      %v755 = vunpack.c.l.b16 %v191
      %v756 = vunpack.c.l.b16 %v192
      %v757 = vunpack.c.l.b16 %v193
      %v758 = vunpack.c.l.b16 %v194
      %v759 = vunpack.c.l.b16 %v195
      %v760 = vunpack.c.l.b16 %v196
      %v761 = vunpack.c.l.b16 %v197
      %v762 = vunpack.c.l.b16 %v198
      %v763 = vunpack.c.l.b16 %v199
      %v764 = vunpack.c.l.b16 %v200
      %v765 = vunpack.c.l.b16 %v201
      %v766 = vunpack.c.l.b16 %v202
      %v767 = vunpack.c.l.b16 %v203
      %v768 = vunpack.c.l.b16 %v204
      %v769 = vunpack.c.l.b16 %v205
      %v770 = vunpack.c.l.b16 %v206
      %v771 = vunpack.c.l.b16 %v207
      %v772 = vunpack.c.l.b16 %v208
      %v773 = vunpack.c.l.b16 %v209
      %v774 = vunpack.c.l.b16 %v210
      %v775 = vunpack.c.l.b16 %v211
      %v776 = vunpack.c.l.b16 %v212
      %v777 = vunpack.c.l.b16 %v213
      %v778 = vunpack.c.l.b16 %v214
      %v779 = vunpack.c.l.b16 %v215
      %v780 = vunpack.c.l.b16 %v216
      %v781 = vunpack.c.l.b16 %v217
      %v782 = vunpack.c.l.b16 %v218
      %v783 = vunpack.c.l.b16 %v219
      %v784 = vunpack.c.l.b16 %v220
      %v785 = vunpack.c.l.b16 %v221
      %v786 = vunpack.c.l.b16 %v222
      %v787 = vunpack.c.l.b16 %v223
      %v788 = vunpack.c.l.b16 %v224
      %v789 = vunpack.c.l.b16 %v225
      %v790 = vunpack.c.l.b16 %v226
      %v791 = vunpack.c.l.b16 %v227
      %v792 = vunpack.c.l.b16 %v228
      %v793 = vunpack.c.l.b16 %v229
      %v794 = vunpack.c.l.b16 %v230
      %v795 = vunpack.c.l.b16 %v231
      %v796 = vunpack.c.l.b16 %v232
      %v797 = vunpack.c.l.b16 %v233
      %v798 = vunpack.c.l.b16 %v234
      %v799 = vunpack.c.l.b16 %v235
      %v800 = vpack.c.b16 %v753, %v752
      %v801 = vpack.c.b16 %v755, %v754
      %v802 = vpack.c.b16 %v757, %v756
      %v803 = vpack.c.b16 %v759, %v758
      %v804 = vpack.c.b16 %v761, %v760
      %v805 = vpack.c.b16 %v763, %v762
      %v806 = vpack.c.b16 %v765, %v764
      %v807 = vpack.c.b16 %v767, %v766
      %v808 = vpack.c.b16 %v769, %v768
      %v809 = vpack.c.b16 %v771, %v770
      %v810 = vpack.c.b16 %v773, %v772
      %v811 = vpack.c.b16 %v775, %v774
      %v812 = vpack.c.b16 %v777, %v776
      %v813 = vpack.c.b16 %v779, %v778
      %v814 = vpack.c.b16 %v781, %v780
      %v815 = vpack.c.b16 %v783, %v782
      %v816 = vpack.c.b16 %v785, %v784
      %v817 = vpack.c.b16 %v787, %v786
      %v818 = vpack.c.b16 %v789, %v788
      %v819 = vpack.c.b16 %v791, %v790
      %v820 = vpack.c.b16 %v793, %v792
      %v821 = vpack.c.b16 %v795, %v794
      %v822 = vpack.c.b16 %v797, %v796
      %v823 = vpack.c.b16 %v799, %v798
      %848 = vmatprep.subr.bf16.mxu0 0
      %849 = vmatpush1.bf16.msra.mxu0 %v800
      %850 = vmatprep.subr.bf16.mxu0 0
      %851 = vmatpush1.bf16.msra.mxu0 %v801
      %852 = vmatprep.subr.bf16.mxu0 0
      %853 = vmatpush1.bf16.msra.mxu0 %v802
      %854 = vmatprep.subr.bf16.mxu0 0
      %855 = vmatpush1.bf16.msra.mxu0 %v803
      %856 = vmatprep.subr.bf16.mxu0 0
      %857 = vmatpush1.bf16.msra.mxu0 %v804
      %858 = vmatprep.subr.bf16.mxu0 0
      %859 = vmatpush1.bf16.msra.mxu0 %v805
      %860 = vmatprep.subr.bf16.mxu0 0
      %861 = vmatpush1.bf16.msra.mxu0 %v806
      %862 = vmatprep.subr.bf16.mxu0 0
      %863 = vmatpush1.bf16.msra.mxu0 %v807
      %864 = vmatprep.subr.bf16.mxu0 0
      %865 = vmatpush1.bf16.msra.mxu0 %v808
      %866 = vmatprep.subr.bf16.mxu0 0
      %867 = vmatpush1.bf16.msra.mxu0 %v809
      %868 = vmatprep.subr.bf16.mxu0 0
      %869 = vmatpush1.bf16.msra.mxu0 %v810
      %870 = vmatprep.subr.bf16.mxu0 0
      %871 = vmatpush1.bf16.msra.mxu0 %v811
      %872 = vmatprep.subr.bf16.mxu0 0
      %873 = vmatpush1.bf16.msra.mxu0 %v812
      %874 = vmatprep.subr.bf16.mxu0 0
      %875 = vmatpush1.bf16.msra.mxu0 %v813
      %876 = vmatprep.subr.bf16.mxu0 0
      %877 = vmatpush1.bf16.msra.mxu0 %v814
      %878 = vmatprep.subr.bf16.mxu0 0
      %879 = vmatpush1.bf16.msra.mxu0 %v815
      %880 = vmatprep.mubr.bf16.mxu0 %v681
      %881 = vmatmul.mubr.bf16.gmra.mrb[0].mxu0 %v680
      %v882 = vpop.f32.mrb[0].mxu0
      %v883 = vadd.f32 %v610, %v882
      %v884 = vpop.f32.mrb[0].mxu0
      %v885 = vpop.f32.mrb[0].mxu0
      %v886 = vadd.f32 %v613, %v885
      %v887 = vpop.f32.mrb[0].mxu0
      %888 = vmatprep.mubr.bf16.mxu0 %v684
      %889 = vmatmul.mubr.bf16.gmra.mrb[0].mxu0 %v683
      %v890 = vpop.f32.mrb[0].mxu0
      %v891 = vadd.f32 %v618, %v890
      %v892 = vpop.f32.mrb[0].mxu0
      %v893 = vpop.f32.mrb[0].mxu0
      %v894 = vadd.f32 %v621, %v893
      %v895 = vpop.f32.mrb[0].mxu0
      %896 = vmatprep.mubr.bf16.mxu0 %v687
      %897 = vmatmul.mubr.bf16.gmra.mrb[0].mxu0 %v686
      %v898 = vpop.f32.mrb[0].mxu0
      %v899 = vadd.f32 %v626, %v898
      %v900 = vpop.f32.mrb[0].mxu0
      %v901 = vpop.f32.mrb[0].mxu0
      %v902 = vadd.f32 %v629, %v901
      %v903 = vpop.f32.mrb[0].mxu0
      %904 = vmatprep.mubr.bf16.mxu0 %v690
      %905 = vmatmul.mubr.bf16.gmra.mrb[0].mxu0 %v689
      %v906 = vpop.f32.mrb[0].mxu0
      %v907 = vadd.f32 %v634, %v906
      %v908 = vpop.f32.mrb[0].mxu0
      %v909 = vpop.f32.mrb[0].mxu0
      %v910 = vadd.f32 %v637, %v909
      %v911 = vpop.f32.mrb[0].mxu0
      %912 = vdwg.mxu0
      %913 = vmatprep.subr.bf16.mxu0 0
      %914 = vmatpush1.bf16.msra.mxu0 %v816
      %915 = vmatprep.subr.bf16.mxu0 0
      %916 = vmatpush1.bf16.msra.mxu0 %v817
      %917 = vmatprep.subr.bf16.mxu0 0
      %918 = vmatpush1.bf16.msra.mxu0 %v818
      %919 = vmatprep.subr.bf16.mxu0 0
      %920 = vmatpush1.bf16.msra.mxu0 %v819
      %921 = vmatprep.subr.bf16.mxu0 0
      %922 = vmatpush1.bf16.msra.mxu0 %v820
      %923 = vmatprep.subr.bf16.mxu0 0
      %924 = vmatpush1.bf16.msra.mxu0 %v821
      %925 = vmatprep.subr.bf16.mxu0 0
      %926 = vmatpush1.bf16.msra.mxu0 %v822
      %927 = vmatprep.subr.bf16.mxu0 0
      %928 = vmatpush1.bf16.msra.mxu0 %v823
      %929 = vmatprep.subr.bf16.mxu0 0
      %930 = vmatpush1.bf16.msra.mxu0 0
      %931 = vmatprep.subr.bf16.mxu0 0
      %932 = vmatpush1.bf16.msra.mxu0 0
      %933 = vmatprep.subr.bf16.mxu0 0
      %934 = vmatpush1.bf16.msra.mxu0 0
      %935 = vmatprep.subr.bf16.mxu0 0
      %936 = vmatpush1.bf16.msra.mxu0 0
      %937 = vmatprep.subr.bf16.mxu0 0
      %938 = vmatpush1.bf16.msra.mxu0 0
      %939 = vmatprep.subr.bf16.mxu0 0
      %940 = vmatpush1.bf16.msra.mxu0 0
      %941 = vmatprep.subr.bf16.mxu0 0
      %942 = vmatpush1.bf16.msra.mxu0 0
      %943 = vmatprep.subr.bf16.mxu0 0
      %944 = vmatpush1.bf16.msra.mxu0 0
      %945 = vmatprep.mubr.bf16.mxu0 0
      %946 = vmatmul.mubr.bf16.gmra.mrb[0].mxu0 %v682
      %v947 = vpop.f32.mrb[0].mxu0
      %v948 = vadd.f32 %v883, %v947
      %v949 = vpop.f32.mrb[0].mxu0
      %v950 = vpop.f32.mrb[0].mxu0
      %v951 = vadd.f32 %v886, %v950
      %v952 = vpop.f32.mrb[0].mxu0
      %953 = vmatprep.mubr.bf16.mxu0 0
      %954 = vmatmul.mubr.bf16.gmra.mrb[0].mxu0 %v685
      %v955 = vpop.f32.mrb[0].mxu0
      %v956 = vadd.f32 %v891, %v955
      %v957 = vpop.f32.mrb[0].mxu0
      %v958 = vpop.f32.mrb[0].mxu0
      %v959 = vadd.f32 %v894, %v958
      %v960 = vpop.f32.mrb[0].mxu0
      %961 = vmatprep.mubr.bf16.mxu0 0
      %962 = vmatmul.mubr.bf16.gmra.mrb[0].mxu0 %v688
      %v963 = vpop.f32.mrb[0].mxu0
      %v964 = vadd.f32 %v899, %v963
      %v965 = vpop.f32.mrb[0].mxu0
      %v966 = vpop.f32.mrb[0].mxu0
      %v967 = vadd.f32 %v902, %v966
      %v968 = vpop.f32.mrb[0].mxu0
      %969 = vmatprep.mubr.bf16.mxu0 0
      %970 = vmatmul.mubr.bf16.gmra.mrb[0].mxu0 %v691
      %v971 = vpop.f32.mrb[0].mxu0
      %v972 = vadd.f32 %v907, %v971
      %v973 = vpop.f32.mrb[0].mxu0
      %v974 = vpop.f32.mrb[0].mxu0
      %v975 = vadd.f32 %v910, %v974
      %v976 = vpop.f32.mrb[0].mxu0
      %977 = vdwg.mxu0
      %s978 = scalar_lea.vmem %s165, 24
      %v979 = vld [vmem:[%s978] sm:$0xff]
      %v980 = vld [vmem:[%s978 + $0x8] sm:$0xf]
      %v981 = vld [vmem:[%s978 + $0xc] sm:$0xff]
      %v982 = vld [vmem:[%s978 + $0x14] sm:$0xf]
      %v983 = vld [vmem:[%s978 + $0x18] sm:$0xff]
      %v984 = vld [vmem:[%s978 + $0x20] sm:$0xf]
      %v985 = vld [vmem:[%s978 + $0x24] sm:$0xff]
      %v986 = vld [vmem:[%s978 + $0x2c] sm:$0xf]
      %v987 = vld [vmem:[%s978 + $0x30] sm:$0xff]
      %v988 = vld [vmem:[%s978 + $0x38] sm:$0xf]
      %v989 = vld [vmem:[%s978 + $0x3c] sm:$0xff]
      %v990 = vld [vmem:[%s978 + $0x44] sm:$0xf]
      %v991 = vld [vmem:[%s978 + $0x48] sm:$0xff]
      %v992 = vld [vmem:[%s978 + $0x50] sm:$0xf]
      %v993 = vld [vmem:[%s978 + $0x54] sm:$0xff]
      %v994 = vld [vmem:[%s978 + $0x5c] sm:$0xf]
      %s995 = scalar_lea.vmem %s1, 384
      %v996 = vld [vmem:[%s995] sm:$0xf]
      %v997 = vld [vmem:[%s995 + $0x4] sm:$0xf]
      %v998 = vld [vmem:[%s995 + $0x8] sm:$0xf]
      %v999 = vld [vmem:[%s995 + $0xc] sm:$0xf]
      %v1000 = vld [vmem:[%s995 + $0x10] sm:$0xf]
      %v1001 = vld [vmem:[%s995 + $0x14] sm:$0xf]
      %v1002 = vld [vmem:[%s995 + $0x18] sm:$0xf]
      %v1003 = vld [vmem:[%s995 + $0x1c] sm:$0xf]
      %v1004 = vld [vmem:[%s995 + $0x20] sm:$0xf]
      %v1005 = vld [vmem:[%s995 + $0x24] sm:$0xf]
      %v1006 = vld [vmem:[%s995 + $0x28] sm:$0xf]
      %v1007 = vld [vmem:[%s995 + $0x2c] sm:$0xf]
      %v1008 = vld [vmem:[%s995 + $0x30] sm:$0xf]
      %v1009 = vld [vmem:[%s995 + $0x34] sm:$0xf]
      %v1010 = vld [vmem:[%s995 + $0x38] sm:$0xf]
      %v1011 = vld [vmem:[%s995 + $0x3c] sm:$0xf]
      %v1012 = vld [vmem:[%s995 + $0x40] sm:$0xf]
      %v1013 = vld [vmem:[%s995 + $0x44] sm:$0xf]
      %v1014 = vld [vmem:[%s995 + $0x48] sm:$0xf]
      %v1015 = vld [vmem:[%s995 + $0x4c] sm:$0xf]
      %v1016 = vld [vmem:[%s995 + $0x50] sm:$0xf]
      %v1017 = vld [vmem:[%s995 + $0x54] sm:$0xf]
      %v1018 = vld [vmem:[%s995 + $0x58] sm:$0xf]
      %v1019 = vld [vmem:[%s995 + $0x5c] sm:$0xf]
      %v1020 = vld [vmem:[%s995 + $0x60] sm:$0xf]
      %v1021 = vld [vmem:[%s995 + $0x64] sm:$0xf]
      %v1022 = vld [vmem:[%s995 + $0x68] sm:$0xf]
      %v1023 = vld [vmem:[%s995 + $0x6c] sm:$0xf]
      %v1024 = vld [vmem:[%s995 + $0x70] sm:$0xf]
      %v1025 = vld [vmem:[%s995 + $0x74] sm:$0xf]
      %v1026 = vld [vmem:[%s995 + $0x78] sm:$0xf]
      %v1027 = vld [vmem:[%s995 + $0x7c] sm:$0xf]
      %v1028 = vld [vmem:[%s995 + $0x80] sm:$0xf]
      %v1029 = vld [vmem:[%s995 + $0x84] sm:$0xf]
      %v1030 = vld [vmem:[%s995 + $0x88] sm:$0xf]
      %v1031 = vld [vmem:[%s995 + $0x8c] sm:$0xf]
      %v1032 = vld [vmem:[%s995 + $0x90] sm:$0xf]
      %v1033 = vld [vmem:[%s995 + $0x94] sm:$0xf]
      %v1034 = vld [vmem:[%s995 + $0x98] sm:$0xf]
      %v1035 = vld [vmem:[%s995 + $0x9c] sm:$0xf]
      %v1036 = vld [vmem:[%s995 + $0xa0] sm:$0xf]
      %v1037 = vld [vmem:[%s995 + $0xa4] sm:$0xf]
      %v1038 = vld [vmem:[%s995 + $0xa8] sm:$0xf]
      %v1039 = vld [vmem:[%s995 + $0xac] sm:$0xf]
      %v1040 = vld [vmem:[%s995 + $0xb0] sm:$0xf]
      %v1041 = vld [vmem:[%s995 + $0xb4] sm:$0xf]
      %v1042 = vld [vmem:[%s995 + $0xb8] sm:$0xf]
      %v1043 = vld [vmem:[%s995 + $0xbc] sm:$0xf]
      %v1060 = vunpack.c.l.b16 %v979
      %v1061 = vunpack.c.h.b16 %v979
      %v1062 = vunpack.c.l.b16 %v980
      %v1063 = vunpack.c.l.b16 %v981
      %v1064 = vunpack.c.h.b16 %v981
      %v1065 = vunpack.c.l.b16 %v982
      %v1066 = vunpack.c.l.b16 %v983
      %v1067 = vunpack.c.h.b16 %v983
      %v1068 = vunpack.c.l.b16 %v984
      %v1069 = vunpack.c.l.b16 %v985
      %v1070 = vunpack.c.h.b16 %v985
      %v1071 = vunpack.c.l.b16 %v986
      %v1072 = vunpack.c.l.b16 %v987
      %v1073 = vunpack.c.h.b16 %v987
      %v1074 = vunpack.c.l.b16 %v988
      %v1075 = vunpack.c.l.b16 %v989
      %v1076 = vunpack.c.h.b16 %v989
      %v1077 = vunpack.c.l.b16 %v990
      %v1078 = vunpack.c.l.b16 %v991
      %v1079 = vunpack.c.h.b16 %v991
      %v1080 = vunpack.c.l.b16 %v992
      %v1081 = vunpack.c.l.b16 %v993
      %v1082 = vunpack.c.h.b16 %v993
      %v1083 = vunpack.c.l.b16 %v994
      %v1084 = vpack.c.b16 %v1063, %v1060
      %v1085 = vpack.c.b16 %v1064, %v1061
      %v1086 = vpack.c.b16 %v1065, %v1062
      %v1087 = vpack.c.b16 %v1069, %v1066
      %v1088 = vpack.c.b16 %v1070, %v1067
      %v1089 = vpack.c.b16 %v1071, %v1068
      %v1090 = vpack.c.b16 %v1075, %v1072
      %v1091 = vpack.c.b16 %v1076, %v1073
      %v1092 = vpack.c.b16 %v1077, %v1074
      %v1093 = vpack.c.b16 %v1081, %v1078
      %v1094 = vpack.c.b16 %v1082, %v1079
      %v1095 = vpack.c.b16 %v1083, %v1080
      %v1156 = vunpack.c.l.b16 %v996
      %v1157 = vunpack.c.l.b16 %v997
      %v1158 = vunpack.c.l.b16 %v998
      %v1159 = vunpack.c.l.b16 %v999
      %v1160 = vunpack.c.l.b16 %v1000
      %v1161 = vunpack.c.l.b16 %v1001
      %v1162 = vunpack.c.l.b16 %v1002
      %v1163 = vunpack.c.l.b16 %v1003
      %v1164 = vunpack.c.l.b16 %v1004
      %v1165 = vunpack.c.l.b16 %v1005
      %v1166 = vunpack.c.l.b16 %v1006
      %v1167 = vunpack.c.l.b16 %v1007
      %v1168 = vunpack.c.l.b16 %v1008
      %v1169 = vunpack.c.l.b16 %v1009
      %v1170 = vunpack.c.l.b16 %v1010
      %v1171 = vunpack.c.l.b16 %v1011
      %v1172 = vunpack.c.l.b16 %v1012
      %v1173 = vunpack.c.l.b16 %v1013
      %v1174 = vunpack.c.l.b16 %v1014
      %v1175 = vunpack.c.l.b16 %v1015
      %v1176 = vunpack.c.l.b16 %v1016
      %v1177 = vunpack.c.l.b16 %v1017
      %v1178 = vunpack.c.l.b16 %v1018
      %v1179 = vunpack.c.l.b16 %v1019
      %v1180 = vunpack.c.l.b16 %v1020
      %v1181 = vunpack.c.l.b16 %v1021
      %v1182 = vunpack.c.l.b16 %v1022
      %v1183 = vunpack.c.l.b16 %v1023
      %v1184 = vunpack.c.l.b16 %v1024
      %v1185 = vunpack.c.l.b16 %v1025
      %v1186 = vunpack.c.l.b16 %v1026
      %v1187 = vunpack.c.l.b16 %v1027
      %v1188 = vunpack.c.l.b16 %v1028
      %v1189 = vunpack.c.l.b16 %v1029
      %v1190 = vunpack.c.l.b16 %v1030
      %v1191 = vunpack.c.l.b16 %v1031
      %v1192 = vunpack.c.l.b16 %v1032
      %v1193 = vunpack.c.l.b16 %v1033
      %v1194 = vunpack.c.l.b16 %v1034
      %v1195 = vunpack.c.l.b16 %v1035
      %v1196 = vunpack.c.l.b16 %v1036
      %v1197 = vunpack.c.l.b16 %v1037
      %v1198 = vunpack.c.l.b16 %v1038
      %v1199 = vunpack.c.l.b16 %v1039
      %v1200 = vunpack.c.l.b16 %v1040
      %v1201 = vunpack.c.l.b16 %v1041
      %v1202 = vunpack.c.l.b16 %v1042
      %v1203 = vunpack.c.l.b16 %v1043
      %v1204 = vpack.c.b16 %v1157, %v1156
      %v1205 = vpack.c.b16 %v1159, %v1158
      %v1206 = vpack.c.b16 %v1161, %v1160
      %v1207 = vpack.c.b16 %v1163, %v1162
      %v1208 = vpack.c.b16 %v1165, %v1164
      %v1209 = vpack.c.b16 %v1167, %v1166
      %v1210 = vpack.c.b16 %v1169, %v1168
      %v1211 = vpack.c.b16 %v1171, %v1170
      %v1212 = vpack.c.b16 %v1173, %v1172
      %v1213 = vpack.c.b16 %v1175, %v1174
      %v1214 = vpack.c.b16 %v1177, %v1176
      %v1215 = vpack.c.b16 %v1179, %v1178
      %v1216 = vpack.c.b16 %v1181, %v1180
      %v1217 = vpack.c.b16 %v1183, %v1182
      %v1218 = vpack.c.b16 %v1185, %v1184
      %v1219 = vpack.c.b16 %v1187, %v1186
      %v1220 = vpack.c.b16 %v1189, %v1188
      %v1221 = vpack.c.b16 %v1191, %v1190
      %v1222 = vpack.c.b16 %v1193, %v1192
      %v1223 = vpack.c.b16 %v1195, %v1194
      %v1224 = vpack.c.b16 %v1197, %v1196
      %v1225 = vpack.c.b16 %v1199, %v1198
      %v1226 = vpack.c.b16 %v1201, %v1200
      %v1227 = vpack.c.b16 %v1203, %v1202
      %1252 = vmatprep.subr.bf16.mxu0 0
      %1253 = vmatpush1.bf16.msra.mxu0 %v1204
      %1254 = vmatprep.subr.bf16.mxu0 0
      %1255 = vmatpush1.bf16.msra.mxu0 %v1205
      %1256 = vmatprep.subr.bf16.mxu0 0
      %1257 = vmatpush1.bf16.msra.mxu0 %v1206
      %1258 = vmatprep.subr.bf16.mxu0 0
      %1259 = vmatpush1.bf16.msra.mxu0 %v1207
      %1260 = vmatprep.subr.bf16.mxu0 0
      %1261 = vmatpush1.bf16.msra.mxu0 %v1208
      %1262 = vmatprep.subr.bf16.mxu0 0
      %1263 = vmatpush1.bf16.msra.mxu0 %v1209
      %1264 = vmatprep.subr.bf16.mxu0 0
      %1265 = vmatpush1.bf16.msra.mxu0 %v1210
      %1266 = vmatprep.subr.bf16.mxu0 0
      %1267 = vmatpush1.bf16.msra.mxu0 %v1211
      %1268 = vmatprep.subr.bf16.mxu0 0
      %1269 = vmatpush1.bf16.msra.mxu0 %v1212
      %1270 = vmatprep.subr.bf16.mxu0 0
      %1271 = vmatpush1.bf16.msra.mxu0 %v1213
      %1272 = vmatprep.subr.bf16.mxu0 0
      %1273 = vmatpush1.bf16.msra.mxu0 %v1214
      %1274 = vmatprep.subr.bf16.mxu0 0
      %1275 = vmatpush1.bf16.msra.mxu0 %v1215
      %1276 = vmatprep.subr.bf16.mxu0 0
      %1277 = vmatpush1.bf16.msra.mxu0 %v1216
      %1278 = vmatprep.subr.bf16.mxu0 0
      %1279 = vmatpush1.bf16.msra.mxu0 %v1217
      %1280 = vmatprep.subr.bf16.mxu0 0
      %1281 = vmatpush1.bf16.msra.mxu0 %v1218
      %1282 = vmatprep.subr.bf16.mxu0 0
      %1283 = vmatpush1.bf16.msra.mxu0 %v1219
      %1284 = vmatprep.mubr.bf16.mxu0 %v1085
      %1285 = vmatmul.mubr.bf16.gmra.mrb[0].mxu0 %v1084
      %v1286 = vpop.f32.mrb[0].mxu0
      %v1287 = vadd.f32 0.0, %v1286
      %v1288 = vpop.f32.mrb[0].mxu0
      %v1289 = vpop.f32.mrb[0].mxu0
      %v1290 = vadd.f32 0.0, %v1289
      %v1291 = vpop.f32.mrb[0].mxu0
      %1292 = vmatprep.mubr.bf16.mxu0 %v1088
      %1293 = vmatmul.mubr.bf16.gmra.mrb[0].mxu0 %v1087
      %v1294 = vpop.f32.mrb[0].mxu0
      %v1295 = vadd.f32 0.0, %v1294
      %v1296 = vpop.f32.mrb[0].mxu0
      %v1297 = vpop.f32.mrb[0].mxu0
      %v1298 = vadd.f32 0.0, %v1297
      %v1299 = vpop.f32.mrb[0].mxu0
      %1300 = vmatprep.mubr.bf16.mxu0 %v1091
      %1301 = vmatmul.mubr.bf16.gmra.mrb[0].mxu0 %v1090
      %v1302 = vpop.f32.mrb[0].mxu0
      %v1303 = vadd.f32 0.0, %v1302
      %v1304 = vpop.f32.mrb[0].mxu0
      %v1305 = vpop.f32.mrb[0].mxu0
      %v1306 = vadd.f32 0.0, %v1305
      %v1307 = vpop.f32.mrb[0].mxu0
      %1308 = vmatprep.mubr.bf16.mxu0 %v1094
      %1309 = vmatmul.mubr.bf16.gmra.mrb[0].mxu0 %v1093
      %v1310 = vpop.f32.mrb[0].mxu0
      %v1311 = vadd.f32 0.0, %v1310
      %v1312 = vpop.f32.mrb[0].mxu0
      %v1313 = vpop.f32.mrb[0].mxu0
      %v1314 = vadd.f32 0.0, %v1313
      %v1315 = vpop.f32.mrb[0].mxu0
      %1316 = vdwg.mxu0
      %1317 = vmatprep.subr.bf16.mxu0 0
      %1318 = vmatpush1.bf16.msra.mxu0 %v1220
      %1319 = vmatprep.subr.bf16.mxu0 0
      %1320 = vmatpush1.bf16.msra.mxu0 %v1221
      %1321 = vmatprep.subr.bf16.mxu0 0
      %1322 = vmatpush1.bf16.msra.mxu0 %v1222
      %1323 = vmatprep.subr.bf16.mxu0 0
      %1324 = vmatpush1.bf16.msra.mxu0 %v1223
      %1325 = vmatprep.subr.bf16.mxu0 0
      %1326 = vmatpush1.bf16.msra.mxu0 %v1224
      %1327 = vmatprep.subr.bf16.mxu0 0
      %1328 = vmatpush1.bf16.msra.mxu0 %v1225
      %1329 = vmatprep.subr.bf16.mxu0 0
      %1330 = vmatpush1.bf16.msra.mxu0 %v1226
      %1331 = vmatprep.subr.bf16.mxu0 0
      %1332 = vmatpush1.bf16.msra.mxu0 %v1227
      %1333 = vmatprep.subr.bf16.mxu0 0
      %1334 = vmatpush1.bf16.msra.mxu0 0
      %1335 = vmatprep.subr.bf16.mxu0 0
      %1336 = vmatpush1.bf16.msra.mxu0 0
      %1337 = vmatprep.subr.bf16.mxu0 0
      %1338 = vmatpush1.bf16.msra.mxu0 0
      %1339 = vmatprep.subr.bf16.mxu0 0
      %1340 = vmatpush1.bf16.msra.mxu0 0
      %1341 = vmatprep.subr.bf16.mxu0 0
      %1342 = vmatpush1.bf16.msra.mxu0 0
      %1343 = vmatprep.subr.bf16.mxu0 0
      %1344 = vmatpush1.bf16.msra.mxu0 0
      %1345 = vmatprep.subr.bf16.mxu0 0
      %1346 = vmatpush1.bf16.msra.mxu0 0
      %1347 = vmatprep.subr.bf16.mxu0 0
      %1348 = vmatpush1.bf16.msra.mxu0 0
      %1349 = vmatprep.mubr.bf16.mxu0 0
      %1350 = vmatmul.mubr.bf16.gmra.mrb[0].mxu0 %v1086
      %v1351 = vpop.f32.mrb[0].mxu0
      %v1352 = vadd.f32 %v1287, %v1351
      %v1353 = vpop.f32.mrb[0].mxu0
      %v1354 = vpop.f32.mrb[0].mxu0
      %v1355 = vadd.f32 %v1290, %v1354
      %v1356 = vpop.f32.mrb[0].mxu0
      %1357 = vmatprep.mubr.bf16.mxu0 0
      %1358 = vmatmul.mubr.bf16.gmra.mrb[0].mxu0 %v1089
      %v1359 = vpop.f32.mrb[0].mxu0
      %v1360 = vadd.f32 %v1295, %v1359
      %v1361 = vpop.f32.mrb[0].mxu0
      %v1362 = vpop.f32.mrb[0].mxu0
      %v1363 = vadd.f32 %v1298, %v1362
      %v1364 = vpop.f32.mrb[0].mxu0
      %1365 = vmatprep.mubr.bf16.mxu0 0
      %1366 = vmatmul.mubr.bf16.gmra.mrb[0].mxu0 %v1092
      %v1367 = vpop.f32.mrb[0].mxu0
      %v1368 = vadd.f32 %v1303, %v1367
      %v1369 = vpop.f32.mrb[0].mxu0
      %v1370 = vpop.f32.mrb[0].mxu0
      %v1371 = vadd.f32 %v1306, %v1370
      %v1372 = vpop.f32.mrb[0].mxu0
      %1373 = vmatprep.mubr.bf16.mxu0 0
      %1374 = vmatmul.mubr.bf16.gmra.mrb[0].mxu0 %v1095
      %v1375 = vpop.f32.mrb[0].mxu0
      %v1376 = vadd.f32 %v1311, %v1375
      %v1377 = vpop.f32.mrb[0].mxu0
      %v1378 = vpop.f32.mrb[0].mxu0
      %v1379 = vadd.f32 %v1314, %v1378
      %v1380 = vpop.f32.mrb[0].mxu0
      %1381 = vdwg.mxu0
      %v1382 = vadd.f32 %v948, %v1352
      %v1383 = vadd.f32 %v951, %v1355
      %v1384 = vadd.f32 %v956, %v1360
      %v1385 = vadd.f32 %v959, %v1363
      %v1386 = vadd.f32 %v964, %v1368
      %v1387 = vadd.f32 %v967, %v1371
      %v1388 = vadd.f32 %v972, %v1376
      %v1389 = vadd.f32 %v975, %v1379
      %v1390 = vld [vmem:[%s2] sm:$0x1]
      %v1392 = vlaneseq
      %v1393 = vshrl.u32 %v1392, 7
      %v1394 = vsub.s32 0, %v1393
      %v1395 = vrot.slane %v1390, %v1394
      %v1397 = vadd.f32 %v1382, %v1395
      %v1398 = vadd.f32 %v1383, %v1395
      %v1399 = vadd.f32 %v1384, %v1395
      %v1400 = vadd.f32 %v1385, %v1395
      %v1401 = vadd.f32 %v1386, %v1395
      %v1402 = vadd.f32 %v1387, %v1395
      %v1403 = vadd.f32 %v1388, %v1395
      %v1404 = vadd.f32 %v1389, %v1395
      %v1405 = vmax.f32 %v1397, 0.0
      %v1406 = vmax.f32 %v1398, 0.0
      %v1407 = vmax.f32 %v1399, 0.0
      %v1408 = vmax.f32 %v1400, 0.0
      %v1409 = vmax.f32 %v1401, 0.0
      %v1410 = vmax.f32 %v1402, 0.0
      %v1411 = vmax.f32 %v1403, 0.0
      %v1412 = vmax.f32 %v1404, 0.0
      %v1413 = vpack.c.bf16 %v1405, %v1405
      %v1414 = vpack.c.bf16 %v1406, %v1406
      %v1415 = vpack.c.bf16 %v1407, %v1407
      %v1416 = vpack.c.bf16 %v1408, %v1408
      %v1417 = vpack.c.bf16 %v1409, %v1409
      %v1418 = vpack.c.bf16 %v1410, %v1410
      %v1419 = vpack.c.bf16 %v1411, %v1411
      %v1420 = vpack.c.bf16 %v1412, %v1412
      %1421 = vst [vmem:[%s170] sm:$0xf] %v1413
      %1422 = vst [vmem:[%s170 + $0x4] sm:$0xf] %v1414
      %1423 = vst [vmem:[%s170 + $0x8] sm:$0xf] %v1415
      %1424 = vst [vmem:[%s170 + $0xc] sm:$0xf] %v1416
      %1425 = vst [vmem:[%s170 + $0x10] sm:$0xf] %v1417
      %1426 = vst [vmem:[%s170 + $0x14] sm:$0xf] %v1418
      %1427 = vst [vmem:[%s170 + $0x18] sm:$0xf] %v1419
      %1428 = vst [vmem:[%s170 + $0x1c] sm:$0xf] %v1420
      %p1429 = scmp.lt.s32.totalorder %s14, 1
      %s1430 = scalar_select %p1429, %s14, 1
      %s1431 = smul.addr %s1430, 8
      %s1432 = smul.addr %s1431, 4
      %s1433 = scalar_lea.vmem %s3, %s1432
      // Predicated region
      $region33: #{resnet50_forward.10} parent=31 // pred_check
        %p1434 = pneg %p100
      $region34: #{resnet50_forward.10} parent=31 // pred_check_branch
        %1436 = sbr.rel (%p1434) target = $region36
      $region35: #{resnet50_forward.10} parent=31 // pred_region
        _
      $region36: #{resnet50_forward.10} parent=31 // pred_fallthru
        _
    $region32: #{resnet50_forward.10} parent=5 // pred_fallthru
      _
    %p1437 = scmp.le.s32.totalorder 2, %s9
    // Predicated region
    $region37: #{resnet50_forward.10} parent=5 // pred_check
      %p1438 = pneg %p1437
    $region38: #{resnet50_forward.10} parent=5 // pred_check_branch
      %1440 = sbr.rel (%p1438) target = $region40
    $region39: #{resnet50_forward.10} parent=5 // pred_region
      %s1441 = ssub.s32 %s9, 2
      // Predicated region
      $region41: #{resnet50_forward.10} parent=39 // pred_check
        %p1442 = pneg %p106
      $region42: #{resnet50_forward.10} parent=39 // pred_check_branch
        %1444 = sbr.rel (%p1442) target = $region44
      $region43: #{resnet50_forward.10} parent=39 // pred_region
        %p1445 = scmp.lt.s32.totalorder %s15, 1
        %s1446 = scalar_select %p1445, %s15, 1
        %s1447 = smul.addr %s1446, 8
        %s1448 = smul.addr %s1447, 4
        %s1449 = scalar_lea.vmem %s3, %s1448
      $region44: #{resnet50_forward.10} parent=39 // pred_fallthru
        _
    $region40: #{resnet50_forward.10} parent=5 // pred_fallthru
      _
  $region6: #{resnet50_forward.10} parent=0 // loop_footer
    %s13 = sadd.s32 1, %s9
  $region7: #{resnet50_forward.10} parent=0 // loop_footer_branch
    %8 = sbr.rel target = $region3
  $region8: #{resnet50_forward.10} parent=0 // loop_exit
    _

// kernel: resnet50_forward.14
$region0: #{resnet50_forward.14}
  #allocation0 [shape = 'u32[]', space=smem, size = 0x4, offset = 0x4, fixed_abs, tag = 'smem constant byte address 0x4 - core index']
  #allocation1 [shape = 'u32[144,128]{1,0:T(1,128)}', space=vmem, size = 0x12000, scoped, tag = 'internal scratch']
  %s0 = inlined_call_operand.vmem [shape: bf16[2,16,128], index: 0, kind: input, shape index: {}]
  %s1 = inlined_call_operand.vmem [shape: f32[2,128], index: 1, kind: output, shape index: {}]
  %s2 = sld [smem:[#allocation0]]
  $region14: #{resnet50_forward.14} parent=0
    _
  %s4 = ssub.s32 1, %s2
  %s5 = scalar_select 0, %s4, %s2
  // Predicated region
  $region2: #{resnet50_forward.14} parent=0 // pred_check
    _
  $region3: #{resnet50_forward.14} parent=0 // pred_check_branch
    %7 = sbr.rel (0) target = $region5
  $region4: #{resnet50_forward.14} parent=0 // pred_region
    _
  $region5: #{resnet50_forward.14} parent=0 // pred_fallthru
    _
  %v8 = vld [vmem:[%s0] sm:$0xf]
  %v9 = vld [vmem:[%s0 + $0x4] sm:$0xf]
  %v10 = vld [vmem:[%s0 + $0x8] sm:$0xf]
  %v11 = vld [vmem:[%s0 + $0xc] sm:$0xf]
  %v12 = vunpack.c.l.bf16 %v8
  %v13 = vunpack.c.l.bf16 %v9
  %v14 = vunpack.c.l.bf16 %v10
  %v15 = vunpack.c.l.bf16 %v11
  %v16 = vadd.f32 %v12, %v13
  %v17 = vrot.slane %v16, 4
  %v18 = vadd.f32 %v16, %v17
  %v19 = vrot.slane %v18, 2
  %v20 = vadd.f32 %v18, %v19
  %v21 = vrot.slane %v20, 1
  %v22 = vadd.f32 %v20, %v21
  %v23 = vadd.f32 %v14, %v15
  %v24 = vrot.slane %v23, 4
  %v25 = vadd.f32 %v23, %v24
  %v26 = vrot.slane %v25, 2
  %v27 = vadd.f32 %v25, %v26
  %v28 = vrot.slane %v27, 1
  %v29 = vadd.f32 %v27, %v28
  %vm32 = vcmask 1041409
  %v33 = vsel %vm32, %v29, %v22
  %35 = vst [vmem:[%s1] sm:$0x3] %v33
  // Predicated region
  $region6: #{resnet50_forward.14} parent=0 // pred_check
    _
  $region7: #{resnet50_forward.14} parent=0 // pred_check_branch
    %37 = sbr.rel (0) target = $region9
  $region8: #{resnet50_forward.14} parent=0 // pred_region
    _
  $region9: #{resnet50_forward.14} parent=0 // pred_fallthru
    _
  // Predicated region
  $region10: #{resnet50_forward.14} parent=0 // pred_check
    _
  $region11: #{resnet50_forward.14} parent=0 // pred_check_branch
    %39 = sbr.rel (0) target = $region13
  $region12: #{resnet50_forward.14} parent=0 // pred_region
    _
  $region13: #{resnet50_forward.14} parent=0 // pred_fallthru
    _

// kernel: resnet50_forward.12
$region0: #{resnet50_forward.12}
  #allocation0 [shape = 'u32[]', space=smem, size = 0x4, offset = 0x4, fixed_abs, tag = 'smem constant byte address 0x4 - core index']
  #allocation1 [shape = 'u32[144,128]{1,0:T(1,128)}', space=vmem, size = 0x12000, scoped, tag = 'internal scratch']
  %s0 = inlined_call_operand.vmem [shape: bf16[32,1152], index: 0, kind: input, shape index: {}]
  %s1 = inlined_call_operand.vmem [shape: bf16[1152,128], index: 1, kind: input, shape index: {}]
  %s2 = inlined_call_operand.vmem [shape: f32[1,128], index: 2, kind: input, shape index: {}]
  %s3 = inlined_call_operand.vmem [shape: bf16[32,128], index: 3, kind: output, shape index: {}]
  %s4 = sld [smem:[#allocation0]]
  $region45: #{resnet50_forward.12} parent=0
    _
  %s6 = ssub.s32 1, %s4
  %s7 = scalar_select 0, %s6, %s4
  loop: start=0, step=1, limit=4
  $region2: #{resnet50_forward.12} parent=0 // loop_pre_header
    _
  $region3: #{resnet50_forward.12} parent=0 // loop_header
    %s9 = sphi 0, %s13
    %p10 = scmp.ge.s32.totalorder %s9, 4
    %s16 = sphi 0, %s28
    %s17 = sphi 0, %s24
    %s18 = sphi 0, %s16
    %s19 = sphi 0, %s17
    %s20 = sphi 0, %s18
    %s21 = sphi 0, %s19
    %s31 = sphi 0, %s33
    %s34 = sphi 0, %s31
    %s35 = sphi 0, %s34
    %s51 = sphi 0, %s35
    %s57 = sphi 0, %s59
    %s60 = sphi 0, %s57
    %s61 = sphi 0, %s60
    %s77 = sphi 0, %s61
    %s83 = sphi 0, %s85
    %s86 = sphi 0, %s83
    %s87 = sphi 0, %s86
    %s103 = sphi 0, %s87
    %s111 = sphi 0, %s113
    %s114 = sphi 0, %s111
    %s115 = sphi 0, %s114
    %s131 = sphi 0, %s115
  $region4: #{resnet50_forward.12} parent=0 // loop_header_branch
    %12 = sbr.rel (%p10) target = $region8
  $region5: #{resnet50_forward.12} parent=0 // loop_body
    %s14 = ssub.s32 %s9, 1
    %s15 = ssub.s32 %s9, 2
    %s22 = sadd.s32 1, %s17
    %p23 = scmp.ge.s32.totalorder %s22, 1
    %s24 = scalar_select %p23, 0, %s22
    %s25 = sadd.s32 1, %s16
    %s26 = scalar_select %p23, %s25, %s16
    %p27 = scmp.ge.s32.totalorder %s26, 2
    %s28 = scalar_select %p27, 0, %s26
    %s29 = ssub.s32 %s16, %s28
    %p30 = scmp.eq.s32.totalorder %s29, 0
    %s32 = sadd.s32 %s31, 1
    %s33 = scalar_select %p30, %s31, %s32
    %p36 = pneg %p30
    %p37 = scmp.eq.s32.totalorder %s9, 1
    %p38 = por %p36, %p37
    %p39 = scmp.ne.s32.totalorder %s31, %s34
    %p40 = scmp.eq.s32.totalorder %s9, 0
    %p41 = por %p39, %p40
    %p42 = scmp.ne.s32.totalorder %s31, %s34
    %p43 = scmp.eq.s32.totalorder %s14, 1
    %p44 = por %p42, %p43
    %p45 = scmp.ne.s32.totalorder %s34, %s35
    %p46 = scmp.eq.s32.totalorder %s14, 0
    %p47 = por %p45, %p46
    %p48 = scmp.ne.s32.totalorder %s34, %s35
    %p49 = scmp.eq.s32.totalorder %s15, 1
    %p50 = por %p48, %p49
    %p52 = scmp.ne.s32.totalorder %s35, %s51
    %p53 = scmp.eq.s32.totalorder %s15, 0
    %p54 = por %p52, %p53
    %s55 = ssub.s32 %s17, %s24
    %p56 = scmp.eq.s32.totalorder %s55, 0
    %s58 = sadd.s32 %s57, 1
    %s59 = scalar_select %p56, %s57, %s58
    %p62 = pneg %p56
    %p63 = scmp.eq.s32.totalorder %s9, 1
    %p64 = por %p62, %p63
    %p65 = scmp.ne.s32.totalorder %s57, %s60
    %p66 = scmp.eq.s32.totalorder %s9, 0
    %p67 = por %p65, %p66
    %p68 = scmp.ne.s32.totalorder %s57, %s60
    %p69 = scmp.eq.s32.totalorder %s14, 1
    %p70 = por %p68, %p69
    %p71 = scmp.ne.s32.totalorder %s60, %s61
    %p72 = scmp.eq.s32.totalorder %s14, 0
    %p73 = por %p71, %p72
    %p74 = scmp.ne.s32.totalorder %s60, %s61
    %p75 = scmp.eq.s32.totalorder %s15, 1
    %p76 = por %p74, %p75
    %p78 = scmp.ne.s32.totalorder %s61, %s77
    %p79 = scmp.eq.s32.totalorder %s15, 0
    %p80 = por %p78, %p79
    %s81 = ssub.s32 %s17, %s24
    %p82 = scmp.eq.s32.totalorder %s81, 0
    %s84 = sadd.s32 %s83, 1
    %s85 = scalar_select %p82, %s83, %s84
    %p88 = pneg %p82
    %p89 = scmp.eq.s32.totalorder %s9, 1
    %p90 = por %p88, %p89
    %p91 = scmp.ne.s32.totalorder %s83, %s86
    %p92 = scmp.eq.s32.totalorder %s9, 0
    %p93 = por %p91, %p92
    %p94 = scmp.ne.s32.totalorder %s83, %s86
    %p95 = scmp.eq.s32.totalorder %s14, 1
    %p96 = por %p94, %p95
    %p97 = scmp.ne.s32.totalorder %s86, %s87
    %p98 = scmp.eq.s32.totalorder %s14, 0
    %p99 = por %p97, %p98
    %p100 = scmp.ne.s32.totalorder %s86, %s87
    %p101 = scmp.eq.s32.totalorder %s15, 1
    %p102 = por %p100, %p101
    %p104 = scmp.ne.s32.totalorder %s87, %s103
    %p105 = scmp.eq.s32.totalorder %s15, 0
    %p106 = por %p104, %p105
    %s107 = ssub.s32 %s16, %s28
    %s108 = ssub.s32 %s17, %s24
    %s109 = sor.u32 %s107, %s108
    %p110 = scmp.eq.s32.totalorder %s109, 0
    %s112 = sadd.s32 %s111, 1
    %s113 = scalar_select %p110, %s111, %s112
    %p116 = pneg %p110
    %p117 = scmp.eq.s32.totalorder %s9, 1
    %p118 = por %p116, %p117
    %p119 = scmp.ne.s32.totalorder %s111, %s114
    %p120 = scmp.eq.s32.totalorder %s9, 0
    %p121 = por %p119, %p120
    %p122 = scmp.ne.s32.totalorder %s111, %s114
    %p123 = scmp.eq.s32.totalorder %s14, 1
    %p124 = por %p122, %p123
    %p125 = scmp.ne.s32.totalorder %s114, %s115
    %p126 = scmp.eq.s32.totalorder %s14, 0
    %p127 = por %p125, %p126
    %p128 = scmp.ne.s32.totalorder %s114, %s115
    %p129 = scmp.eq.s32.totalorder %s15, 1
    %p130 = por %p128, %p129
    %p132 = scmp.ne.s32.totalorder %s115, %s131
    %p133 = scmp.eq.s32.totalorder %s15, 0
    %p134 = por %p132, %p133
    %p135 = scmp.le.s32.totalorder 1, %s9
    %p136 = scmp.lt.s32.totalorder %s9, 3
    %p137 = pnand %p135, %p136
    %p138 = pneg %p137
    // Predicated region
    $region9: #{resnet50_forward.12} parent=5 // pred_check
      _
    $region10: #{resnet50_forward.12} parent=5 // pred_check_branch
      %140 = sbr.rel (%p137) target = $region12
    $region11: #{resnet50_forward.12} parent=5 // pred_region
      %s141 = ssub.s32 %s9, 1
      // Predicated region
      $region13: #{resnet50_forward.12} parent=11 // pred_check
        %p142 = pneg %p73
      $region14: #{resnet50_forward.12} parent=11 // pred_check_branch
        %144 = sbr.rel (%p142) target = $region16
      $region15: #{resnet50_forward.12} parent=11 // pred_region
        %p145 = scmp.lt.s32.totalorder %s19, 0
        %s146 = scalar_select %p145, %s19, 0
        %s147 = smul.addr %s146, 4
        %s148 = scalar_lea.vmem %s1, %s147
      $region16: #{resnet50_forward.12} parent=11 // pred_fallthru
        _
      // Predicated region
      $region17: #{resnet50_forward.12} parent=11 // pred_check
        %p149 = pneg %p99
      $region18: #{resnet50_forward.12} parent=11 // pred_check_branch
        %151 = sbr.rel (%p149) target = $region20
      $region19: #{resnet50_forward.12} parent=11 // pred_region
        %p152 = scmp.lt.s32.totalorder %s19, 0
        %s153 = scalar_select %p152, %s19, 0
        %s154 = scalar_lea.vmem %s2, %s153
      $region20: #{resnet50_forward.12} parent=11 // pred_fallthru
        _
    $region12: #{resnet50_forward.12} parent=5 // pred_fallthru
      _
    %p155 = scmp.lt.s32.totalorder %s9, 2
    // Predicated region
    $region21: #{resnet50_forward.12} parent=5 // pred_check
      %p156 = pneg %p155
    $region22: #{resnet50_forward.12} parent=5 // pred_check_branch
      %158 = sbr.rel (%p156) target = $region24
    $region23: #{resnet50_forward.12} parent=5 // pred_region
      // Predicated region
      $region25: #{resnet50_forward.12} parent=23 // pred_check
        %p159 = pneg %p41
      $region26: #{resnet50_forward.12} parent=23 // pred_check_branch
        %161 = sbr.rel (%p159) target = $region28
      $region27: #{resnet50_forward.12} parent=23 // pred_region
        %s162 = smul.u32 2, %s16
        %p163 = scmp.lt.s32.totalorder %s162, 3
        %s164 = scalar_select %p163, %s162, 3
        %s165 = smul.addr %s164, 9
        %s166 = smul.addr %s165, 4
        %s167 = scalar_lea.vmem %s0, %s166
        %s168 = smul.u32 2, %s16
      $region28: #{resnet50_forward.12} parent=23 // pred_fallthru
        _
    $region24: #{resnet50_forward.12} parent=5 // pred_fallthru
      _
    %p169 = scmp.le.s32.totalorder 1, %s9
    %p170 = scmp.lt.s32.totalorder %s9, 3
    %p171 = pnand %p169, %p170
    %p172 = pneg %p171
    // Predicated region
    $region29: #{resnet50_forward.12} parent=5 // pred_check
      _
    $region30: #{resnet50_forward.12} parent=5 // pred_check_branch
      %174 = sbr.rel (%p171) target = $region32
    $region31: #{resnet50_forward.12} parent=5 // pred_region
      %s175 = ssub.s32 %s9, 1
      %s176 = smul.u32 2, %s18
      %p177 = scmp.lt.s32.totalorder %s176, 3
      %s178 = scalar_select %p177, %s176, 3
      %s179 = smul.addr %s178, 9
      %s180 = smul.addr %s179, 4
      %s181 = scalar_lea.vmem %s0, %s180
      %p182 = pneg %p47
      %p183 = pneg %p44
      %p184 = scmp.lt.s32.totalorder %s19, 0
      %s185 = scalar_select %p184, %s19, 0
      %s186 = smul.addr %s185, 4
      %s187 = scalar_lea.vmem %s1, %s186
      %p188 = pneg %p73
      %p189 = pneg %p70
      %p190 = scmp.lt.s32.totalorder %s19, 0
      %s191 = scalar_select %p190, %s19, 0
      %s192 = scalar_lea.vmem %s2, %s191
      %p193 = pneg %p99
      %p194 = pneg %p96
      %p195 = pneg %p127
      %p196 = pneg %p124
      %s197 = smul.u32 2, %s18
      %p198 = scmp.lt.s32.totalorder %s197, 3
      %s199 = scalar_select %p198, %s197, 3
      %p200 = scmp.lt.s32.totalorder %s19, 0
      %s201 = scalar_select %p200, %s19, 0
      %s202 = sadd.s32 %s201, %s199
      %s203 = smul.addr %s202, 4
      %s204 = scalar_lea.vmem %s3, %s203
      %s205 = smul.u32 2, %s18
      %p206 = scmp.lt.s32.totalorder %s205, 3
      %s207 = scalar_select %p206, %s205, 3
      %s208 = smul.addr %s207, 9
      %s209 = smul.addr %s208, 4
      %s210 = scalar_lea.vmem %s0, %s209
      %s211 = smul.u32 2, %s18
      %p212 = scmp.lt.s32.totalorder %s19, 0
      %s213 = scalar_select %p212, %s19, 0
      %s214 = smul.addr %s213, 4
      %s215 = scalar_lea.vmem %s1, %s214
      %p216 = scmp.lt.s32.totalorder %s19, 0
      %s217 = scalar_select %p216, %s19, 0
      %s218 = scalar_lea.vmem %s2, %s217
      %s219 = smul.u32 2, %s18
      %p220 = scmp.lt.s32.totalorder %s219, 3
      %s221 = scalar_select %p220, %s219, 3
      %p222 = scmp.lt.s32.totalorder %s19, 0
      %s223 = scalar_select %p222, %s19, 0
      %s224 = sadd.s32 %s223, %s221
      %s225 = smul.addr %s224, 4
      %s226 = scalar_lea.vmem %s3, %s225
      %s227 = smul.u32 2, %s18
      %v229 = vld [vmem:[%s210] sm:$0xff]
      %v230 = vld [vmem:[%s210 + $0x8] sm:$0xff]
      %v231 = vld [vmem:[%s210 + $0x10] sm:$0xff]
      %v232 = vld [vmem:[%s210 + $0x18] sm:$0xff]
      %v233 = vld [vmem:[%s210 + $0x20] sm:$0xf]
      %v234 = vld [vmem:[%s210 + $0x24] sm:$0xff]
      %v235 = vld [vmem:[%s210 + $0x2c] sm:$0xff]
      %v236 = vld [vmem:[%s210 + $0x34] sm:$0xff]
      %v237 = vld [vmem:[%s210 + $0x3c] sm:$0xff]
      %v238 = vld [vmem:[%s210 + $0x44] sm:$0xf]
      %v239 = vld [vmem:[%s215] sm:$0xf]
      %v240 = vld [vmem:[%s215 + $0x4] sm:$0xf]
      %v241 = vld [vmem:[%s215 + $0x8] sm:$0xf]
      %v242 = vld [vmem:[%s215 + $0xc] sm:$0xf]
      %v243 = vld [vmem:[%s215 + $0x10] sm:$0xf]
      %v244 = vld [vmem:[%s215 + $0x14] sm:$0xf]
      %v245 = vld [vmem:[%s215 + $0x18] sm:$0xf]
      %v246 = vld [vmem:[%s215 + $0x1c] sm:$0xf]
      %v247 = vld [vmem:[%s215 + $0x20] sm:$0xf]
      %v248 = vld [vmem:[%s215 + $0x24] sm:$0xf]
      %v249 = vld [vmem:[%s215 + $0x28] sm:$0xf]
      %v250 = vld [vmem:[%s215 + $0x2c] sm:$0xf]
      %v251 = vld [vmem:[%s215 + $0x30] sm:$0xf]
      %v252 = vld [vmem:[%s215 + $0x34] sm:$0xf]
      %v253 = vld [vmem:[%s215 + $0x38] sm:$0xf]
      %v254 = vld [vmem:[%s215 + $0x3c] sm:$0xf]
      %v255 = vld [vmem:[%s215 + $0x40] sm:$0xf]
      %v256 = vld [vmem:[%s215 + $0x44] sm:$0xf]
      %v257 = vld [vmem:[%s215 + $0x48] sm:$0xf]
      %v258 = vld [vmem:[%s215 + $0x4c] sm:$0xf]
      %v259 = vld [vmem:[%s215 + $0x50] sm:$0xf]
      %v260 = vld [vmem:[%s215 + $0x54] sm:$0xf]
      %v261 = vld [vmem:[%s215 + $0x58] sm:$0xf]
      %v262 = vld [vmem:[%s215 + $0x5c] sm:$0xf]
      %v263 = vld [vmem:[%s215 + $0x60] sm:$0xf]
      %v264 = vld [vmem:[%s215 + $0x64] sm:$0xf]
      %v265 = vld [vmem:[%s215 + $0x68] sm:$0xf]
      %v266 = vld [vmem:[%s215 + $0x6c] sm:$0xf]
      %v267 = vld [vmem:[%s215 + $0x70] sm:$0xf]
      %v268 = vld [vmem:[%s215 + $0x74] sm:$0xf]
      %v269 = vld [vmem:[%s215 + $0x78] sm:$0xf]
      %v270 = vld [vmem:[%s215 + $0x7c] sm:$0xf]
      %v271 = vld [vmem:[%s215 + $0x80] sm:$0xf]
      %v272 = vld [vmem:[%s215 + $0x84] sm:$0xf]
      %v273 = vld [vmem:[%s215 + $0x88] sm:$0xf]
      %v274 = vld [vmem:[%s215 + $0x8c] sm:$0xf]
      %v275 = vld [vmem:[%s215 + $0x90] sm:$0xf]
      %v276 = vld [vmem:[%s215 + $0x94] sm:$0xf]
      %v277 = vld [vmem:[%s215 + $0x98] sm:$0xf]
      %v278 = vld [vmem:[%s215 + $0x9c] sm:$0xf]
      %v279 = vld [vmem:[%s215 + $0xa0] sm:$0xf]
      %v280 = vld [vmem:[%s215 + $0xa4] sm:$0xf]
      %v281 = vld [vmem:[%s215 + $0xa8] sm:$0xf]
      %v282 = vld [vmem:[%s215 + $0xac] sm:$0xf]
      %v283 = vld [vmem:[%s215 + $0xb0] sm:$0xf]
      %v284 = vld [vmem:[%s215 + $0xb4] sm:$0xf]
      %v285 = vld [vmem:[%s215 + $0xb8] sm:$0xf]
      %v286 = vld [vmem:[%s215 + $0xbc] sm:$0xf]
      %v287 = vld [vmem:[%s215 + $0xc0] sm:$0xf]
      %v288 = vld [vmem:[%s215 + $0xc4] sm:$0xf]
      %v289 = vld [vmem:[%s215 + $0xc8] sm:$0xf]
      %v290 = vld [vmem:[%s215 + $0xcc] sm:$0xf]
      %v291 = vld [vmem:[%s215 + $0xd0] sm:$0xf]
      %v292 = vld [vmem:[%s215 + $0xd4] sm:$0xf]
      %v293 = vld [vmem:[%s215 + $0xd8] sm:$0xf]
      %v294 = vld [vmem:[%s215 + $0xdc] sm:$0xf]
      %v295 = vld [vmem:[%s215 + $0xe0] sm:$0xf]
      %v296 = vld [vmem:[%s215 + $0xe4] sm:$0xf]
      %v297 = vld [vmem:[%s215 + $0xe8] sm:$0xf]
      %v298 = vld [vmem:[%s215 + $0xec] sm:$0xf]
      %v299 = vld [vmem:[%s215 + $0xf0] sm:$0xf]
      %v300 = vld [vmem:[%s215 + $0xf4] sm:$0xf]
      %v301 = vld [vmem:[%s215 + $0xf8] sm:$0xf]
      %v302 = vld [vmem:[%s215 + $0xfc] sm:$0xf]
      %v303 = vld [vmem:[%s215 + $0x100] sm:$0xf]
      %v304 = vld [vmem:[%s215 + $0x104] sm:$0xf]
      %v305 = vld [vmem:[%s215 + $0x108] sm:$0xf]
      %v306 = vld [vmem:[%s215 + $0x10c] sm:$0xf]
      %v307 = vld [vmem:[%s215 + $0x110] sm:$0xf]
      %v308 = vld [vmem:[%s215 + $0x114] sm:$0xf]
      %v309 = vld [vmem:[%s215 + $0x118] sm:$0xf]
      %v310 = vld [vmem:[%s215 + $0x11c] sm:$0xf]
      %v311 = vld [vmem:[%s215 + $0x120] sm:$0xf]
      %v312 = vld [vmem:[%s215 + $0x124] sm:$0xf]
      %v313 = vld [vmem:[%s215 + $0x128] sm:$0xf]
      %v314 = vld [vmem:[%s215 + $0x12c] sm:$0xf]
      %v315 = vld [vmem:[%s215 + $0x130] sm:$0xf]
      %v316 = vld [vmem:[%s215 + $0x134] sm:$0xf]
      %v317 = vld [vmem:[%s215 + $0x138] sm:$0xf]
      %v318 = vld [vmem:[%s215 + $0x13c] sm:$0xf]
      %v319 = vld [vmem:[%s215 + $0x140] sm:$0xf]
      %v320 = vld [vmem:[%s215 + $0x144] sm:$0xf]
      %v321 = vld [vmem:[%s215 + $0x148] sm:$0xf]
      %v322 = vld [vmem:[%s215 + $0x14c] sm:$0xf]
      %v323 = vld [vmem:[%s215 + $0x150] sm:$0xf]
      %v324 = vld [vmem:[%s215 + $0x154] sm:$0xf]
      %v325 = vld [vmem:[%s215 + $0x158] sm:$0xf]
      %v326 = vld [vmem:[%s215 + $0x15c] sm:$0xf]
      %v327 = vld [vmem:[%s215 + $0x160] sm:$0xf]
      %v328 = vld [vmem:[%s215 + $0x164] sm:$0xf]
      %v329 = vld [vmem:[%s215 + $0x168] sm:$0xf]
      %v330 = vld [vmem:[%s215 + $0x16c] sm:$0xf]
      %v331 = vld [vmem:[%s215 + $0x170] sm:$0xf]
      %v332 = vld [vmem:[%s215 + $0x174] sm:$0xf]
      %v333 = vld [vmem:[%s215 + $0x178] sm:$0xf]
      %v334 = vld [vmem:[%s215 + $0x17c] sm:$0xf]
      %v335 = vld [vmem:[%s215 + $0x180] sm:$0xf]
      %v336 = vld [vmem:[%s215 + $0x184] sm:$0xf]
      %v337 = vld [vmem:[%s215 + $0x188] sm:$0xf]
      %v338 = vld [vmem:[%s215 + $0x18c] sm:$0xf]
      %v339 = vld [vmem:[%s215 + $0x190] sm:$0xf]
      %v340 = vld [vmem:[%s215 + $0x194] sm:$0xf]
      %v341 = vld [vmem:[%s215 + $0x198] sm:$0xf]
      %v342 = vld [vmem:[%s215 + $0x19c] sm:$0xf]
      %v343 = vld [vmem:[%s215 + $0x1a0] sm:$0xf]
      %v344 = vld [vmem:[%s215 + $0x1a4] sm:$0xf]
      %v345 = vld [vmem:[%s215 + $0x1a8] sm:$0xf]
      %v346 = vld [vmem:[%s215 + $0x1ac] sm:$0xf]
      %v347 = vld [vmem:[%s215 + $0x1b0] sm:$0xf]
      %v348 = vld [vmem:[%s215 + $0x1b4] sm:$0xf]
      %v349 = vld [vmem:[%s215 + $0x1b8] sm:$0xf]
      %v350 = vld [vmem:[%s215 + $0x1bc] sm:$0xf]
      %v351 = vld [vmem:[%s215 + $0x1c0] sm:$0xf]
      %v352 = vld [vmem:[%s215 + $0x1c4] sm:$0xf]
      %v353 = vld [vmem:[%s215 + $0x1c8] sm:$0xf]
      %v354 = vld [vmem:[%s215 + $0x1cc] sm:$0xf]
      %v355 = vld [vmem:[%s215 + $0x1d0] sm:$0xf]
      %v356 = vld [vmem:[%s215 + $0x1d4] sm:$0xf]
      %v357 = vld [vmem:[%s215 + $0x1d8] sm:$0xf]
      %v358 = vld [vmem:[%s215 + $0x1dc] sm:$0xf]
      %v359 = vld [vmem:[%s215 + $0x1e0] sm:$0xf]
      %v360 = vld [vmem:[%s215 + $0x1e4] sm:$0xf]
      %v361 = vld [vmem:[%s215 + $0x1e8] sm:$0xf]
      %v362 = vld [vmem:[%s215 + $0x1ec] sm:$0xf]
      %v363 = vld [vmem:[%s215 + $0x1f0] sm:$0xf]
      %v364 = vld [vmem:[%s215 + $0x1f4] sm:$0xf]
      %v365 = vld [vmem:[%s215 + $0x1f8] sm:$0xf]
      %v366 = vld [vmem:[%s215 + $0x1fc] sm:$0xf]
      %v367 = vld [vmem:[%s215 + $0x200] sm:$0xf]
      %v368 = vld [vmem:[%s215 + $0x204] sm:$0xf]
      %v369 = vld [vmem:[%s215 + $0x208] sm:$0xf]
      %v370 = vld [vmem:[%s215 + $0x20c] sm:$0xf]
      %v371 = vld [vmem:[%s215 + $0x210] sm:$0xf]
      %v372 = vld [vmem:[%s215 + $0x214] sm:$0xf]
      %v373 = vld [vmem:[%s215 + $0x218] sm:$0xf]
      %v374 = vld [vmem:[%s215 + $0x21c] sm:$0xf]
      %v375 = vld [vmem:[%s215 + $0x220] sm:$0xf]
      %v376 = vld [vmem:[%s215 + $0x224] sm:$0xf]
      %v377 = vld [vmem:[%s215 + $0x228] sm:$0xf]
      %v378 = vld [vmem:[%s215 + $0x22c] sm:$0xf]
      %v379 = vld [vmem:[%s215 + $0x230] sm:$0xf]
      %v380 = vld [vmem:[%s215 + $0x234] sm:$0xf]
      %v381 = vld [vmem:[%s215 + $0x238] sm:$0xf]
      %v382 = vld [vmem:[%s215 + $0x23c] sm:$0xf]
      %v383 = vld [vmem:[%s218] sm:$0x1]
      %v385 = vlaneseq
      %v386 = vshrl.u32 %v385, 7
      %v387 = vsub.s32 0, %v386
      %v388 = vrot.slane %v383, %v387
      %v400 = vunpack.c.l.b16 %v229
      %v401 = vunpack.c.h.b16 %v229
      %v402 = vunpack.c.l.b16 %v230
      %v403 = vunpack.c.h.b16 %v230
      %v404 = vunpack.c.l.b16 %v231
      %v405 = vunpack.c.h.b16 %v231
      %v406 = vunpack.c.l.b16 %v232
      %v407 = vunpack.c.h.b16 %v232
      %v408 = vunpack.c.l.b16 %v233
      %v409 = vunpack.c.l.b16 %v234
      %v410 = vunpack.c.h.b16 %v234
      %v411 = vunpack.c.l.b16 %v235
      %v412 = vunpack.c.h.b16 %v235
      %v413 = vunpack.c.l.b16 %v236
      %v414 = vunpack.c.h.b16 %v236
      %v415 = vunpack.c.l.b16 %v237
      %v416 = vunpack.c.h.b16 %v237
      %v417 = vunpack.c.l.b16 %v238
      %v418 = vpack.c.b16 %v409, %v400
      %v419 = vpack.c.b16 %v410, %v401
      %v420 = vpack.c.b16 %v411, %v402
      %v421 = vpack.c.b16 %v412, %v403
      %v422 = vpack.c.b16 %v413, %v404
      %v423 = vpack.c.b16 %v414, %v405
      %v424 = vpack.c.b16 %v415, %v406
      %v425 = vpack.c.b16 %v416, %v407
      %v426 = vpack.c.b16 %v417, %v408
      %v580 = vunpack.c.l.b16 %v239
      %v581 = vunpack.c.l.b16 %v240
      %v582 = vunpack.c.l.b16 %v241
      %v583 = vunpack.c.l.b16 %v242
      %v584 = vunpack.c.l.b16 %v243
      %v585 = vunpack.c.l.b16 %v244
      %v586 = vunpack.c.l.b16 %v245
      %v587 = vunpack.c.l.b16 %v246
      %v588 = vunpack.c.l.b16 %v247
      %v589 = vunpack.c.l.b16 %v248
      %v590 = vunpack.c.l.b16 %v249
      %v591 = vunpack.c.l.b16 %v250
      %v592 = vunpack.c.l.b16 %v251
      %v593 = vunpack.c.l.b16 %v252
      %v594 = vunpack.c.l.b16 %v253
      %v595 = vunpack.c.l.b16 %v254
      %v596 = vunpack.c.l.b16 %v255
      %v597 = vunpack.c.l.b16 %v256
      %v598 = vunpack.c.l.b16 %v257
      %v599 = vunpack.c.l.b16 %v258
      %v600 = vunpack.c.l.b16 %v259
      %v601 = vunpack.c.l.b16 %v260
      %v602 = vunpack.c.l.b16 %v261
      %v603 = vunpack.c.l.b16 %v262
      %v604 = vunpack.c.l.b16 %v263
      %v605 = vunpack.c.l.b16 %v264
      %v606 = vunpack.c.l.b16 %v265
      %v607 = vunpack.c.l.b16 %v266
      %v608 = vunpack.c.l.b16 %v267
      %v609 = vunpack.c.l.b16 %v268
      %v610 = vunpack.c.l.b16 %v269
      %v611 = vunpack.c.l.b16 %v270
      %v612 = vunpack.c.l.b16 %v271
      %v613 = vunpack.c.l.b16 %v272
      %v614 = vunpack.c.l.b16 %v273
      %v615 = vunpack.c.l.b16 %v274
      %v616 = vunpack.c.l.b16 %v275
      %v617 = vunpack.c.l.b16 %v276
      %v618 = vunpack.c.l.b16 %v277
      %v619 = vunpack.c.l.b16 %v278
      %v620 = vunpack.c.l.b16 %v279
      %v621 = vunpack.c.l.b16 %v280
      %v622 = vunpack.c.l.b16 %v281
      %v623 = vunpack.c.l.b16 %v282
      %v624 = vunpack.c.l.b16 %v283
      %v625 = vunpack.c.l.b16 %v284
      %v626 = vunpack.c.l.b16 %v285
      %v627 = vunpack.c.l.b16 %v286
      %v628 = vunpack.c.l.b16 %v287
      %v629 = vunpack.c.l.b16 %v288
      %v630 = vunpack.c.l.b16 %v289
      %v631 = vunpack.c.l.b16 %v290
      %v632 = vunpack.c.l.b16 %v291
      %v633 = vunpack.c.l.b16 %v292
      %v634 = vunpack.c.l.b16 %v293
      %v635 = vunpack.c.l.b16 %v294
      %v636 = vunpack.c.l.b16 %v295
      %v637 = vunpack.c.l.b16 %v296
      %v638 = vunpack.c.l.b16 %v297
      %v639 = vunpack.c.l.b16 %v298
      %v640 = vunpack.c.l.b16 %v299
      %v641 = vunpack.c.l.b16 %v300
      %v642 = vunpack.c.l.b16 %v301
      %v643 = vunpack.c.l.b16 %v302
      %v644 = vunpack.c.l.b16 %v303
      %v645 = vunpack.c.l.b16 %v304
      %v646 = vunpack.c.l.b16 %v305
      %v647 = vunpack.c.l.b16 %v306
      %v648 = vunpack.c.l.b16 %v307
      %v649 = vunpack.c.l.b16 %v308
      %v650 = vunpack.c.l.b16 %v309
      %v651 = vunpack.c.l.b16 %v310
      %v652 = vunpack.c.l.b16 %v311
      %v653 = vunpack.c.l.b16 %v312
      %v654 = vunpack.c.l.b16 %v313
      %v655 = vunpack.c.l.b16 %v314
      %v656 = vunpack.c.l.b16 %v315
      %v657 = vunpack.c.l.b16 %v316
      %v658 = vunpack.c.l.b16 %v317
      %v659 = vunpack.c.l.b16 %v318
      %v660 = vunpack.c.l.b16 %v319
      %v661 = vunpack.c.l.b16 %v320
      %v662 = vunpack.c.l.b16 %v321
      %v663 = vunpack.c.l.b16 %v322
      %v664 = vunpack.c.l.b16 %v323
      %v665 = vunpack.c.l.b16 %v324
      %v666 = vunpack.c.l.b16 %v325
      %v667 = vunpack.c.l.b16 %v326
      %v668 = vunpack.c.l.b16 %v327
      %v669 = vunpack.c.l.b16 %v328
      %v670 = vunpack.c.l.b16 %v329
      %v671 = vunpack.c.l.b16 %v330
      %v672 = vunpack.c.l.b16 %v331
      %v673 = vunpack.c.l.b16 %v332
      %v674 = vunpack.c.l.b16 %v333
      %v675 = vunpack.c.l.b16 %v334
      %v676 = vunpack.c.l.b16 %v335
      %v677 = vunpack.c.l.b16 %v336
      %v678 = vunpack.c.l.b16 %v337
      %v679 = vunpack.c.l.b16 %v338
      %v680 = vunpack.c.l.b16 %v339
      %v681 = vunpack.c.l.b16 %v340
      %v682 = vunpack.c.l.b16 %v341
      %v683 = vunpack.c.l.b16 %v342
      %v684 = vunpack.c.l.b16 %v343
      %v685 = vunpack.c.l.b16 %v344
      %v686 = vunpack.c.l.b16 %v345
      %v687 = vunpack.c.l.b16 %v346
      %v688 = vunpack.c.l.b16 %v347
      %v689 = vunpack.c.l.b16 %v348
      %v690 = vunpack.c.l.b16 %v349
      %v691 = vunpack.c.l.b16 %v350
      %v692 = vunpack.c.l.b16 %v351
      %v693 = vunpack.c.l.b16 %v352
      %v694 = vunpack.c.l.b16 %v353
      %v695 = vunpack.c.l.b16 %v354
      %v696 = vunpack.c.l.b16 %v355
      %v697 = vunpack.c.l.b16 %v356
      %v698 = vunpack.c.l.b16 %v357
      %v699 = vunpack.c.l.b16 %v358
      %v700 = vunpack.c.l.b16 %v359
      %v701 = vunpack.c.l.b16 %v360
      %v702 = vunpack.c.l.b16 %v361
      %v703 = vunpack.c.l.b16 %v362
      %v704 = vunpack.c.l.b16 %v363
      %v705 = vunpack.c.l.b16 %v364
      %v706 = vunpack.c.l.b16 %v365
      %v707 = vunpack.c.l.b16 %v366
      %v708 = vunpack.c.l.b16 %v367
      %v709 = vunpack.c.l.b16 %v368
      %v710 = vunpack.c.l.b16 %v369
      %v711 = vunpack.c.l.b16 %v370
      %v712 = vunpack.c.l.b16 %v371
      %v713 = vunpack.c.l.b16 %v372
      %v714 = vunpack.c.l.b16 %v373
      %v715 = vunpack.c.l.b16 %v374
      %v716 = vunpack.c.l.b16 %v375
      %v717 = vunpack.c.l.b16 %v376
      %v718 = vunpack.c.l.b16 %v377
      %v719 = vunpack.c.l.b16 %v378
      %v720 = vunpack.c.l.b16 %v379
      %v721 = vunpack.c.l.b16 %v380
      %v722 = vunpack.c.l.b16 %v381
      %v723 = vunpack.c.l.b16 %v382
      %v724 = vpack.c.b16 %v581, %v580
      %v725 = vpack.c.b16 %v583, %v582
      %v726 = vpack.c.b16 %v585, %v584
      %v727 = vpack.c.b16 %v587, %v586
      %v728 = vpack.c.b16 %v589, %v588
      %v729 = vpack.c.b16 %v591, %v590
      %v730 = vpack.c.b16 %v593, %v592
      %v731 = vpack.c.b16 %v595, %v594
      %v732 = vpack.c.b16 %v597, %v596
      %v733 = vpack.c.b16 %v599, %v598
      %v734 = vpack.c.b16 %v601, %v600
      %v735 = vpack.c.b16 %v603, %v602
      %v736 = vpack.c.b16 %v605, %v604
      %v737 = vpack.c.b16 %v607, %v606
      %v738 = vpack.c.b16 %v609, %v608
      %v739 = vpack.c.b16 %v611, %v610
      %v740 = vpack.c.b16 %v613, %v612
      %v741 = vpack.c.b16 %v615, %v614
      %v742 = vpack.c.b16 %v617, %v616
      %v743 = vpack.c.b16 %v619, %v618
      %v744 = vpack.c.b16 %v621, %v620
      %v745 = vpack.c.b16 %v623, %v622
      %v746 = vpack.c.b16 %v625, %v624
      %v747 = vpack.c.b16 %v627, %v626
      %v748 = vpack.c.b16 %v629, %v628
      %v749 = vpack.c.b16 %v631, %v630
      %v750 = vpack.c.b16 %v633, %v632
      %v751 = vpack.c.b16 %v635, %v634
      %v752 = vpack.c.b16 %v637, %v636
      %v753 = vpack.c.b16 %v639, %v638
      %v754 = vpack.c.b16 %v641, %v640
      %v755 = vpack.c.b16 %v643, %v642
      %v756 = vpack.c.b16 %v645, %v644
      %v757 = vpack.c.b16 %v647, %v646
      %v758 = vpack.c.b16 %v649, %v648
      %v759 = vpack.c.b16 %v651, %v650
      %v760 = vpack.c.b16 %v653, %v652
      %v761 = vpack.c.b16 %v655, %v654
      %v762 = vpack.c.b16 %v657, %v656
      %v763 = vpack.c.b16 %v659, %v658
      %v764 = vpack.c.b16 %v661, %v660
      %v765 = vpack.c.b16 %v663, %v662
      %v766 = vpack.c.b16 %v665, %v664
      %v767 = vpack.c.b16 %v667, %v666
      %v768 = vpack.c.b16 %v669, %v668
      %v769 = vpack.c.b16 %v671, %v670
      %v770 = vpack.c.b16 %v673, %v672
      %v771 = vpack.c.b16 %v675, %v674
      %v772 = vpack.c.b16 %v677, %v676
      %v773 = vpack.c.b16 %v679, %v678
      %v774 = vpack.c.b16 %v681, %v680
      %v775 = vpack.c.b16 %v683, %v682
      %v776 = vpack.c.b16 %v685, %v684
      %v777 = vpack.c.b16 %v687, %v686
      %v778 = vpack.c.b16 %v689, %v688
      %v779 = vpack.c.b16 %v691, %v690
      %v780 = vpack.c.b16 %v693, %v692
      %v781 = vpack.c.b16 %v695, %v694
      %v782 = vpack.c.b16 %v697, %v696
      %v783 = vpack.c.b16 %v699, %v698
      %v784 = vpack.c.b16 %v701, %v700
      %v785 = vpack.c.b16 %v703, %v702
      %v786 = vpack.c.b16 %v705, %v704
      %v787 = vpack.c.b16 %v707, %v706
      %v788 = vpack.c.b16 %v709, %v708
      %v789 = vpack.c.b16 %v711, %v710
      %v790 = vpack.c.b16 %v713, %v712
      %v791 = vpack.c.b16 %v715, %v714
      %v792 = vpack.c.b16 %v717, %v716
      %v793 = vpack.c.b16 %v719, %v718
      %v794 = vpack.c.b16 %v721, %v720
      %v795 = vpack.c.b16 %v723, %v722
      %868 = vmatprep.subr.bf16.mxu0 0
      %869 = vmatpush1.bf16.msra.mxu0 %v724
      %870 = vmatprep.subr.bf16.mxu0 0
      %871 = vmatpush1.bf16.msra.mxu0 %v725
      %872 = vmatprep.subr.bf16.mxu0 0
      %873 = vmatpush1.bf16.msra.mxu0 %v726
      %874 = vmatprep.subr.bf16.mxu0 0
      %875 = vmatpush1.bf16.msra.mxu0 %v727
      %876 = vmatprep.subr.bf16.mxu0 0
      %877 = vmatpush1.bf16.msra.mxu0 %v728
      %878 = vmatprep.subr.bf16.mxu0 0
      %879 = vmatpush1.bf16.msra.mxu0 %v729
      %880 = vmatprep.subr.bf16.mxu0 0
      %881 = vmatpush1.bf16.msra.mxu0 %v730
      %882 = vmatprep.subr.bf16.mxu0 0
      %883 = vmatpush1.bf16.msra.mxu0 %v731
      %884 = vmatprep.subr.bf16.mxu0 0
      %885 = vmatpush1.bf16.msra.mxu0 %v732
      %886 = vmatprep.subr.bf16.mxu0 0
      %887 = vmatpush1.bf16.msra.mxu0 %v733
      %888 = vmatprep.subr.bf16.mxu0 0
      %889 = vmatpush1.bf16.msra.mxu0 %v734
      %890 = vmatprep.subr.bf16.mxu0 0
      %891 = vmatpush1.bf16.msra.mxu0 %v735
      %892 = vmatprep.subr.bf16.mxu0 0
      %893 = vmatpush1.bf16.msra.mxu0 %v736
      %894 = vmatprep.subr.bf16.mxu0 0
      %895 = vmatpush1.bf16.msra.mxu0 %v737
      %896 = vmatprep.subr.bf16.mxu0 0
      %897 = vmatpush1.bf16.msra.mxu0 %v738
      %898 = vmatprep.subr.bf16.mxu0 0
      %899 = vmatpush1.bf16.msra.mxu0 %v739
      %900 = vmatprep.mubr.bf16.mxu0 %v419
      %901 = vmatmul.mubr.bf16.gmra.mrb[0].mxu0 %v418
      %v902 = vpop.f32.mrb[0].mxu0
      %v903 = vadd.f32 %v388, %v902
      %v904 = vpop.f32.mrb[0].mxu0
      %v905 = vpop.f32.mrb[0].mxu0
      %v906 = vadd.f32 %v388, %v905
      %v907 = vpop.f32.mrb[0].mxu0
      %908 = vdwg.mxu0
      %909 = vmatprep.subr.bf16.mxu0 0
      %910 = vmatpush1.bf16.msra.mxu0 %v740
      %911 = vmatprep.subr.bf16.mxu0 0
      %912 = vmatpush1.bf16.msra.mxu0 %v741
      %913 = vmatprep.subr.bf16.mxu0 0
      %914 = vmatpush1.bf16.msra.mxu0 %v742
      %915 = vmatprep.subr.bf16.mxu0 0
      %916 = vmatpush1.bf16.msra.mxu0 %v743
      %917 = vmatprep.subr.bf16.mxu0 0
      %918 = vmatpush1.bf16.msra.mxu0 %v744
      %919 = vmatprep.subr.bf16.mxu0 0
      %920 = vmatpush1.bf16.msra.mxu0 %v745
      %921 = vmatprep.subr.bf16.mxu0 0
      %922 = vmatpush1.bf16.msra.mxu0 %v746
      %923 = vmatprep.subr.bf16.mxu0 0
      %924 = vmatpush1.bf16.msra.mxu0 %v747
      %925 = vmatprep.subr.bf16.mxu0 0
      %926 = vmatpush1.bf16.msra.mxu0 %v748
      %927 = vmatprep.subr.bf16.mxu0 0
      %928 = vmatpush1.bf16.msra.mxu0 %v749
      %929 = vmatprep.subr.bf16.mxu0 0
      %930 = vmatpush1.bf16.msra.mxu0 %v750
      %931 = vmatprep.subr.bf16.mxu0 0
      %932 = vmatpush1.bf16.msra.mxu0 %v751
      %933 = vmatprep.subr.bf16.mxu0 0
      %934 = vmatpush1.bf16.msra.mxu0 %v752
      %935 = vmatprep.subr.bf16.mxu0 0
      %936 = vmatpush1.bf16.msra.mxu0 %v753
      %937 = vmatprep.subr.bf16.mxu0 0
      %938 = vmatpush1.bf16.msra.mxu0 %v754
      %939 = vmatprep.subr.bf16.mxu0 0
      %940 = vmatpush1.bf16.msra.mxu0 %v755
      %941 = vmatprep.mubr.bf16.mxu0 %v421
      %942 = vmatmul.mubr.bf16.gmra.mrb[0].mxu0 %v420
      %v943 = vpop.f32.mrb[0].mxu0
      %v944 = vadd.f32 %v903, %v943
      %v945 = vpop.f32.mrb[0].mxu0
      %v946 = vpop.f32.mrb[0].mxu0
      %v947 = vadd.f32 %v906, %v946
      %v948 = vpop.f32.mrb[0].mxu0
      %949 = vdwg.mxu0
      %950 = vmatprep.subr.bf16.mxu0 0
      %951 = vmatpush1.bf16.msra.mxu0 %v756
      %952 = vmatprep.subr.bf16.mxu0 0
      %953 = vmatpush1.bf16.msra.mxu0 %v757
      %954 = vmatprep.subr.bf16.mxu0 0
      %955 = vmatpush1.bf16.msra.mxu0 %v758
      %956 = vmatprep.subr.bf16.mxu0 0
      %957 = vmatpush1.bf16.msra.mxu0 %v759
      %958 = vmatprep.subr.bf16.mxu0 0
      %959 = vmatpush1.bf16.msra.mxu0 %v760
      %960 = vmatprep.subr.bf16.mxu0 0
      %961 = vmatpush1.bf16.msra.mxu0 %v761
      %962 = vmatprep.subr.bf16.mxu0 0
      %963 = vmatpush1.bf16.msra.mxu0 %v762
      %964 = vmatprep.subr.bf16.mxu0 0
      %965 = vmatpush1.bf16.msra.mxu0 %v763
      %966 = vmatprep.subr.bf16.mxu0 0
      %967 = vmatpush1.bf16.msra.mxu0 %v764
      %968 = vmatprep.subr.bf16.mxu0 0
      %969 = vmatpush1.bf16.msra.mxu0 %v765
      %970 = vmatprep.subr.bf16.mxu0 0
      %971 = vmatpush1.bf16.msra.mxu0 %v766
      %972 = vmatprep.subr.bf16.mxu0 0
      %973 = vmatpush1.bf16.msra.mxu0 %v767
      %974 = vmatprep.subr.bf16.mxu0 0
      %975 = vmatpush1.bf16.msra.mxu0 %v768
      %976 = vmatprep.subr.bf16.mxu0 0
      %977 = vmatpush1.bf16.msra.mxu0 %v769
      %978 = vmatprep.subr.bf16.mxu0 0
      %979 = vmatpush1.bf16.msra.mxu0 %v770
      %980 = vmatprep.subr.bf16.mxu0 0
      %981 = vmatpush1.bf16.msra.mxu0 %v771
      %982 = vmatprep.mubr.bf16.mxu0 %v423
      %983 = vmatmul.mubr.bf16.gmra.mrb[0].mxu0 %v422
      %v984 = vpop.f32.mrb[0].mxu0
      %v985 = vadd.f32 %v944, %v984
      %v986 = vpop.f32.mrb[0].mxu0
      %v987 = vpop.f32.mrb[0].mxu0
      %v988 = vadd.f32 %v947, %v987
      %v989 = vpop.f32.mrb[0].mxu0
      %990 = vdwg.mxu0
      %991 = vmatprep.subr.bf16.mxu0 0
      %992 = vmatpush1.bf16.msra.mxu0 %v772
      %993 = vmatprep.subr.bf16.mxu0 0
      %994 = vmatpush1.bf16.msra.mxu0 %v773
      %995 = vmatprep.subr.bf16.mxu0 0
      %996 = vmatpush1.bf16.msra.mxu0 %v774
      %997 = vmatprep.subr.bf16.mxu0 0
      %998 = vmatpush1.bf16.msra.mxu0 %v775
      %999 = vmatprep.subr.bf16.mxu0 0
      %1000 = vmatpush1.bf16.msra.mxu0 %v776
      %1001 = vmatprep.subr.bf16.mxu0 0
      %1002 = vmatpush1.bf16.msra.mxu0 %v777
      %1003 = vmatprep.subr.bf16.mxu0 0
      %1004 = vmatpush1.bf16.msra.mxu0 %v778
      %1005 = vmatprep.subr.bf16.mxu0 0
      %1006 = vmatpush1.bf16.msra.mxu0 %v779
      %1007 = vmatprep.subr.bf16.mxu0 0
      %1008 = vmatpush1.bf16.msra.mxu0 %v780
      %1009 = vmatprep.subr.bf16.mxu0 0
      %1010 = vmatpush1.bf16.msra.mxu0 %v781
      %1011 = vmatprep.subr.bf16.mxu0 0
      %1012 = vmatpush1.bf16.msra.mxu0 %v782
      %1013 = vmatprep.subr.bf16.mxu0 0
      %1014 = vmatpush1.bf16.msra.mxu0 %v783
      %1015 = vmatprep.subr.bf16.mxu0 0
      %1016 = vmatpush1.bf16.msra.mxu0 %v784
      %1017 = vmatprep.subr.bf16.mxu0 0
      %1018 = vmatpush1.bf16.msra.mxu0 %v785
      %1019 = vmatprep.subr.bf16.mxu0 0
      %1020 = vmatpush1.bf16.msra.mxu0 %v786
      %1021 = vmatprep.subr.bf16.mxu0 0
      %1022 = vmatpush1.bf16.msra.mxu0 %v787
      %1023 = vmatprep.mubr.bf16.mxu0 %v425
      %1024 = vmatmul.mubr.bf16.gmra.mrb[0].mxu0 %v424
      %v1025 = vpop.f32.mrb[0].mxu0
      %v1026 = vadd.f32 %v985, %v1025
      %v1027 = vpop.f32.mrb[0].mxu0
      %v1028 = vpop.f32.mrb[0].mxu0
      %v1029 = vadd.f32 %v988, %v1028
      %v1030 = vpop.f32.mrb[0].mxu0
      %1031 = vdwg.mxu0
      %1032 = vmatprep.subr.bf16.mxu0 0
      %1033 = vmatpush1.bf16.msra.mxu0 %v788
      %1034 = vmatprep.subr.bf16.mxu0 0
      %1035 = vmatpush1.bf16.msra.mxu0 %v789
      %1036 = vmatprep.subr.bf16.mxu0 0
      %1037 = vmatpush1.bf16.msra.mxu0 %v790
      %1038 = vmatprep.subr.bf16.mxu0 0
      %1039 = vmatpush1.bf16.msra.mxu0 %v791
      %1040 = vmatprep.subr.bf16.mxu0 0
      %1041 = vmatpush1.bf16.msra.mxu0 %v792
      %1042 = vmatprep.subr.bf16.mxu0 0
      %1043 = vmatpush1.bf16.msra.mxu0 %v793
      %1044 = vmatprep.subr.bf16.mxu0 0
      %1045 = vmatpush1.bf16.msra.mxu0 %v794
      %1046 = vmatprep.subr.bf16.mxu0 0
      %1047 = vmatpush1.bf16.msra.mxu0 %v795
      %1048 = vmatprep.subr.bf16.mxu0 0
      %1049 = vmatpush1.bf16.msra.mxu0 0
      %1050 = vmatprep.subr.bf16.mxu0 0
      %1051 = vmatpush1.bf16.msra.mxu0 0
      %1052 = vmatprep.subr.bf16.mxu0 0
      %1053 = vmatpush1.bf16.msra.mxu0 0
      %1054 = vmatprep.subr.bf16.mxu0 0
      %1055 = vmatpush1.bf16.msra.mxu0 0
      %1056 = vmatprep.subr.bf16.mxu0 0
      %1057 = vmatpush1.bf16.msra.mxu0 0
      %1058 = vmatprep.subr.bf16.mxu0 0
      %1059 = vmatpush1.bf16.msra.mxu0 0
      %1060 = vmatprep.subr.bf16.mxu0 0
      %1061 = vmatpush1.bf16.msra.mxu0 0
      %1062 = vmatprep.subr.bf16.mxu0 0
      %1063 = vmatpush1.bf16.msra.mxu0 0
      %1064 = vmatprep.mubr.bf16.mxu0 0
      %1065 = vmatmul.mubr.bf16.gmra.mrb[0].mxu0 %v426
      %v1066 = vpop.f32.mrb[0].mxu0
      %v1067 = vadd.f32 %v1026, %v1066
      %v1068 = vpop.f32.mrb[0].mxu0
      %v1069 = vpop.f32.mrb[0].mxu0
      %v1070 = vadd.f32 %v1029, %v1069
      %v1071 = vpop.f32.mrb[0].mxu0
      %1072 = vdwg.mxu0
      %v1073 = vmax.f32 %v1067, 0.0
      %v1074 = vmax.f32 %v1070, 0.0
      %v1075 = vpack.c.bf16 %v1074, %v1073
      %v1077 = vunpack.c.l.b16 %v1075
      %v1078 = vunpack.c.h.b16 %v1075
      %v1079 = vpack.c.b16 %v1077, %v1077
      %v1080 = vpack.c.b16 %v1078, %v1078
      %1083 = vst [vmem:[%s226] sm:$0xf] %v1079
      %1084 = vst [vmem:[%s226 + $0x4] sm:$0xf] %v1080
      %s1085 = smul.u32 2, %s18
      %p1086 = scmp.lt.s32.totalorder %s1085, 3
      %s1087 = scalar_select %p1086, %s1085, 3
      %p1088 = scmp.lt.s32.totalorder %s19, 0
      %s1089 = scalar_select %p1088, %s19, 0
      %s1090 = sadd.s32 %s1089, %s1087
      %s1091 = smul.addr %s1090, 4
      %s1092 = scalar_lea.vmem %s3, %s1091
      // Predicated region
      $region33: #{resnet50_forward.12} parent=31 // pred_check
        %p1093 = pneg %p124
      $region34: #{resnet50_forward.12} parent=31 // pred_check_branch
        %1095 = sbr.rel (%p1093) target = $region36
      $region35: #{resnet50_forward.12} parent=31 // pred_region
        %s1096 = smul.u32 2, %s18
      $region36: #{resnet50_forward.12} parent=31 // pred_fallthru
        _
    $region32: #{resnet50_forward.12} parent=5 // pred_fallthru
      _
    %p1097 = scmp.le.s32.totalorder 2, %s9
    // Predicated region
    $region37: #{resnet50_forward.12} parent=5 // pred_check
      %p1098 = pneg %p1097
    $region38: #{resnet50_forward.12} parent=5 // pred_check_branch
      %1100 = sbr.rel (%p1098) target = $region40
    $region39: #{resnet50_forward.12} parent=5 // pred_region
      %s1101 = ssub.s32 %s9, 2
      // Predicated region
      $region41: #{resnet50_forward.12} parent=39 // pred_check
        %p1102 = pneg %p130
      $region42: #{resnet50_forward.12} parent=39 // pred_check_branch
        %1104 = sbr.rel (%p1102) target = $region44
      $region43: #{resnet50_forward.12} parent=39 // pred_region
        %s1105 = smul.u32 2, %s20
        %p1106 = scmp.lt.s32.totalorder %s1105, 3
        %s1107 = scalar_select %p1106, %s1105, 3
        %p1108 = scmp.lt.s32.totalorder %s21, 0
        %s1109 = scalar_select %p1108, %s21, 0
        %s1110 = sadd.s32 %s1109, %s1107
        %s1111 = smul.addr %s1110, 4
        %s1112 = scalar_lea.vmem %s3, %s1111
      $region44: #{resnet50_forward.12} parent=39 // pred_fallthru
        _
    $region40: #{resnet50_forward.12} parent=5 // pred_fallthru
      _
  $region6: #{resnet50_forward.12} parent=0 // loop_footer
    %s13 = sadd.s32 1, %s9
  $region7: #{resnet50_forward.12} parent=0 // loop_footer_branch
    %8 = sbr.rel target = $region3
  $region8: #{resnet50_forward.12} parent=0 // loop_exit
    _

// kernel: resnet50_forward.13
$region0: #{resnet50_forward.13}
  #allocation0 [shape = 'u32[]', space=smem, size = 0x4, offset = 0x4, fixed_abs, tag = 'smem constant byte address 0x4 - core index']
  #allocation1 [shape = 'u32[144,128]{1,0:T(1,128)}', space=vmem, size = 0x12000, scoped, tag = 'internal scratch']
  %s0 = inlined_call_operand.vmem [shape: bf16[2,6,8,384], index: 0, kind: input, shape index: {}]
  %s1 = inlined_call_operand.vmem [shape: bf16[3,384,128], index: 1, kind: input, shape index: {}]
  %s2 = inlined_call_operand.vmem [shape: f32[1,128], index: 2, kind: input, shape index: {}]
  %s3 = inlined_call_operand.vmem [shape: bf16[2,4,8,128], index: 3, kind: output, shape index: {}]
  %s4 = sld [smem:[#allocation0]]
  $region45: #{resnet50_forward.13} parent=0
    _
  %s6 = ssub.s32 1, %s4
  %s7 = scalar_select 0, %s6, %s4
  loop: start=0, step=1, limit=4
  $region2: #{resnet50_forward.13} parent=0 // loop_pre_header
    _
  $region3: #{resnet50_forward.13} parent=0 // loop_header
    %s9 = sphi 0, %s13
    %p10 = scmp.ge.s32.totalorder %s9, 4
    %s19 = sphi 0, %s21
    %s22 = sphi 0, %s19
    %s23 = sphi 0, %s22
    %s39 = sphi 0, %s23
    %s43 = sphi 0, %s43
    %s45 = sphi 0, %s43
    %s46 = sphi 0, %s45
    %s60 = sphi 0, %s46
    %s64 = sphi 0, %s64
    %s66 = sphi 0, %s64
    %s67 = sphi 0, %s66
    %s81 = sphi 0, %s67
    %s87 = sphi 0, %s89
    %s90 = sphi 0, %s87
    %s91 = sphi 0, %s90
    %s107 = sphi 0, %s91
  $region4: #{resnet50_forward.13} parent=0 // loop_header_branch
    %12 = sbr.rel (%p10) target = $region8
  $region5: #{resnet50_forward.13} parent=0 // loop_body
    %s14 = ssub.s32 %s9, 1
    %s15 = ssub.s32 %s9, 2
    %s16 = sadd.s32 %s9, 1
    %s17 = ssub.s32 %s9, %s16
    %p18 = scmp.eq.s32.totalorder %s17, 0
    %s20 = sadd.s32 %s19, 1
    %s21 = scalar_select %p18, %s19, %s20
    %p24 = pneg %p18
    %p25 = scmp.eq.s32.totalorder %s9, 1
    %p26 = por %p24, %p25
    %p27 = scmp.ne.s32.totalorder %s19, %s22
    %p28 = scmp.eq.s32.totalorder %s9, 0
    %p29 = por %p27, %p28
    %p30 = scmp.ne.s32.totalorder %s19, %s22
    %p31 = scmp.eq.s32.totalorder %s14, 1
    %p32 = por %p30, %p31
    %p33 = scmp.ne.s32.totalorder %s22, %s23
    %p34 = scmp.eq.s32.totalorder %s14, 0
    %p35 = por %p33, %p34
    %p36 = scmp.ne.s32.totalorder %s22, %s23
    %p37 = scmp.eq.s32.totalorder %s15, 1
    %p38 = por %p36, %p37
    %p40 = scmp.ne.s32.totalorder %s23, %s39
    %p41 = scmp.eq.s32.totalorder %s15, 0
    %p42 = por %p40, %p41
    %s44 = sadd.s32 %s43, 1
    %p47 = scmp.eq.s32.totalorder %s9, 1
    %p48 = scmp.ne.s32.totalorder %s43, %s45
    %p49 = scmp.eq.s32.totalorder %s9, 0
    %p50 = por %p48, %p49
    %p51 = scmp.ne.s32.totalorder %s43, %s45
    %p52 = scmp.eq.s32.totalorder %s14, 1
    %p53 = por %p51, %p52
    %p54 = scmp.ne.s32.totalorder %s45, %s46
    %p55 = scmp.eq.s32.totalorder %s14, 0
    %p56 = por %p54, %p55
    %p57 = scmp.ne.s32.totalorder %s45, %s46
    %p58 = scmp.eq.s32.totalorder %s15, 1
    %p59 = por %p57, %p58
    %p61 = scmp.ne.s32.totalorder %s46, %s60
    %p62 = scmp.eq.s32.totalorder %s15, 0
    %p63 = por %p61, %p62
    %s65 = sadd.s32 %s64, 1
    %p68 = scmp.eq.s32.totalorder %s9, 1
    %p69 = scmp.ne.s32.totalorder %s64, %s66
    %p70 = scmp.eq.s32.totalorder %s9, 0
    %p71 = por %p69, %p70
    %p72 = scmp.ne.s32.totalorder %s64, %s66
    %p73 = scmp.eq.s32.totalorder %s14, 1
    %p74 = por %p72, %p73
    %p75 = scmp.ne.s32.totalorder %s66, %s67
    %p76 = scmp.eq.s32.totalorder %s14, 0
    %p77 = por %p75, %p76
    %p78 = scmp.ne.s32.totalorder %s66, %s67
    %p79 = scmp.eq.s32.totalorder %s15, 1
    %p80 = por %p78, %p79
    %p82 = scmp.ne.s32.totalorder %s67, %s81
    %p83 = scmp.eq.s32.totalorder %s15, 0
    %p84 = por %p82, %p83
    %s85 = ssub.s32 %s9, %s16
    %p86 = scmp.eq.s32.totalorder %s85, 0
    %s88 = sadd.s32 %s87, 1
    %s89 = scalar_select %p86, %s87, %s88
    %p92 = pneg %p86
    %p93 = scmp.eq.s32.totalorder %s9, 1
    %p94 = por %p92, %p93
    %p95 = scmp.ne.s32.totalorder %s87, %s90
    %p96 = scmp.eq.s32.totalorder %s9, 0
    %p97 = por %p95, %p96
    %p98 = scmp.ne.s32.totalorder %s87, %s90
    %p99 = scmp.eq.s32.totalorder %s14, 1
    %p100 = por %p98, %p99
    %p101 = scmp.ne.s32.totalorder %s90, %s91
    %p102 = scmp.eq.s32.totalorder %s14, 0
    %p103 = por %p101, %p102
    %p104 = scmp.ne.s32.totalorder %s90, %s91
    %p105 = scmp.eq.s32.totalorder %s15, 1
    %p106 = por %p104, %p105
    %p108 = scmp.ne.s32.totalorder %s91, %s107
    %p109 = scmp.eq.s32.totalorder %s15, 0
    %p110 = por %p108, %p109
    %p111 = scmp.le.s32.totalorder 1, %s9
    %p112 = scmp.lt.s32.totalorder %s9, 3
    %p113 = pnand %p111, %p112
    %p114 = pneg %p113
    // Predicated region
    $region9: #{resnet50_forward.13} parent=5 // pred_check
      _
    $region10: #{resnet50_forward.13} parent=5 // pred_check_branch
      %116 = sbr.rel (%p113) target = $region12
    $region11: #{resnet50_forward.13} parent=5 // pred_region
      %s117 = ssub.s32 %s9, 1
      // Predicated region
      $region13: #{resnet50_forward.13} parent=11 // pred_check
        %p118 = pneg %p56
      $region14: #{resnet50_forward.13} parent=11 // pred_check_branch
        %120 = sbr.rel (%p118) target = $region16
      $region15: #{resnet50_forward.13} parent=11 // pred_region
        _
      $region16: #{resnet50_forward.13} parent=11 // pred_fallthru
        _
      // Predicated region
      $region17: #{resnet50_forward.13} parent=11 // pred_check
        %p121 = pneg %p77
      $region18: #{resnet50_forward.13} parent=11 // pred_check_branch
        %123 = sbr.rel (%p121) target = $region20
      $region19: #{resnet50_forward.13} parent=11 // pred_region
        _
      $region20: #{resnet50_forward.13} parent=11 // pred_fallthru
        _
    $region12: #{resnet50_forward.13} parent=5 // pred_fallthru
      _
    %p124 = scmp.lt.s32.totalorder %s9, 2
    // Predicated region
    $region21: #{resnet50_forward.13} parent=5 // pred_check
      %p125 = pneg %p124
    $region22: #{resnet50_forward.13} parent=5 // pred_check_branch
      %127 = sbr.rel (%p125) target = $region24
    $region23: #{resnet50_forward.13} parent=5 // pred_region
      // Predicated region
      $region25: #{resnet50_forward.13} parent=23 // pred_check
        %p128 = pneg %p29
      $region26: #{resnet50_forward.13} parent=23 // pred_check_branch
        %130 = sbr.rel (%p128) target = $region28
      $region27: #{resnet50_forward.13} parent=23 // pred_region
        %p131 = scmp.lt.s32.totalorder %s9, 1
        %s132 = scalar_select %p131, %s9, 1
        %s133 = smul.addr %s132, 18
        %s134 = smul.addr %s133, 4
        %s135 = scalar_lea.vmem %s0, %s134
      $region28: #{resnet50_forward.13} parent=23 // pred_fallthru
        _
    $region24: #{resnet50_forward.13} parent=5 // pred_fallthru
      _
    %p136 = scmp.le.s32.totalorder 1, %s9
    %p137 = scmp.lt.s32.totalorder %s9, 3
    %p138 = pnand %p136, %p137
    %p139 = pneg %p138
    // Predicated region
    $region29: #{resnet50_forward.13} parent=5 // pred_check
      _
    $region30: #{resnet50_forward.13} parent=5 // pred_check_branch
      %141 = sbr.rel (%p138) target = $region32
    $region31: #{resnet50_forward.13} parent=5 // pred_region
      %s142 = ssub.s32 %s9, 1
      %p143 = scmp.lt.s32.totalorder %s14, 1
      %s144 = scalar_select %p143, %s14, 1
      %s145 = smul.addr %s144, 18
      %s146 = smul.addr %s145, 4
      %s147 = scalar_lea.vmem %s0, %s146
      %p148 = pneg %p35
      %p149 = pneg %p32
      %p150 = pneg %p56
      %p151 = pneg %p53
      %p152 = pneg %p77
      %p153 = pneg %p74
      %p154 = pneg %p103
      %p155 = pneg %p100
      %p156 = scmp.lt.s32.totalorder %s14, 1
      %s157 = scalar_select %p156, %s14, 1
      %s158 = smul.addr %s157, 4
      %s159 = smul.addr %s158, 4
      %s160 = scalar_lea.vmem %s3, %s159
      %p161 = scmp.lt.s32.totalorder %s14, 1
      %s162 = scalar_select %p161, %s14, 1
      %s163 = smul.addr %s162, 18
      %s164 = smul.addr %s163, 4
      %s165 = scalar_lea.vmem %s0, %s164
      %p166 = scmp.lt.s32.totalorder %s14, 1
      %s167 = scalar_select %p166, %s14, 1
      %s168 = smul.addr %s167, 4
      %s169 = smul.addr %s168, 4
      %s170 = scalar_lea.vmem %s3, %s169
      %v172 = vld [vmem:[%s165] sm:$0xff]
      %v173 = vld [vmem:[%s165 + $0x8] sm:$0xf]
      %v174 = vld [vmem:[%s165 + $0xc] sm:$0xff]
      %v175 = vld [vmem:[%s165 + $0x14] sm:$0xf]
      %v176 = vld [vmem:[%s165 + $0x18] sm:$0xff]
      %v177 = vld [vmem:[%s165 + $0x20] sm:$0xf]
      %v178 = vld [vmem:[%s165 + $0x24] sm:$0xff]
      %v179 = vld [vmem:[%s165 + $0x2c] sm:$0xf]
      %v180 = vld [vmem:[%s1] sm:$0xf]
      %v181 = vld [vmem:[%s1 + $0x4] sm:$0xf]
      %v182 = vld [vmem:[%s1 + $0x8] sm:$0xf]
      %v183 = vld [vmem:[%s1 + $0xc] sm:$0xf]
      %v184 = vld [vmem:[%s1 + $0x10] sm:$0xf]
      %v185 = vld [vmem:[%s1 + $0x14] sm:$0xf]
      %v186 = vld [vmem:[%s1 + $0x18] sm:$0xf]
      %v187 = vld [vmem:[%s1 + $0x1c] sm:$0xf]
      %v188 = vld [vmem:[%s1 + $0x20] sm:$0xf]
      %v189 = vld [vmem:[%s1 + $0x24] sm:$0xf]
      %v190 = vld [vmem:[%s1 + $0x28] sm:$0xf]
      %v191 = vld [vmem:[%s1 + $0x2c] sm:$0xf]
      %v192 = vld [vmem:[%s1 + $0x30] sm:$0xf]
      %v193 = vld [vmem:[%s1 + $0x34] sm:$0xf]
      %v194 = vld [vmem:[%s1 + $0x38] sm:$0xf]
      %v195 = vld [vmem:[%s1 + $0x3c] sm:$0xf]
      %v196 = vld [vmem:[%s1 + $0x40] sm:$0xf]
      %v197 = vld [vmem:[%s1 + $0x44] sm:$0xf]
      %v198 = vld [vmem:[%s1 + $0x48] sm:$0xf]
      %v199 = vld [vmem:[%s1 + $0x4c] sm:$0xf]
      %v200 = vld [vmem:[%s1 + $0x50] sm:$0xf]
      %v201 = vld [vmem:[%s1 + $0x54] sm:$0xf]
      %v202 = vld [vmem:[%s1 + $0x58] sm:$0xf]
      %v203 = vld [vmem:[%s1 + $0x5c] sm:$0xf]
      %v204 = vld [vmem:[%s1 + $0x60] sm:$0xf]
      %v205 = vld [vmem:[%s1 + $0x64] sm:$0xf]
      %v206 = vld [vmem:[%s1 + $0x68] sm:$0xf]
      %v207 = vld [vmem:[%s1 + $0x6c] sm:$0xf]
      %v208 = vld [vmem:[%s1 + $0x70] sm:$0xf]
      %v209 = vld [vmem:[%s1 + $0x74] sm:$0xf]
      %v210 = vld [vmem:[%s1 + $0x78] sm:$0xf]
      %v211 = vld [vmem:[%s1 + $0x7c] sm:$0xf]
      %v212 = vld [vmem:[%s1 + $0x80] sm:$0xf]
      %v213 = vld [vmem:[%s1 + $0x84] sm:$0xf]
      %v214 = vld [vmem:[%s1 + $0x88] sm:$0xf]
      %v215 = vld [vmem:[%s1 + $0x8c] sm:$0xf]
      %v216 = vld [vmem:[%s1 + $0x90] sm:$0xf]
      %v217 = vld [vmem:[%s1 + $0x94] sm:$0xf]
      %v218 = vld [vmem:[%s1 + $0x98] sm:$0xf]
      %v219 = vld [vmem:[%s1 + $0x9c] sm:$0xf]
      %v220 = vld [vmem:[%s1 + $0xa0] sm:$0xf]
      %v221 = vld [vmem:[%s1 + $0xa4] sm:$0xf]
      %v222 = vld [vmem:[%s1 + $0xa8] sm:$0xf]
      %v223 = vld [vmem:[%s1 + $0xac] sm:$0xf]
      %v224 = vld [vmem:[%s1 + $0xb0] sm:$0xf]
      %v225 = vld [vmem:[%s1 + $0xb4] sm:$0xf]
      %v226 = vld [vmem:[%s1 + $0xb8] sm:$0xf]
      %v227 = vld [vmem:[%s1 + $0xbc] sm:$0xf]
      %s228 = scalar_lea.vmem %s165, 12
      %v229 = vld [vmem:[%s228] sm:$0xff]
      %v230 = vld [vmem:[%s228 + $0x8] sm:$0xf]
      %v231 = vld [vmem:[%s228 + $0xc] sm:$0xff]
      %v232 = vld [vmem:[%s228 + $0x14] sm:$0xf]
      %v233 = vld [vmem:[%s228 + $0x18] sm:$0xff]
      %v234 = vld [vmem:[%s228 + $0x20] sm:$0xf]
      %v235 = vld [vmem:[%s228 + $0x24] sm:$0xff]
      %v236 = vld [vmem:[%s228 + $0x2c] sm:$0xf]
      %s237 = scalar_lea.vmem %s1, 192
      %v238 = vld [vmem:[%s237] sm:$0xf]
      %v239 = vld [vmem:[%s237 + $0x4] sm:$0xf]
      %v240 = vld [vmem:[%s237 + $0x8] sm:$0xf]
      %v241 = vld [vmem:[%s237 + $0xc] sm:$0xf]
      %v242 = vld [vmem:[%s237 + $0x10] sm:$0xf]
      %v243 = vld [vmem:[%s237 + $0x14] sm:$0xf]
      %v244 = vld [vmem:[%s237 + $0x18] sm:$0xf]
      %v245 = vld [vmem:[%s237 + $0x1c] sm:$0xf]
      %v246 = vld [vmem:[%s237 + $0x20] sm:$0xf]
      %v247 = vld [vmem:[%s237 + $0x24] sm:$0xf]
      %v248 = vld [vmem:[%s237 + $0x28] sm:$0xf]
      %v249 = vld [vmem:[%s237 + $0x2c] sm:$0xf]
      %v250 = vld [vmem:[%s237 + $0x30] sm:$0xf]
      %v251 = vld [vmem:[%s237 + $0x34] sm:$0xf]
      %v252 = vld [vmem:[%s237 + $0x38] sm:$0xf]
      %v253 = vld [vmem:[%s237 + $0x3c] sm:$0xf]
      %v254 = vld [vmem:[%s237 + $0x40] sm:$0xf]
      %v255 = vld [vmem:[%s237 + $0x44] sm:$0xf]
      %v256 = vld [vmem:[%s237 + $0x48] sm:$0xf]
      %v257 = vld [vmem:[%s237 + $0x4c] sm:$0xf]
      %v258 = vld [vmem:[%s237 + $0x50] sm:$0xf]
      %v259 = vld [vmem:[%s237 + $0x54] sm:$0xf]
      %v260 = vld [vmem:[%s237 + $0x58] sm:$0xf]
      %v261 = vld [vmem:[%s237 + $0x5c] sm:$0xf]
      %v262 = vld [vmem:[%s237 + $0x60] sm:$0xf]
      %v263 = vld [vmem:[%s237 + $0x64] sm:$0xf]
      %v264 = vld [vmem:[%s237 + $0x68] sm:$0xf]
      %v265 = vld [vmem:[%s237 + $0x6c] sm:$0xf]
      %v266 = vld [vmem:[%s237 + $0x70] sm:$0xf]
      %v267 = vld [vmem:[%s237 + $0x74] sm:$0xf]
      %v268 = vld [vmem:[%s237 + $0x78] sm:$0xf]
      %v269 = vld [vmem:[%s237 + $0x7c] sm:$0xf]
      %v270 = vld [vmem:[%s237 + $0x80] sm:$0xf]
      %v271 = vld [vmem:[%s237 + $0x84] sm:$0xf]
      %v272 = vld [vmem:[%s237 + $0x88] sm:$0xf]
      %v273 = vld [vmem:[%s237 + $0x8c] sm:$0xf]
      %v274 = vld [vmem:[%s237 + $0x90] sm:$0xf]
      %v275 = vld [vmem:[%s237 + $0x94] sm:$0xf]
      %v276 = vld [vmem:[%s237 + $0x98] sm:$0xf]
      %v277 = vld [vmem:[%s237 + $0x9c] sm:$0xf]
      %v278 = vld [vmem:[%s237 + $0xa0] sm:$0xf]
      %v279 = vld [vmem:[%s237 + $0xa4] sm:$0xf]
      %v280 = vld [vmem:[%s237 + $0xa8] sm:$0xf]
      %v281 = vld [vmem:[%s237 + $0xac] sm:$0xf]
      %v282 = vld [vmem:[%s237 + $0xb0] sm:$0xf]
      %v283 = vld [vmem:[%s237 + $0xb4] sm:$0xf]
      %v284 = vld [vmem:[%s237 + $0xb8] sm:$0xf]
      %v285 = vld [vmem:[%s237 + $0xbc] sm:$0xf]
      %v294 = vunpack.c.l.b16 %v229
      %v295 = vunpack.c.h.b16 %v229
      %v296 = vunpack.c.l.b16 %v230
      %v297 = vunpack.c.l.b16 %v231
      %v298 = vunpack.c.h.b16 %v231
      %v299 = vunpack.c.l.b16 %v232
      %v300 = vunpack.c.l.b16 %v233
      %v301 = vunpack.c.h.b16 %v233
      %v302 = vunpack.c.l.b16 %v234
      %v303 = vunpack.c.l.b16 %v235
      %v304 = vunpack.c.h.b16 %v235
      %v305 = vunpack.c.l.b16 %v236
      %v306 = vpack.c.b16 %v297, %v294
      %v307 = vpack.c.b16 %v298, %v295
      %v308 = vpack.c.b16 %v299, %v296
      %v309 = vpack.c.b16 %v303, %v300
      %v310 = vpack.c.b16 %v304, %v301
      %v311 = vpack.c.b16 %v305, %v302
      %v366 = vunpack.c.l.b16 %v238
      %v367 = vunpack.c.l.b16 %v239
      %v368 = vunpack.c.l.b16 %v240
      %v369 = vunpack.c.l.b16 %v241
      %v370 = vunpack.c.l.b16 %v242
      %v371 = vunpack.c.l.b16 %v243
      %v372 = vunpack.c.l.b16 %v244
      %v373 = vunpack.c.l.b16 %v245
      %v374 = vunpack.c.l.b16 %v246
      %v375 = vunpack.c.l.b16 %v247
      %v376 = vunpack.c.l.b16 %v248
      %v377 = vunpack.c.l.b16 %v249
      %v378 = vunpack.c.l.b16 %v250
      %v379 = vunpack.c.l.b16 %v251
      %v380 = vunpack.c.l.b16 %v252
      %v381 = vunpack.c.l.b16 %v253
      %v382 = vunpack.c.l.b16 %v254
      %v383 = vunpack.c.l.b16 %v255
      %v384 = vunpack.c.l.b16 %v256
      %v385 = vunpack.c.l.b16 %v257
      %v386 = vunpack.c.l.b16 %v258
      %v387 = vunpack.c.l.b16 %v259
      %v388 = vunpack.c.l.b16 %v260
      %v389 = vunpack.c.l.b16 %v261
      %v390 = vunpack.c.l.b16 %v262
      %v391 = vunpack.c.l.b16 %v263
      %v392 = vunpack.c.l.b16 %v264
      %v393 = vunpack.c.l.b16 %v265
      %v394 = vunpack.c.l.b16 %v266
      %v395 = vunpack.c.l.b16 %v267
      %v396 = vunpack.c.l.b16 %v268
      %v397 = vunpack.c.l.b16 %v269
      %v398 = vunpack.c.l.b16 %v270
      %v399 = vunpack.c.l.b16 %v271
      %v400 = vunpack.c.l.b16 %v272
      %v401 = vunpack.c.l.b16 %v273
      %v402 = vunpack.c.l.b16 %v274
      %v403 = vunpack.c.l.b16 %v275
      %v404 = vunpack.c.l.b16 %v276
      %v405 = vunpack.c.l.b16 %v277
      %v406 = vunpack.c.l.b16 %v278
      %v407 = vunpack.c.l.b16 %v279
      %v408 = vunpack.c.l.b16 %v280
      %v409 = vunpack.c.l.b16 %v281
      %v410 = vunpack.c.l.b16 %v282
      %v411 = vunpack.c.l.b16 %v283
      %v412 = vunpack.c.l.b16 %v284
      %v413 = vunpack.c.l.b16 %v285
      %v414 = vpack.c.b16 %v367, %v366
      %v415 = vpack.c.b16 %v369, %v368
      %v416 = vpack.c.b16 %v371, %v370
      %v417 = vpack.c.b16 %v373, %v372
      %v418 = vpack.c.b16 %v375, %v374
      %v419 = vpack.c.b16 %v377, %v376
      %v420 = vpack.c.b16 %v379, %v378
      %v421 = vpack.c.b16 %v381, %v380
      %v422 = vpack.c.b16 %v383, %v382
      %v423 = vpack.c.b16 %v385, %v384
      %v424 = vpack.c.b16 %v387, %v386
      %v425 = vpack.c.b16 %v389, %v388
      %v426 = vpack.c.b16 %v391, %v390
      %v427 = vpack.c.b16 %v393, %v392
      %v428 = vpack.c.b16 %v395, %v394
      %v429 = vpack.c.b16 %v397, %v396
      %v430 = vpack.c.b16 %v399, %v398
      %v431 = vpack.c.b16 %v401, %v400
      %v432 = vpack.c.b16 %v403, %v402
      %v433 = vpack.c.b16 %v405, %v404
      %v434 = vpack.c.b16 %v407, %v406
      %v435 = vpack.c.b16 %v409, %v408
      %v436 = vpack.c.b16 %v411, %v410
      %v437 = vpack.c.b16 %v413, %v412
      %462 = vmatprep.subr.bf16.mxu0 0
      %463 = vmatpush1.bf16.msra.mxu0 %v414
      %464 = vmatprep.subr.bf16.mxu0 0
      %465 = vmatpush1.bf16.msra.mxu0 %v415
      %466 = vmatprep.subr.bf16.mxu0 0
      %467 = vmatpush1.bf16.msra.mxu0 %v416
      %468 = vmatprep.subr.bf16.mxu0 0
      %469 = vmatpush1.bf16.msra.mxu0 %v417
      %470 = vmatprep.subr.bf16.mxu0 0
      %471 = vmatpush1.bf16.msra.mxu0 %v418
      %472 = vmatprep.subr.bf16.mxu0 0
      %473 = vmatpush1.bf16.msra.mxu0 %v419
      %474 = vmatprep.subr.bf16.mxu0 0
      %475 = vmatpush1.bf16.msra.mxu0 %v420
      %476 = vmatprep.subr.bf16.mxu0 0
      %477 = vmatpush1.bf16.msra.mxu0 %v421
      %478 = vmatprep.subr.bf16.mxu0 0
      %479 = vmatpush1.bf16.msra.mxu0 %v422
      %480 = vmatprep.subr.bf16.mxu0 0
      %481 = vmatpush1.bf16.msra.mxu0 %v423
      %482 = vmatprep.subr.bf16.mxu0 0
      %483 = vmatpush1.bf16.msra.mxu0 %v424
      %484 = vmatprep.subr.bf16.mxu0 0
      %485 = vmatpush1.bf16.msra.mxu0 %v425
      %486 = vmatprep.subr.bf16.mxu0 0
      %487 = vmatpush1.bf16.msra.mxu0 %v426
      %488 = vmatprep.subr.bf16.mxu0 0
      %489 = vmatpush1.bf16.msra.mxu0 %v427
      %490 = vmatprep.subr.bf16.mxu0 0
      %491 = vmatpush1.bf16.msra.mxu0 %v428
      %492 = vmatprep.subr.bf16.mxu0 0
      %493 = vmatpush1.bf16.msra.mxu0 %v429
      %494 = vmatprep.mubr.bf16.mxu0 %v307
      %495 = vmatmul.mubr.bf16.gmra.mrb[0].mxu0 %v306
      %v496 = vpop.f32.mrb[0].mxu0
      %v497 = vadd.f32 0.0, %v496
      %v498 = vpop.f32.mrb[0].mxu0
      %v499 = vpop.f32.mrb[0].mxu0
      %v500 = vadd.f32 0.0, %v499
      %v501 = vpop.f32.mrb[0].mxu0
      %502 = vmatprep.mubr.bf16.mxu0 %v310
      %503 = vmatmul.mubr.bf16.gmra.mrb[0].mxu0 %v309
      %v504 = vpop.f32.mrb[0].mxu0
      %v505 = vadd.f32 0.0, %v504
      %v506 = vpop.f32.mrb[0].mxu0
      %v507 = vpop.f32.mrb[0].mxu0
      %v508 = vadd.f32 0.0, %v507
      %v509 = vpop.f32.mrb[0].mxu0
      %510 = vdwg.mxu0
      %511 = vmatprep.subr.bf16.mxu0 0
      %512 = vmatpush1.bf16.msra.mxu0 %v430
      %513 = vmatprep.subr.bf16.mxu0 0
      %514 = vmatpush1.bf16.msra.mxu0 %v431
      %515 = vmatprep.subr.bf16.mxu0 0
      %516 = vmatpush1.bf16.msra.mxu0 %v432
      %517 = vmatprep.subr.bf16.mxu0 0
      %518 = vmatpush1.bf16.msra.mxu0 %v433
      %519 = vmatprep.subr.bf16.mxu0 0
      %520 = vmatpush1.bf16.msra.mxu0 %v434
      %521 = vmatprep.subr.bf16.mxu0 0
      %522 = vmatpush1.bf16.msra.mxu0 %v435
      %523 = vmatprep.subr.bf16.mxu0 0
      %524 = vmatpush1.bf16.msra.mxu0 %v436
      %525 = vmatprep.subr.bf16.mxu0 0
      %526 = vmatpush1.bf16.msra.mxu0 %v437
      %527 = vmatprep.subr.bf16.mxu0 0
      %528 = vmatpush1.bf16.msra.mxu0 0
      %529 = vmatprep.subr.bf16.mxu0 0
      %530 = vmatpush1.bf16.msra.mxu0 0
      %531 = vmatprep.subr.bf16.mxu0 0
      %532 = vmatpush1.bf16.msra.mxu0 0
      %533 = vmatprep.subr.bf16.mxu0 0
      %534 = vmatpush1.bf16.msra.mxu0 0
      %535 = vmatprep.subr.bf16.mxu0 0
      %536 = vmatpush1.bf16.msra.mxu0 0
      %537 = vmatprep.subr.bf16.mxu0 0
      %538 = vmatpush1.bf16.msra.mxu0 0
      %539 = vmatprep.subr.bf16.mxu0 0
      %540 = vmatpush1.bf16.msra.mxu0 0
      %541 = vmatprep.subr.bf16.mxu0 0
      %542 = vmatpush1.bf16.msra.mxu0 0
      %543 = vmatprep.mubr.bf16.mxu0 0
      %544 = vmatmul.mubr.bf16.gmra.mrb[0].mxu0 %v308
      %v545 = vpop.f32.mrb[0].mxu0
      %v546 = vadd.f32 %v497, %v545
      %v547 = vpop.f32.mrb[0].mxu0
      %v548 = vpop.f32.mrb[0].mxu0
      %v549 = vadd.f32 %v500, %v548
      %v550 = vpop.f32.mrb[0].mxu0
      %551 = vmatprep.mubr.bf16.mxu0 0
      %552 = vmatmul.mubr.bf16.gmra.mrb[0].mxu0 %v311
      %v553 = vpop.f32.mrb[0].mxu0
      %v554 = vadd.f32 %v505, %v553
      %v555 = vpop.f32.mrb[0].mxu0
      %v556 = vpop.f32.mrb[0].mxu0
      %v557 = vadd.f32 %v508, %v556
      %v558 = vpop.f32.mrb[0].mxu0
      %559 = vdwg.mxu0
      %v568 = vunpack.c.l.b16 %v172
      %v569 = vunpack.c.h.b16 %v172
      %v570 = vunpack.c.l.b16 %v173
      %v571 = vunpack.c.l.b16 %v174
      %v572 = vunpack.c.h.b16 %v174
      %v573 = vunpack.c.l.b16 %v175
      %v574 = vunpack.c.l.b16 %v176
      %v575 = vunpack.c.h.b16 %v176
      %v576 = vunpack.c.l.b16 %v177
      %v577 = vunpack.c.l.b16 %v178
      %v578 = vunpack.c.h.b16 %v178
      %v579 = vunpack.c.l.b16 %v179
      %v580 = vpack.c.b16 %v571, %v568
      %v581 = vpack.c.b16 %v572, %v569
      %v582 = vpack.c.b16 %v573, %v570
      %v583 = vpack.c.b16 %v577, %v574
      %v584 = vpack.c.b16 %v578, %v575
      %v585 = vpack.c.b16 %v579, %v576
      %v640 = vunpack.c.l.b16 %v180
      %v641 = vunpack.c.l.b16 %v181
      %v642 = vunpack.c.l.b16 %v182
      %v643 = vunpack.c.l.b16 %v183
      %v644 = vunpack.c.l.b16 %v184
      %v645 = vunpack.c.l.b16 %v185
      %v646 = vunpack.c.l.b16 %v186
      %v647 = vunpack.c.l.b16 %v187
      %v648 = vunpack.c.l.b16 %v188
      %v649 = vunpack.c.l.b16 %v189
      %v650 = vunpack.c.l.b16 %v190
      %v651 = vunpack.c.l.b16 %v191
      %v652 = vunpack.c.l.b16 %v192
      %v653 = vunpack.c.l.b16 %v193
      %v654 = vunpack.c.l.b16 %v194
      %v655 = vunpack.c.l.b16 %v195
      %v656 = vunpack.c.l.b16 %v196
      %v657 = vunpack.c.l.b16 %v197
      %v658 = vunpack.c.l.b16 %v198
      %v659 = vunpack.c.l.b16 %v199
      %v660 = vunpack.c.l.b16 %v200
      %v661 = vunpack.c.l.b16 %v201
      %v662 = vunpack.c.l.b16 %v202
      %v663 = vunpack.c.l.b16 %v203
      %v664 = vunpack.c.l.b16 %v204
      %v665 = vunpack.c.l.b16 %v205
      %v666 = vunpack.c.l.b16 %v206
      %v667 = vunpack.c.l.b16 %v207
      %v668 = vunpack.c.l.b16 %v208
      %v669 = vunpack.c.l.b16 %v209
      %v670 = vunpack.c.l.b16 %v210
      %v671 = vunpack.c.l.b16 %v211
      %v672 = vunpack.c.l.b16 %v212
      %v673 = vunpack.c.l.b16 %v213
      %v674 = vunpack.c.l.b16 %v214
      %v675 = vunpack.c.l.b16 %v215
      %v676 = vunpack.c.l.b16 %v216
      %v677 = vunpack.c.l.b16 %v217
      %v678 = vunpack.c.l.b16 %v218
      %v679 = vunpack.c.l.b16 %v219
      %v680 = vunpack.c.l.b16 %v220
      %v681 = vunpack.c.l.b16 %v221
      %v682 = vunpack.c.l.b16 %v222
      %v683 = vunpack.c.l.b16 %v223
      %v684 = vunpack.c.l.b16 %v224
      %v685 = vunpack.c.l.b16 %v225
      %v686 = vunpack.c.l.b16 %v226
      %v687 = vunpack.c.l.b16 %v227
      %v688 = vpack.c.b16 %v641, %v640
      %v689 = vpack.c.b16 %v643, %v642
      %v690 = vpack.c.b16 %v645, %v644
      %v691 = vpack.c.b16 %v647, %v646
      %v692 = vpack.c.b16 %v649, %v648
      %v693 = vpack.c.b16 %v651, %v650
      %v694 = vpack.c.b16 %v653, %v652
      %v695 = vpack.c.b16 %v655, %v654
      %v696 = vpack.c.b16 %v657, %v656
      %v697 = vpack.c.b16 %v659, %v658
      %v698 = vpack.c.b16 %v661, %v660
      %v699 = vpack.c.b16 %v663, %v662
      %v700 = vpack.c.b16 %v665, %v664
      %v701 = vpack.c.b16 %v667, %v666
      %v702 = vpack.c.b16 %v669, %v668
      %v703 = vpack.c.b16 %v671, %v670
      %v704 = vpack.c.b16 %v673, %v672
      %v705 = vpack.c.b16 %v675, %v674
      %v706 = vpack.c.b16 %v677, %v676
      %v707 = vpack.c.b16 %v679, %v678
      %v708 = vpack.c.b16 %v681, %v680
      %v709 = vpack.c.b16 %v683, %v682
      %v710 = vpack.c.b16 %v685, %v684
      %v711 = vpack.c.b16 %v687, %v686
      %736 = vmatprep.subr.bf16.mxu0 0
      %737 = vmatpush1.bf16.msra.mxu0 %v688
      %738 = vmatprep.subr.bf16.mxu0 0
      %739 = vmatpush1.bf16.msra.mxu0 %v689
      %740 = vmatprep.subr.bf16.mxu0 0
      %741 = vmatpush1.bf16.msra.mxu0 %v690
      %742 = vmatprep.subr.bf16.mxu0 0
      %743 = vmatpush1.bf16.msra.mxu0 %v691
      %744 = vmatprep.subr.bf16.mxu0 0
      %745 = vmatpush1.bf16.msra.mxu0 %v692
      %746 = vmatprep.subr.bf16.mxu0 0
      %747 = vmatpush1.bf16.msra.mxu0 %v693
      %748 = vmatprep.subr.bf16.mxu0 0
      %749 = vmatpush1.bf16.msra.mxu0 %v694
      %750 = vmatprep.subr.bf16.mxu0 0
      %751 = vmatpush1.bf16.msra.mxu0 %v695
      %752 = vmatprep.subr.bf16.mxu0 0
      %753 = vmatpush1.bf16.msra.mxu0 %v696
      %754 = vmatprep.subr.bf16.mxu0 0
      %755 = vmatpush1.bf16.msra.mxu0 %v697
      %756 = vmatprep.subr.bf16.mxu0 0
      %757 = vmatpush1.bf16.msra.mxu0 %v698
      %758 = vmatprep.subr.bf16.mxu0 0
      %759 = vmatpush1.bf16.msra.mxu0 %v699
      %760 = vmatprep.subr.bf16.mxu0 0
      %761 = vmatpush1.bf16.msra.mxu0 %v700
      %762 = vmatprep.subr.bf16.mxu0 0
      %763 = vmatpush1.bf16.msra.mxu0 %v701
      %764 = vmatprep.subr.bf16.mxu0 0
      %765 = vmatpush1.bf16.msra.mxu0 %v702
      %766 = vmatprep.subr.bf16.mxu0 0
      %767 = vmatpush1.bf16.msra.mxu0 %v703
      %768 = vmatprep.mubr.bf16.mxu0 %v581
      %769 = vmatmul.mubr.bf16.gmra.mrb[0].mxu0 %v580
      %v770 = vpop.f32.mrb[0].mxu0
      %v771 = vadd.f32 %v546, %v770
      %v772 = vpop.f32.mrb[0].mxu0
      %v773 = vpop.f32.mrb[0].mxu0
      %v774 = vadd.f32 %v549, %v773
      %v775 = vpop.f32.mrb[0].mxu0
      %776 = vmatprep.mubr.bf16.mxu0 %v584
      %777 = vmatmul.mubr.bf16.gmra.mrb[0].mxu0 %v583
      %v778 = vpop.f32.mrb[0].mxu0
      %v779 = vadd.f32 %v554, %v778
      %v780 = vpop.f32.mrb[0].mxu0
      %v781 = vpop.f32.mrb[0].mxu0
      %v782 = vadd.f32 %v557, %v781
      %v783 = vpop.f32.mrb[0].mxu0
      %784 = vdwg.mxu0
      %785 = vmatprep.subr.bf16.mxu0 0
      %786 = vmatpush1.bf16.msra.mxu0 %v704
      %787 = vmatprep.subr.bf16.mxu0 0
      %788 = vmatpush1.bf16.msra.mxu0 %v705
      %789 = vmatprep.subr.bf16.mxu0 0
      %790 = vmatpush1.bf16.msra.mxu0 %v706
      %791 = vmatprep.subr.bf16.mxu0 0
      %792 = vmatpush1.bf16.msra.mxu0 %v707
      %793 = vmatprep.subr.bf16.mxu0 0
      %794 = vmatpush1.bf16.msra.mxu0 %v708
      %795 = vmatprep.subr.bf16.mxu0 0
      %796 = vmatpush1.bf16.msra.mxu0 %v709
      %797 = vmatprep.subr.bf16.mxu0 0
      %798 = vmatpush1.bf16.msra.mxu0 %v710
      %799 = vmatprep.subr.bf16.mxu0 0
      %800 = vmatpush1.bf16.msra.mxu0 %v711
      %801 = vmatprep.subr.bf16.mxu0 0
      %802 = vmatpush1.bf16.msra.mxu0 0
      %803 = vmatprep.subr.bf16.mxu0 0
      %804 = vmatpush1.bf16.msra.mxu0 0
      %805 = vmatprep.subr.bf16.mxu0 0
      %806 = vmatpush1.bf16.msra.mxu0 0
      %807 = vmatprep.subr.bf16.mxu0 0
      %808 = vmatpush1.bf16.msra.mxu0 0
      %809 = vmatprep.subr.bf16.mxu0 0
      %810 = vmatpush1.bf16.msra.mxu0 0
      %811 = vmatprep.subr.bf16.mxu0 0
      %812 = vmatpush1.bf16.msra.mxu0 0
      %813 = vmatprep.subr.bf16.mxu0 0
      %814 = vmatpush1.bf16.msra.mxu0 0
      %815 = vmatprep.subr.bf16.mxu0 0
      %816 = vmatpush1.bf16.msra.mxu0 0
      %817 = vmatprep.mubr.bf16.mxu0 0
      %818 = vmatmul.mubr.bf16.gmra.mrb[0].mxu0 %v582
      %v819 = vpop.f32.mrb[0].mxu0
      %v820 = vadd.f32 %v771, %v819
      %v821 = vpop.f32.mrb[0].mxu0
      %v822 = vpop.f32.mrb[0].mxu0
      %v823 = vadd.f32 %v774, %v822
      %v824 = vpop.f32.mrb[0].mxu0
      %825 = vmatprep.mubr.bf16.mxu0 0
      %826 = vmatmul.mubr.bf16.gmra.mrb[0].mxu0 %v585
      %v827 = vpop.f32.mrb[0].mxu0
      %v828 = vadd.f32 %v779, %v827
      %v829 = vpop.f32.mrb[0].mxu0
      %v830 = vpop.f32.mrb[0].mxu0
      %v831 = vadd.f32 %v782, %v830
      %v832 = vpop.f32.mrb[0].mxu0
      %833 = vdwg.mxu0
      %s834 = scalar_lea.vmem %s165, 24
      %v835 = vld [vmem:[%s834] sm:$0xff]
      %v836 = vld [vmem:[%s834 + $0x8] sm:$0xf]
      %v837 = vld [vmem:[%s834 + $0xc] sm:$0xff]
      %v838 = vld [vmem:[%s834 + $0x14] sm:$0xf]
      %v839 = vld [vmem:[%s834 + $0x18] sm:$0xff]
      %v840 = vld [vmem:[%s834 + $0x20] sm:$0xf]
      %v841 = vld [vmem:[%s834 + $0x24] sm:$0xff]
      %v842 = vld [vmem:[%s834 + $0x2c] sm:$0xf]
      %s843 = scalar_lea.vmem %s1, 384
      %v844 = vld [vmem:[%s843] sm:$0xf]
      %v845 = vld [vmem:[%s843 + $0x4] sm:$0xf]
      %v846 = vld [vmem:[%s843 + $0x8] sm:$0xf]
      %v847 = vld [vmem:[%s843 + $0xc] sm:$0xf]
      %v848 = vld [vmem:[%s843 + $0x10] sm:$0xf]
      %v849 = vld [vmem:[%s843 + $0x14] sm:$0xf]
      %v850 = vld [vmem:[%s843 + $0x18] sm:$0xf]
      %v851 = vld [vmem:[%s843 + $0x1c] sm:$0xf]
      %v852 = vld [vmem:[%s843 + $0x20] sm:$0xf]
      %v853 = vld [vmem:[%s843 + $0x24] sm:$0xf]
      %v854 = vld [vmem:[%s843 + $0x28] sm:$0xf]
      %v855 = vld [vmem:[%s843 + $0x2c] sm:$0xf]
      %v856 = vld [vmem:[%s843 + $0x30] sm:$0xf]
      %v857 = vld [vmem:[%s843 + $0x34] sm:$0xf]
      %v858 = vld [vmem:[%s843 + $0x38] sm:$0xf]
      %v859 = vld [vmem:[%s843 + $0x3c] sm:$0xf]
      %v860 = vld [vmem:[%s843 + $0x40] sm:$0xf]
      %v861 = vld [vmem:[%s843 + $0x44] sm:$0xf]
      %v862 = vld [vmem:[%s843 + $0x48] sm:$0xf]
      %v863 = vld [vmem:[%s843 + $0x4c] sm:$0xf]
      %v864 = vld [vmem:[%s843 + $0x50] sm:$0xf]
      %v865 = vld [vmem:[%s843 + $0x54] sm:$0xf]
      %v866 = vld [vmem:[%s843 + $0x58] sm:$0xf]
      %v867 = vld [vmem:[%s843 + $0x5c] sm:$0xf]
      %v868 = vld [vmem:[%s843 + $0x60] sm:$0xf]
      %v869 = vld [vmem:[%s843 + $0x64] sm:$0xf]
      %v870 = vld [vmem:[%s843 + $0x68] sm:$0xf]
      %v871 = vld [vmem:[%s843 + $0x6c] sm:$0xf]
      %v872 = vld [vmem:[%s843 + $0x70] sm:$0xf]
      %v873 = vld [vmem:[%s843 + $0x74] sm:$0xf]
      %v874 = vld [vmem:[%s843 + $0x78] sm:$0xf]
      %v875 = vld [vmem:[%s843 + $0x7c] sm:$0xf]
      %v876 = vld [vmem:[%s843 + $0x80] sm:$0xf]
      %v877 = vld [vmem:[%s843 + $0x84] sm:$0xf]
      %v878 = vld [vmem:[%s843 + $0x88] sm:$0xf]
      %v879 = vld [vmem:[%s843 + $0x8c] sm:$0xf]
      %v880 = vld [vmem:[%s843 + $0x90] sm:$0xf]
      %v881 = vld [vmem:[%s843 + $0x94] sm:$0xf]
      %v882 = vld [vmem:[%s843 + $0x98] sm:$0xf]
      %v883 = vld [vmem:[%s843 + $0x9c] sm:$0xf]
      %v884 = vld [vmem:[%s843 + $0xa0] sm:$0xf]
      %v885 = vld [vmem:[%s843 + $0xa4] sm:$0xf]
      %v886 = vld [vmem:[%s843 + $0xa8] sm:$0xf]
      %v887 = vld [vmem:[%s843 + $0xac] sm:$0xf]
      %v888 = vld [vmem:[%s843 + $0xb0] sm:$0xf]
      %v889 = vld [vmem:[%s843 + $0xb4] sm:$0xf]
      %v890 = vld [vmem:[%s843 + $0xb8] sm:$0xf]
      %v891 = vld [vmem:[%s843 + $0xbc] sm:$0xf]
      %v900 = vunpack.c.l.b16 %v835
      %v901 = vunpack.c.h.b16 %v835
      %v902 = vunpack.c.l.b16 %v836
      %v903 = vunpack.c.l.b16 %v837
      %v904 = vunpack.c.h.b16 %v837
      %v905 = vunpack.c.l.b16 %v838
      %v906 = vunpack.c.l.b16 %v839
      %v907 = vunpack.c.h.b16 %v839
      %v908 = vunpack.c.l.b16 %v840
      %v909 = vunpack.c.l.b16 %v841
      %v910 = vunpack.c.h.b16 %v841
      %v911 = vunpack.c.l.b16 %v842
      %v912 = vpack.c.b16 %v903, %v900
      %v913 = vpack.c.b16 %v904, %v901
      %v914 = vpack.c.b16 %v905, %v902
      %v915 = vpack.c.b16 %v909, %v906
      %v916 = vpack.c.b16 %v910, %v907
      %v917 = vpack.c.b16 %v911, %v908
      %v972 = vunpack.c.l.b16 %v844
      %v973 = vunpack.c.l.b16 %v845
      %v974 = vunpack.c.l.b16 %v846
      %v975 = vunpack.c.l.b16 %v847
      %v976 = vunpack.c.l.b16 %v848
      %v977 = vunpack.c.l.b16 %v849
      %v978 = vunpack.c.l.b16 %v850
      %v979 = vunpack.c.l.b16 %v851
      %v980 = vunpack.c.l.b16 %v852
      %v981 = vunpack.c.l.b16 %v853
      %v982 = vunpack.c.l.b16 %v854
      %v983 = vunpack.c.l.b16 %v855
      %v984 = vunpack.c.l.b16 %v856
      %v985 = vunpack.c.l.b16 %v857
      %v986 = vunpack.c.l.b16 %v858
      %v987 = vunpack.c.l.b16 %v859
      %v988 = vunpack.c.l.b16 %v860
      %v989 = vunpack.c.l.b16 %v861
      %v990 = vunpack.c.l.b16 %v862
      %v991 = vunpack.c.l.b16 %v863
      %v992 = vunpack.c.l.b16 %v864
      %v993 = vunpack.c.l.b16 %v865
      %v994 = vunpack.c.l.b16 %v866
      %v995 = vunpack.c.l.b16 %v867
      %v996 = vunpack.c.l.b16 %v868
      %v997 = vunpack.c.l.b16 %v869
      %v998 = vunpack.c.l.b16 %v870
      %v999 = vunpack.c.l.b16 %v871
      %v1000 = vunpack.c.l.b16 %v872
      %v1001 = vunpack.c.l.b16 %v873
      %v1002 = vunpack.c.l.b16 %v874
      %v1003 = vunpack.c.l.b16 %v875
      %v1004 = vunpack.c.l.b16 %v876
      %v1005 = vunpack.c.l.b16 %v877
      %v1006 = vunpack.c.l.b16 %v878
      %v1007 = vunpack.c.l.b16 %v879
      %v1008 = vunpack.c.l.b16 %v880
      %v1009 = vunpack.c.l.b16 %v881
      %v1010 = vunpack.c.l.b16 %v882
      %v1011 = vunpack.c.l.b16 %v883
      %v1012 = vunpack.c.l.b16 %v884
      %v1013 = vunpack.c.l.b16 %v885
      %v1014 = vunpack.c.l.b16 %v886
      %v1015 = vunpack.c.l.b16 %v887
      %v1016 = vunpack.c.l.b16 %v888
      %v1017 = vunpack.c.l.b16 %v889
      %v1018 = vunpack.c.l.b16 %v890
      %v1019 = vunpack.c.l.b16 %v891
      %v1020 = vpack.c.b16 %v973, %v972
      %v1021 = vpack.c.b16 %v975, %v974
      %v1022 = vpack.c.b16 %v977, %v976
      %v1023 = vpack.c.b16 %v979, %v978
      %v1024 = vpack.c.b16 %v981, %v980
      %v1025 = vpack.c.b16 %v983, %v982
      %v1026 = vpack.c.b16 %v985, %v984
      %v1027 = vpack.c.b16 %v987, %v986
      %v1028 = vpack.c.b16 %v989, %v988
      %v1029 = vpack.c.b16 %v991, %v990
      %v1030 = vpack.c.b16 %v993, %v992
      %v1031 = vpack.c.b16 %v995, %v994
      %v1032 = vpack.c.b16 %v997, %v996
      %v1033 = vpack.c.b16 %v999, %v998
      %v1034 = vpack.c.b16 %v1001, %v1000
      %v1035 = vpack.c.b16 %v1003, %v1002
      %v1036 = vpack.c.b16 %v1005, %v1004
      %v1037 = vpack.c.b16 %v1007, %v1006
      %v1038 = vpack.c.b16 %v1009, %v1008
      %v1039 = vpack.c.b16 %v1011, %v1010
      %v1040 = vpack.c.b16 %v1013, %v1012
      %v1041 = vpack.c.b16 %v1015, %v1014
      %v1042 = vpack.c.b16 %v1017, %v1016
      %v1043 = vpack.c.b16 %v1019, %v1018
      %1068 = vmatprep.subr.bf16.mxu0 0
      %1069 = vmatpush1.bf16.msra.mxu0 %v1020
      %1070 = vmatprep.subr.bf16.mxu0 0
      %1071 = vmatpush1.bf16.msra.mxu0 %v1021
      %1072 = vmatprep.subr.bf16.mxu0 0
      %1073 = vmatpush1.bf16.msra.mxu0 %v1022
      %1074 = vmatprep.subr.bf16.mxu0 0
      %1075 = vmatpush1.bf16.msra.mxu0 %v1023
      %1076 = vmatprep.subr.bf16.mxu0 0
      %1077 = vmatpush1.bf16.msra.mxu0 %v1024
      %1078 = vmatprep.subr.bf16.mxu0 0
      %1079 = vmatpush1.bf16.msra.mxu0 %v1025
      %1080 = vmatprep.subr.bf16.mxu0 0
      %1081 = vmatpush1.bf16.msra.mxu0 %v1026
      %1082 = vmatprep.subr.bf16.mxu0 0
      %1083 = vmatpush1.bf16.msra.mxu0 %v1027
      %1084 = vmatprep.subr.bf16.mxu0 0
      %1085 = vmatpush1.bf16.msra.mxu0 %v1028
      %1086 = vmatprep.subr.bf16.mxu0 0
      %1087 = vmatpush1.bf16.msra.mxu0 %v1029
      %1088 = vmatprep.subr.bf16.mxu0 0
      %1089 = vmatpush1.bf16.msra.mxu0 %v1030
      %1090 = vmatprep.subr.bf16.mxu0 0
      %1091 = vmatpush1.bf16.msra.mxu0 %v1031
      %1092 = vmatprep.subr.bf16.mxu0 0
      %1093 = vmatpush1.bf16.msra.mxu0 %v1032
      %1094 = vmatprep.subr.bf16.mxu0 0
      %1095 = vmatpush1.bf16.msra.mxu0 %v1033
      %1096 = vmatprep.subr.bf16.mxu0 0
      %1097 = vmatpush1.bf16.msra.mxu0 %v1034
      %1098 = vmatprep.subr.bf16.mxu0 0
      %1099 = vmatpush1.bf16.msra.mxu0 %v1035
      %1100 = vmatprep.mubr.bf16.mxu0 %v913
      %1101 = vmatmul.mubr.bf16.gmra.mrb[0].mxu0 %v912
      %v1102 = vpop.f32.mrb[0].mxu0
      %v1103 = vadd.f32 0.0, %v1102
      %v1104 = vpop.f32.mrb[0].mxu0
      %v1105 = vpop.f32.mrb[0].mxu0
      %v1106 = vadd.f32 0.0, %v1105
      %v1107 = vpop.f32.mrb[0].mxu0
      %1108 = vmatprep.mubr.bf16.mxu0 %v916
      %1109 = vmatmul.mubr.bf16.gmra.mrb[0].mxu0 %v915
      %v1110 = vpop.f32.mrb[0].mxu0
      %v1111 = vadd.f32 0.0, %v1110
      %v1112 = vpop.f32.mrb[0].mxu0
      %v1113 = vpop.f32.mrb[0].mxu0
      %v1114 = vadd.f32 0.0, %v1113
      %v1115 = vpop.f32.mrb[0].mxu0
      %1116 = vdwg.mxu0
      %1117 = vmatprep.subr.bf16.mxu0 0
      %1118 = vmatpush1.bf16.msra.mxu0 %v1036
      %1119 = vmatprep.subr.bf16.mxu0 0
      %1120 = vmatpush1.bf16.msra.mxu0 %v1037
      %1121 = vmatprep.subr.bf16.mxu0 0
      %1122 = vmatpush1.bf16.msra.mxu0 %v1038
      %1123 = vmatprep.subr.bf16.mxu0 0
      %1124 = vmatpush1.bf16.msra.mxu0 %v1039
      %1125 = vmatprep.subr.bf16.mxu0 0
      %1126 = vmatpush1.bf16.msra.mxu0 %v1040
      %1127 = vmatprep.subr.bf16.mxu0 0
      %1128 = vmatpush1.bf16.msra.mxu0 %v1041
      %1129 = vmatprep.subr.bf16.mxu0 0
      %1130 = vmatpush1.bf16.msra.mxu0 %v1042
      %1131 = vmatprep.subr.bf16.mxu0 0
      %1132 = vmatpush1.bf16.msra.mxu0 %v1043
      %1133 = vmatprep.subr.bf16.mxu0 0
      %1134 = vmatpush1.bf16.msra.mxu0 0
      %1135 = vmatprep.subr.bf16.mxu0 0
      %1136 = vmatpush1.bf16.msra.mxu0 0
      %1137 = vmatprep.subr.bf16.mxu0 0
      %1138 = vmatpush1.bf16.msra.mxu0 0
      %1139 = vmatprep.subr.bf16.mxu0 0
      %1140 = vmatpush1.bf16.msra.mxu0 0
      %1141 = vmatprep.subr.bf16.mxu0 0
      %1142 = vmatpush1.bf16.msra.mxu0 0
      %1143 = vmatprep.subr.bf16.mxu0 0
      %1144 = vmatpush1.bf16.msra.mxu0 0
      %1145 = vmatprep.subr.bf16.mxu0 0
      %1146 = vmatpush1.bf16.msra.mxu0 0
      %1147 = vmatprep.subr.bf16.mxu0 0
      %1148 = vmatpush1.bf16.msra.mxu0 0
      %1149 = vmatprep.mubr.bf16.mxu0 0
      %1150 = vmatmul.mubr.bf16.gmra.mrb[0].mxu0 %v914
      %v1151 = vpop.f32.mrb[0].mxu0
      %v1152 = vadd.f32 %v1103, %v1151
      %v1153 = vpop.f32.mrb[0].mxu0
      %v1154 = vpop.f32.mrb[0].mxu0
      %v1155 = vadd.f32 %v1106, %v1154
      %v1156 = vpop.f32.mrb[0].mxu0
      %1157 = vmatprep.mubr.bf16.mxu0 0
      %1158 = vmatmul.mubr.bf16.gmra.mrb[0].mxu0 %v917
      %v1159 = vpop.f32.mrb[0].mxu0
      %v1160 = vadd.f32 %v1111, %v1159
      %v1161 = vpop.f32.mrb[0].mxu0
      %v1162 = vpop.f32.mrb[0].mxu0
      %v1163 = vadd.f32 %v1114, %v1162
      %v1164 = vpop.f32.mrb[0].mxu0
      %1165 = vdwg.mxu0
      %v1166 = vadd.f32 %v820, %v1152
      %v1167 = vadd.f32 %v823, %v1155
      %v1168 = vadd.f32 %v828, %v1160
      %v1169 = vadd.f32 %v831, %v1163
      %v1170 = vld [vmem:[%s2] sm:$0x1]
      %v1172 = vlaneseq
      %v1173 = vshrl.u32 %v1172, 7
      %v1174 = vsub.s32 0, %v1173
      %v1175 = vrot.slane %v1170, %v1174
      %v1177 = vadd.f32 %v1166, %v1175
      %v1178 = vadd.f32 %v1167, %v1175
      %v1179 = vadd.f32 %v1168, %v1175
      %v1180 = vadd.f32 %v1169, %v1175
      %v1181 = vmax.f32 %v1177, 0.0
      %v1182 = vmax.f32 %v1178, 0.0
      %v1183 = vmax.f32 %v1179, 0.0
      %v1184 = vmax.f32 %v1180, 0.0
      %v1185 = vpack.c.bf16 %v1181, %v1181
      %v1186 = vpack.c.bf16 %v1182, %v1182
      %v1187 = vpack.c.bf16 %v1183, %v1183
      %v1188 = vpack.c.bf16 %v1184, %v1184
      %1189 = vst [vmem:[%s170] sm:$0xf] %v1185
      %1190 = vst [vmem:[%s170 + $0x4] sm:$0xf] %v1186
      %1191 = vst [vmem:[%s170 + $0x8] sm:$0xf] %v1187
      %1192 = vst [vmem:[%s170 + $0xc] sm:$0xf] %v1188
      %p1193 = scmp.lt.s32.totalorder %s14, 1
      %s1194 = scalar_select %p1193, %s14, 1
      %s1195 = smul.addr %s1194, 4
      %s1196 = smul.addr %s1195, 4
      %s1197 = scalar_lea.vmem %s3, %s1196
      // Predicated region
      $region33: #{resnet50_forward.13} parent=31 // pred_check
        %p1198 = pneg %p100
      $region34: #{resnet50_forward.13} parent=31 // pred_check_branch
        %1200 = sbr.rel (%p1198) target = $region36
      $region35: #{resnet50_forward.13} parent=31 // pred_region
        _
      $region36: #{resnet50_forward.13} parent=31 // pred_fallthru
        _
    $region32: #{resnet50_forward.13} parent=5 // pred_fallthru
      _
    %p1201 = scmp.le.s32.totalorder 2, %s9
    // Predicated region
    $region37: #{resnet50_forward.13} parent=5 // pred_check
      %p1202 = pneg %p1201
    $region38: #{resnet50_forward.13} parent=5 // pred_check_branch
      %1204 = sbr.rel (%p1202) target = $region40
    $region39: #{resnet50_forward.13} parent=5 // pred_region
      %s1205 = ssub.s32 %s9, 2
      // Predicated region
      $region41: #{resnet50_forward.13} parent=39 // pred_check
        %p1206 = pneg %p106
      $region42: #{resnet50_forward.13} parent=39 // pred_check_branch
        %1208 = sbr.rel (%p1206) target = $region44
      $region43: #{resnet50_forward.13} parent=39 // pred_region
        %p1209 = scmp.lt.s32.totalorder %s15, 1
        %s1210 = scalar_select %p1209, %s15, 1
        %s1211 = smul.addr %s1210, 4
        %s1212 = smul.addr %s1211, 4
        %s1213 = scalar_lea.vmem %s3, %s1212
      $region44: #{resnet50_forward.13} parent=39 // pred_fallthru
        _
    $region40: #{resnet50_forward.13} parent=5 // pred_fallthru
      _
  $region6: #{resnet50_forward.13} parent=0 // loop_footer
    %s13 = sadd.s32 1, %s9
  $region7: #{resnet50_forward.13} parent=0 // loop_footer_branch
    %8 = sbr.rel target = $region3
  $region8: #{resnet50_forward.13} parent=0 // loop_exit
    _

// kernel: resnet50_forward.15
$region0: #{resnet50_forward.15}
  #allocation0 [shape = 'u32[]', space=smem, size = 0x4, offset = 0x4, fixed_abs, tag = 'smem constant byte address 0x4 - core index']
  #allocation1 [shape = 'u32[144,128]{1,0:T(1,128)}', space=vmem, size = 0x12000, scoped, tag = 'internal scratch']
  %s0 = inlined_call_operand.vmem [shape: bf16[16,128], index: 0, kind: input, shape index: {}]
  %s1 = inlined_call_operand.vmem [shape: bf16[128,1024], index: 1, kind: input, shape index: {}]
  %s2 = inlined_call_operand.vmem [shape: f32[1,1024], index: 2, kind: input, shape index: {}]
  %s3 = inlined_call_operand.vmem [shape: f32[16,1024], index: 3, kind: output, shape index: {}]
  %s4 = sld [smem:[#allocation0]]
  $region102: #{resnet50_forward.15} parent=0
    _
  %s6 = ssub.s32 1, %s4
  %s7 = scalar_select 0, %s6, %s4
  $region1: #{resnet50_forward.15} parent=0
    #allocation2 [shape = 'u8[131072]{0}', space=vmem, size = 0x20000, scoped, tag = 'input window, operand 1']
    #allocation3 [shape = 'u8[32768]{0}', space=vmem, size = 0x8000, scoped, tag = 'output window, operand 0']
    loop: start=0, step=1, limit=6
    $region2: #{resnet50_forward.15} parent=1 // loop_pre_header
      _
    $region3: #{resnet50_forward.15} parent=1 // loop_header
      %s9 = sphi 0, %s13
      %p10 = scmp.ge.s32.totalorder %s9, 6
      %s16 = sphi 0, %s28
      %s17 = sphi 0, %s24
      %s18 = sphi 0, %s16
      %s19 = sphi 0, %s17
      %s20 = sphi 0, %s18
      %s21 = sphi 0, %s19
      %s31 = sphi 0, %s33
      %s34 = sphi 0, %s31
      %s35 = sphi 0, %s34
      %s51 = sphi 0, %s35
      %s57 = sphi 0, %s59
      %s60 = sphi 0, %s57
      %s61 = sphi 0, %s60
      %s77 = sphi 0, %s61
      %s83 = sphi 0, %s85
      %s86 = sphi 0, %s83
      %s87 = sphi 0, %s86
      %s103 = sphi 0, %s87
      %s111 = sphi 0, %s113
      %s114 = sphi 0, %s111
      %s115 = sphi 0, %s114
      %s131 = sphi 0, %s115
    $region4: #{resnet50_forward.15} parent=1 // loop_header_branch
      %12 = sbr.rel (%p10) target = $region8
    $region5: #{resnet50_forward.15} parent=1 // loop_body
      %s14 = ssub.s32 %s9, 1
      %s15 = ssub.s32 %s9, 2
      %s22 = sadd.s32 1, %s17
      %p23 = scmp.ge.s32.totalorder %s22, 4
      %s24 = scalar_select %p23, 0, %s22
      %s25 = sadd.s32 1, %s16
      %s26 = scalar_select %p23, %s25, %s16
      %p27 = scmp.ge.s32.totalorder %s26, 1
      %s28 = scalar_select %p27, 0, %s26
      %s29 = ssub.s32 %s16, %s28
      %p30 = scmp.eq.s32.totalorder %s29, 0
      %s32 = sadd.s32 %s31, 1
      %s33 = scalar_select %p30, %s31, %s32
      %p36 = pneg %p30
      %p37 = scmp.eq.s32.totalorder %s9, 3
      %p38 = por %p36, %p37
      %p39 = scmp.ne.s32.totalorder %s31, %s34
      %p40 = scmp.eq.s32.totalorder %s9, 0
      %p41 = por %p39, %p40
      %p42 = scmp.ne.s32.totalorder %s31, %s34
      %p43 = scmp.eq.s32.totalorder %s14, 3
      %p44 = por %p42, %p43
      %p45 = scmp.ne.s32.totalorder %s34, %s35
      %p46 = scmp.eq.s32.totalorder %s14, 0
      %p47 = por %p45, %p46
      %p48 = scmp.ne.s32.totalorder %s34, %s35
      %p49 = scmp.eq.s32.totalorder %s15, 3
      %p50 = por %p48, %p49
      %p52 = scmp.ne.s32.totalorder %s35, %s51
      %p53 = scmp.eq.s32.totalorder %s15, 0
      %p54 = por %p52, %p53
      %s55 = ssub.s32 %s17, %s24
      %p56 = scmp.eq.s32.totalorder %s55, 0
      %s58 = sadd.s32 %s57, 1
      %s59 = scalar_select %p56, %s57, %s58
      %p62 = pneg %p56
      %p63 = scmp.eq.s32.totalorder %s9, 3
      %p64 = por %p62, %p63
      %p65 = scmp.ne.s32.totalorder %s57, %s60
      %p66 = scmp.eq.s32.totalorder %s9, 0
      %p67 = por %p65, %p66
      %p68 = scmp.ne.s32.totalorder %s57, %s60
      %p69 = scmp.eq.s32.totalorder %s14, 3
      %p70 = por %p68, %p69
      %p71 = scmp.ne.s32.totalorder %s60, %s61
      %p72 = scmp.eq.s32.totalorder %s14, 0
      %p73 = por %p71, %p72
      %p74 = scmp.ne.s32.totalorder %s60, %s61
      %p75 = scmp.eq.s32.totalorder %s15, 3
      %p76 = por %p74, %p75
      %p78 = scmp.ne.s32.totalorder %s61, %s77
      %p79 = scmp.eq.s32.totalorder %s15, 0
      %p80 = por %p78, %p79
      %s81 = ssub.s32 %s17, %s24
      %p82 = scmp.eq.s32.totalorder %s81, 0
      %s84 = sadd.s32 %s83, 1
      %s85 = scalar_select %p82, %s83, %s84
      %p88 = pneg %p82
      %p89 = scmp.eq.s32.totalorder %s9, 3
      %p90 = por %p88, %p89
      %p91 = scmp.ne.s32.totalorder %s83, %s86
      %p92 = scmp.eq.s32.totalorder %s9, 0
      %p93 = por %p91, %p92
      %p94 = scmp.ne.s32.totalorder %s83, %s86
      %p95 = scmp.eq.s32.totalorder %s14, 3
      %p96 = por %p94, %p95
      %p97 = scmp.ne.s32.totalorder %s86, %s87
      %p98 = scmp.eq.s32.totalorder %s14, 0
      %p99 = por %p97, %p98
      %p100 = scmp.ne.s32.totalorder %s86, %s87
      %p101 = scmp.eq.s32.totalorder %s15, 3
      %p102 = por %p100, %p101
      %p104 = scmp.ne.s32.totalorder %s87, %s103
      %p105 = scmp.eq.s32.totalorder %s15, 0
      %p106 = por %p104, %p105
      %s107 = ssub.s32 %s16, %s28
      %s108 = ssub.s32 %s17, %s24
      %s109 = sor.u32 %s107, %s108
      %p110 = scmp.eq.s32.totalorder %s109, 0
      %s112 = sadd.s32 %s111, 1
      %s113 = scalar_select %p110, %s111, %s112
      %p116 = pneg %p110
      %p117 = scmp.eq.s32.totalorder %s9, 3
      %p118 = por %p116, %p117
      %p119 = scmp.ne.s32.totalorder %s111, %s114
      %p120 = scmp.eq.s32.totalorder %s9, 0
      %p121 = por %p119, %p120
      %p122 = scmp.ne.s32.totalorder %s111, %s114
      %p123 = scmp.eq.s32.totalorder %s14, 3
      %p124 = por %p122, %p123
      %p125 = scmp.ne.s32.totalorder %s114, %s115
      %p126 = scmp.eq.s32.totalorder %s14, 0
      %p127 = por %p125, %p126
      %p128 = scmp.ne.s32.totalorder %s114, %s115
      %p129 = scmp.eq.s32.totalorder %s15, 3
      %p130 = por %p128, %p129
      %p132 = scmp.ne.s32.totalorder %s115, %s131
      %p133 = scmp.eq.s32.totalorder %s15, 0
      %p134 = por %p132, %p133
      %p135 = scmp.le.s32.totalorder 1, %s9
      %p136 = scmp.lt.s32.totalorder %s9, 5
      %p137 = pnand %p135, %p136
      %p138 = pneg %p137
      // Predicated region
      $region9: #{resnet50_forward.15} parent=5 // pred_check
        _
      $region10: #{resnet50_forward.15} parent=5 // pred_check_branch
        %140 = sbr.rel (%p137) target = $region12
      $region11: #{resnet50_forward.15} parent=5 // pred_region
        %s141 = ssub.s32 %s9, 1
        // Predicated region
        $region13: #{resnet50_forward.15} parent=11 // pred_check
          %p142 = pneg %p47
        $region14: #{resnet50_forward.15} parent=11 // pred_check_branch
          %144 = sbr.rel (%p142) target = $region16
        $region15: #{resnet50_forward.15} parent=11 // pred_region
          %s145 = smul.u32 2, %s18
          %p146 = scmp.lt.s32.totalorder %s145, 1
          %s147 = scalar_select %p146, %s145, 1
          %s148 = smul.addr %s147, 4
          %s149 = scalar_lea.vmem %s0, %s148
          %s150 = smul.u32 2, %s18
        $region16: #{resnet50_forward.15} parent=11 // pred_fallthru
          _
      $region12: #{resnet50_forward.15} parent=5 // pred_fallthru
        _
      %p151 = scmp.lt.s32.totalorder %s9, 4
      // Predicated region
      $region17: #{resnet50_forward.15} parent=5 // pred_check
        %p152 = pneg %p151
      $region18: #{resnet50_forward.15} parent=5 // pred_check_branch
        %154 = sbr.rel (%p152) target = $region20
      $region19: #{resnet50_forward.15} parent=5 // pred_region
        // Predicated region
        $region21: #{resnet50_forward.15} parent=19 // pred_check
          %p155 = pneg %p67
        $region22: #{resnet50_forward.15} parent=19 // pred_check_branch
          %157 = sbr.rel (%p155) target = $region24
        $region23: #{resnet50_forward.15} parent=19 // pred_region
          %s158 = sand.u32 %s57, 1
          %s159 = sand.u32 %s57, 1
          %s160 = smul.addr %s159, 128
          %s161 = scalar_lea.vmem [#allocation2], %s160
          %s162 = smul.u32 2, %s17
          %s163 = smul.addr %s162, 4
          %s164 = scalar_lea.vmem %s1, %s163
          // Predicated region
          $region25: #{resnet50_forward.15} parent=23 // pred_check
            _
          $region26: #{resnet50_forward.15} parent=23 // pred_check_branch
            %166 = sbr.rel (0) target = $region28
          $region27: #{resnet50_forward.15} parent=23 // pred_region
            // Predicated region
            $region29: #{resnet50_forward.15} parent=27 // pred_check
              _
            $region30: #{resnet50_forward.15} parent=27 // pred_check_branch
              %168 = sbr.rel (0) target = $region32
            $region31: #{resnet50_forward.15} parent=27 // pred_region
              // Predicated region
              $region44: #{resnet50_forward.15} parent=31 // pred_check
                _
              $region45: #{resnet50_forward.15} parent=31 // pred_check_branch
                %213 = sbr.rel (0) target = $region47
              $region46: #{resnet50_forward.15} parent=31 // pred_region
                loop: start=0, step=1, limit=1
                $region48: #{resnet50_forward.15} parent=46 // loop_pre_header
                  _
                $region49: #{resnet50_forward.15} parent=46 // loop_header
                  %s215 = sphi 0, %s219
                  %p216 = scmp.ge.s32.totalorder %s215, 1
                  %s220 = sphi %s164, %s164
                  %s221 = sphi %s161, %s161
                $region50: #{resnet50_forward.15} parent=46 // loop_header_branch
                  %218 = sbr.rel (%p216) target = $region54
                $region51: #{resnet50_forward.15} parent=46 // loop_body
                  %v222 = vld [vmem:[%s220] sm:$0xff]
                  %223 = vst [vmem:[%s221] sm:$0xff] %v222
                  %v224 = vld [vmem:[%s220 + $0x20] sm:$0xff]
                  %225 = vst [vmem:[%s221 + $0x8] sm:$0xff] %v224
                  %v226 = vld [vmem:[%s220 + $0x40] sm:$0xff]
                  %227 = vst [vmem:[%s221 + $0x10] sm:$0xff] %v226
                  %v228 = vld [vmem:[%s220 + $0x60] sm:$0xff]
                  %229 = vst [vmem:[%s221 + $0x18] sm:$0xff] %v228
                  %v230 = vld [vmem:[%s220 + $0x80] sm:$0xff]
                  %231 = vst [vmem:[%s221 + $0x20] sm:$0xff] %v230
                  %v232 = vld [vmem:[%s220 + $0xa0] sm:$0xff]
                  %233 = vst [vmem:[%s221 + $0x28] sm:$0xff] %v232
                  %v234 = vld [vmem:[%s220 + $0xc0] sm:$0xff]
                  %235 = vst [vmem:[%s221 + $0x30] sm:$0xff] %v234
                  %v236 = vld [vmem:[%s220 + $0xe0] sm:$0xff]
                  %237 = vst [vmem:[%s221 + $0x38] sm:$0xff] %v236
                  %v238 = vld [vmem:[%s220 + $0x100] sm:$0xff]
                  %239 = vst [vmem:[%s221 + $0x40] sm:$0xff] %v238
                  %v240 = vld [vmem:[%s220 + $0x120] sm:$0xff]
                  %241 = vst [vmem:[%s221 + $0x48] sm:$0xff] %v240
                  %v242 = vld [vmem:[%s220 + $0x140] sm:$0xff]
                  %243 = vst [vmem:[%s221 + $0x50] sm:$0xff] %v242
                  %v244 = vld [vmem:[%s220 + $0x160] sm:$0xff]
                  %245 = vst [vmem:[%s221 + $0x58] sm:$0xff] %v244
                  %v246 = vld [vmem:[%s220 + $0x180] sm:$0xff]
                  %247 = vst [vmem:[%s221 + $0x60] sm:$0xff] %v246
                  %v248 = vld [vmem:[%s220 + $0x1a0] sm:$0xff]
                  %249 = vst [vmem:[%s221 + $0x68] sm:$0xff] %v248
                  %v250 = vld [vmem:[%s220 + $0x1c0] sm:$0xff]
                  %251 = vst [vmem:[%s221 + $0x70] sm:$0xff] %v250
                  %v252 = vld [vmem:[%s220 + $0x1e0] sm:$0xff]
                  %253 = vst [vmem:[%s221 + $0x78] sm:$0xff] %v252
                $region52: #{resnet50_forward.15} parent=46 // loop_footer
                  %s219 = sadd.s32 1, %s215
                $region53: #{resnet50_forward.15} parent=46 // loop_footer_branch
                  %214 = sbr.rel target = $region49
                $region54: #{resnet50_forward.15} parent=46 // loop_exit
                  _
              $region47: #{resnet50_forward.15} parent=31 // pred_fallthru
                _
              // Predicated region
              $region55: #{resnet50_forward.15} parent=31 // pred_check
                _
              $region56: #{resnet50_forward.15} parent=31 // pred_check_branch
                %255 = sbr.rel target = $region58
              $region57: #{resnet50_forward.15} parent=31 // pred_region
                _
              $region58: #{resnet50_forward.15} parent=31 // pred_fallthru
                _
            $region32: #{resnet50_forward.15} parent=27 // pred_fallthru
              _
            // Predicated region
            $region33: #{resnet50_forward.15} parent=27 // pred_check
              _
            $region34: #{resnet50_forward.15} parent=27 // pred_check_branch
              %170 = sbr.rel target = $region36
            $region35: #{resnet50_forward.15} parent=27 // pred_region
              loop: start=0, step=1, limit=1
              $region37: #{resnet50_forward.15} parent=35 // loop_pre_header
                _
              $region38: #{resnet50_forward.15} parent=35 // loop_header
                %s173 = sphi 0, %s177
                %p174 = scmp.ge.s32.totalorder %s173, 1
                %s178 = sphi %s164, %s164
                %s179 = sphi %s161, %s161
              $region39: #{resnet50_forward.15} parent=35 // loop_header_branch
                %176 = sbr.rel (%p174) target = $region43
              $region40: #{resnet50_forward.15} parent=35 // loop_body
                %v180 = vld [vmem:[%s178] sm:$0xff]
                %181 = vst [vmem:[%s179] sm:$0xff] %v180
                %v182 = vld [vmem:[%s178 + $0x20] sm:$0xff]
                %183 = vst [vmem:[%s179 + $0x8] sm:$0xff] %v182
                %v184 = vld [vmem:[%s178 + $0x40] sm:$0xff]
                %185 = vst [vmem:[%s179 + $0x10] sm:$0xff] %v184
                %v186 = vld [vmem:[%s178 + $0x60] sm:$0xff]
                %187 = vst [vmem:[%s179 + $0x18] sm:$0xff] %v186
                %v188 = vld [vmem:[%s178 + $0x80] sm:$0xff]
                %189 = vst [vmem:[%s179 + $0x20] sm:$0xff] %v188
                %v190 = vld [vmem:[%s178 + $0xa0] sm:$0xff]
                %191 = vst [vmem:[%s179 + $0x28] sm:$0xff] %v190
                %v192 = vld [vmem:[%s178 + $0xc0] sm:$0xff]
                %193 = vst [vmem:[%s179 + $0x30] sm:$0xff] %v192
                %v194 = vld [vmem:[%s178 + $0xe0] sm:$0xff]
                %195 = vst [vmem:[%s179 + $0x38] sm:$0xff] %v194
                %v196 = vld [vmem:[%s178 + $0x100] sm:$0xff]
                %197 = vst [vmem:[%s179 + $0x40] sm:$0xff] %v196
                %v198 = vld [vmem:[%s178 + $0x120] sm:$0xff]
                %199 = vst [vmem:[%s179 + $0x48] sm:$0xff] %v198
                %v200 = vld [vmem:[%s178 + $0x140] sm:$0xff]
                %201 = vst [vmem:[%s179 + $0x50] sm:$0xff] %v200
                %v202 = vld [vmem:[%s178 + $0x160] sm:$0xff]
                %203 = vst [vmem:[%s179 + $0x58] sm:$0xff] %v202
                %v204 = vld [vmem:[%s178 + $0x180] sm:$0xff]
                %205 = vst [vmem:[%s179 + $0x60] sm:$0xff] %v204
                %v206 = vld [vmem:[%s178 + $0x1a0] sm:$0xff]
                %207 = vst [vmem:[%s179 + $0x68] sm:$0xff] %v206
                %v208 = vld [vmem:[%s178 + $0x1c0] sm:$0xff]
                %209 = vst [vmem:[%s179 + $0x70] sm:$0xff] %v208
                %v210 = vld [vmem:[%s178 + $0x1e0] sm:$0xff]
                %211 = vst [vmem:[%s179 + $0x78] sm:$0xff] %v210
              $region41: #{resnet50_forward.15} parent=35 // loop_footer
                %s177 = sadd.s32 1, %s173
              $region42: #{resnet50_forward.15} parent=35 // loop_footer_branch
                %172 = sbr.rel target = $region38
              $region43: #{resnet50_forward.15} parent=35 // loop_exit
                _
            $region36: #{resnet50_forward.15} parent=27 // pred_fallthru
              _
          $region28: #{resnet50_forward.15} parent=23 // pred_fallthru
            _
          %256 = vnop
        $region24: #{resnet50_forward.15} parent=19 // pred_fallthru
          _
        // Predicated region
        $region59: #{resnet50_forward.15} parent=19 // pred_check
          %p257 = pneg %p93
        $region60: #{resnet50_forward.15} parent=19 // pred_check_branch
          %259 = sbr.rel (%p257) target = $region62
        $region61: #{resnet50_forward.15} parent=19 // pred_region
          %s260 = smul.u32 2, %s17
          %p261 = scmp.lt.s32.totalorder %s260, 7
          %s262 = scalar_select %p261, %s260, 7
          %s263 = scalar_lea.vmem %s2, %s262
          %s264 = smul.u32 2, %s17
        $region62: #{resnet50_forward.15} parent=19 // pred_fallthru
          _
      $region20: #{resnet50_forward.15} parent=5 // pred_fallthru
        _
      %p265 = scmp.le.s32.totalorder 1, %s9
      %p266 = scmp.lt.s32.totalorder %s9, 5
      %p267 = pnand %p265, %p266
      %p268 = pneg %p267
      // Predicated region
      $region63: #{resnet50_forward.15} parent=5 // pred_check
        _
      $region64: #{resnet50_forward.15} parent=5 // pred_check_branch
        %270 = sbr.rel (%p267) target = $region66
      $region65: #{resnet50_forward.15} parent=5 // pred_region
        %s271 = ssub.s32 %s9, 1
        %s272 = sand.u32 %s60, 1
        %s273 = sand.u32 %s60, 1
        %s274 = smul.addr %s273, 128
        %s275 = scalar_lea.vmem [#allocation2], %s274
        // Predicated region
        $region67: #{resnet50_forward.15} parent=65 // pred_check
          %p276 = pneg %p73
        $region68: #{resnet50_forward.15} parent=65 // pred_check_branch
          %278 = sbr.rel (%p276) target = $region70
        $region69: #{resnet50_forward.15} parent=65 // pred_region
          _
        $region70: #{resnet50_forward.15} parent=65 // pred_fallthru
          _
        %s279 = smul.u32 2, %s18
        %p280 = scmp.lt.s32.totalorder %s279, 1
        %s281 = scalar_select %p280, %s279, 1
        %s282 = smul.addr %s281, 4
        %s283 = scalar_lea.vmem %s0, %s282
        %p284 = pneg %p47
        %p285 = pneg %p44
        %s286 = sand.u32 %s60, 1
        %s287 = sand.u32 %s60, 1
        %s288 = smul.addr %s287, 128
        %s289 = scalar_lea.vmem [#allocation2], %s288
        %p290 = pneg %p73
        %p291 = pneg %p70
        %s292 = smul.u32 2, %s19
        %p293 = scmp.lt.s32.totalorder %s292, 7
        %s294 = scalar_select %p293, %s292, 7
        %s295 = scalar_lea.vmem %s2, %s294
        %p296 = pneg %p99
        %p297 = pneg %p96
        %p298 = pneg %p127
        %p299 = pneg %p124
        %s300 = sand.u32 %s114, 1
        %s301 = sand.u32 %s114, 1
        %s302 = smul.addr %s301, 32
        %s303 = scalar_lea.vmem [#allocation3], %s302
        %s304 = smul.u32 2, %s18
        %p305 = scmp.lt.s32.totalorder %s304, 1
        %s306 = scalar_select %p305, %s304, 1
        %s307 = smul.addr %s306, 4
        %s308 = scalar_lea.vmem %s0, %s307
        %s309 = smul.u32 2, %s18
        %s310 = smul.u32 2, %s19
        %s311 = smul.u32 2, %s19
        %p312 = scmp.lt.s32.totalorder %s311, 7
        %s313 = scalar_select %p312, %s311, 7
        %s314 = scalar_lea.vmem %s2, %s313
        %s315 = smul.u32 2, %s19
        %s316 = smul.u32 2, %s18
        %s317 = smul.u32 2, %s19
        %v319 = vld [vmem:[%s308] sm:$0xf]
        %v320 = vld [vmem:[%s308 + $0x4] sm:$0xf]
        %v321 = vld [vmem:[%s275] sm:$0xff]
        %v322 = vld [vmem:[%s275 + $0x8] sm:$0xff]
        %v323 = vld [vmem:[%s275 + $0x10] sm:$0xff]
        %v324 = vld [vmem:[%s275 + $0x18] sm:$0xff]
        %v325 = vld [vmem:[%s275 + $0x20] sm:$0xff]
        %v326 = vld [vmem:[%s275 + $0x28] sm:$0xff]
        %v327 = vld [vmem:[%s275 + $0x30] sm:$0xff]
        %v328 = vld [vmem:[%s275 + $0x38] sm:$0xff]
        %v329 = vld [vmem:[%s275 + $0x40] sm:$0xff]
        %v330 = vld [vmem:[%s275 + $0x48] sm:$0xff]
        %v331 = vld [vmem:[%s275 + $0x50] sm:$0xff]
        %v332 = vld [vmem:[%s275 + $0x58] sm:$0xff]
        %v333 = vld [vmem:[%s275 + $0x60] sm:$0xff]
        %v334 = vld [vmem:[%s275 + $0x68] sm:$0xff]
        %v335 = vld [vmem:[%s275 + $0x70] sm:$0xff]
        %v336 = vld [vmem:[%s275 + $0x78] sm:$0xff]
        %v337 = vld [vmem:[%s314] sm:$0x3]
        %v339 = vlaneseq
        %v340 = vshrl.u32 %v339, 7
        %v341 = vsub.s32 0, %v340
        %v342 = vrot.slane %v337, %v341
        %v343 = vlaneseq
        %v344 = vshrl.u32 %v343, 7
        %v345 = vsub.s32 1, %v344
        %v346 = vrot.slane %v337, %v345
        %v351 = vunpack.c.l.b16 %v319
        %v352 = vunpack.c.l.b16 %v320
        %v353 = vpack.c.b16 %v352, %v351
        %v371 = vunpack.c.l.b16 %v321
        %v372 = vunpack.c.h.b16 %v321
        %v373 = vunpack.c.l.b16 %v322
        %v374 = vunpack.c.h.b16 %v322
        %v375 = vunpack.c.l.b16 %v323
        %v376 = vunpack.c.h.b16 %v323
        %v377 = vunpack.c.l.b16 %v324
        %v378 = vunpack.c.h.b16 %v324
        %v379 = vunpack.c.l.b16 %v325
        %v380 = vunpack.c.h.b16 %v325
        %v381 = vunpack.c.l.b16 %v326
        %v382 = vunpack.c.h.b16 %v326
        %v383 = vunpack.c.l.b16 %v327
        %v384 = vunpack.c.h.b16 %v327
        %v385 = vunpack.c.l.b16 %v328
        %v386 = vunpack.c.h.b16 %v328
        %v387 = vunpack.c.l.b16 %v329
        %v388 = vunpack.c.h.b16 %v329
        %v389 = vunpack.c.l.b16 %v330
        %v390 = vunpack.c.h.b16 %v330
        %v391 = vunpack.c.l.b16 %v331
        %v392 = vunpack.c.h.b16 %v331
        %v393 = vunpack.c.l.b16 %v332
        %v394 = vunpack.c.h.b16 %v332
        %v395 = vunpack.c.l.b16 %v333
        %v396 = vunpack.c.h.b16 %v333
        %v397 = vunpack.c.l.b16 %v334
        %v398 = vunpack.c.h.b16 %v334
        %v399 = vunpack.c.l.b16 %v335
        %v400 = vunpack.c.h.b16 %v335
        %v401 = vunpack.c.l.b16 %v336
        %v402 = vunpack.c.h.b16 %v336
        %v403 = vpack.c.b16 %v373, %v371
        %v404 = vpack.c.b16 %v374, %v372
        %v405 = vpack.c.b16 %v377, %v375
        %v406 = vpack.c.b16 %v378, %v376
        %v407 = vpack.c.b16 %v381, %v379
        %v408 = vpack.c.b16 %v382, %v380
        %v409 = vpack.c.b16 %v385, %v383
        %v410 = vpack.c.b16 %v386, %v384
        %v411 = vpack.c.b16 %v389, %v387
        %v412 = vpack.c.b16 %v390, %v388
        %v413 = vpack.c.b16 %v393, %v391
        %v414 = vpack.c.b16 %v394, %v392
        %v415 = vpack.c.b16 %v397, %v395
        %v416 = vpack.c.b16 %v398, %v396
        %v417 = vpack.c.b16 %v401, %v399
        %v418 = vpack.c.b16 %v402, %v400
        %435 = vmatprep.subr.bf16.mxu0 %v404
        %436 = vmatpush1.bf16.msra.mxu0 %v403
        %437 = vmatprep.subr.bf16.mxu0 %v406
        %438 = vmatpush1.bf16.msra.mxu0 %v405
        %439 = vmatprep.subr.bf16.mxu0 %v408
        %440 = vmatpush1.bf16.msra.mxu0 %v407
        %441 = vmatprep.subr.bf16.mxu0 %v410
        %442 = vmatpush1.bf16.msra.mxu0 %v409
        %443 = vmatprep.subr.bf16.mxu0 %v412
        %444 = vmatpush1.bf16.msra.mxu0 %v411
        %445 = vmatprep.subr.bf16.mxu0 %v414
        %446 = vmatpush1.bf16.msra.mxu0 %v413
        %447 = vmatprep.subr.bf16.mxu0 %v416
        %448 = vmatpush1.bf16.msra.mxu0 %v415
        %449 = vmatprep.subr.bf16.mxu0 %v418
        %450 = vmatpush1.bf16.msra.mxu0 %v417
        %451 = vmatprep.subr.bf16.mxu0 0
        %452 = vmatpush1.bf16.msra.mxu0 0
        %453 = vmatprep.subr.bf16.mxu0 0
        %454 = vmatpush1.bf16.msra.mxu0 0
        %455 = vmatprep.subr.bf16.mxu0 0
        %456 = vmatpush1.bf16.msra.mxu0 0
        %457 = vmatprep.subr.bf16.mxu0 0
        %458 = vmatpush1.bf16.msra.mxu0 0
        %459 = vmatprep.subr.bf16.mxu0 0
        %460 = vmatpush1.bf16.msra.mxu0 0
        %461 = vmatprep.subr.bf16.mxu0 0
        %462 = vmatpush1.bf16.msra.mxu0 0
        %463 = vmatprep.subr.bf16.mxu0 0
        %464 = vmatpush1.bf16.msra.mxu0 0
        %465 = vmatprep.subr.bf16.mxu0 0
        %466 = vmatpush1.bf16.msra.mxu0 0
        %467 = vmatprep.mubr.bf16.mxu0 0
        %468 = vmatmul.mubr.bf16.gmra.mrb[0].mxu0 %v353
        %v469 = vpop.f32.mrb[0].mxu0
        %v470 = vadd.f32 %v342, %v469
        %v471 = vpop.f32.mrb[0].mxu0
        %v472 = vadd.f32 %v346, %v471
        %v473 = vpop.f32.mrb[0].mxu0
        %v474 = vadd.f32 %v342, %v473
        %v475 = vpop.f32.mrb[0].mxu0
        %v476 = vadd.f32 %v346, %v475
        %477 = vdwg.mxu0
        %478 = vst [vmem:[%s303] sm:$0xff] %v470
        %479 = vst [vmem:[%s303 + $0x8] sm:$0xff] %v472
        %480 = vst [vmem:[%s303 + $0x10] sm:$0xff] %v474
        %481 = vst [vmem:[%s303 + $0x18] sm:$0xff] %v476
        %s482 = sand.u32 %s114, 1
        %s483 = sand.u32 %s114, 1
        %s484 = smul.addr %s483, 32
        %s485 = scalar_lea.vmem [#allocation3], %s484
        // Predicated region
        $region71: #{resnet50_forward.15} parent=65 // pred_check
          %p486 = pneg %p124
        $region72: #{resnet50_forward.15} parent=65 // pred_check_branch
          %488 = sbr.rel (%p486) target = $region74
        $region73: #{resnet50_forward.15} parent=65 // pred_region
          %s489 = smul.u32 2, %s18
          %s490 = smul.u32 2, %s19
          %s491 = smul.addr %s489, 8
          %s492 = sadd.s32 %s490, %s491
          %s493 = smul.addr %s492, 8
          %s494 = scalar_lea.vmem %s3, %s493
          // Predicated region
          $region75: #{resnet50_forward.15} parent=73 // pred_check
            _
          $region76: #{resnet50_forward.15} parent=73 // pred_check_branch
            %496 = sbr.rel (0) target = $region78
          $region77: #{resnet50_forward.15} parent=73 // pred_region
            // Predicated region
            $region79: #{resnet50_forward.15} parent=77 // pred_check
              _
            $region80: #{resnet50_forward.15} parent=77 // pred_check_branch
              %498 = sbr.rel (0) target = $region82
            $region81: #{resnet50_forward.15} parent=77 // pred_region
              loop: start=0, step=1, limit=1
              $region83: #{resnet50_forward.15} parent=81 // loop_pre_header
                _
              $region84: #{resnet50_forward.15} parent=81 // loop_header
                %s500 = sphi 0, %s504
                %p501 = scmp.ge.s32.totalorder %s500, 1
                %s505 = sphi %s485, %s485
                %s506 = sphi %s494, %s494
              $region85: #{resnet50_forward.15} parent=81 // loop_header_branch
                %503 = sbr.rel (%p501) target = $region89
              $region86: #{resnet50_forward.15} parent=81 // loop_body
                %v507 = vld [vmem:[%s505] sm:$0xff]
                %508 = vst [vmem:[%s506] sm:$0xff] %v507
                %v509 = vld [vmem:[%s505 + $0x8] sm:$0xff]
                %510 = vst [vmem:[%s506 + $0x8] sm:$0xff] %v509
                %v511 = vld [vmem:[%s505 + $0x10] sm:$0xff]
                %512 = vst [vmem:[%s506 + $0x40] sm:$0xff] %v511
                %v513 = vld [vmem:[%s505 + $0x18] sm:$0xff]
                %514 = vst [vmem:[%s506 + $0x48] sm:$0xff] %v513
              $region87: #{resnet50_forward.15} parent=81 // loop_footer
                %s504 = sadd.s32 1, %s500
              $region88: #{resnet50_forward.15} parent=81 // loop_footer_branch
                %499 = sbr.rel target = $region84
              $region89: #{resnet50_forward.15} parent=81 // loop_exit
                _
            $region82: #{resnet50_forward.15} parent=77 // pred_fallthru
              _
            // Predicated region
            $region90: #{resnet50_forward.15} parent=77 // pred_check
              _
            $region91: #{resnet50_forward.15} parent=77 // pred_check_branch
              %516 = sbr.rel target = $region93
            $region92: #{resnet50_forward.15} parent=77 // pred_region
              _
            $region93: #{resnet50_forward.15} parent=77 // pred_fallthru
              _
          $region78: #{resnet50_forward.15} parent=73 // pred_fallthru
            _
          %517 = vnop
        $region74: #{resnet50_forward.15} parent=65 // pred_fallthru
          _
      $region66: #{resnet50_forward.15} parent=5 // pred_fallthru
        _
      %p518 = scmp.le.s32.totalorder 2, %s9
      // Predicated region
      $region94: #{resnet50_forward.15} parent=5 // pred_check
        %p519 = pneg %p518
      $region95: #{resnet50_forward.15} parent=5 // pred_check_branch
        %521 = sbr.rel (%p519) target = $region97
      $region96: #{resnet50_forward.15} parent=5 // pred_region
        %s522 = ssub.s32 %s9, 2
        // Predicated region
        $region98: #{resnet50_forward.15} parent=96 // pred_check
          %p523 = pneg %p130
        $region99: #{resnet50_forward.15} parent=96 // pred_check_branch
          %525 = sbr.rel (%p523) target = $region101
        $region100: #{resnet50_forward.15} parent=96 // pred_region
          %s526 = sand.u32 %s115, 1
          %s527 = sand.u32 %s115, 1
          %s528 = smul.addr %s527, 32
          %s529 = scalar_lea.vmem [#allocation3], %s528
        $region101: #{resnet50_forward.15} parent=96 // pred_fallthru
          _
      $region97: #{resnet50_forward.15} parent=5 // pred_fallthru
        _
    $region6: #{resnet50_forward.15} parent=1 // loop_footer
      %s13 = sadd.s32 1, %s9
    $region7: #{resnet50_forward.15} parent=1 // loop_footer_branch
      %8 = sbr.rel target = $region3
    $region8: #{resnet50_forward.15} parent=1 // loop_exit
      _

</llo_original>
